<compile_context>
chip_gen: v7x
topology: tpu7x:2x2x1
jax: 0.10.0
libtpu: 0.0.40
codegen_flags: <defaults>
</compile_context>

<pallas_src>
import jax
import jax.numpy as jnp
from jax.experimental import pallas as pl
from jax.experimental.pallas import tpu as pltpu

# Small, TPU-friendly config consistent with the module's constraints
# (n_embed % n_head == 0).  Full config would be n_embed=384, n_head=6.
N_EMBED = 128
N_HEAD = 4
HEAD = N_EMBED // N_HEAD
EPS = 1e-5                      # nn.LayerNorm default eps
_SQRT_HALF = 0.7071067811865476  # 1/sqrt(2)


def _layernorm(x, g, b):
    mean = jnp.mean(x, axis=-1, keepdims=True)
    var = jnp.mean(jnp.square(x - mean), axis=-1, keepdims=True)
    return (x - mean) * jax.lax.rsqrt(var + EPS) * g + b


def block_kernel(x_ref, ln1g_ref, ln1b_ref, wqkv_ref, bqkv_ref, wo_ref, bo_ref,
                 ln2g_ref, ln2b_ref, wfc_ref, bfc_ref, wp_ref, bp_ref, o_ref):
    bt, T, C = x_ref.shape                        # static block shape
    M = bt * T
    x = x_ref[...].reshape(M, C)                  # (M, C) f32, Bt batch rows fused into M

    # ---------- attention branch: x + c_proj(attn(ln1(x))) ----------
    h = _layernorm(x, ln1g_ref[0], ln1b_ref[0]).astype(jnp.bfloat16)
    # 1/sqrt(HEAD) is pre-folded into the Q columns of wqkv/bqkv (param prep).
    qkv = jnp.dot(h, wqkv_ref[...], preferred_element_type=jnp.float32) + bqkv_ref[0]
    qkv_bf = qkv.astype(jnp.bfloat16)             # single bf16 cast of the whole (M, 3C)

    def split_heads(z):
        # (M, C) -> (NH*bt, T, HEAD); head-major batch.  Per-head lane slice + free
        # major-dim reshapes + one major-axis concat (no per-head casts, no 4D transpose).
        parts = [z[:, i * HEAD:(i + 1) * HEAD].reshape(1, M, HEAD) for i in range(N_HEAD)]
        return jnp.concatenate(parts, axis=0).reshape(N_HEAD * bt, T, HEAD)

    qh = split_heads(qkv_bf[:, :C])               # 128-lane-aligned q/k/v slabs
    kh = split_heads(qkv_bf[:, C:2 * C])
    vh = split_heads(qkv_bf[:, 2 * C:])

    # One batched matmul per stage over all (head, batch-row) pairs.
    s = jnp.einsum('bqd,bkd->bqk', qh, kh,
                   preferred_element_type=jnp.float32)        # (NH*bt, T, T) f32
    s = s - jnp.max(s, axis=-1, keepdims=True)
    p = jnp.exp(s)
    p = p * pl.reciprocal(jnp.sum(p, axis=-1, keepdims=True), approx=True)
    o = jnp.einsum('bqk,bkd->bqd', p.astype(jnp.bfloat16), vh,
                   preferred_element_type=jnp.float32)        # (NH*bt, T, HEAD) f32

    # Merge heads back to (M, C): head-major batch -> per-head major slice + lane concat.
    o = o.reshape(N_HEAD, M, HEAD)
    y = jnp.concatenate([o[i] for i in range(N_HEAD)], axis=-1)   # (M, C) f32

    attn_out = jnp.dot(y.astype(jnp.bfloat16), wo_ref[...],
                       preferred_element_type=jnp.float32) + bo_ref[0]
    x1 = x + attn_out

    # ---------- MLP branch: x1 + c_proj(gelu(c_fc(ln2(x1)))) ----------
    h2 = _layernorm(x1, ln2g_ref[0], ln2b_ref[0]).astype(jnp.bfloat16)
    # wfc/bfc are pre-scaled by 1/sqrt(2); with u = t/sqrt(2):
    #   GELU(t) = 0.5*t*(1+erf(t/sqrt(2))) = sqrt(1/2)*u*(1+erf(u))   (exact erf GELU)
    u = jnp.dot(h2, wfc_ref[...], preferred_element_type=jnp.float32) + bfc_ref[0]
    g = _SQRT_HALF * u * (1.0 + jax.lax.erf(u))
    mlp_out = jnp.dot(g.astype(jnp.bfloat16), wp_ref[...],
                      preferred_element_type=jnp.float32) + bp_ref[0]

    o_ref[...] = (x1 + mlp_out).reshape(bt, T, C).astype(o_ref.dtype)


def prepare_block_params(params):
    """One-time parameter preparation (do this once, NOT per forward call):
    fold the SDPA 1/sqrt(head) scale into the Q columns of c_attn, fold the GELU
    1/sqrt(2) into c_fc, and cast the big weight matrices to bfloat16 for the MXU
    (halves weight DMA / VMEM).  Biases and LayerNorm params stay f32."""
    (ln1g, ln1b, wqkv, bqkv, wo, bo, ln2g, ln2b, wfc, bfc, wp, bp) = params
    C = N_EMBED
    sdpa = 1.0 / (HEAD ** 0.5)
    qkv_scale = jnp.concatenate(
        [jnp.full((C,), sdpa, jnp.float32), jnp.ones((2 * C,), jnp.float32)])
    wqkv_s = wqkv * qkv_scale[None, :]
    bqkv_s = bqkv * qkv_scale[None, :]
    wfc_s = wfc * _SQRT_HALF
    bfc_s = bfc * _SQRT_HALF

    bf = jnp.bfloat16
    return (ln1g, ln1b,
            wqkv_s.astype(bf), bqkv_s,
            wo.astype(bf), bo,
            ln2g, ln2b,
            wfc_s.astype(bf), bfc_s,
            wp.astype(bf), bp)


def block_forward(x, prepared_params, *, bt=8):
    """x: (B, T, C) f32; prepared_params from prepare_block_params()."""
    B, T, C = x.shape
    assert B % bt == 0, "batch must be divisible by the per-program batch tile"
    (ln1g, ln1b, wqkv, bqkv, wo, bo, ln2g, ln2b, wfc, bfc, wp, bp) = prepared_params

    args = (x, ln1g, ln1b, wqkv, bqkv, wo, bo, ln2g, ln2b, wfc, bfc, wp, bp)

    row = lambda d: pl.BlockSpec((1, d), lambda b: (0, 0))
    mat = lambda m, n: pl.BlockSpec((m, n), lambda b: (0, 0))
    # TODO(synk): at full n_embed=384, single-buffer these grid-invariant weight blocks
    # (pipeline_mode=pl.Buffered(1) or one-shot DMA) to halve weight VMEM per core on v7x.
    in_specs = [
        pl.BlockSpec((bt, T, C), lambda b: (b, 0, 0)),   # x: Bt batch rows per program
        row(C), row(C),                                  # ln1 gamma / beta
        mat(C, 3 * C), row(3 * C),                       # c_attn W, b (SDPA scale folded)
        mat(C, C), row(C),                               # attn c_proj W, b
        row(C), row(C),                                  # ln2 gamma / beta
        mat(C, 4 * C), row(4 * C),                       # mlp c_fc W, b (1/sqrt2 folded)
        mat(4 * C, C), row(C),                           # mlp c_proj W, b
    ]
    return pl.pallas_call(
        block_kernel,
        out_shape=jax.ShapeDtypeStruct((B, T, C), x.dtype),
        grid=(B // bt,),
        in_specs=in_specs,
        out_specs=pl.BlockSpec((bt, T, C), lambda b: (b, 0, 0)),
        compiler_params=pltpu.CompilerParams(dimension_semantics=("parallel",)),
    )(*args)


def block_ref(x, params):
    """Pure-JAX f32 reference mirroring the PyTorch module semantics."""
    (ln1g, ln1b, wqkv, bqkv, wo, bo, ln2g, ln2b, wfc, bfc, wp, bp) = params

    def ln(z, g, b):
        m = z.mean(-1, keepdims=True)
        v = ((z - m) ** 2).mean(-1, keepdims=True)
        return (z - m) / jnp.sqrt(v + EPS) * g[0] + b[0]

    B, T, C = x.shape
    h = ln(x, ln1g, ln1b)
    qkv = h @ wqkv + bqkv[0]
    q, k, v = jnp.split(qkv, 3, axis=-1)
    q = q.reshape(B, T, N_HEAD, HEAD).transpose(0, 2, 1, 3)
    k = k.reshape(B, T, N_HEAD, HEAD).transpose(0, 2, 1, 3)
    v = v.reshape(B, T, N_HEAD, HEAD).transpose(0, 2, 1, 3)
    s = jnp.einsum("bhqd,bhkd->bhqk", q, k) / (HEAD ** 0.5)
    p = jax.nn.softmax(s, axis=-1)
    y = jnp.einsum("bhqk,bhkd->bhqd", p, v).transpose(0, 2, 1, 3).reshape(B, T, C)
    x1 = x + y @ wo + bo[0]
    h2 = ln(x1, ln2g, ln2b)
    u = h2 @ wfc + bfc[0]
    u = 0.5 * u * (1.0 + jax.lax.erf(u * _SQRT_HALF))
    return x1 + u @ wp + bp[0]


if __name__ == "__main__":
    B, T, C = 16, 32, N_EMBED     # bt=8 -> GEMM M = 256, grid=(2,) parallel programs
    key = jax.random.PRNGKey(0)
    keys = jax.random.split(key, 10)
    x = jax.random.normal(keys[0], (B, T, C), jnp.float32)

    def w(k, shape, scale=0.02):
        return (scale * jax.random.normal(k, shape)).astype(jnp.float32)

    params = (
        jnp.ones((1, C), jnp.float32),   # ln1 gamma (PyTorch default init)
        jnp.zeros((1, C), jnp.float32),  # ln1 beta
        w(keys[1], (C, 3 * C)),          # c_attn weight (in, out)
        w(keys[2], (1, 3 * C)),          # c_attn bias
        w(keys[3], (C, C)),              # attn c_proj weight
        w(keys[4], (1, C)),              # attn c_proj bias
        jnp.ones((1, C), jnp.float32),   # ln2 gamma
        jnp.zeros((1, C), jnp.float32),  # ln2 beta
        w(keys[5], (C, 4 * C)),          # mlp c_fc weight
        w(keys[6], (1, 4 * C)),          # mlp c_fc bias
        w(keys[7], (4 * C, C)),          # mlp c_proj weight
        w(keys[8], (1, C)),              # mlp c_proj bias
    )

    prepared = prepare_block_params(params)   # one-time scale folds + bf16 casts

    out = jax.block_until_ready(block_forward(x, prepared, bt=8))
    ref = block_ref(x, params)
    assert out.shape == (B, T, C)
    err = float(jnp.max(jnp.abs(out - ref)))
    assert jnp.allclose(out, ref, atol=2e-2, rtol=2e-2), err
    print("KERNEL_OK")
</pallas_src>

<mosaic_0001>
module attributes {stable_mosaic.version = 11 : i64} {
  func.func @block_kernel(%arg0: i32, %arg1: memref<8x32x128xf32, #tpu.memory_space<vmem>>, %arg2: memref<1x128xf32, #tpu.memory_space<vmem>>, %arg3: memref<1x128xf32, #tpu.memory_space<vmem>>, %arg4: memref<128x384xbf16, #tpu.memory_space<vmem>>, %arg5: memref<1x384xf32, #tpu.memory_space<vmem>>, %arg6: memref<128x128xbf16, #tpu.memory_space<vmem>>, %arg7: memref<1x128xf32, #tpu.memory_space<vmem>>, %arg8: memref<1x128xf32, #tpu.memory_space<vmem>>, %arg9: memref<1x128xf32, #tpu.memory_space<vmem>>, %arg10: memref<128x512xbf16, #tpu.memory_space<vmem>>, %arg11: memref<1x512xf32, #tpu.memory_space<vmem>>, %arg12: memref<512x128xbf16, #tpu.memory_space<vmem>>, %arg13: memref<1x128xf32, #tpu.memory_space<vmem>>, %arg14: memref<8x32x128xf32, #tpu.memory_space<vmem>>) attributes {dimension_semantics = [#tpu.dimension_semantics<parallel>], iteration_bounds = array<i64: 2>, scalar_prefetch = 0 : i64, scratch_operands = 0 : i64, tpu.core_type = #tpu.core_type<tc>, window_params = [{transform_indices = @transform_0, window_bounds = array<i64: 8, 32, 128>}, {pipeline_mode = #tpu.pipeline_mode<synchronous>, transform_indices = @transform_1, window_bounds = array<i64: 1, 128>}, {pipeline_mode = #tpu.pipeline_mode<synchronous>, transform_indices = @transform_2, window_bounds = array<i64: 1, 128>}, {pipeline_mode = #tpu.pipeline_mode<synchronous>, transform_indices = @transform_3, window_bounds = array<i64: 128, 384>}, {pipeline_mode = #tpu.pipeline_mode<synchronous>, transform_indices = @transform_4, window_bounds = array<i64: 1, 384>}, {pipeline_mode = #tpu.pipeline_mode<synchronous>, transform_indices = @transform_5, window_bounds = array<i64: 128, 128>}, {pipeline_mode = #tpu.pipeline_mode<synchronous>, transform_indices = @transform_6, window_bounds = array<i64: 1, 128>}, {pipeline_mode = #tpu.pipeline_mode<synchronous>, transform_indices = @transform_7, window_bounds = array<i64: 1, 128>}, {pipeline_mode = #tpu.pipeline_mode<synchronous>, transform_indices = @transform_8, window_bounds = array<i64: 1, 128>}, {pipeline_mode = #tpu.pipeline_mode<synchronous>, transform_indices = @transform_9, window_bounds = array<i64: 128, 512>}, {pipeline_mode = #tpu.pipeline_mode<synchronous>, transform_indices = @transform_10, window_bounds = array<i64: 1, 512>}, {pipeline_mode = #tpu.pipeline_mode<synchronous>, transform_indices = @transform_11, window_bounds = array<i64: 512, 128>}, {pipeline_mode = #tpu.pipeline_mode<synchronous>, transform_indices = @transform_12, window_bounds = array<i64: 1, 128>}, {transform_indices = @transform_13, window_bounds = array<i64: 8, 32, 128>}]} {
    %c0 = arith.constant 0 : index
    %c0_0 = arith.constant 0 : index
    %c0_1 = arith.constant 0 : index
    %0 = vector.load %arg1[%c0, %c0_0, %c0_1] : memref<8x32x128xf32, #tpu.memory_space<vmem>>, vector<8x32x128xf32>
    %1 = vector.shape_cast %0 : vector<8x32x128xf32> to vector<256x128xf32>
    %c0_2 = arith.constant 0 : index
    %c0_3 = arith.constant 0 : index
    %2 = vector.load %arg2[%c0_2, %c0_3] : memref<1x128xf32, #tpu.memory_space<vmem>>, vector<1x128xf32>
    %3 = vector.shape_cast %2 : vector<1x128xf32> to vector<128xf32>
    %c0_4 = arith.constant 0 : index
    %c0_5 = arith.constant 0 : index
    %4 = vector.load %arg3[%c0_4, %c0_5] : memref<1x128xf32, #tpu.memory_space<vmem>>, vector<1x128xf32>
    %5 = vector.shape_cast %4 : vector<1x128xf32> to vector<128xf32>
    %cst = arith.constant dense<0.000000e+00> : vector<256xf32>
    %6 = vector.multi_reduction <add>, %1, %cst [1] : vector<256x128xf32> to vector<256xf32>
    %7 = vector.shape_cast %6 : vector<256xf32> to vector<256x1xf32>
    %cst_6 = arith.constant 1.280000e+02 : f32
    %8 = vector.broadcast %cst_6 : f32 to vector<256x1xf32>
    %9 = arith.divf %7, %8 : vector<256x1xf32>
    %10 = vector.broadcast %9 : vector<256x1xf32> to vector<256x128xf32>
    %11 = arith.subf %1, %10 : vector<256x128xf32>
    %12 = arith.mulf %11, %11 : vector<256x128xf32>
    %cst_7 = arith.constant dense<0.000000e+00> : vector<256xf32>
    %13 = vector.multi_reduction <add>, %12, %cst_7 [1] : vector<256x128xf32> to vector<256xf32>
    %14 = vector.shape_cast %13 : vector<256xf32> to vector<256x1xf32>
    %cst_8 = arith.constant 1.280000e+02 : f32
    %15 = vector.broadcast %cst_8 : f32 to vector<256x1xf32>
    %16 = arith.divf %14, %15 : vector<256x1xf32>
    %17 = vector.broadcast %9 : vector<256x1xf32> to vector<256x128xf32>
    %18 = arith.subf %1, %17 : vector<256x128xf32>
    %cst_9 = arith.constant 9.99999974E-6 : f32
    %19 = vector.broadcast %cst_9 : f32 to vector<256x1xf32>
    %20 = arith.addf %16, %19 : vector<256x1xf32>
    %21 = math.rsqrt %20 : vector<256x1xf32>
    %22 = vector.broadcast %21 : vector<256x1xf32> to vector<256x128xf32>
    %23 = arith.mulf %18, %22 : vector<256x128xf32>
    %24 = vector.shape_cast %3 : vector<128xf32> to vector<1x128xf32>
    %25 = vector.broadcast %24 : vector<1x128xf32> to vector<256x128xf32>
    %26 = arith.mulf %23, %25 : vector<256x128xf32>
    %27 = vector.shape_cast %5 : vector<128xf32> to vector<1x128xf32>
    %28 = vector.broadcast %27 : vector<1x128xf32> to vector<256x128xf32>
    %29 = arith.addf %26, %28 : vector<256x128xf32>
    %30 = arith.truncf %29 : vector<256x128xf32> to vector<256x128xbf16>
    %c0_10 = arith.constant 0 : index
    %c0_11 = arith.constant 0 : index
    %31 = vector.load %arg4[%c0_10, %c0_11] : memref<128x384xbf16, #tpu.memory_space<vmem>>, vector<128x384xbf16>
    %cst_12 = arith.constant dense<0.000000e+00> : vector<256x384xf32>
    %32 = tpu.matmul %30, %31, %cst_12 {dimension_numbers = #tpu.dot_dimension_numbers<[1], [0], [0], [1], [0, 0, 1, 1], [], []>} : vector<256x128xbf16>, vector<128x384xbf16>, vector<256x384xf32> -> vector<256x384xf32>
    %c0_13 = arith.constant 0 : index
    %c0_14 = arith.constant 0 : index
    %33 = vector.load %arg5[%c0_13, %c0_14] : memref<1x384xf32, #tpu.memory_space<vmem>>, vector<1x384xf32>
    %34 = vector.shape_cast %33 : vector<1x384xf32> to vector<384xf32>
    %35 = vector.shape_cast %34 : vector<384xf32> to vector<1x384xf32>
    %36 = vector.broadcast %35 : vector<1x384xf32> to vector<256x384xf32>
    %37 = arith.addf %32, %36 : vector<256x384xf32>
    %38 = arith.truncf %37 : vector<256x384xf32> to vector<256x384xbf16>
    %39 = vector.extract_strided_slice %38 {offsets = [0, 0], sizes = [256, 128], strides = [1, 1]} : vector<256x384xbf16> to vector<256x128xbf16>
    %40 = vector.extract_strided_slice %39 {offsets = [0, 0], sizes = [256, 32], strides = [1, 1]} : vector<256x128xbf16> to vector<256x32xbf16>
    %41 = vector.shape_cast %40 : vector<256x32xbf16> to vector<1x256x32xbf16>
    %42 = vector.extract_strided_slice %39 {offsets = [0, 32], sizes = [256, 32], strides = [1, 1]} : vector<256x128xbf16> to vector<256x32xbf16>
    %43 = vector.shape_cast %42 : vector<256x32xbf16> to vector<1x256x32xbf16>
    %44 = vector.extract_strided_slice %39 {offsets = [0, 64], sizes = [256, 32], strides = [1, 1]} : vector<256x128xbf16> to vector<256x32xbf16>
    %45 = vector.shape_cast %44 : vector<256x32xbf16> to vector<1x256x32xbf16>
    %46 = vector.extract_strided_slice %39 {offsets = [0, 96], sizes = [256, 32], strides = [1, 1]} : vector<256x128xbf16> to vector<256x32xbf16>
    %47 = vector.shape_cast %46 : vector<256x32xbf16> to vector<1x256x32xbf16>
    %48 = tpu.concatenate %41, %43, %45, %47 in 0 : vector<1x256x32xbf16>, vector<1x256x32xbf16>, vector<1x256x32xbf16>, vector<1x256x32xbf16> -> vector<4x256x32xbf16>
    %49 = vector.shape_cast %48 : vector<4x256x32xbf16> to vector<32x32x32xbf16>
    %50 = vector.extract_strided_slice %38 {offsets = [0, 128], sizes = [256, 128], strides = [1, 1]} : vector<256x384xbf16> to vector<256x128xbf16>
    %51 = vector.extract_strided_slice %50 {offsets = [0, 0], sizes = [256, 32], strides = [1, 1]} : vector<256x128xbf16> to vector<256x32xbf16>
    %52 = vector.shape_cast %51 : vector<256x32xbf16> to vector<1x256x32xbf16>
    %53 = vector.extract_strided_slice %50 {offsets = [0, 32], sizes = [256, 32], strides = [1, 1]} : vector<256x128xbf16> to vector<256x32xbf16>
    %54 = vector.shape_cast %53 : vector<256x32xbf16> to vector<1x256x32xbf16>
    %55 = vector.extract_strided_slice %50 {offsets = [0, 64], sizes = [256, 32], strides = [1, 1]} : vector<256x128xbf16> to vector<256x32xbf16>
    %56 = vector.shape_cast %55 : vector<256x32xbf16> to vector<1x256x32xbf16>
    %57 = vector.extract_strided_slice %50 {offsets = [0, 96], sizes = [256, 32], strides = [1, 1]} : vector<256x128xbf16> to vector<256x32xbf16>
    %58 = vector.shape_cast %57 : vector<256x32xbf16> to vector<1x256x32xbf16>
    %59 = tpu.concatenate %52, %54, %56, %58 in 0 : vector<1x256x32xbf16>, vector<1x256x32xbf16>, vector<1x256x32xbf16>, vector<1x256x32xbf16> -> vector<4x256x32xbf16>
    %60 = vector.shape_cast %59 : vector<4x256x32xbf16> to vector<32x32x32xbf16>
    %61 = vector.extract_strided_slice %38 {offsets = [0, 256], sizes = [256, 128], strides = [1, 1]} : vector<256x384xbf16> to vector<256x128xbf16>
    %62 = vector.extract_strided_slice %61 {offsets = [0, 0], sizes = [256, 32], strides = [1, 1]} : vector<256x128xbf16> to vector<256x32xbf16>
    %63 = vector.shape_cast %62 : vector<256x32xbf16> to vector<1x256x32xbf16>
    %64 = vector.extract_strided_slice %61 {offsets = [0, 32], sizes = [256, 32], strides = [1, 1]} : vector<256x128xbf16> to vector<256x32xbf16>
    %65 = vector.shape_cast %64 : vector<256x32xbf16> to vector<1x256x32xbf16>
    %66 = vector.extract_strided_slice %61 {offsets = [0, 64], sizes = [256, 32], strides = [1, 1]} : vector<256x128xbf16> to vector<256x32xbf16>
    %67 = vector.shape_cast %66 : vector<256x32xbf16> to vector<1x256x32xbf16>
    %68 = vector.extract_strided_slice %61 {offsets = [0, 96], sizes = [256, 32], strides = [1, 1]} : vector<256x128xbf16> to vector<256x32xbf16>
    %69 = vector.shape_cast %68 : vector<256x32xbf16> to vector<1x256x32xbf16>
    %70 = tpu.concatenate %63, %65, %67, %69 in 0 : vector<1x256x32xbf16>, vector<1x256x32xbf16>, vector<1x256x32xbf16>, vector<1x256x32xbf16> -> vector<4x256x32xbf16>
    %71 = vector.shape_cast %70 : vector<4x256x32xbf16> to vector<32x32x32xbf16>
    "tpu.trace_start"() <{level = 10 : i32, message = "bqd,bkd->bqk"}> : () -> ()
    %cst_15 = arith.constant dense<0.000000e+00> : vector<32x32x32xf32>
    %72 = tpu.matmul %49, %60, %cst_15 {dimension_numbers = #tpu.dot_dimension_numbers<[2], [2], [1], [1], [0, 0, 0, 1, 1, 1], [0], [0]>} : vector<32x32x32xbf16>, vector<32x32x32xbf16>, vector<32x32x32xf32> -> vector<32x32x32xf32>
    "tpu.trace_stop"() : () -> ()
    %cst_16 = arith.constant dense<0xFF800000> : vector<32x32xf32>
    %73 = vector.multi_reduction <maximumf>, %72, %cst_16 [2] : vector<32x32x32xf32> to vector<32x32xf32>
    %74 = vector.shape_cast %73 : vector<32x32xf32> to vector<32x32x1xf32>
    %75 = vector.broadcast %74 : vector<32x32x1xf32> to vector<32x32x32xf32>
    %76 = arith.subf %72, %75 : vector<32x32x32xf32>
    %77 = math.exp %76 : vector<32x32x32xf32>
    %cst_17 = arith.constant dense<0.000000e+00> : vector<32x32xf32>
    %78 = vector.multi_reduction <add>, %77, %cst_17 [2] : vector<32x32x32xf32> to vector<32x32xf32>
    %79 = vector.shape_cast %78 : vector<32x32xf32> to vector<32x32x1xf32>
    %80 = tpu.reciprocal %79 {approx = true} : vector<32x32x1xf32> -> vector<32x32x1xf32>
    %81 = vector.broadcast %80 : vector<32x32x1xf32> to vector<32x32x32xf32>
    %82 = arith.mulf %77, %81 : vector<32x32x32xf32>
    %83 = arith.truncf %82 : vector<32x32x32xf32> to vector<32x32x32xbf16>
    "tpu.trace_start"() <{level = 10 : i32, message = "bqk,bkd->bqd"}> : () -> ()
    %cst_18 = arith.constant dense<0.000000e+00> : vector<32x32x32xf32>
    %84 = tpu.matmul %83, %71, %cst_18 {dimension_numbers = #tpu.dot_dimension_numbers<[2], [1], [1], [2], [0, 0, 0, 1, 1, 2], [0], [0]>} : vector<32x32x32xbf16>, vector<32x32x32xbf16>, vector<32x32x32xf32> -> vector<32x32x32xf32>
    "tpu.trace_stop"() : () -> ()
    %85 = vector.shape_cast %84 : vector<32x32x32xf32> to vector<4x256x32xf32>
    %86 = vector.extract_strided_slice %85 {offsets = [0, 0, 0], sizes = [1, 256, 32], strides = [1, 1, 1]} : vector<4x256x32xf32> to vector<1x256x32xf32>
    %87 = vector.shape_cast %86 : vector<1x256x32xf32> to vector<256x32xf32>
    %88 = vector.extract_strided_slice %85 {offsets = [1, 0, 0], sizes = [1, 256, 32], strides = [1, 1, 1]} : vector<4x256x32xf32> to vector<1x256x32xf32>
    %89 = vector.shape_cast %88 : vector<1x256x32xf32> to vector<256x32xf32>
    %90 = vector.extract_strided_slice %85 {offsets = [2, 0, 0], sizes = [1, 256, 32], strides = [1, 1, 1]} : vector<4x256x32xf32> to vector<1x256x32xf32>
    %91 = vector.shape_cast %90 : vector<1x256x32xf32> to vector<256x32xf32>
    %92 = vector.extract_strided_slice %85 {offsets = [3, 0, 0], sizes = [1, 256, 32], strides = [1, 1, 1]} : vector<4x256x32xf32> to vector<1x256x32xf32>
    %93 = vector.shape_cast %92 : vector<1x256x32xf32> to vector<256x32xf32>
    %94 = tpu.concatenate %87, %89, %91, %93 in 1 : vector<256x32xf32>, vector<256x32xf32>, vector<256x32xf32>, vector<256x32xf32> -> vector<256x128xf32>
    %95 = arith.truncf %94 : vector<256x128xf32> to vector<256x128xbf16>
    %c0_19 = arith.constant 0 : index
    %c0_20 = arith.constant 0 : index
    %96 = vector.load %arg6[%c0_19, %c0_20] : memref<128x128xbf16, #tpu.memory_space<vmem>>, vector<128x128xbf16>
    %cst_21 = arith.constant dense<0.000000e+00> : vector<256x128xf32>
    %97 = tpu.matmul %95, %96, %cst_21 {dimension_numbers = #tpu.dot_dimension_numbers<[1], [0], [0], [1], [0, 0, 1, 1], [], []>} : vector<256x128xbf16>, vector<128x128xbf16>, vector<256x128xf32> -> vector<256x128xf32>
    %c0_22 = arith.constant 0 : index
    %c0_23 = arith.constant 0 : index
    %98 = vector.load %arg7[%c0_22, %c0_23] : memref<1x128xf32, #tpu.memory_space<vmem>>, vector<1x128xf32>
    %99 = vector.shape_cast %98 : vector<1x128xf32> to vector<128xf32>
    %100 = vector.shape_cast %99 : vector<128xf32> to vector<1x128xf32>
    %101 = vector.broadcast %100 : vector<1x128xf32> to vector<256x128xf32>
    %102 = arith.addf %97, %101 : vector<256x128xf32>
    %103 = arith.addf %1, %102 : vector<256x128xf32>
    %c0_24 = arith.constant 0 : index
    %c0_25 = arith.constant 0 : index
    %104 = vector.load %arg8[%c0_24, %c0_25] : memref<1x128xf32, #tpu.memory_space<vmem>>, vector<1x128xf32>
    %105 = vector.shape_cast %104 : vector<1x128xf32> to vector<128xf32>
    %c0_26 = arith.constant 0 : index
    %c0_27 = arith.constant 0 : index
    %106 = vector.load %arg9[%c0_26, %c0_27] : memref<1x128xf32, #tpu.memory_space<vmem>>, vector<1x128xf32>
    %107 = vector.shape_cast %106 : vector<1x128xf32> to vector<128xf32>
    %cst_28 = arith.constant dense<0.000000e+00> : vector<256xf32>
    %108 = vector.multi_reduction <add>, %103, %cst_28 [1] : vector<256x128xf32> to vector<256xf32>
    %109 = vector.shape_cast %108 : vector<256xf32> to vector<256x1xf32>
    %cst_29 = arith.constant 1.280000e+02 : f32
    %110 = vector.broadcast %cst_29 : f32 to vector<256x1xf32>
    %111 = arith.divf %109, %110 : vector<256x1xf32>
    %112 = vector.broadcast %111 : vector<256x1xf32> to vector<256x128xf32>
    %113 = arith.subf %103, %112 : vector<256x128xf32>
    %114 = arith.mulf %113, %113 : vector<256x128xf32>
    %cst_30 = arith.constant dense<0.000000e+00> : vector<256xf32>
    %115 = vector.multi_reduction <add>, %114, %cst_30 [1] : vector<256x128xf32> to vector<256xf32>
    %116 = vector.shape_cast %115 : vector<256xf32> to vector<256x1xf32>
    %cst_31 = arith.constant 1.280000e+02 : f32
    %117 = vector.broadcast %cst_31 : f32 to vector<256x1xf32>
    %118 = arith.divf %116, %117 : vector<256x1xf32>
    %119 = vector.broadcast %111 : vector<256x1xf32> to vector<256x128xf32>
    %120 = arith.subf %103, %119 : vector<256x128xf32>
    %cst_32 = arith.constant 9.99999974E-6 : f32
    %121 = vector.broadcast %cst_32 : f32 to vector<256x1xf32>
    %122 = arith.addf %118, %121 : vector<256x1xf32>
    %123 = math.rsqrt %122 : vector<256x1xf32>
    %124 = vector.broadcast %123 : vector<256x1xf32> to vector<256x128xf32>
    %125 = arith.mulf %120, %124 : vector<256x128xf32>
    %126 = vector.shape_cast %105 : vector<128xf32> to vector<1x128xf32>
    %127 = vector.broadcast %126 : vector<1x128xf32> to vector<256x128xf32>
    %128 = arith.mulf %125, %127 : vector<256x128xf32>
    %129 = vector.shape_cast %107 : vector<128xf32> to vector<1x128xf32>
    %130 = vector.broadcast %129 : vector<1x128xf32> to vector<256x128xf32>
    %131 = arith.addf %128, %130 : vector<256x128xf32>
    %132 = arith.truncf %131 : vector<256x128xf32> to vector<256x128xbf16>
    %c0_33 = arith.constant 0 : index
    %c0_34 = arith.constant 0 : index
    %133 = vector.load %arg10[%c0_33, %c0_34] : memref<128x512xbf16, #tpu.memory_space<vmem>>, vector<128x512xbf16>
    %cst_35 = arith.constant dense<0.000000e+00> : vector<256x512xf32>
    %134 = tpu.matmul %132, %133, %cst_35 {dimension_numbers = #tpu.dot_dimension_numbers<[1], [0], [0], [1], [0, 0, 1, 1], [], []>} : vector<256x128xbf16>, vector<128x512xbf16>, vector<256x512xf32> -> vector<256x512xf32>
    %c0_36 = arith.constant 0 : index
    %c0_37 = arith.constant 0 : index
    %135 = vector.load %arg11[%c0_36, %c0_37] : memref<1x512xf32, #tpu.memory_space<vmem>>, vector<1x512xf32>
    %136 = vector.shape_cast %135 : vector<1x512xf32> to vector<512xf32>
    %137 = vector.shape_cast %136 : vector<512xf32> to vector<1x512xf32>
    %138 = vector.broadcast %137 : vector<1x512xf32> to vector<256x512xf32>
    %139 = arith.addf %134, %138 : vector<256x512xf32>
    %cst_38 = arith.constant 0.707106769 : f32
    %140 = vector.broadcast %cst_38 : f32 to vector<256x512xf32>
    %141 = arith.mulf %140, %139 : vector<256x512xf32>
    %142 = math.erf %139 : vector<256x512xf32>
    %cst_39 = arith.constant 1.000000e+00 : f32
    %143 = vector.broadcast %cst_39 : f32 to vector<256x512xf32>
    %144 = arith.addf %143, %142 : vector<256x512xf32>
    %145 = arith.mulf %141, %144 : vector<256x512xf32>
    %146 = arith.truncf %145 : vector<256x512xf32> to vector<256x512xbf16>
    %c0_40 = arith.constant 0 : index
    %c0_41 = arith.constant 0 : index
    %147 = vector.load %arg12[%c0_40, %c0_41] : memref<512x128xbf16, #tpu.memory_space<vmem>>, vector<512x128xbf16>
    %cst_42 = arith.constant dense<0.000000e+00> : vector<256x128xf32>
    %148 = tpu.matmul %146, %147, %cst_42 {dimension_numbers = #tpu.dot_dimension_numbers<[1], [0], [0], [1], [0, 0, 1, 1], [], []>} : vector<256x512xbf16>, vector<512x128xbf16>, vector<256x128xf32> -> vector<256x128xf32>
    %c0_43 = arith.constant 0 : index
    %c0_44 = arith.constant 0 : index
    %149 = vector.load %arg13[%c0_43, %c0_44] : memref<1x128xf32, #tpu.memory_space<vmem>>, vector<1x128xf32>
    %150 = vector.shape_cast %149 : vector<1x128xf32> to vector<128xf32>
    %151 = vector.shape_cast %150 : vector<128xf32> to vector<1x128xf32>
    %152 = vector.broadcast %151 : vector<1x128xf32> to vector<256x128xf32>
    %153 = arith.addf %148, %152 : vector<256x128xf32>
    %154 = arith.addf %103, %153 : vector<256x128xf32>
    %155 = vector.shape_cast %154 : vector<256x128xf32> to vector<8x32x128xf32>
    %c0_45 = arith.constant 0 : index
    %c0_46 = arith.constant 0 : index
    %c0_47 = arith.constant 0 : index
    %156 = vector.load %arg14[%c0_45, %c0_46, %c0_47] : memref<8x32x128xf32, #tpu.memory_space<vmem>>, vector<8x32x128xf32>
    tpu.vector_store %arg14[%c0_45, %c0_46, %c0_47], %155 {strides = array<i32>} : memref<8x32x128xf32, #tpu.memory_space<vmem>>, vector<8x32x128xf32>,
    return
  }
  func.func @transform_0(%arg0: i32) -> (i32, i32, i32) {
    %c0_i32 = arith.constant 0 : i32
    %c0_i32_0 = arith.constant 0 : i32
    %c0_i32_1 = arith.constant 0 : i32
    return %arg0, %c0_i32, %c0_i32_0 : i32, i32, i32
  }
  func.func @transform_1(%arg0: i32) -> (i32, i32) {
    %c0_i32 = arith.constant 0 : i32
    %c0_i32_0 = arith.constant 0 : i32
    %c0_i32_1 = arith.constant 0 : i32
    return %c0_i32, %c0_i32_0 : i32, i32
  }
  func.func @transform_2(%arg0: i32) -> (i32, i32) {
    %c0_i32 = arith.constant 0 : i32
    %c0_i32_0 = arith.constant 0 : i32
    %c0_i32_1 = arith.constant 0 : i32
    return %c0_i32, %c0_i32_0 : i32, i32
  }
  func.func @transform_3(%arg0: i32) -> (i32, i32) {
    %c0_i32 = arith.constant 0 : i32
    %c0_i32_0 = arith.constant 0 : i32
    %c0_i32_1 = arith.constant 0 : i32
    return %c0_i32, %c0_i32_0 : i32, i32
  }
  func.func @transform_4(%arg0: i32) -> (i32, i32) {
    %c0_i32 = arith.constant 0 : i32
    %c0_i32_0 = arith.constant 0 : i32
    %c0_i32_1 = arith.constant 0 : i32
    return %c0_i32, %c0_i32_0 : i32, i32
  }
  func.func @transform_5(%arg0: i32) -> (i32, i32) {
    %c0_i32 = arith.constant 0 : i32
    %c0_i32_0 = arith.constant 0 : i32
    %c0_i32_1 = arith.constant 0 : i32
    return %c0_i32, %c0_i32_0 : i32, i32
  }
  func.func @transform_6(%arg0: i32) -> (i32, i32) {
    %c0_i32 = arith.constant 0 : i32
    %c0_i32_0 = arith.constant 0 : i32
    %c0_i32_1 = arith.constant 0 : i32
    return %c0_i32, %c0_i32_0 : i32, i32
  }
  func.func @transform_7(%arg0: i32) -> (i32, i32) {
    %c0_i32 = arith.constant 0 : i32
    %c0_i32_0 = arith.constant 0 : i32
    %c0_i32_1 = arith.constant 0 : i32
    return %c0_i32, %c0_i32_0 : i32, i32
  }
  func.func @transform_8(%arg0: i32) -> (i32, i32) {
    %c0_i32 = arith.constant 0 : i32
    %c0_i32_0 = arith.constant 0 : i32
    %c0_i32_1 = arith.constant 0 : i32
    return %c0_i32, %c0_i32_0 : i32, i32
  }
  func.func @transform_9(%arg0: i32) -> (i32, i32) {
    %c0_i32 = arith.constant 0 : i32
    %c0_i32_0 = arith.constant 0 : i32
    %c0_i32_1 = arith.constant 0 : i32
    return %c0_i32, %c0_i32_0 : i32, i32
  }
  func.func @transform_10(%arg0: i32) -> (i32, i32) {
    %c0_i32 = arith.constant 0 : i32
    %c0_i32_0 = arith.constant 0 : i32
    %c0_i32_1 = arith.constant 0 : i32
    return %c0_i32, %c0_i32_0 : i32, i32
  }
  func.func @transform_11(%arg0: i32) -> (i32, i32) {
    %c0_i32 = arith.constant 0 : i32
    %c0_i32_0 = arith.constant 0 : i32
    %c0_i32_1 = arith.constant 0 : i32
    return %c0_i32, %c0_i32_0 : i32, i32
  }
  func.func @transform_12(%arg0: i32) -> (i32, i32) {
    %c0_i32 = arith.constant 0 : i32
    %c0_i32_0 = arith.constant 0 : i32
    %c0_i32_1 = arith.constant 0 : i32
    return %c0_i32, %c0_i32_0 : i32, i32
  }
  func.func @transform_13(%arg0: i32) -> (i32, i32, i32) {
    %c0_i32 = arith.constant 0 : i32
    %c0_i32_0 = arith.constant 0 : i32
    %c0_i32_1 = arith.constant 0 : i32
    return %arg0, %c0_i32, %c0_i32_0 : i32, i32, i32
  }
}

</mosaic_0001>

<llo_original>
// kernel: tpu_custom_call.1
$region0: #{tpu_custom_call.1}
  #allocation0 [shape = 'u32[]', space=smem, size = 0x4, offset = 0x4, fixed_abs, tag = 'smem constant byte address 0x4 - core index']
  #allocation1 [shape = 'u32[144,128]{1,0:T(1,128)}', space=vmem, size = 0x12000, scoped, tag = 'internal scratch']
  %s0 = inlined_call_operand.hbm [shape: f32[16,32,128], index: 0, kind: input, shape index: {}]
  %s1 = inlined_call_operand.hbm [shape: f32[1,128], index: 1, kind: input, shape index: {}]
  %s2 = inlined_call_operand.hbm [shape: f32[1,128], index: 2, kind: input, shape index: {}]
  %s3 = inlined_call_operand.hbm [shape: bf16[128,384], index: 3, kind: input, shape index: {}]
  %s4 = inlined_call_operand.vmem [shape: f32[1,384], index: 4, kind: input, shape index: {}]
  %s5 = inlined_call_operand.hbm [shape: bf16[128,128], index: 5, kind: input, shape index: {}]
  %s6 = inlined_call_operand.vmem [shape: f32[1,128], index: 6, kind: input, shape index: {}]
  %s7 = inlined_call_operand.vmem [shape: f32[1,128], index: 7, kind: input, shape index: {}]
  %s8 = inlined_call_operand.vmem [shape: f32[1,128], index: 8, kind: input, shape index: {}]
  %s9 = inlined_call_operand.hbm [shape: bf16[128,512], index: 9, kind: input, shape index: {}]
  %s10 = inlined_call_operand.vmem [shape: f32[1,512], index: 10, kind: input, shape index: {}]
  %s11 = inlined_call_operand.hbm [shape: bf16[512,128], index: 11, kind: input, shape index: {}]
  %s12 = inlined_call_operand.vmem [shape: f32[1,128], index: 12, kind: input, shape index: {}]
  %s13 = inlined_call_operand.hbm [shape: f32[16,32,128], index: 13, kind: output, shape index: {}]
  %s14 = sld [smem:[#allocation0]]
  $region113: #{tpu_custom_call.1} parent=0
    _
  %s16 = ssub.s32 1, %s14
  %s17 = scalar_select 0, %s16, %s14
  $region1: #{tpu_custom_call.1} parent=0
    #allocation2 [shape = 'u8[262144]{0}', space=vmem, size = 0x40000, scoped, tag = 'input window, operand 0']
    #allocation3 [shape = 's32[2]{0}', space=sflag, size = 0x8, scoped, tag = 'scoped memory for tpu_custom_call.1']
    #allocation4 [shape = 's32[2]{0}', space=sflag, size = 0x8, scoped, tag = 'scoped memory for tpu_custom_call.1']
    #allocation5 [shape = 'u8[512]{0}', space=vmem, size = 0x400, scoped, tag = 'input window, operand 1, single buffered']
    #allocation6 [shape = 's32[1]{0}', space=sflag, size = 0x4, scoped, tag = 'scoped memory for tpu_custom_call.1']
    #allocation7 [shape = 'u8[512]{0}', space=vmem, size = 0x400, scoped, tag = 'input window, operand 2, single buffered']
    #allocation8 [shape = 'u8[98304]{0}', space=vmem, size = 0x18000, scoped, tag = 'input window, operand 3, single buffered']
    #allocation9 [shape = 's32[1]{0}', space=sflag, size = 0x4, scoped, tag = 'scoped memory for tpu_custom_call.1']
    #allocation10 [shape = 'u8[32768]{0}', space=vmem, size = 0x8000, scoped, tag = 'input window, operand 5, single buffered']
    #allocation11 [shape = 'u8[131072]{0}', space=vmem, size = 0x20000, scoped, tag = 'input window, operand 9, single buffered']
    #allocation12 [shape = 's32[1]{0}', space=sflag, size = 0x4, scoped, tag = 'scoped memory for tpu_custom_call.1']
    #allocation13 [shape = 'u8[131072]{0}', space=vmem, size = 0x20000, scoped, tag = 'input window, operand 11, single buffered']
    #allocation14 [shape = 'u8[262144]{0}', space=vmem, size = 0x40000, scoped, tag = 'output window, operand 0']
    %18 = vsyncpa [#allocation3], 0
    %s19 = scalar_lea.sflag [#allocation3], 1
    %20 = vsyncpa %s19, 0
    %21 = vsyncpa [#allocation6], 0
    %22 = vsyncpa [#allocation9], 0
    %23 = vsyncpa [#allocation12], 0
    %24 = vsyncpa [#allocation4], 0
    %s25 = scalar_lea.sflag [#allocation4], 1
    %26 = vsyncpa %s25, 0
    loop: start=0, step=1, limit=4
    $region2: #{tpu_custom_call.1} parent=1 // loop_pre_header
      _
    $region3: #{tpu_custom_call.1} parent=1 // loop_header
      %s28 = sphi 0, %s32
      %p29 = scmp.ge.s32.totalorder %s28, 4
      %s38 = sphi 0, %s40
      %s41 = sphi 0, %s38
      %s42 = sphi 0, %s41
      %s58 = sphi 0, %s42
      %s62 = sphi 0, %s62
      %s64 = sphi 0, %s62
      %s65 = sphi 0, %s64
      %s79 = sphi 0, %s65
      %s83 = sphi 0, %s83
      %s85 = sphi 0, %s83
      %s86 = sphi 0, %s85
      %s100 = sphi 0, %s86
      %s104 = sphi 0, %s104
      %s106 = sphi 0, %s104
      %s107 = sphi 0, %s106
      %s121 = sphi 0, %s107
      %s125 = sphi 0, %s125
      %s127 = sphi 0, %s125
      %s128 = sphi 0, %s127
      %s142 = sphi 0, %s128
      %s146 = sphi 0, %s146
      %s148 = sphi 0, %s146
      %s149 = sphi 0, %s148
      %s163 = sphi 0, %s149
      %s167 = sphi 0, %s167
      %s169 = sphi 0, %s167
      %s170 = sphi 0, %s169
      %s184 = sphi 0, %s170
      %s188 = sphi 0, %s188
      %s190 = sphi 0, %s188
      %s191 = sphi 0, %s190
      %s205 = sphi 0, %s191
      %s209 = sphi 0, %s209
      %s211 = sphi 0, %s209
      %s212 = sphi 0, %s211
      %s226 = sphi 0, %s212
      %s230 = sphi 0, %s230
      %s232 = sphi 0, %s230
      %s233 = sphi 0, %s232
      %s247 = sphi 0, %s233
      %s251 = sphi 0, %s251
      %s253 = sphi 0, %s251
      %s254 = sphi 0, %s253
      %s268 = sphi 0, %s254
      %s272 = sphi 0, %s272
      %s274 = sphi 0, %s272
      %s275 = sphi 0, %s274
      %s289 = sphi 0, %s275
      %s293 = sphi 0, %s293
      %s295 = sphi 0, %s293
      %s296 = sphi 0, %s295
      %s310 = sphi 0, %s296
      %s316 = sphi 0, %s318
      %s319 = sphi 0, %s316
      %s320 = sphi 0, %s319
      %s336 = sphi 0, %s320
    $region4: #{tpu_custom_call.1} parent=1 // loop_header_branch
      %31 = sbr.rel (%p29) target = $region8
    $region5: #{tpu_custom_call.1} parent=1 // loop_body
      %s33 = ssub.s32 %s28, 1
      %s34 = ssub.s32 %s28, 2
      %s35 = sadd.s32 %s28, 1
      %s36 = ssub.s32 %s28, %s35
      %p37 = scmp.eq.s32.totalorder %s36, 0
      %s39 = sadd.s32 %s38, 1
      %s40 = scalar_select %p37, %s38, %s39
      %p43 = pneg %p37
      %p44 = scmp.eq.s32.totalorder %s28, 1
      %p45 = por %p43, %p44
      %p46 = scmp.ne.s32.totalorder %s38, %s41
      %p47 = scmp.eq.s32.totalorder %s28, 0
      %p48 = por %p46, %p47
      %p49 = scmp.ne.s32.totalorder %s38, %s41
      %p50 = scmp.eq.s32.totalorder %s33, 1
      %p51 = por %p49, %p50
      %p52 = scmp.ne.s32.totalorder %s41, %s42
      %p53 = scmp.eq.s32.totalorder %s33, 0
      %p54 = por %p52, %p53
      %p55 = scmp.ne.s32.totalorder %s41, %s42
      %p56 = scmp.eq.s32.totalorder %s34, 1
      %p57 = por %p55, %p56
      %p59 = scmp.ne.s32.totalorder %s42, %s58
      %p60 = scmp.eq.s32.totalorder %s34, 0
      %p61 = por %p59, %p60
      %s63 = sadd.s32 %s62, 1
      %p66 = scmp.eq.s32.totalorder %s28, 1
      %p67 = scmp.ne.s32.totalorder %s62, %s64
      %p68 = scmp.eq.s32.totalorder %s28, 0
      %p69 = por %p67, %p68
      %p70 = scmp.ne.s32.totalorder %s62, %s64
      %p71 = scmp.eq.s32.totalorder %s33, 1
      %p72 = por %p70, %p71
      %p73 = scmp.ne.s32.totalorder %s64, %s65
      %p74 = scmp.eq.s32.totalorder %s33, 0
      %p75 = por %p73, %p74
      %p76 = scmp.ne.s32.totalorder %s64, %s65
      %p77 = scmp.eq.s32.totalorder %s34, 1
      %p78 = por %p76, %p77
      %p80 = scmp.ne.s32.totalorder %s65, %s79
      %p81 = scmp.eq.s32.totalorder %s34, 0
      %p82 = por %p80, %p81
      %s84 = sadd.s32 %s83, 1
      %p87 = scmp.eq.s32.totalorder %s28, 1
      %p88 = scmp.ne.s32.totalorder %s83, %s85
      %p89 = scmp.eq.s32.totalorder %s28, 0
      %p90 = por %p88, %p89
      %p91 = scmp.ne.s32.totalorder %s83, %s85
      %p92 = scmp.eq.s32.totalorder %s33, 1
      %p93 = por %p91, %p92
      %p94 = scmp.ne.s32.totalorder %s85, %s86
      %p95 = scmp.eq.s32.totalorder %s33, 0
      %p96 = por %p94, %p95
      %p97 = scmp.ne.s32.totalorder %s85, %s86
      %p98 = scmp.eq.s32.totalorder %s34, 1
      %p99 = por %p97, %p98
      %p101 = scmp.ne.s32.totalorder %s86, %s100
      %p102 = scmp.eq.s32.totalorder %s34, 0
      %p103 = por %p101, %p102
      %s105 = sadd.s32 %s104, 1
      %p108 = scmp.eq.s32.totalorder %s28, 1
      %p109 = scmp.ne.s32.totalorder %s104, %s106
      %p110 = scmp.eq.s32.totalorder %s28, 0
      %p111 = por %p109, %p110
      %p112 = scmp.ne.s32.totalorder %s104, %s106
      %p113 = scmp.eq.s32.totalorder %s33, 1
      %p114 = por %p112, %p113
      %p115 = scmp.ne.s32.totalorder %s106, %s107
      %p116 = scmp.eq.s32.totalorder %s33, 0
      %p117 = por %p115, %p116
      %p118 = scmp.ne.s32.totalorder %s106, %s107
      %p119 = scmp.eq.s32.totalorder %s34, 1
      %p120 = por %p118, %p119
      %p122 = scmp.ne.s32.totalorder %s107, %s121
      %p123 = scmp.eq.s32.totalorder %s34, 0
      %p124 = por %p122, %p123
      %s126 = sadd.s32 %s125, 1
      %p129 = scmp.eq.s32.totalorder %s28, 1
      %p130 = scmp.ne.s32.totalorder %s125, %s127
      %p131 = scmp.eq.s32.totalorder %s28, 0
      %p132 = por %p130, %p131
      %p133 = scmp.ne.s32.totalorder %s125, %s127
      %p134 = scmp.eq.s32.totalorder %s33, 1
      %p135 = por %p133, %p134
      %p136 = scmp.ne.s32.totalorder %s127, %s128
      %p137 = scmp.eq.s32.totalorder %s33, 0
      %p138 = por %p136, %p137
      %p139 = scmp.ne.s32.totalorder %s127, %s128
      %p140 = scmp.eq.s32.totalorder %s34, 1
      %p141 = por %p139, %p140
      %p143 = scmp.ne.s32.totalorder %s128, %s142
      %p144 = scmp.eq.s32.totalorder %s34, 0
      %p145 = por %p143, %p144
      %s147 = sadd.s32 %s146, 1
      %p150 = scmp.eq.s32.totalorder %s28, 1
      %p151 = scmp.ne.s32.totalorder %s146, %s148
      %p152 = scmp.eq.s32.totalorder %s28, 0
      %p153 = por %p151, %p152
      %p154 = scmp.ne.s32.totalorder %s146, %s148
      %p155 = scmp.eq.s32.totalorder %s33, 1
      %p156 = por %p154, %p155
      %p157 = scmp.ne.s32.totalorder %s148, %s149
      %p158 = scmp.eq.s32.totalorder %s33, 0
      %p159 = por %p157, %p158
      %p160 = scmp.ne.s32.totalorder %s148, %s149
      %p161 = scmp.eq.s32.totalorder %s34, 1
      %p162 = por %p160, %p161
      %p164 = scmp.ne.s32.totalorder %s149, %s163
      %p165 = scmp.eq.s32.totalorder %s34, 0
      %p166 = por %p164, %p165
      %s168 = sadd.s32 %s167, 1
      %p171 = scmp.eq.s32.totalorder %s28, 1
      %p172 = scmp.ne.s32.totalorder %s167, %s169
      %p173 = scmp.eq.s32.totalorder %s28, 0
      %p174 = por %p172, %p173
      %p175 = scmp.ne.s32.totalorder %s167, %s169
      %p176 = scmp.eq.s32.totalorder %s33, 1
      %p177 = por %p175, %p176
      %p178 = scmp.ne.s32.totalorder %s169, %s170
      %p179 = scmp.eq.s32.totalorder %s33, 0
      %p180 = por %p178, %p179
      %p181 = scmp.ne.s32.totalorder %s169, %s170
      %p182 = scmp.eq.s32.totalorder %s34, 1
      %p183 = por %p181, %p182
      %p185 = scmp.ne.s32.totalorder %s170, %s184
      %p186 = scmp.eq.s32.totalorder %s34, 0
      %p187 = por %p185, %p186
      %s189 = sadd.s32 %s188, 1
      %p192 = scmp.eq.s32.totalorder %s28, 1
      %p193 = scmp.ne.s32.totalorder %s188, %s190
      %p194 = scmp.eq.s32.totalorder %s28, 0
      %p195 = por %p193, %p194
      %p196 = scmp.ne.s32.totalorder %s188, %s190
      %p197 = scmp.eq.s32.totalorder %s33, 1
      %p198 = por %p196, %p197
      %p199 = scmp.ne.s32.totalorder %s190, %s191
      %p200 = scmp.eq.s32.totalorder %s33, 0
      %p201 = por %p199, %p200
      %p202 = scmp.ne.s32.totalorder %s190, %s191
      %p203 = scmp.eq.s32.totalorder %s34, 1
      %p204 = por %p202, %p203
      %p206 = scmp.ne.s32.totalorder %s191, %s205
      %p207 = scmp.eq.s32.totalorder %s34, 0
      %p208 = por %p206, %p207
      %s210 = sadd.s32 %s209, 1
      %p213 = scmp.eq.s32.totalorder %s28, 1
      %p214 = scmp.ne.s32.totalorder %s209, %s211
      %p215 = scmp.eq.s32.totalorder %s28, 0
      %p216 = por %p214, %p215
      %p217 = scmp.ne.s32.totalorder %s209, %s211
      %p218 = scmp.eq.s32.totalorder %s33, 1
      %p219 = por %p217, %p218
      %p220 = scmp.ne.s32.totalorder %s211, %s212
      %p221 = scmp.eq.s32.totalorder %s33, 0
      %p222 = por %p220, %p221
      %p223 = scmp.ne.s32.totalorder %s211, %s212
      %p224 = scmp.eq.s32.totalorder %s34, 1
      %p225 = por %p223, %p224
      %p227 = scmp.ne.s32.totalorder %s212, %s226
      %p228 = scmp.eq.s32.totalorder %s34, 0
      %p229 = por %p227, %p228
      %s231 = sadd.s32 %s230, 1
      %p234 = scmp.eq.s32.totalorder %s28, 1
      %p235 = scmp.ne.s32.totalorder %s230, %s232
      %p236 = scmp.eq.s32.totalorder %s28, 0
      %p237 = por %p235, %p236
      %p238 = scmp.ne.s32.totalorder %s230, %s232
      %p239 = scmp.eq.s32.totalorder %s33, 1
      %p240 = por %p238, %p239
      %p241 = scmp.ne.s32.totalorder %s232, %s233
      %p242 = scmp.eq.s32.totalorder %s33, 0
      %p243 = por %p241, %p242
      %p244 = scmp.ne.s32.totalorder %s232, %s233
      %p245 = scmp.eq.s32.totalorder %s34, 1
      %p246 = por %p244, %p245
      %p248 = scmp.ne.s32.totalorder %s233, %s247
      %p249 = scmp.eq.s32.totalorder %s34, 0
      %p250 = por %p248, %p249
      %s252 = sadd.s32 %s251, 1
      %p255 = scmp.eq.s32.totalorder %s28, 1
      %p256 = scmp.ne.s32.totalorder %s251, %s253
      %p257 = scmp.eq.s32.totalorder %s28, 0
      %p258 = por %p256, %p257
      %p259 = scmp.ne.s32.totalorder %s251, %s253
      %p260 = scmp.eq.s32.totalorder %s33, 1
      %p261 = por %p259, %p260
      %p262 = scmp.ne.s32.totalorder %s253, %s254
      %p263 = scmp.eq.s32.totalorder %s33, 0
      %p264 = por %p262, %p263
      %p265 = scmp.ne.s32.totalorder %s253, %s254
      %p266 = scmp.eq.s32.totalorder %s34, 1
      %p267 = por %p265, %p266
      %p269 = scmp.ne.s32.totalorder %s254, %s268
      %p270 = scmp.eq.s32.totalorder %s34, 0
      %p271 = por %p269, %p270
      %s273 = sadd.s32 %s272, 1
      %p276 = scmp.eq.s32.totalorder %s28, 1
      %p277 = scmp.ne.s32.totalorder %s272, %s274
      %p278 = scmp.eq.s32.totalorder %s28, 0
      %p279 = por %p277, %p278
      %p280 = scmp.ne.s32.totalorder %s272, %s274
      %p281 = scmp.eq.s32.totalorder %s33, 1
      %p282 = por %p280, %p281
      %p283 = scmp.ne.s32.totalorder %s274, %s275
      %p284 = scmp.eq.s32.totalorder %s33, 0
      %p285 = por %p283, %p284
      %p286 = scmp.ne.s32.totalorder %s274, %s275
      %p287 = scmp.eq.s32.totalorder %s34, 1
      %p288 = por %p286, %p287
      %p290 = scmp.ne.s32.totalorder %s275, %s289
      %p291 = scmp.eq.s32.totalorder %s34, 0
      %p292 = por %p290, %p291
      %s294 = sadd.s32 %s293, 1
      %p297 = scmp.eq.s32.totalorder %s28, 1
      %p298 = scmp.ne.s32.totalorder %s293, %s295
      %p299 = scmp.eq.s32.totalorder %s28, 0
      %p300 = por %p298, %p299
      %p301 = scmp.ne.s32.totalorder %s293, %s295
      %p302 = scmp.eq.s32.totalorder %s33, 1
      %p303 = por %p301, %p302
      %p304 = scmp.ne.s32.totalorder %s295, %s296
      %p305 = scmp.eq.s32.totalorder %s33, 0
      %p306 = por %p304, %p305
      %p307 = scmp.ne.s32.totalorder %s295, %s296
      %p308 = scmp.eq.s32.totalorder %s34, 1
      %p309 = por %p307, %p308
      %p311 = scmp.ne.s32.totalorder %s296, %s310
      %p312 = scmp.eq.s32.totalorder %s34, 0
      %p313 = por %p311, %p312
      %s314 = ssub.s32 %s28, %s35
      %p315 = scmp.eq.s32.totalorder %s314, 0
      %s317 = sadd.s32 %s316, 1
      %s318 = scalar_select %p315, %s316, %s317
      %p321 = pneg %p315
      %p322 = scmp.eq.s32.totalorder %s28, 1
      %p323 = por %p321, %p322
      %p324 = scmp.ne.s32.totalorder %s316, %s319
      %p325 = scmp.eq.s32.totalorder %s28, 0
      %p326 = por %p324, %p325
      %p327 = scmp.ne.s32.totalorder %s316, %s319
      %p328 = scmp.eq.s32.totalorder %s33, 1
      %p329 = por %p327, %p328
      %p330 = scmp.ne.s32.totalorder %s319, %s320
      %p331 = scmp.eq.s32.totalorder %s33, 0
      %p332 = por %p330, %p331
      %p333 = scmp.ne.s32.totalorder %s319, %s320
      %p334 = scmp.eq.s32.totalorder %s34, 1
      %p335 = por %p333, %p334
      %p337 = scmp.ne.s32.totalorder %s320, %s336
      %p338 = scmp.eq.s32.totalorder %s34, 0
      %p339 = por %p337, %p338
      %p340 = scmp.le.s32.totalorder 1, %s28
      %p341 = scmp.lt.s32.totalorder %s28, 3
      %p342 = pnand %p340, %p341
      %p343 = pneg %p342
      // Predicated region
      $region9: #{tpu_custom_call.1} parent=5 // pred_check
        _
      $region10: #{tpu_custom_call.1} parent=5 // pred_check_branch
        %345 = sbr.rel (%p342) target = $region12
      $region11: #{tpu_custom_call.1} parent=5 // pred_region
        %s346 = ssub.s32 %s28, 1
        // Predicated region
        $region13: #{tpu_custom_call.1} parent=11 // pred_check
          %p347 = pneg %p75
        $region14: #{tpu_custom_call.1} parent=11 // pred_check_branch
          %349 = sbr.rel (%p347) target = $region16
        $region15: #{tpu_custom_call.1} parent=11 // pred_region
          %s351 = ssub.s32 16, 16
          %352 = vsyncadd [#allocation6], %s351
          %s354 = sshll.u32 [#allocation5], 4
          %s355 = int_to_ptr.vmem [resolvable:$true] %s354
          %357 = dma.hbm_to_vmem [thread:$0]  %s1, 16, %s355, [#allocation6]
        $region16: #{tpu_custom_call.1} parent=11 // pred_fallthru
          _
        // Predicated region
        $region17: #{tpu_custom_call.1} parent=11 // pred_check
          %p358 = pneg %p96
        $region18: #{tpu_custom_call.1} parent=11 // pred_check_branch
          %360 = sbr.rel (%p358) target = $region20
        $region19: #{tpu_custom_call.1} parent=11 // pred_region
          %s362 = ssub.s32 16, 16
          %363 = vsyncadd [#allocation6], %s362
          %s365 = sshll.u32 [#allocation7], 4
          %s366 = int_to_ptr.vmem [resolvable:$true] %s365
          %368 = dma.hbm_to_vmem [thread:$0]  %s2, 16, %s366, [#allocation6]
        $region20: #{tpu_custom_call.1} parent=11 // pred_fallthru
          _
        // Predicated region
        $region21: #{tpu_custom_call.1} parent=11 // pred_check
          %p369 = pneg %p117
        $region22: #{tpu_custom_call.1} parent=11 // pred_check_branch
          %371 = sbr.rel (%p369) target = $region24
        $region23: #{tpu_custom_call.1} parent=11 // pred_region
          %s373 = ssub.s32 3072, 3072
          %374 = vsyncadd [#allocation9], %s373
          %s375 = sshll.u32 [#allocation8], 4
          %s376 = int_to_ptr.vmem [resolvable:$true] %s375
          %381 = dma.hbm_to_vmem [thread:$0]  %s3, 3072, %s376, [#allocation9], 192, 192, 12
        $region24: #{tpu_custom_call.1} parent=11 // pred_fallthru
          _
        // Predicated region
        $region25: #{tpu_custom_call.1} parent=11 // pred_check
          %p382 = pneg %p138
        $region26: #{tpu_custom_call.1} parent=11 // pred_check_branch
          %384 = sbr.rel (%p382) target = $region28
        $region27: #{tpu_custom_call.1} parent=11 // pred_region
          _
        $region28: #{tpu_custom_call.1} parent=11 // pred_fallthru
          _
        // Predicated region
        $region29: #{tpu_custom_call.1} parent=11 // pred_check
          %p385 = pneg %p159
        $region30: #{tpu_custom_call.1} parent=11 // pred_check_branch
          %387 = sbr.rel (%p385) target = $region32
        $region31: #{tpu_custom_call.1} parent=11 // pred_region
          %s389 = ssub.s32 1024, 1024
          %390 = vsyncadd [#allocation9], %s389
          %s391 = sshll.u32 [#allocation10], 4
          %s392 = int_to_ptr.vmem [resolvable:$true] %s391
          %397 = dma.hbm_to_vmem [thread:$0]  %s5, 1024, %s392, [#allocation9], 64, 64, 4
        $region32: #{tpu_custom_call.1} parent=11 // pred_fallthru
          _
        // Predicated region
        $region33: #{tpu_custom_call.1} parent=11 // pred_check
          %p398 = pneg %p180
        $region34: #{tpu_custom_call.1} parent=11 // pred_check_branch
          %400 = sbr.rel (%p398) target = $region36
        $region35: #{tpu_custom_call.1} parent=11 // pred_region
          _
        $region36: #{tpu_custom_call.1} parent=11 // pred_fallthru
          _
        // Predicated region
        $region37: #{tpu_custom_call.1} parent=11 // pred_check
          %p401 = pneg %p201
        $region38: #{tpu_custom_call.1} parent=11 // pred_check_branch
          %403 = sbr.rel (%p401) target = $region40
        $region39: #{tpu_custom_call.1} parent=11 // pred_region
          _
        $region40: #{tpu_custom_call.1} parent=11 // pred_fallthru
          _
        // Predicated region
        $region41: #{tpu_custom_call.1} parent=11 // pred_check
          %p404 = pneg %p222
        $region42: #{tpu_custom_call.1} parent=11 // pred_check_branch
          %406 = sbr.rel (%p404) target = $region44
        $region43: #{tpu_custom_call.1} parent=11 // pred_region
          _
        $region44: #{tpu_custom_call.1} parent=11 // pred_fallthru
          _
        // Predicated region
        $region45: #{tpu_custom_call.1} parent=11 // pred_check
          %p407 = pneg %p243
        $region46: #{tpu_custom_call.1} parent=11 // pred_check_branch
          %409 = sbr.rel (%p407) target = $region48
        $region47: #{tpu_custom_call.1} parent=11 // pred_region
          %s411 = ssub.s32 4096, 4096
          %412 = vsyncadd [#allocation12], %s411
          %s413 = sshll.u32 [#allocation11], 4
          %s414 = int_to_ptr.vmem [resolvable:$true] %s413
          %419 = dma.hbm_to_vmem [thread:$0]  %s9, 4096, %s414, [#allocation12], 256, 256, 16
        $region48: #{tpu_custom_call.1} parent=11 // pred_fallthru
          _
        // Predicated region
        $region49: #{tpu_custom_call.1} parent=11 // pred_check
          %p420 = pneg %p264
        $region50: #{tpu_custom_call.1} parent=11 // pred_check_branch
          %422 = sbr.rel (%p420) target = $region52
        $region51: #{tpu_custom_call.1} parent=11 // pred_region
          _
        $region52: #{tpu_custom_call.1} parent=11 // pred_fallthru
          _
        // Predicated region
        $region53: #{tpu_custom_call.1} parent=11 // pred_check
          %p423 = pneg %p285
        $region54: #{tpu_custom_call.1} parent=11 // pred_check_branch
          %425 = sbr.rel (%p423) target = $region56
        $region55: #{tpu_custom_call.1} parent=11 // pred_region
          %s427 = ssub.s32 4096, 4096
          %428 = vsyncadd [#allocation12], %s427
          %s429 = sshll.u32 [#allocation13], 4
          %s430 = int_to_ptr.vmem [resolvable:$true] %s429
          %435 = dma.hbm_to_vmem [thread:$0]  %s11, 4096, %s430, [#allocation12], 64, 64, 4
        $region56: #{tpu_custom_call.1} parent=11 // pred_fallthru
          _
        // Predicated region
        $region57: #{tpu_custom_call.1} parent=11 // pred_check
          %p436 = pneg %p306
        $region58: #{tpu_custom_call.1} parent=11 // pred_check_branch
          %438 = sbr.rel (%p436) target = $region60
        $region59: #{tpu_custom_call.1} parent=11 // pred_region
          _
        $region60: #{tpu_custom_call.1} parent=11 // pred_fallthru
          _
      $region12: #{tpu_custom_call.1} parent=5 // pred_fallthru
        _
      %p439 = scmp.lt.s32.totalorder %s28, 2
      // Predicated region
      $region61: #{tpu_custom_call.1} parent=5 // pred_check
        %p440 = pneg %p439
      $region62: #{tpu_custom_call.1} parent=5 // pred_check_branch
        %442 = sbr.rel (%p440) target = $region64
      $region63: #{tpu_custom_call.1} parent=5 // pred_region
        // Predicated region
        $region65: #{tpu_custom_call.1} parent=63 // pred_check
          %p443 = pneg %p48
        $region66: #{tpu_custom_call.1} parent=63 // pred_check_branch
          %445 = sbr.rel (%p443) target = $region68
        $region67: #{tpu_custom_call.1} parent=63 // pred_region
          %s446 = sand.u32 %s38, 1
          %s447 = scalar_lea.sflag [#allocation3], %s446
          %s448 = sand.u32 %s38, 1
          %s449 = smul.addr %s448, 256
          %s450 = scalar_lea.vmem [#allocation2], %s449
          %s451 = smul.u32 8, %s28
          %s453 = ssub.s32 4096, 4096
          %454 = vsyncadd %s447, %s453
          %s455 = smul.addr %s451, 4
          %s456 = smul.addr %s455, 128
          %s457 = scalar_lea.hbm %s0, %s456
          %s458 = sshll.u32 %s450, 4
          %s459 = int_to_ptr.vmem [resolvable:$true] %s458
          %464 = dma.hbm_to_vmem [thread:$0]  %s457, 4096, %s459, %s447, 128, 128, 8
        $region68: #{tpu_custom_call.1} parent=63 // pred_fallthru
          _
      $region64: #{tpu_custom_call.1} parent=5 // pred_fallthru
        _
      %p465 = scmp.le.s32.totalorder 1, %s28
      %p466 = scmp.lt.s32.totalorder %s28, 3
      %p467 = pnand %p465, %p466
      %p468 = pneg %p467
      // Predicated region
      $region69: #{tpu_custom_call.1} parent=5 // pred_check
        _
      $region70: #{tpu_custom_call.1} parent=5 // pred_check_branch
        %470 = sbr.rel (%p467) target = $region72
      $region71: #{tpu_custom_call.1} parent=5 // pred_region
        %s471 = ssub.s32 %s28, 1
        %s472 = sand.u32 %s41, 1
        %s473 = scalar_lea.sflag [#allocation3], %s472
        %s474 = sand.u32 %s41, 1
        %s475 = smul.addr %s474, 256
        %s476 = scalar_lea.vmem [#allocation2], %s475
        // Predicated region
        $region73: #{tpu_custom_call.1} parent=71 // pred_check
          %p477 = pneg %p54
        $region74: #{tpu_custom_call.1} parent=71 // pred_check_branch
          %479 = sbr.rel (%p477) target = $region76
        $region75: #{tpu_custom_call.1} parent=71 // pred_region
          %480 = dma.done %s473, 4096
        $region76: #{tpu_custom_call.1} parent=71 // pred_fallthru
          _
        // Predicated region
        $region77: #{tpu_custom_call.1} parent=71 // pred_check
          %p481 = pneg %p75
        $region78: #{tpu_custom_call.1} parent=71 // pred_check_branch
          %483 = sbr.rel (%p481) target = $region80
        $region79: #{tpu_custom_call.1} parent=71 // pred_region
          %484 = dma.done [#allocation6], 16
        $region80: #{tpu_custom_call.1} parent=71 // pred_fallthru
          _
        // Predicated region
        $region81: #{tpu_custom_call.1} parent=71 // pred_check
          %p485 = pneg %p96
        $region82: #{tpu_custom_call.1} parent=71 // pred_check_branch
          %487 = sbr.rel (%p485) target = $region84
        $region83: #{tpu_custom_call.1} parent=71 // pred_region
          %488 = dma.done [#allocation6], 16
        $region84: #{tpu_custom_call.1} parent=71 // pred_fallthru
          _
        // Predicated region
        $region85: #{tpu_custom_call.1} parent=71 // pred_check
          %p489 = pneg %p117
        $region86: #{tpu_custom_call.1} parent=71 // pred_check_branch
          %491 = sbr.rel (%p489) target = $region88
        $region87: #{tpu_custom_call.1} parent=71 // pred_region
          %492 = dma.done [#allocation9], 3072
        $region88: #{tpu_custom_call.1} parent=71 // pred_fallthru
          _
        // Predicated region
        $region89: #{tpu_custom_call.1} parent=71 // pred_check
          %p493 = pneg %p159
        $region90: #{tpu_custom_call.1} parent=71 // pred_check_branch
          %495 = sbr.rel (%p493) target = $region92
        $region91: #{tpu_custom_call.1} parent=71 // pred_region
          %496 = dma.done [#allocation9], 1024
        $region92: #{tpu_custom_call.1} parent=71 // pred_fallthru
          _
        // Predicated region
        $region93: #{tpu_custom_call.1} parent=71 // pred_check
          %p497 = pneg %p243
        $region94: #{tpu_custom_call.1} parent=71 // pred_check_branch
          %499 = sbr.rel (%p497) target = $region96
        $region95: #{tpu_custom_call.1} parent=71 // pred_region
          %500 = dma.done [#allocation12], 4096
        $region96: #{tpu_custom_call.1} parent=71 // pred_fallthru
          _
        // Predicated region
        $region97: #{tpu_custom_call.1} parent=71 // pred_check
          %p501 = pneg %p285
        $region98: #{tpu_custom_call.1} parent=71 // pred_check_branch
          %503 = sbr.rel (%p501) target = $region100
        $region99: #{tpu_custom_call.1} parent=71 // pred_region
          %504 = dma.done [#allocation12], 4096
        $region100: #{tpu_custom_call.1} parent=71 // pred_fallthru
          _
        %s505 = sand.u32 %s41, 1
        %s506 = scalar_lea.sflag [#allocation3], %s505
        %s507 = sand.u32 %s41, 1
        %s508 = smul.addr %s507, 256
        %s509 = scalar_lea.vmem [#allocation2], %s508
        %p510 = pneg %p54
        %p511 = pneg %p51
        %p512 = pneg %p75
        %p513 = pneg %p72
        %p514 = pneg %p96
        %p515 = pneg %p93
        %p516 = pneg %p117
        %p517 = pneg %p114
        %p518 = pneg %p138
        %p519 = pneg %p135
        %p520 = pneg %p159
        %p521 = pneg %p156
        %p522 = pneg %p180
        %p523 = pneg %p177
        %p524 = pneg %p201
        %p525 = pneg %p198
        %p526 = pneg %p222
        %p527 = pneg %p219
        %p528 = pneg %p243
        %p529 = pneg %p240
        %p530 = pneg %p264
        %p531 = pneg %p261
        %p532 = pneg %p285
        %p533 = pneg %p282
        %p534 = pneg %p306
        %p535 = pneg %p303
        %p536 = pneg %p332
        %p537 = pneg %p329
        %s538 = sand.u32 %s319, 1
        %s539 = scalar_lea.sflag [#allocation4], %s538
        %s540 = sand.u32 %s319, 1
        %s541 = smul.addr %s540, 256
        %s542 = scalar_lea.vmem [#allocation14], %s541
        %s543 = smul.u32 8, %s33
        %s544 = smul.u32 8, %s33
        %v546 = vld [vmem:[%s476] sm:$0xff]
        %v547 = vld [vmem:[%s476 + $0x8] sm:$0xff]
        %v548 = vld [vmem:[%s476 + $0x10] sm:$0xff]
        %v549 = vld [vmem:[%s476 + $0x18] sm:$0xff]
        %v550 = vld [vmem:[%s476 + $0x20] sm:$0xff]
        %v551 = vld [vmem:[%s476 + $0x28] sm:$0xff]
        %v552 = vld [vmem:[%s476 + $0x30] sm:$0xff]
        %v553 = vld [vmem:[%s476 + $0x38] sm:$0xff]
        %v554 = vld [vmem:[%s476 + $0x40] sm:$0xff]
        %v555 = vld [vmem:[%s476 + $0x48] sm:$0xff]
        %v556 = vld [vmem:[%s476 + $0x50] sm:$0xff]
        %v557 = vld [vmem:[%s476 + $0x58] sm:$0xff]
        %v558 = vld [vmem:[%s476 + $0x60] sm:$0xff]
        %v559 = vld [vmem:[%s476 + $0x68] sm:$0xff]
        %v560 = vld [vmem:[%s476 + $0x70] sm:$0xff]
        %v561 = vld [vmem:[%s476 + $0x78] sm:$0xff]
        %v562 = vld [vmem:[%s476 + $0x80] sm:$0xff]
        %v563 = vld [vmem:[%s476 + $0x88] sm:$0xff]
        %v564 = vld [vmem:[%s476 + $0x90] sm:$0xff]
        %v565 = vld [vmem:[%s476 + $0x98] sm:$0xff]
        %v566 = vld [vmem:[%s476 + $0xa0] sm:$0xff]
        %v567 = vld [vmem:[%s476 + $0xa8] sm:$0xff]
        %v568 = vld [vmem:[%s476 + $0xb0] sm:$0xff]
        %v569 = vld [vmem:[%s476 + $0xb8] sm:$0xff]
        %v570 = vld [vmem:[%s476 + $0xc0] sm:$0xff]
        %v571 = vld [vmem:[%s476 + $0xc8] sm:$0xff]
        %v572 = vld [vmem:[%s476 + $0xd0] sm:$0xff]
        %v573 = vld [vmem:[%s476 + $0xd8] sm:$0xff]
        %v574 = vld [vmem:[%s476 + $0xe0] sm:$0xff]
        %v575 = vld [vmem:[%s476 + $0xe8] sm:$0xff]
        %v576 = vld [vmem:[%s476 + $0xf0] sm:$0xff]
        %v577 = vld [vmem:[%s476 + $0xf8] sm:$0xff]
        %v578 = vld [vmem:[#allocation5] sm:$0x1]
        %v579 = vld [vmem:[#allocation7] sm:$0x1]
        %580 = vadd.xlane.f32.xlu0 %v546
        %v581 = vpop.xlane.xlu0 %580
        %582 = vadd.xlane.f32.xlu0 %v547
        %v583 = vpop.xlane.xlu0 %582
        %584 = vadd.xlane.f32.xlu0 %v548
        %v585 = vpop.xlane.xlu0 %584
        %586 = vadd.xlane.f32.xlu0 %v549
        %v587 = vpop.xlane.xlu0 %586
        %588 = vadd.xlane.f32.xlu0 %v550
        %v589 = vpop.xlane.xlu0 %588
        %590 = vadd.xlane.f32.xlu0 %v551
        %v591 = vpop.xlane.xlu0 %590
        %592 = vadd.xlane.f32.xlu0 %v552
        %v593 = vpop.xlane.xlu0 %592
        %594 = vadd.xlane.f32.xlu0 %v553
        %v595 = vpop.xlane.xlu0 %594
        %596 = vadd.xlane.f32.xlu0 %v554
        %v597 = vpop.xlane.xlu0 %596
        %598 = vadd.xlane.f32.xlu0 %v555
        %v599 = vpop.xlane.xlu0 %598
        %600 = vadd.xlane.f32.xlu0 %v556
        %v601 = vpop.xlane.xlu0 %600
        %602 = vadd.xlane.f32.xlu0 %v557
        %v603 = vpop.xlane.xlu0 %602
        %604 = vadd.xlane.f32.xlu0 %v558
        %v605 = vpop.xlane.xlu0 %604
        %606 = vadd.xlane.f32.xlu0 %v559
        %v607 = vpop.xlane.xlu0 %606
        %608 = vadd.xlane.f32.xlu0 %v560
        %v609 = vpop.xlane.xlu0 %608
        %610 = vadd.xlane.f32.xlu0 %v561
        %v611 = vpop.xlane.xlu0 %610
        %612 = vadd.xlane.f32.xlu0 %v562
        %v613 = vpop.xlane.xlu0 %612
        %614 = vadd.xlane.f32.xlu0 %v563
        %v615 = vpop.xlane.xlu0 %614
        %616 = vadd.xlane.f32.xlu0 %v564
        %v617 = vpop.xlane.xlu0 %616
        %618 = vadd.xlane.f32.xlu0 %v565
        %v619 = vpop.xlane.xlu0 %618
        %620 = vadd.xlane.f32.xlu0 %v566
        %v621 = vpop.xlane.xlu0 %620
        %622 = vadd.xlane.f32.xlu0 %v567
        %v623 = vpop.xlane.xlu0 %622
        %624 = vadd.xlane.f32.xlu0 %v568
        %v625 = vpop.xlane.xlu0 %624
        %626 = vadd.xlane.f32.xlu0 %v569
        %v627 = vpop.xlane.xlu0 %626
        %628 = vadd.xlane.f32.xlu0 %v570
        %v629 = vpop.xlane.xlu0 %628
        %630 = vadd.xlane.f32.xlu0 %v571
        %v631 = vpop.xlane.xlu0 %630
        %632 = vadd.xlane.f32.xlu0 %v572
        %v633 = vpop.xlane.xlu0 %632
        %634 = vadd.xlane.f32.xlu0 %v573
        %v635 = vpop.xlane.xlu0 %634
        %636 = vadd.xlane.f32.xlu0 %v574
        %v637 = vpop.xlane.xlu0 %636
        %638 = vadd.xlane.f32.xlu0 %v575
        %v639 = vpop.xlane.xlu0 %638
        %640 = vadd.xlane.f32.xlu0 %v576
        %v641 = vpop.xlane.xlu0 %640
        %642 = vadd.xlane.f32.xlu0 %v577
        %v643 = vpop.xlane.xlu0 %642
        %v644 = vrcp.pop 128.0
        %v645 = vmul.f32 %v581, %v644
        %v646 = vmul.f32 %v583, %v644
        %v647 = vmul.f32 %v585, %v644
        %v648 = vmul.f32 %v587, %v644
        %v649 = vmul.f32 %v589, %v644
        %v650 = vmul.f32 %v591, %v644
        %v651 = vmul.f32 %v593, %v644
        %v652 = vmul.f32 %v595, %v644
        %v653 = vmul.f32 %v597, %v644
        %v654 = vmul.f32 %v599, %v644
        %v655 = vmul.f32 %v601, %v644
        %v656 = vmul.f32 %v603, %v644
        %v657 = vmul.f32 %v605, %v644
        %v658 = vmul.f32 %v607, %v644
        %v659 = vmul.f32 %v609, %v644
        %v660 = vmul.f32 %v611, %v644
        %v661 = vmul.f32 %v613, %v644
        %v662 = vmul.f32 %v615, %v644
        %v663 = vmul.f32 %v617, %v644
        %v664 = vmul.f32 %v619, %v644
        %v665 = vmul.f32 %v621, %v644
        %v666 = vmul.f32 %v623, %v644
        %v667 = vmul.f32 %v625, %v644
        %v668 = vmul.f32 %v627, %v644
        %v669 = vmul.f32 %v629, %v644
        %v670 = vmul.f32 %v631, %v644
        %v671 = vmul.f32 %v633, %v644
        %v672 = vmul.f32 %v635, %v644
        %v673 = vmul.f32 %v637, %v644
        %v674 = vmul.f32 %v639, %v644
        %v675 = vmul.f32 %v641, %v644
        %v676 = vmul.f32 %v643, %v644
        %v677 = vsub.f32 %v546, %v645
        %v678 = vsub.f32 %v547, %v646
        %v679 = vsub.f32 %v548, %v647
        %v680 = vsub.f32 %v549, %v648
        %v681 = vsub.f32 %v550, %v649
        %v682 = vsub.f32 %v551, %v650
        %v683 = vsub.f32 %v552, %v651
        %v684 = vsub.f32 %v553, %v652
        %v685 = vsub.f32 %v554, %v653
        %v686 = vsub.f32 %v555, %v654
        %v687 = vsub.f32 %v556, %v655
        %v688 = vsub.f32 %v557, %v656
        %v689 = vsub.f32 %v558, %v657
        %v690 = vsub.f32 %v559, %v658
        %v691 = vsub.f32 %v560, %v659
        %v692 = vsub.f32 %v561, %v660
        %v693 = vsub.f32 %v562, %v661
        %v694 = vsub.f32 %v563, %v662
        %v695 = vsub.f32 %v564, %v663
        %v696 = vsub.f32 %v565, %v664
        %v697 = vsub.f32 %v566, %v665
        %v698 = vsub.f32 %v567, %v666
        %v699 = vsub.f32 %v568, %v667
        %v700 = vsub.f32 %v569, %v668
        %v701 = vsub.f32 %v570, %v669
        %v702 = vsub.f32 %v571, %v670
        %v703 = vsub.f32 %v572, %v671
        %v704 = vsub.f32 %v573, %v672
        %v705 = vsub.f32 %v574, %v673
        %v706 = vsub.f32 %v575, %v674
        %v707 = vsub.f32 %v576, %v675
        %v708 = vsub.f32 %v577, %v676
        %v709 = vmul.f32 %v677, %v677
        %v710 = vmul.f32 %v678, %v678
        %v711 = vmul.f32 %v679, %v679
        %v712 = vmul.f32 %v680, %v680
        %v713 = vmul.f32 %v681, %v681
        %v714 = vmul.f32 %v682, %v682
        %v715 = vmul.f32 %v683, %v683
        %v716 = vmul.f32 %v684, %v684
        %v717 = vmul.f32 %v685, %v685
        %v718 = vmul.f32 %v686, %v686
        %v719 = vmul.f32 %v687, %v687
        %v720 = vmul.f32 %v688, %v688
        %v721 = vmul.f32 %v689, %v689
        %v722 = vmul.f32 %v690, %v690
        %v723 = vmul.f32 %v691, %v691
        %v724 = vmul.f32 %v692, %v692
        %v725 = vmul.f32 %v693, %v693
        %v726 = vmul.f32 %v694, %v694
        %v727 = vmul.f32 %v695, %v695
        %v728 = vmul.f32 %v696, %v696
        %v729 = vmul.f32 %v697, %v697
        %v730 = vmul.f32 %v698, %v698
        %v731 = vmul.f32 %v699, %v699
        %v732 = vmul.f32 %v700, %v700
        %v733 = vmul.f32 %v701, %v701
        %v734 = vmul.f32 %v702, %v702
        %v735 = vmul.f32 %v703, %v703
        %v736 = vmul.f32 %v704, %v704
        %v737 = vmul.f32 %v705, %v705
        %v738 = vmul.f32 %v706, %v706
        %v739 = vmul.f32 %v707, %v707
        %v740 = vmul.f32 %v708, %v708
        %741 = vadd.xlane.f32.xlu0 %v709
        %v742 = vpop.xlane.xlu0 %741
        %743 = vadd.xlane.f32.xlu0 %v710
        %v744 = vpop.xlane.xlu0 %743
        %745 = vadd.xlane.f32.xlu0 %v711
        %v746 = vpop.xlane.xlu0 %745
        %747 = vadd.xlane.f32.xlu0 %v712
        %v748 = vpop.xlane.xlu0 %747
        %749 = vadd.xlane.f32.xlu0 %v713
        %v750 = vpop.xlane.xlu0 %749
        %751 = vadd.xlane.f32.xlu0 %v714
        %v752 = vpop.xlane.xlu0 %751
        %753 = vadd.xlane.f32.xlu0 %v715
        %v754 = vpop.xlane.xlu0 %753
        %755 = vadd.xlane.f32.xlu0 %v716
        %v756 = vpop.xlane.xlu0 %755
        %757 = vadd.xlane.f32.xlu0 %v717
        %v758 = vpop.xlane.xlu0 %757
        %759 = vadd.xlane.f32.xlu0 %v718
        %v760 = vpop.xlane.xlu0 %759
        %761 = vadd.xlane.f32.xlu0 %v719
        %v762 = vpop.xlane.xlu0 %761
        %763 = vadd.xlane.f32.xlu0 %v720
        %v764 = vpop.xlane.xlu0 %763
        %765 = vadd.xlane.f32.xlu0 %v721
        %v766 = vpop.xlane.xlu0 %765
        %767 = vadd.xlane.f32.xlu0 %v722
        %v768 = vpop.xlane.xlu0 %767
        %769 = vadd.xlane.f32.xlu0 %v723
        %v770 = vpop.xlane.xlu0 %769
        %771 = vadd.xlane.f32.xlu0 %v724
        %v772 = vpop.xlane.xlu0 %771
        %773 = vadd.xlane.f32.xlu0 %v725
        %v774 = vpop.xlane.xlu0 %773
        %775 = vadd.xlane.f32.xlu0 %v726
        %v776 = vpop.xlane.xlu0 %775
        %777 = vadd.xlane.f32.xlu0 %v727
        %v778 = vpop.xlane.xlu0 %777
        %779 = vadd.xlane.f32.xlu0 %v728
        %v780 = vpop.xlane.xlu0 %779
        %781 = vadd.xlane.f32.xlu0 %v729
        %v782 = vpop.xlane.xlu0 %781
        %783 = vadd.xlane.f32.xlu0 %v730
        %v784 = vpop.xlane.xlu0 %783
        %785 = vadd.xlane.f32.xlu0 %v731
        %v786 = vpop.xlane.xlu0 %785
        %787 = vadd.xlane.f32.xlu0 %v732
        %v788 = vpop.xlane.xlu0 %787
        %789 = vadd.xlane.f32.xlu0 %v733
        %v790 = vpop.xlane.xlu0 %789
        %791 = vadd.xlane.f32.xlu0 %v734
        %v792 = vpop.xlane.xlu0 %791
        %793 = vadd.xlane.f32.xlu0 %v735
        %v794 = vpop.xlane.xlu0 %793
        %795 = vadd.xlane.f32.xlu0 %v736
        %v796 = vpop.xlane.xlu0 %795
        %797 = vadd.xlane.f32.xlu0 %v737
        %v798 = vpop.xlane.xlu0 %797
        %799 = vadd.xlane.f32.xlu0 %v738
        %v800 = vpop.xlane.xlu0 %799
        %801 = vadd.xlane.f32.xlu0 %v739
        %v802 = vpop.xlane.xlu0 %801
        %803 = vadd.xlane.f32.xlu0 %v740
        %v804 = vpop.xlane.xlu0 %803
        %v805 = vmul.f32 %v742, %v644
        %v806 = vmul.f32 %v744, %v644
        %v807 = vmul.f32 %v746, %v644
        %v808 = vmul.f32 %v748, %v644
        %v809 = vmul.f32 %v750, %v644
        %v810 = vmul.f32 %v752, %v644
        %v811 = vmul.f32 %v754, %v644
        %v812 = vmul.f32 %v756, %v644
        %v813 = vmul.f32 %v758, %v644
        %v814 = vmul.f32 %v760, %v644
        %v815 = vmul.f32 %v762, %v644
        %v816 = vmul.f32 %v764, %v644
        %v817 = vmul.f32 %v766, %v644
        %v818 = vmul.f32 %v768, %v644
        %v819 = vmul.f32 %v770, %v644
        %v820 = vmul.f32 %v772, %v644
        %v821 = vmul.f32 %v774, %v644
        %v822 = vmul.f32 %v776, %v644
        %v823 = vmul.f32 %v778, %v644
        %v824 = vmul.f32 %v780, %v644
        %v825 = vmul.f32 %v782, %v644
        %v826 = vmul.f32 %v784, %v644
        %v827 = vmul.f32 %v786, %v644
        %v828 = vmul.f32 %v788, %v644
        %v829 = vmul.f32 %v790, %v644
        %v830 = vmul.f32 %v792, %v644
        %v831 = vmul.f32 %v794, %v644
        %v832 = vmul.f32 %v796, %v644
        %v833 = vmul.f32 %v798, %v644
        %v834 = vmul.f32 %v800, %v644
        %v835 = vmul.f32 %v802, %v644
        %v836 = vmul.f32 %v804, %v644
        %v837 = vadd.f32 %v805, 1e-05
        %v838 = vadd.f32 %v806, 1e-05
        %v839 = vadd.f32 %v807, 1e-05
        %v840 = vadd.f32 %v808, 1e-05
        %v841 = vadd.f32 %v809, 1e-05
        %v842 = vadd.f32 %v810, 1e-05
        %v843 = vadd.f32 %v811, 1e-05
        %v844 = vadd.f32 %v812, 1e-05
        %v845 = vadd.f32 %v813, 1e-05
        %v846 = vadd.f32 %v814, 1e-05
        %v847 = vadd.f32 %v815, 1e-05
        %v848 = vadd.f32 %v816, 1e-05
        %v849 = vadd.f32 %v817, 1e-05
        %v850 = vadd.f32 %v818, 1e-05
        %v851 = vadd.f32 %v819, 1e-05
        %v852 = vadd.f32 %v820, 1e-05
        %v853 = vadd.f32 %v821, 1e-05
        %v854 = vadd.f32 %v822, 1e-05
        %v855 = vadd.f32 %v823, 1e-05
        %v856 = vadd.f32 %v824, 1e-05
        %v857 = vadd.f32 %v825, 1e-05
        %v858 = vadd.f32 %v826, 1e-05
        %v859 = vadd.f32 %v827, 1e-05
        %v860 = vadd.f32 %v828, 1e-05
        %v861 = vadd.f32 %v829, 1e-05
        %v862 = vadd.f32 %v830, 1e-05
        %v863 = vadd.f32 %v831, 1e-05
        %v864 = vadd.f32 %v832, 1e-05
        %v865 = vadd.f32 %v833, 1e-05
        %v866 = vadd.f32 %v834, 1e-05
        %v867 = vadd.f32 %v835, 1e-05
        %v868 = vadd.f32 %v836, 1e-05
        %v869 = vrsqrt.pop %v837
        %v870 = vrsqrt.pop %v838
        %v871 = vrsqrt.pop %v839
        %v872 = vrsqrt.pop %v840
        %v873 = vrsqrt.pop %v841
        %v874 = vrsqrt.pop %v842
        %v875 = vrsqrt.pop %v843
        %v876 = vrsqrt.pop %v844
        %v877 = vrsqrt.pop %v845
        %v878 = vrsqrt.pop %v846
        %v879 = vrsqrt.pop %v847
        %v880 = vrsqrt.pop %v848
        %v881 = vrsqrt.pop %v849
        %v882 = vrsqrt.pop %v850
        %v883 = vrsqrt.pop %v851
        %v884 = vrsqrt.pop %v852
        %v885 = vrsqrt.pop %v853
        %v886 = vrsqrt.pop %v854
        %v887 = vrsqrt.pop %v855
        %v888 = vrsqrt.pop %v856
        %v889 = vrsqrt.pop %v857
        %v890 = vrsqrt.pop %v858
        %v891 = vrsqrt.pop %v859
        %v892 = vrsqrt.pop %v860
        %v893 = vrsqrt.pop %v861
        %v894 = vrsqrt.pop %v862
        %v895 = vrsqrt.pop %v863
        %v896 = vrsqrt.pop %v864
        %v897 = vrsqrt.pop %v865
        %v898 = vrsqrt.pop %v866
        %v899 = vrsqrt.pop %v867
        %v900 = vrsqrt.pop %v868
        %v901 = vmul.f32 %v677, %v869
        %v902 = vmul.f32 %v678, %v870
        %v903 = vmul.f32 %v679, %v871
        %v904 = vmul.f32 %v680, %v872
        %v905 = vmul.f32 %v681, %v873
        %v906 = vmul.f32 %v682, %v874
        %v907 = vmul.f32 %v683, %v875
        %v908 = vmul.f32 %v684, %v876
        %v909 = vmul.f32 %v685, %v877
        %v910 = vmul.f32 %v686, %v878
        %v911 = vmul.f32 %v687, %v879
        %v912 = vmul.f32 %v688, %v880
        %v913 = vmul.f32 %v689, %v881
        %v914 = vmul.f32 %v690, %v882
        %v915 = vmul.f32 %v691, %v883
        %v916 = vmul.f32 %v692, %v884
        %v917 = vmul.f32 %v693, %v885
        %v918 = vmul.f32 %v694, %v886
        %v919 = vmul.f32 %v695, %v887
        %v920 = vmul.f32 %v696, %v888
        %v921 = vmul.f32 %v697, %v889
        %v922 = vmul.f32 %v698, %v890
        %v923 = vmul.f32 %v699, %v891
        %v924 = vmul.f32 %v700, %v892
        %v925 = vmul.f32 %v701, %v893
        %v926 = vmul.f32 %v702, %v894
        %v927 = vmul.f32 %v703, %v895
        %v928 = vmul.f32 %v704, %v896
        %v929 = vmul.f32 %v705, %v897
        %v930 = vmul.f32 %v706, %v898
        %v931 = vmul.f32 %v707, %v899
        %v932 = vmul.f32 %v708, %v900
        %v934 = vlaneseq
        %v935 = vshrl.u32 %v934, 7
        %v936 = vsub.s32 0, %v935
        %v937 = vrot.slane %v578, %v936
        %v939 = vmul.f32 %v901, %v937
        %v940 = vmul.f32 %v902, %v937
        %v941 = vmul.f32 %v903, %v937
        %v942 = vmul.f32 %v904, %v937
        %v943 = vmul.f32 %v905, %v937
        %v944 = vmul.f32 %v906, %v937
        %v945 = vmul.f32 %v907, %v937
        %v946 = vmul.f32 %v908, %v937
        %v947 = vmul.f32 %v909, %v937
        %v948 = vmul.f32 %v910, %v937
        %v949 = vmul.f32 %v911, %v937
        %v950 = vmul.f32 %v912, %v937
        %v951 = vmul.f32 %v913, %v937
        %v952 = vmul.f32 %v914, %v937
        %v953 = vmul.f32 %v915, %v937
        %v954 = vmul.f32 %v916, %v937
        %v955 = vmul.f32 %v917, %v937
        %v956 = vmul.f32 %v918, %v937
        %v957 = vmul.f32 %v919, %v937
        %v958 = vmul.f32 %v920, %v937
        %v959 = vmul.f32 %v921, %v937
        %v960 = vmul.f32 %v922, %v937
        %v961 = vmul.f32 %v923, %v937
        %v962 = vmul.f32 %v924, %v937
        %v963 = vmul.f32 %v925, %v937
        %v964 = vmul.f32 %v926, %v937
        %v965 = vmul.f32 %v927, %v937
        %v966 = vmul.f32 %v928, %v937
        %v967 = vmul.f32 %v929, %v937
        %v968 = vmul.f32 %v930, %v937
        %v969 = vmul.f32 %v931, %v937
        %v970 = vmul.f32 %v932, %v937
        %v972 = vlaneseq
        %v973 = vshrl.u32 %v972, 7
        %v974 = vsub.s32 0, %v973
        %v975 = vrot.slane %v579, %v974
        %v977 = vadd.f32 %v939, %v975
        %v978 = vadd.f32 %v940, %v975
        %v979 = vadd.f32 %v941, %v975
        %v980 = vadd.f32 %v942, %v975
        %v981 = vadd.f32 %v943, %v975
        %v982 = vadd.f32 %v944, %v975
        %v983 = vadd.f32 %v945, %v975
        %v984 = vadd.f32 %v946, %v975
        %v985 = vadd.f32 %v947, %v975
        %v986 = vadd.f32 %v948, %v975
        %v987 = vadd.f32 %v949, %v975
        %v988 = vadd.f32 %v950, %v975
        %v989 = vadd.f32 %v951, %v975
        %v990 = vadd.f32 %v952, %v975
        %v991 = vadd.f32 %v953, %v975
        %v992 = vadd.f32 %v954, %v975
        %v993 = vadd.f32 %v955, %v975
        %v994 = vadd.f32 %v956, %v975
        %v995 = vadd.f32 %v957, %v975
        %v996 = vadd.f32 %v958, %v975
        %v997 = vadd.f32 %v959, %v975
        %v998 = vadd.f32 %v960, %v975
        %v999 = vadd.f32 %v961, %v975
        %v1000 = vadd.f32 %v962, %v975
        %v1001 = vadd.f32 %v963, %v975
        %v1002 = vadd.f32 %v964, %v975
        %v1003 = vadd.f32 %v965, %v975
        %v1004 = vadd.f32 %v966, %v975
        %v1005 = vadd.f32 %v967, %v975
        %v1006 = vadd.f32 %v968, %v975
        %v1007 = vadd.f32 %v969, %v975
        %v1008 = vadd.f32 %v970, %v975
        %v1009 = vpack.c.bf16 %v978, %v977
        %v1010 = vpack.c.bf16 %v980, %v979
        %v1011 = vpack.c.bf16 %v982, %v981
        %v1012 = vpack.c.bf16 %v984, %v983
        %v1013 = vpack.c.bf16 %v986, %v985
        %v1014 = vpack.c.bf16 %v988, %v987
        %v1015 = vpack.c.bf16 %v990, %v989
        %v1016 = vpack.c.bf16 %v992, %v991
        %v1017 = vpack.c.bf16 %v994, %v993
        %v1018 = vpack.c.bf16 %v996, %v995
        %v1019 = vpack.c.bf16 %v998, %v997
        %v1020 = vpack.c.bf16 %v1000, %v999
        %v1021 = vpack.c.bf16 %v1002, %v1001
        %v1022 = vpack.c.bf16 %v1004, %v1003
        %v1023 = vpack.c.bf16 %v1006, %v1005
        %v1024 = vpack.c.bf16 %v1008, %v1007
        %v1025 = vld [vmem:[#allocation8] sm:$0xff]
        %v1026 = vld [vmem:[#allocation8 + $0x8] sm:$0xf]
        %v1027 = vld [vmem:[#allocation8 + $0xc] sm:$0xff]
        %v1028 = vld [vmem:[#allocation8 + $0x14] sm:$0xf]
        %v1029 = vld [vmem:[#allocation8 + $0x18] sm:$0xff]
        %v1030 = vld [vmem:[#allocation8 + $0x20] sm:$0xf]
        %v1031 = vld [vmem:[#allocation8 + $0x24] sm:$0xff]
        %v1032 = vld [vmem:[#allocation8 + $0x2c] sm:$0xf]
        %v1033 = vld [vmem:[#allocation8 + $0x30] sm:$0xff]
        %v1034 = vld [vmem:[#allocation8 + $0x38] sm:$0xf]
        %v1035 = vld [vmem:[#allocation8 + $0x3c] sm:$0xff]
        %v1036 = vld [vmem:[#allocation8 + $0x44] sm:$0xf]
        %v1037 = vld [vmem:[#allocation8 + $0x48] sm:$0xff]
        %v1038 = vld [vmem:[#allocation8 + $0x50] sm:$0xf]
        %v1039 = vld [vmem:[#allocation8 + $0x54] sm:$0xff]
        %v1040 = vld [vmem:[#allocation8 + $0x5c] sm:$0xf]
        %v1041 = vld [vmem:[#allocation8 + $0x60] sm:$0xff]
        %v1042 = vld [vmem:[#allocation8 + $0x68] sm:$0xf]
        %v1043 = vld [vmem:[#allocation8 + $0x6c] sm:$0xff]
        %v1044 = vld [vmem:[#allocation8 + $0x74] sm:$0xf]
        %v1045 = vld [vmem:[#allocation8 + $0x78] sm:$0xff]
        %v1046 = vld [vmem:[#allocation8 + $0x80] sm:$0xf]
        %v1047 = vld [vmem:[#allocation8 + $0x84] sm:$0xff]
        %v1048 = vld [vmem:[#allocation8 + $0x8c] sm:$0xf]
        %v1049 = vld [vmem:[#allocation8 + $0x90] sm:$0xff]
        %v1050 = vld [vmem:[#allocation8 + $0x98] sm:$0xf]
        %v1051 = vld [vmem:[#allocation8 + $0x9c] sm:$0xff]
        %v1052 = vld [vmem:[#allocation8 + $0xa4] sm:$0xf]
        %v1053 = vld [vmem:[#allocation8 + $0xa8] sm:$0xff]
        %v1054 = vld [vmem:[#allocation8 + $0xb0] sm:$0xf]
        %v1055 = vld [vmem:[#allocation8 + $0xb4] sm:$0xff]
        %v1056 = vld [vmem:[#allocation8 + $0xbc] sm:$0xf]
        %v1057 = vld [vmem:[%s4] sm:$0x7]
        %v1059 = vlaneseq
        %v1060 = vshrl.u32 %v1059, 7
        %v1061 = vsub.s32 0, %v1060
        %v1062 = vrot.slane %v1057, %v1061
        %v1063 = vlaneseq
        %v1064 = vshrl.u32 %v1063, 7
        %v1065 = vsub.s32 1, %v1064
        %v1066 = vrot.slane %v1057, %v1065
        %v1067 = vlaneseq
        %v1068 = vshrl.u32 %v1067, 7
        %v1069 = vsub.s32 2, %v1068
        %v1070 = vrot.slane %v1057, %v1069
        %v1106 = vunpack.c.l.b16 %v1025
        %v1107 = vunpack.c.h.b16 %v1025
        %v1108 = vunpack.c.l.b16 %v1026
        %v1109 = vunpack.c.l.b16 %v1027
        %v1110 = vunpack.c.h.b16 %v1027
        %v1111 = vunpack.c.l.b16 %v1028
        %v1112 = vunpack.c.l.b16 %v1029
        %v1113 = vunpack.c.h.b16 %v1029
        %v1114 = vunpack.c.l.b16 %v1030
        %v1115 = vunpack.c.l.b16 %v1031
        %v1116 = vunpack.c.h.b16 %v1031
        %v1117 = vunpack.c.l.b16 %v1032
        %v1118 = vunpack.c.l.b16 %v1033
        %v1119 = vunpack.c.h.b16 %v1033
        %v1120 = vunpack.c.l.b16 %v1034
        %v1121 = vunpack.c.l.b16 %v1035
        %v1122 = vunpack.c.h.b16 %v1035
        %v1123 = vunpack.c.l.b16 %v1036
        %v1124 = vunpack.c.l.b16 %v1037
        %v1125 = vunpack.c.h.b16 %v1037
        %v1126 = vunpack.c.l.b16 %v1038
        %v1127 = vunpack.c.l.b16 %v1039
        %v1128 = vunpack.c.h.b16 %v1039
        %v1129 = vunpack.c.l.b16 %v1040
        %v1130 = vunpack.c.l.b16 %v1041
        %v1131 = vunpack.c.h.b16 %v1041
        %v1132 = vunpack.c.l.b16 %v1042
        %v1133 = vunpack.c.l.b16 %v1043
        %v1134 = vunpack.c.h.b16 %v1043
        %v1135 = vunpack.c.l.b16 %v1044
        %v1136 = vunpack.c.l.b16 %v1045
        %v1137 = vunpack.c.h.b16 %v1045
        %v1138 = vunpack.c.l.b16 %v1046
        %v1139 = vunpack.c.l.b16 %v1047
        %v1140 = vunpack.c.h.b16 %v1047
        %v1141 = vunpack.c.l.b16 %v1048
        %v1142 = vunpack.c.l.b16 %v1049
        %v1143 = vunpack.c.h.b16 %v1049
        %v1144 = vunpack.c.l.b16 %v1050
        %v1145 = vunpack.c.l.b16 %v1051
        %v1146 = vunpack.c.h.b16 %v1051
        %v1147 = vunpack.c.l.b16 %v1052
        %v1148 = vunpack.c.l.b16 %v1053
        %v1149 = vunpack.c.h.b16 %v1053
        %v1150 = vunpack.c.l.b16 %v1054
        %v1151 = vunpack.c.l.b16 %v1055
        %v1152 = vunpack.c.h.b16 %v1055
        %v1153 = vunpack.c.l.b16 %v1056
        %v1154 = vpack.c.b16 %v1109, %v1106
        %v1155 = vpack.c.b16 %v1110, %v1107
        %v1156 = vpack.c.b16 %v1111, %v1108
        %v1157 = vpack.c.b16 %v1115, %v1112
        %v1158 = vpack.c.b16 %v1116, %v1113
        %v1159 = vpack.c.b16 %v1117, %v1114
        %v1160 = vpack.c.b16 %v1121, %v1118
        %v1161 = vpack.c.b16 %v1122, %v1119
        %v1162 = vpack.c.b16 %v1123, %v1120
        %v1163 = vpack.c.b16 %v1127, %v1124
        %v1164 = vpack.c.b16 %v1128, %v1125
        %v1165 = vpack.c.b16 %v1129, %v1126
        %v1166 = vpack.c.b16 %v1133, %v1130
        %v1167 = vpack.c.b16 %v1134, %v1131
        %v1168 = vpack.c.b16 %v1135, %v1132
        %v1169 = vpack.c.b16 %v1139, %v1136
        %v1170 = vpack.c.b16 %v1140, %v1137
        %v1171 = vpack.c.b16 %v1141, %v1138
        %v1172 = vpack.c.b16 %v1145, %v1142
        %v1173 = vpack.c.b16 %v1146, %v1143
        %v1174 = vpack.c.b16 %v1147, %v1144
        %v1175 = vpack.c.b16 %v1151, %v1148
        %v1176 = vpack.c.b16 %v1152, %v1149
        %v1177 = vpack.c.b16 %v1153, %v1150
        %1202 = vmatprep.subr.bf16.mxu0 %v1155
        %1203 = vmatpush1.bf16.msra.mxu0 %v1154
        %1204 = vmatprep.subr.bf16.mxu0 %v1158
        %1205 = vmatpush1.bf16.msra.mxu0 %v1157
        %1206 = vmatprep.subr.bf16.mxu0 %v1161
        %1207 = vmatpush1.bf16.msra.mxu0 %v1160
        %1208 = vmatprep.subr.bf16.mxu0 %v1164
        %1209 = vmatpush1.bf16.msra.mxu0 %v1163
        %1210 = vmatprep.subr.bf16.mxu0 %v1167
        %1211 = vmatpush1.bf16.msra.mxu0 %v1166
        %1212 = vmatprep.subr.bf16.mxu0 %v1170
        %1213 = vmatpush1.bf16.msra.mxu0 %v1169
        %1214 = vmatprep.subr.bf16.mxu0 %v1173
        %1215 = vmatpush1.bf16.msra.mxu0 %v1172
        %1216 = vmatprep.subr.bf16.mxu0 %v1176
        %1217 = vmatpush1.bf16.msra.mxu0 %v1175
        %1218 = vmatprep.subr.bf16.mxu0 0
        %1219 = vmatpush1.bf16.msra.mxu0 0
        %1220 = vmatprep.subr.bf16.mxu0 0
        %1221 = vmatpush1.bf16.msra.mxu0 0
        %1222 = vmatprep.subr.bf16.mxu0 0
        %1223 = vmatpush1.bf16.msra.mxu0 0
        %1224 = vmatprep.subr.bf16.mxu0 0
        %1225 = vmatpush1.bf16.msra.mxu0 0
        %1226 = vmatprep.subr.bf16.mxu0 0
        %1227 = vmatpush1.bf16.msra.mxu0 0
        %1228 = vmatprep.subr.bf16.mxu0 0
        %1229 = vmatpush1.bf16.msra.mxu0 0
        %1230 = vmatprep.subr.bf16.mxu0 0
        %1231 = vmatpush1.bf16.msra.mxu0 0
        %1232 = vmatprep.subr.bf16.mxu0 0
        %1233 = vmatpush1.bf16.msra.mxu0 0
        %1234 = vmatprep.mubr.bf16.mxu0 0
        %1235 = vmatmul.mubr.bf16.gmra.mrb[0].mxu0 %v1009
        %v1236 = vpop.f32.mrb[0].mxu0
        %v1237 = vadd.f32 %v1062, %v1236
        %v1238 = vpop.f32.mrb[0].mxu0
        %v1239 = vadd.f32 %v1066, %v1238
        %v1240 = vpop.f32.mrb[0].mxu0
        %v1241 = vadd.f32 %v1062, %v1240
        %v1242 = vpop.f32.mrb[0].mxu0
        %v1243 = vadd.f32 %v1066, %v1242
        %1244 = vmatprep.mubr.bf16.mxu0 0
        %1245 = vmatmul.mubr.bf16.gmra.mrb[0].mxu0 %v1010
        %v1246 = vpop.f32.mrb[0].mxu0
        %v1247 = vadd.f32 %v1062, %v1246
        %v1248 = vpop.f32.mrb[0].mxu0
        %v1249 = vadd.f32 %v1066, %v1248
        %v1250 = vpop.f32.mrb[0].mxu0
        %v1251 = vadd.f32 %v1062, %v1250
        %v1252 = vpop.f32.mrb[0].mxu0
        %v1253 = vadd.f32 %v1066, %v1252
        %1254 = vmatprep.mubr.bf16.mxu0 0
        %1255 = vmatmul.mubr.bf16.gmra.mrb[0].mxu0 %v1011
        %v1256 = vpop.f32.mrb[0].mxu0
        %v1257 = vadd.f32 %v1062, %v1256
        %v1258 = vpop.f32.mrb[0].mxu0
        %v1259 = vadd.f32 %v1066, %v1258
        %v1260 = vpop.f32.mrb[0].mxu0
        %v1261 = vadd.f32 %v1062, %v1260
        %v1262 = vpop.f32.mrb[0].mxu0
        %v1263 = vadd.f32 %v1066, %v1262
        %1264 = vmatprep.mubr.bf16.mxu0 0
        %1265 = vmatmul.mubr.bf16.gmra.mrb[0].mxu0 %v1012
        %v1266 = vpop.f32.mrb[0].mxu0
        %v1267 = vadd.f32 %v1062, %v1266
        %v1268 = vpop.f32.mrb[0].mxu0
        %v1269 = vadd.f32 %v1066, %v1268
        %v1270 = vpop.f32.mrb[0].mxu0
        %v1271 = vadd.f32 %v1062, %v1270
        %v1272 = vpop.f32.mrb[0].mxu0
        %v1273 = vadd.f32 %v1066, %v1272
        %1274 = vmatprep.mubr.bf16.mxu0 0
        %1275 = vmatmul.mubr.bf16.gmra.mrb[0].mxu0 %v1013
        %v1276 = vpop.f32.mrb[0].mxu0
        %v1277 = vadd.f32 %v1062, %v1276
        %v1278 = vpop.f32.mrb[0].mxu0
        %v1279 = vadd.f32 %v1066, %v1278
        %v1280 = vpop.f32.mrb[0].mxu0
        %v1281 = vadd.f32 %v1062, %v1280
        %v1282 = vpop.f32.mrb[0].mxu0
        %v1283 = vadd.f32 %v1066, %v1282
        %1284 = vmatprep.mubr.bf16.mxu0 0
        %1285 = vmatmul.mubr.bf16.gmra.mrb[0].mxu0 %v1014
        %v1286 = vpop.f32.mrb[0].mxu0
        %v1287 = vadd.f32 %v1062, %v1286
        %v1288 = vpop.f32.mrb[0].mxu0
        %v1289 = vadd.f32 %v1066, %v1288
        %v1290 = vpop.f32.mrb[0].mxu0
        %v1291 = vadd.f32 %v1062, %v1290
        %v1292 = vpop.f32.mrb[0].mxu0
        %v1293 = vadd.f32 %v1066, %v1292
        %1294 = vmatprep.mubr.bf16.mxu0 0
        %1295 = vmatmul.mubr.bf16.gmra.mrb[0].mxu0 %v1015
        %v1296 = vpop.f32.mrb[0].mxu0
        %v1297 = vadd.f32 %v1062, %v1296
        %v1298 = vpop.f32.mrb[0].mxu0
        %v1299 = vadd.f32 %v1066, %v1298
        %v1300 = vpop.f32.mrb[0].mxu0
        %v1301 = vadd.f32 %v1062, %v1300
        %v1302 = vpop.f32.mrb[0].mxu0
        %v1303 = vadd.f32 %v1066, %v1302
        %1304 = vmatprep.mubr.bf16.mxu0 0
        %1305 = vmatmul.mubr.bf16.gmra.mrb[0].mxu0 %v1016
        %v1306 = vpop.f32.mrb[0].mxu0
        %v1307 = vadd.f32 %v1062, %v1306
        %v1308 = vpop.f32.mrb[0].mxu0
        %v1309 = vadd.f32 %v1066, %v1308
        %v1310 = vpop.f32.mrb[0].mxu0
        %v1311 = vadd.f32 %v1062, %v1310
        %v1312 = vpop.f32.mrb[0].mxu0
        %v1313 = vadd.f32 %v1066, %v1312
        %1314 = vmatprep.mubr.bf16.mxu0 0
        %1315 = vmatmul.mubr.bf16.gmra.mrb[0].mxu0 %v1017
        %v1316 = vpop.f32.mrb[0].mxu0
        %v1317 = vadd.f32 %v1062, %v1316
        %v1318 = vpop.f32.mrb[0].mxu0
        %v1319 = vadd.f32 %v1066, %v1318
        %v1320 = vpop.f32.mrb[0].mxu0
        %v1321 = vadd.f32 %v1062, %v1320
        %v1322 = vpop.f32.mrb[0].mxu0
        %v1323 = vadd.f32 %v1066, %v1322
        %1324 = vmatprep.mubr.bf16.mxu0 0
        %1325 = vmatmul.mubr.bf16.gmra.mrb[0].mxu0 %v1018
        %v1326 = vpop.f32.mrb[0].mxu0
        %v1327 = vadd.f32 %v1062, %v1326
        %v1328 = vpop.f32.mrb[0].mxu0
        %v1329 = vadd.f32 %v1066, %v1328
        %v1330 = vpop.f32.mrb[0].mxu0
        %v1331 = vadd.f32 %v1062, %v1330
        %v1332 = vpop.f32.mrb[0].mxu0
        %v1333 = vadd.f32 %v1066, %v1332
        %1334 = vmatprep.mubr.bf16.mxu0 0
        %1335 = vmatmul.mubr.bf16.gmra.mrb[0].mxu0 %v1019
        %v1336 = vpop.f32.mrb[0].mxu0
        %v1337 = vadd.f32 %v1062, %v1336
        %v1338 = vpop.f32.mrb[0].mxu0
        %v1339 = vadd.f32 %v1066, %v1338
        %v1340 = vpop.f32.mrb[0].mxu0
        %v1341 = vadd.f32 %v1062, %v1340
        %v1342 = vpop.f32.mrb[0].mxu0
        %v1343 = vadd.f32 %v1066, %v1342
        %1344 = vmatprep.mubr.bf16.mxu0 0
        %1345 = vmatmul.mubr.bf16.gmra.mrb[0].mxu0 %v1020
        %v1346 = vpop.f32.mrb[0].mxu0
        %v1347 = vadd.f32 %v1062, %v1346
        %v1348 = vpop.f32.mrb[0].mxu0
        %v1349 = vadd.f32 %v1066, %v1348
        %v1350 = vpop.f32.mrb[0].mxu0
        %v1351 = vadd.f32 %v1062, %v1350
        %v1352 = vpop.f32.mrb[0].mxu0
        %v1353 = vadd.f32 %v1066, %v1352
        %1354 = vmatprep.mubr.bf16.mxu0 0
        %1355 = vmatmul.mubr.bf16.gmra.mrb[0].mxu0 %v1021
        %v1356 = vpop.f32.mrb[0].mxu0
        %v1357 = vadd.f32 %v1062, %v1356
        %v1358 = vpop.f32.mrb[0].mxu0
        %v1359 = vadd.f32 %v1066, %v1358
        %v1360 = vpop.f32.mrb[0].mxu0
        %v1361 = vadd.f32 %v1062, %v1360
        %v1362 = vpop.f32.mrb[0].mxu0
        %v1363 = vadd.f32 %v1066, %v1362
        %1364 = vmatprep.mubr.bf16.mxu0 0
        %1365 = vmatmul.mubr.bf16.gmra.mrb[0].mxu0 %v1022
        %v1366 = vpop.f32.mrb[0].mxu0
        %v1367 = vadd.f32 %v1062, %v1366
        %v1368 = vpop.f32.mrb[0].mxu0
        %v1369 = vadd.f32 %v1066, %v1368
        %v1370 = vpop.f32.mrb[0].mxu0
        %v1371 = vadd.f32 %v1062, %v1370
        %v1372 = vpop.f32.mrb[0].mxu0
        %v1373 = vadd.f32 %v1066, %v1372
        %1374 = vmatprep.mubr.bf16.mxu0 0
        %1375 = vmatmul.mubr.bf16.gmra.mrb[0].mxu0 %v1023
        %v1376 = vpop.f32.mrb[0].mxu0
        %v1377 = vadd.f32 %v1062, %v1376
        %v1378 = vpop.f32.mrb[0].mxu0
        %v1379 = vadd.f32 %v1066, %v1378
        %v1380 = vpop.f32.mrb[0].mxu0
        %v1381 = vadd.f32 %v1062, %v1380
        %v1382 = vpop.f32.mrb[0].mxu0
        %v1383 = vadd.f32 %v1066, %v1382
        %1384 = vmatprep.mubr.bf16.mxu0 0
        %1385 = vmatmul.mubr.bf16.gmra.mrb[0].mxu0 %v1024
        %v1386 = vpop.f32.mrb[0].mxu0
        %v1387 = vadd.f32 %v1062, %v1386
        %v1388 = vpop.f32.mrb[0].mxu0
        %v1389 = vadd.f32 %v1066, %v1388
        %v1390 = vpop.f32.mrb[0].mxu0
        %v1391 = vadd.f32 %v1062, %v1390
        %v1392 = vpop.f32.mrb[0].mxu0
        %v1393 = vadd.f32 %v1066, %v1392
        %1394 = vdwg.mxu0
        %1395 = vmatprep.subr.bf16.mxu0 0
        %1396 = vmatpush1.bf16.msra.mxu0 %v1156
        %1397 = vmatprep.subr.bf16.mxu0 0
        %1398 = vmatpush1.bf16.msra.mxu0 %v1159
        %1399 = vmatprep.subr.bf16.mxu0 0
        %1400 = vmatpush1.bf16.msra.mxu0 %v1162
        %1401 = vmatprep.subr.bf16.mxu0 0
        %1402 = vmatpush1.bf16.msra.mxu0 %v1165
        %1403 = vmatprep.subr.bf16.mxu0 0
        %1404 = vmatpush1.bf16.msra.mxu0 %v1168
        %1405 = vmatprep.subr.bf16.mxu0 0
        %1406 = vmatpush1.bf16.msra.mxu0 %v1171
        %1407 = vmatprep.subr.bf16.mxu0 0
        %1408 = vmatpush1.bf16.msra.mxu0 %v1174
        %1409 = vmatprep.subr.bf16.mxu0 0
        %1410 = vmatpush1.bf16.msra.mxu0 %v1177
        %1411 = vmatprep.subr.bf16.mxu0 0
        %1412 = vmatpush1.bf16.msra.mxu0 0
        %1413 = vmatprep.subr.bf16.mxu0 0
        %1414 = vmatpush1.bf16.msra.mxu0 0
        %1415 = vmatprep.subr.bf16.mxu0 0
        %1416 = vmatpush1.bf16.msra.mxu0 0
        %1417 = vmatprep.subr.bf16.mxu0 0
        %1418 = vmatpush1.bf16.msra.mxu0 0
        %1419 = vmatprep.subr.bf16.mxu0 0
        %1420 = vmatpush1.bf16.msra.mxu0 0
        %1421 = vmatprep.subr.bf16.mxu0 0
        %1422 = vmatpush1.bf16.msra.mxu0 0
        %1423 = vmatprep.subr.bf16.mxu0 0
        %1424 = vmatpush1.bf16.msra.mxu0 0
        %1425 = vmatprep.subr.bf16.mxu0 0
        %1426 = vmatpush1.bf16.msra.mxu0 0
        %1427 = vmatprep.mubr.bf16.mxu0 0
        %1428 = vmatmul.mubr.bf16.gmra.mrb[0].mxu0 %v1009
        %v1429 = vpop.f32.mrb[0].mxu0
        %v1430 = vadd.f32 %v1070, %v1429
        %v1431 = vpop.f32.mrb[0].mxu0
        %v1432 = vpop.f32.mrb[0].mxu0
        %v1433 = vadd.f32 %v1070, %v1432
        %v1434 = vpop.f32.mrb[0].mxu0
        %1435 = vmatprep.mubr.bf16.mxu0 0
        %1436 = vmatmul.mubr.bf16.gmra.mrb[0].mxu0 %v1010
        %v1437 = vpop.f32.mrb[0].mxu0
        %v1438 = vadd.f32 %v1070, %v1437
        %v1439 = vpop.f32.mrb[0].mxu0
        %v1440 = vpop.f32.mrb[0].mxu0
        %v1441 = vadd.f32 %v1070, %v1440
        %v1442 = vpop.f32.mrb[0].mxu0
        %1443 = vmatprep.mubr.bf16.mxu0 0
        %1444 = vmatmul.mubr.bf16.gmra.mrb[0].mxu0 %v1011
        %v1445 = vpop.f32.mrb[0].mxu0
        %v1446 = vadd.f32 %v1070, %v1445
        %v1447 = vpop.f32.mrb[0].mxu0
        %v1448 = vpop.f32.mrb[0].mxu0
        %v1449 = vadd.f32 %v1070, %v1448
        %v1450 = vpop.f32.mrb[0].mxu0
        %1451 = vmatprep.mubr.bf16.mxu0 0
        %1452 = vmatmul.mubr.bf16.gmra.mrb[0].mxu0 %v1012
        %v1453 = vpop.f32.mrb[0].mxu0
        %v1454 = vadd.f32 %v1070, %v1453
        %v1455 = vpop.f32.mrb[0].mxu0
        %v1456 = vpop.f32.mrb[0].mxu0
        %v1457 = vadd.f32 %v1070, %v1456
        %v1458 = vpop.f32.mrb[0].mxu0
        %1459 = vmatprep.mubr.bf16.mxu0 0
        %1460 = vmatmul.mubr.bf16.gmra.mrb[0].mxu0 %v1013
        %v1461 = vpop.f32.mrb[0].mxu0
        %v1462 = vadd.f32 %v1070, %v1461
        %v1463 = vpop.f32.mrb[0].mxu0
        %v1464 = vpop.f32.mrb[0].mxu0
        %v1465 = vadd.f32 %v1070, %v1464
        %v1466 = vpop.f32.mrb[0].mxu0
        %1467 = vmatprep.mubr.bf16.mxu0 0
        %1468 = vmatmul.mubr.bf16.gmra.mrb[0].mxu0 %v1014
        %v1469 = vpop.f32.mrb[0].mxu0
        %v1470 = vadd.f32 %v1070, %v1469
        %v1471 = vpop.f32.mrb[0].mxu0
        %v1472 = vpop.f32.mrb[0].mxu0
        %v1473 = vadd.f32 %v1070, %v1472
        %v1474 = vpop.f32.mrb[0].mxu0
        %1475 = vmatprep.mubr.bf16.mxu0 0
        %1476 = vmatmul.mubr.bf16.gmra.mrb[0].mxu0 %v1015
        %v1477 = vpop.f32.mrb[0].mxu0
        %v1478 = vadd.f32 %v1070, %v1477
        %v1479 = vpop.f32.mrb[0].mxu0
        %v1480 = vpop.f32.mrb[0].mxu0
        %v1481 = vadd.f32 %v1070, %v1480
        %v1482 = vpop.f32.mrb[0].mxu0
        %1483 = vmatprep.mubr.bf16.mxu0 0
        %1484 = vmatmul.mubr.bf16.gmra.mrb[0].mxu0 %v1016
        %v1485 = vpop.f32.mrb[0].mxu0
        %v1486 = vadd.f32 %v1070, %v1485
        %v1487 = vpop.f32.mrb[0].mxu0
        %v1488 = vpop.f32.mrb[0].mxu0
        %v1489 = vadd.f32 %v1070, %v1488
        %v1490 = vpop.f32.mrb[0].mxu0
        %1491 = vmatprep.mubr.bf16.mxu0 0
        %1492 = vmatmul.mubr.bf16.gmra.mrb[0].mxu0 %v1017
        %v1493 = vpop.f32.mrb[0].mxu0
        %v1494 = vadd.f32 %v1070, %v1493
        %v1495 = vpop.f32.mrb[0].mxu0
        %v1496 = vpop.f32.mrb[0].mxu0
        %v1497 = vadd.f32 %v1070, %v1496
        %v1498 = vpop.f32.mrb[0].mxu0
        %1499 = vmatprep.mubr.bf16.mxu0 0
        %1500 = vmatmul.mubr.bf16.gmra.mrb[0].mxu0 %v1018
        %v1501 = vpop.f32.mrb[0].mxu0
        %v1502 = vadd.f32 %v1070, %v1501
        %v1503 = vpop.f32.mrb[0].mxu0
        %v1504 = vpop.f32.mrb[0].mxu0
        %v1505 = vadd.f32 %v1070, %v1504
        %v1506 = vpop.f32.mrb[0].mxu0
        %1507 = vmatprep.mubr.bf16.mxu0 0
        %1508 = vmatmul.mubr.bf16.gmra.mrb[0].mxu0 %v1019
        %v1509 = vpop.f32.mrb[0].mxu0
        %v1510 = vadd.f32 %v1070, %v1509
        %v1511 = vpop.f32.mrb[0].mxu0
        %v1512 = vpop.f32.mrb[0].mxu0
        %v1513 = vadd.f32 %v1070, %v1512
        %v1514 = vpop.f32.mrb[0].mxu0
        %1515 = vmatprep.mubr.bf16.mxu0 0
        %1516 = vmatmul.mubr.bf16.gmra.mrb[0].mxu0 %v1020
        %v1517 = vpop.f32.mrb[0].mxu0
        %v1518 = vadd.f32 %v1070, %v1517
        %v1519 = vpop.f32.mrb[0].mxu0
        %v1520 = vpop.f32.mrb[0].mxu0
        %v1521 = vadd.f32 %v1070, %v1520
        %v1522 = vpop.f32.mrb[0].mxu0
        %1523 = vmatprep.mubr.bf16.mxu0 0
        %1524 = vmatmul.mubr.bf16.gmra.mrb[0].mxu0 %v1021
        %v1525 = vpop.f32.mrb[0].mxu0
        %v1526 = vadd.f32 %v1070, %v1525
        %v1527 = vpop.f32.mrb[0].mxu0
        %v1528 = vpop.f32.mrb[0].mxu0
        %v1529 = vadd.f32 %v1070, %v1528
        %v1530 = vpop.f32.mrb[0].mxu0
        %1531 = vmatprep.mubr.bf16.mxu0 0
        %1532 = vmatmul.mubr.bf16.gmra.mrb[0].mxu0 %v1022
        %v1533 = vpop.f32.mrb[0].mxu0
        %v1534 = vadd.f32 %v1070, %v1533
        %v1535 = vpop.f32.mrb[0].mxu0
        %v1536 = vpop.f32.mrb[0].mxu0
        %v1537 = vadd.f32 %v1070, %v1536
        %v1538 = vpop.f32.mrb[0].mxu0
        %1539 = vmatprep.mubr.bf16.mxu0 0
        %1540 = vmatmul.mubr.bf16.gmra.mrb[0].mxu0 %v1023
        %v1541 = vpop.f32.mrb[0].mxu0
        %v1542 = vadd.f32 %v1070, %v1541
        %v1543 = vpop.f32.mrb[0].mxu0
        %v1544 = vpop.f32.mrb[0].mxu0
        %v1545 = vadd.f32 %v1070, %v1544
        %v1546 = vpop.f32.mrb[0].mxu0
        %1547 = vmatprep.mubr.bf16.mxu0 0
        %1548 = vmatmul.mubr.bf16.gmra.mrb[0].mxu0 %v1024
        %v1549 = vpop.f32.mrb[0].mxu0
        %v1550 = vadd.f32 %v1070, %v1549
        %v1551 = vpop.f32.mrb[0].mxu0
        %v1552 = vpop.f32.mrb[0].mxu0
        %v1553 = vadd.f32 %v1070, %v1552
        %v1554 = vpop.f32.mrb[0].mxu0
        %1555 = vdwg.mxu0
        %v1556 = vpack.c.bf16 %v1241, %v1237
        %v1557 = vpack.c.bf16 %v1243, %v1239
        %v1558 = vpack.c.bf16 %v1433, %v1430
        %v1559 = vpack.c.bf16 %v1251, %v1247
        %v1560 = vpack.c.bf16 %v1253, %v1249
        %v1561 = vpack.c.bf16 %v1441, %v1438
        %v1562 = vpack.c.bf16 %v1261, %v1257
        %v1563 = vpack.c.bf16 %v1263, %v1259
        %v1564 = vpack.c.bf16 %v1449, %v1446
        %v1565 = vpack.c.bf16 %v1271, %v1267
        %v1566 = vpack.c.bf16 %v1273, %v1269
        %v1567 = vpack.c.bf16 %v1457, %v1454
        %v1568 = vpack.c.bf16 %v1281, %v1277
        %v1569 = vpack.c.bf16 %v1283, %v1279
        %v1570 = vpack.c.bf16 %v1465, %v1462
        %v1571 = vpack.c.bf16 %v1291, %v1287
        %v1572 = vpack.c.bf16 %v1293, %v1289
        %v1573 = vpack.c.bf16 %v1473, %v1470
        %v1574 = vpack.c.bf16 %v1301, %v1297
        %v1575 = vpack.c.bf16 %v1303, %v1299
        %v1576 = vpack.c.bf16 %v1481, %v1478
        %v1577 = vpack.c.bf16 %v1311, %v1307
        %v1578 = vpack.c.bf16 %v1313, %v1309
        %v1579 = vpack.c.bf16 %v1489, %v1486
        %v1580 = vpack.c.bf16 %v1321, %v1317
        %v1581 = vpack.c.bf16 %v1323, %v1319
        %v1582 = vpack.c.bf16 %v1497, %v1494
        %v1583 = vpack.c.bf16 %v1331, %v1327
        %v1584 = vpack.c.bf16 %v1333, %v1329
        %v1585 = vpack.c.bf16 %v1505, %v1502
        %v1586 = vpack.c.bf16 %v1341, %v1337
        %v1587 = vpack.c.bf16 %v1343, %v1339
        %v1588 = vpack.c.bf16 %v1513, %v1510
        %v1589 = vpack.c.bf16 %v1351, %v1347
        %v1590 = vpack.c.bf16 %v1353, %v1349
        %v1591 = vpack.c.bf16 %v1521, %v1518
        %v1592 = vpack.c.bf16 %v1361, %v1357
        %v1593 = vpack.c.bf16 %v1363, %v1359
        %v1594 = vpack.c.bf16 %v1529, %v1526
        %v1595 = vpack.c.bf16 %v1371, %v1367
        %v1596 = vpack.c.bf16 %v1373, %v1369
        %v1597 = vpack.c.bf16 %v1537, %v1534
        %v1598 = vpack.c.bf16 %v1381, %v1377
        %v1599 = vpack.c.bf16 %v1383, %v1379
        %v1600 = vpack.c.bf16 %v1545, %v1542
        %v1601 = vpack.c.bf16 %v1391, %v1387
        %v1602 = vpack.c.bf16 %v1393, %v1389
        %v1603 = vpack.c.bf16 %v1553, %v1550
        %1620 = vrot.lane.b32.xlu0 %v1556, 96
        %v1621 = vpop.permute.xlu0 %1620
        %1622 = vrot.lane.b32.xlu0 %v1559, 96
        %v1623 = vpop.permute.xlu0 %1622
        %1624 = vrot.lane.b32.xlu0 %v1562, 96
        %v1625 = vpop.permute.xlu0 %1624
        %1626 = vrot.lane.b32.xlu0 %v1565, 96
        %v1627 = vpop.permute.xlu0 %1626
        %1628 = vrot.lane.b32.xlu0 %v1568, 96
        %v1629 = vpop.permute.xlu0 %1628
        %1630 = vrot.lane.b32.xlu0 %v1571, 96
        %v1631 = vpop.permute.xlu0 %1630
        %1632 = vrot.lane.b32.xlu0 %v1574, 96
        %v1633 = vpop.permute.xlu0 %1632
        %1634 = vrot.lane.b32.xlu0 %v1577, 96
        %v1635 = vpop.permute.xlu0 %1634
        %1636 = vrot.lane.b32.xlu0 %v1580, 96
        %v1637 = vpop.permute.xlu0 %1636
        %1638 = vrot.lane.b32.xlu0 %v1583, 96
        %v1639 = vpop.permute.xlu0 %1638
        %1640 = vrot.lane.b32.xlu0 %v1586, 96
        %v1641 = vpop.permute.xlu0 %1640
        %1642 = vrot.lane.b32.xlu0 %v1589, 96
        %v1643 = vpop.permute.xlu0 %1642
        %1644 = vrot.lane.b32.xlu0 %v1592, 96
        %v1645 = vpop.permute.xlu0 %1644
        %1646 = vrot.lane.b32.xlu0 %v1595, 96
        %v1647 = vpop.permute.xlu0 %1646
        %1648 = vrot.lane.b32.xlu0 %v1598, 96
        %v1649 = vpop.permute.xlu0 %1648
        %1650 = vrot.lane.b32.xlu0 %v1601, 96
        %v1651 = vpop.permute.xlu0 %1650
        %1652 = vrot.lane.b32.xlu0 %v1556, 64
        %v1653 = vpop.permute.xlu0 %1652
        %1654 = vrot.lane.b32.xlu0 %v1559, 64
        %v1655 = vpop.permute.xlu0 %1654
        %1656 = vrot.lane.b32.xlu0 %v1562, 64
        %v1657 = vpop.permute.xlu0 %1656
        %1658 = vrot.lane.b32.xlu0 %v1565, 64
        %v1659 = vpop.permute.xlu0 %1658
        %1660 = vrot.lane.b32.xlu0 %v1568, 64
        %v1661 = vpop.permute.xlu0 %1660
        %1662 = vrot.lane.b32.xlu0 %v1571, 64
        %v1663 = vpop.permute.xlu0 %1662
        %1664 = vrot.lane.b32.xlu0 %v1574, 64
        %v1665 = vpop.permute.xlu0 %1664
        %1666 = vrot.lane.b32.xlu0 %v1577, 64
        %v1667 = vpop.permute.xlu0 %1666
        %1668 = vrot.lane.b32.xlu0 %v1580, 64
        %v1669 = vpop.permute.xlu0 %1668
        %1670 = vrot.lane.b32.xlu0 %v1583, 64
        %v1671 = vpop.permute.xlu0 %1670
        %1672 = vrot.lane.b32.xlu0 %v1586, 64
        %v1673 = vpop.permute.xlu0 %1672
        %1674 = vrot.lane.b32.xlu0 %v1589, 64
        %v1675 = vpop.permute.xlu0 %1674
        %1676 = vrot.lane.b32.xlu0 %v1592, 64
        %v1677 = vpop.permute.xlu0 %1676
        %1678 = vrot.lane.b32.xlu0 %v1595, 64
        %v1679 = vpop.permute.xlu0 %1678
        %1680 = vrot.lane.b32.xlu0 %v1598, 64
        %v1681 = vpop.permute.xlu0 %1680
        %1682 = vrot.lane.b32.xlu0 %v1601, 64
        %v1683 = vpop.permute.xlu0 %1682
        %1684 = vrot.lane.b32.xlu0 %v1556, 32
        %v1685 = vpop.permute.xlu0 %1684
        %1686 = vrot.lane.b32.xlu0 %v1559, 32
        %v1687 = vpop.permute.xlu0 %1686
        %1688 = vrot.lane.b32.xlu0 %v1562, 32
        %v1689 = vpop.permute.xlu0 %1688
        %1690 = vrot.lane.b32.xlu0 %v1565, 32
        %v1691 = vpop.permute.xlu0 %1690
        %1692 = vrot.lane.b32.xlu0 %v1568, 32
        %v1693 = vpop.permute.xlu0 %1692
        %1694 = vrot.lane.b32.xlu0 %v1571, 32
        %v1695 = vpop.permute.xlu0 %1694
        %1696 = vrot.lane.b32.xlu0 %v1574, 32
        %v1697 = vpop.permute.xlu0 %1696
        %1698 = vrot.lane.b32.xlu0 %v1577, 32
        %v1699 = vpop.permute.xlu0 %1698
        %1700 = vrot.lane.b32.xlu0 %v1580, 32
        %v1701 = vpop.permute.xlu0 %1700
        %1702 = vrot.lane.b32.xlu0 %v1583, 32
        %v1703 = vpop.permute.xlu0 %1702
        %1704 = vrot.lane.b32.xlu0 %v1586, 32
        %v1705 = vpop.permute.xlu0 %1704
        %1706 = vrot.lane.b32.xlu0 %v1589, 32
        %v1707 = vpop.permute.xlu0 %1706
        %1708 = vrot.lane.b32.xlu0 %v1592, 32
        %v1709 = vpop.permute.xlu0 %1708
        %1710 = vrot.lane.b32.xlu0 %v1595, 32
        %v1711 = vpop.permute.xlu0 %1710
        %1712 = vrot.lane.b32.xlu0 %v1598, 32
        %v1713 = vpop.permute.xlu0 %1712
        %1714 = vrot.lane.b32.xlu0 %v1601, 32
        %v1715 = vpop.permute.xlu0 %1714
        %1732 = vrot.lane.b32.xlu0 %v1557, 96
        %v1733 = vpop.permute.xlu0 %1732
        %1734 = vrot.lane.b32.xlu0 %v1560, 96
        %v1735 = vpop.permute.xlu0 %1734
        %1736 = vrot.lane.b32.xlu0 %v1563, 96
        %v1737 = vpop.permute.xlu0 %1736
        %1738 = vrot.lane.b32.xlu0 %v1566, 96
        %v1739 = vpop.permute.xlu0 %1738
        %1740 = vrot.lane.b32.xlu0 %v1569, 96
        %v1741 = vpop.permute.xlu0 %1740
        %1742 = vrot.lane.b32.xlu0 %v1572, 96
        %v1743 = vpop.permute.xlu0 %1742
        %1744 = vrot.lane.b32.xlu0 %v1575, 96
        %v1745 = vpop.permute.xlu0 %1744
        %1746 = vrot.lane.b32.xlu0 %v1578, 96
        %v1747 = vpop.permute.xlu0 %1746
        %1748 = vrot.lane.b32.xlu0 %v1581, 96
        %v1749 = vpop.permute.xlu0 %1748
        %1750 = vrot.lane.b32.xlu0 %v1584, 96
        %v1751 = vpop.permute.xlu0 %1750
        %1752 = vrot.lane.b32.xlu0 %v1587, 96
        %v1753 = vpop.permute.xlu0 %1752
        %1754 = vrot.lane.b32.xlu0 %v1590, 96
        %v1755 = vpop.permute.xlu0 %1754
        %1756 = vrot.lane.b32.xlu0 %v1593, 96
        %v1757 = vpop.permute.xlu0 %1756
        %1758 = vrot.lane.b32.xlu0 %v1596, 96
        %v1759 = vpop.permute.xlu0 %1758
        %1760 = vrot.lane.b32.xlu0 %v1599, 96
        %v1761 = vpop.permute.xlu0 %1760
        %1762 = vrot.lane.b32.xlu0 %v1602, 96
        %v1763 = vpop.permute.xlu0 %1762
        %1764 = vrot.lane.b32.xlu0 %v1557, 64
        %v1765 = vpop.permute.xlu0 %1764
        %1766 = vrot.lane.b32.xlu0 %v1560, 64
        %v1767 = vpop.permute.xlu0 %1766
        %1768 = vrot.lane.b32.xlu0 %v1563, 64
        %v1769 = vpop.permute.xlu0 %1768
        %1770 = vrot.lane.b32.xlu0 %v1566, 64
        %v1771 = vpop.permute.xlu0 %1770
        %1772 = vrot.lane.b32.xlu0 %v1569, 64
        %v1773 = vpop.permute.xlu0 %1772
        %1774 = vrot.lane.b32.xlu0 %v1572, 64
        %v1775 = vpop.permute.xlu0 %1774
        %1776 = vrot.lane.b32.xlu0 %v1575, 64
        %v1777 = vpop.permute.xlu0 %1776
        %1778 = vrot.lane.b32.xlu0 %v1578, 64
        %v1779 = vpop.permute.xlu0 %1778
        %1780 = vrot.lane.b32.xlu0 %v1581, 64
        %v1781 = vpop.permute.xlu0 %1780
        %1782 = vrot.lane.b32.xlu0 %v1584, 64
        %v1783 = vpop.permute.xlu0 %1782
        %1784 = vrot.lane.b32.xlu0 %v1587, 64
        %v1785 = vpop.permute.xlu0 %1784
        %1786 = vrot.lane.b32.xlu0 %v1590, 64
        %v1787 = vpop.permute.xlu0 %1786
        %1788 = vrot.lane.b32.xlu0 %v1593, 64
        %v1789 = vpop.permute.xlu0 %1788
        %1790 = vrot.lane.b32.xlu0 %v1596, 64
        %v1791 = vpop.permute.xlu0 %1790
        %1792 = vrot.lane.b32.xlu0 %v1599, 64
        %v1793 = vpop.permute.xlu0 %1792
        %1794 = vrot.lane.b32.xlu0 %v1602, 64
        %v1795 = vpop.permute.xlu0 %1794
        %1796 = vrot.lane.b32.xlu0 %v1557, 32
        %v1797 = vpop.permute.xlu0 %1796
        %1798 = vrot.lane.b32.xlu0 %v1560, 32
        %v1799 = vpop.permute.xlu0 %1798
        %1800 = vrot.lane.b32.xlu0 %v1563, 32
        %v1801 = vpop.permute.xlu0 %1800
        %1802 = vrot.lane.b32.xlu0 %v1566, 32
        %v1803 = vpop.permute.xlu0 %1802
        %1804 = vrot.lane.b32.xlu0 %v1569, 32
        %v1805 = vpop.permute.xlu0 %1804
        %1806 = vrot.lane.b32.xlu0 %v1572, 32
        %v1807 = vpop.permute.xlu0 %1806
        %1808 = vrot.lane.b32.xlu0 %v1575, 32
        %v1809 = vpop.permute.xlu0 %1808
        %1810 = vrot.lane.b32.xlu0 %v1578, 32
        %v1811 = vpop.permute.xlu0 %1810
        %1812 = vrot.lane.b32.xlu0 %v1581, 32
        %v1813 = vpop.permute.xlu0 %1812
        %1814 = vrot.lane.b32.xlu0 %v1584, 32
        %v1815 = vpop.permute.xlu0 %1814
        %1816 = vrot.lane.b32.xlu0 %v1587, 32
        %v1817 = vpop.permute.xlu0 %1816
        %1818 = vrot.lane.b32.xlu0 %v1590, 32
        %v1819 = vpop.permute.xlu0 %1818
        %1820 = vrot.lane.b32.xlu0 %v1593, 32
        %v1821 = vpop.permute.xlu0 %1820
        %1822 = vrot.lane.b32.xlu0 %v1596, 32
        %v1823 = vpop.permute.xlu0 %1822
        %1824 = vrot.lane.b32.xlu0 %v1599, 32
        %v1825 = vpop.permute.xlu0 %1824
        %1826 = vrot.lane.b32.xlu0 %v1602, 32
        %v1827 = vpop.permute.xlu0 %1826
        %1844 = vrot.lane.b32.xlu0 %v1558, 96
        %v1845 = vpop.permute.xlu0 %1844
        %1846 = vrot.lane.b32.xlu0 %v1561, 96
        %v1847 = vpop.permute.xlu0 %1846
        %1848 = vrot.lane.b32.xlu0 %v1564, 96
        %v1849 = vpop.permute.xlu0 %1848
        %1850 = vrot.lane.b32.xlu0 %v1567, 96
        %v1851 = vpop.permute.xlu0 %1850
        %1852 = vrot.lane.b32.xlu0 %v1570, 96
        %v1853 = vpop.permute.xlu0 %1852
        %1854 = vrot.lane.b32.xlu0 %v1573, 96
        %v1855 = vpop.permute.xlu0 %1854
        %1856 = vrot.lane.b32.xlu0 %v1576, 96
        %v1857 = vpop.permute.xlu0 %1856
        %1858 = vrot.lane.b32.xlu0 %v1579, 96
        %v1859 = vpop.permute.xlu0 %1858
        %1860 = vrot.lane.b32.xlu0 %v1582, 96
        %v1861 = vpop.permute.xlu0 %1860
        %1862 = vrot.lane.b32.xlu0 %v1585, 96
        %v1863 = vpop.permute.xlu0 %1862
        %1864 = vrot.lane.b32.xlu0 %v1588, 96
        %v1865 = vpop.permute.xlu0 %1864
        %1866 = vrot.lane.b32.xlu0 %v1591, 96
        %v1867 = vpop.permute.xlu0 %1866
        %1868 = vrot.lane.b32.xlu0 %v1594, 96
        %v1869 = vpop.permute.xlu0 %1868
        %1870 = vrot.lane.b32.xlu0 %v1597, 96
        %v1871 = vpop.permute.xlu0 %1870
        %1872 = vrot.lane.b32.xlu0 %v1600, 96
        %v1873 = vpop.permute.xlu0 %1872
        %1874 = vrot.lane.b32.xlu0 %v1603, 96
        %v1875 = vpop.permute.xlu0 %1874
        %1892 = vrot.lane.b32.xlu0 %v1558, 64
        %v1893 = vpop.permute.xlu0 %1892
        %1894 = vrot.lane.b32.xlu0 %v1561, 64
        %v1895 = vpop.permute.xlu0 %1894
        %1896 = vrot.lane.b32.xlu0 %v1564, 64
        %v1897 = vpop.permute.xlu0 %1896
        %1898 = vrot.lane.b32.xlu0 %v1567, 64
        %v1899 = vpop.permute.xlu0 %1898
        %1900 = vrot.lane.b32.xlu0 %v1570, 64
        %v1901 = vpop.permute.xlu0 %1900
        %1902 = vrot.lane.b32.xlu0 %v1573, 64
        %v1903 = vpop.permute.xlu0 %1902
        %1904 = vrot.lane.b32.xlu0 %v1576, 64
        %v1905 = vpop.permute.xlu0 %1904
        %1906 = vrot.lane.b32.xlu0 %v1579, 64
        %v1907 = vpop.permute.xlu0 %1906
        %1908 = vrot.lane.b32.xlu0 %v1582, 64
        %v1909 = vpop.permute.xlu0 %1908
        %1910 = vrot.lane.b32.xlu0 %v1585, 64
        %v1911 = vpop.permute.xlu0 %1910
        %1912 = vrot.lane.b32.xlu0 %v1588, 64
        %v1913 = vpop.permute.xlu0 %1912
        %1914 = vrot.lane.b32.xlu0 %v1591, 64
        %v1915 = vpop.permute.xlu0 %1914
        %1916 = vrot.lane.b32.xlu0 %v1594, 64
        %v1917 = vpop.permute.xlu0 %1916
        %1918 = vrot.lane.b32.xlu0 %v1597, 64
        %v1919 = vpop.permute.xlu0 %1918
        %1920 = vrot.lane.b32.xlu0 %v1600, 64
        %v1921 = vpop.permute.xlu0 %1920
        %1922 = vrot.lane.b32.xlu0 %v1603, 64
        %v1923 = vpop.permute.xlu0 %1922
        %1940 = vrot.lane.b32.xlu0 %v1558, 32
        %v1941 = vpop.permute.xlu0 %1940
        %1942 = vrot.lane.b32.xlu0 %v1561, 32
        %v1943 = vpop.permute.xlu0 %1942
        %1944 = vrot.lane.b32.xlu0 %v1564, 32
        %v1945 = vpop.permute.xlu0 %1944
        %1946 = vrot.lane.b32.xlu0 %v1567, 32
        %v1947 = vpop.permute.xlu0 %1946
        %1948 = vrot.lane.b32.xlu0 %v1570, 32
        %v1949 = vpop.permute.xlu0 %1948
        %1950 = vrot.lane.b32.xlu0 %v1573, 32
        %v1951 = vpop.permute.xlu0 %1950
        %1952 = vrot.lane.b32.xlu0 %v1576, 32
        %v1953 = vpop.permute.xlu0 %1952
        %1954 = vrot.lane.b32.xlu0 %v1579, 32
        %v1955 = vpop.permute.xlu0 %1954
        %1956 = vrot.lane.b32.xlu0 %v1582, 32
        %v1957 = vpop.permute.xlu0 %1956
        %1958 = vrot.lane.b32.xlu0 %v1585, 32
        %v1959 = vpop.permute.xlu0 %1958
        %1960 = vrot.lane.b32.xlu0 %v1588, 32
        %v1961 = vpop.permute.xlu0 %1960
        %1962 = vrot.lane.b32.xlu0 %v1591, 32
        %v1963 = vpop.permute.xlu0 %1962
        %1964 = vrot.lane.b32.xlu0 %v1594, 32
        %v1965 = vpop.permute.xlu0 %1964
        %1966 = vrot.lane.b32.xlu0 %v1597, 32
        %v1967 = vpop.permute.xlu0 %1966
        %1968 = vrot.lane.b32.xlu0 %v1600, 32
        %v1969 = vpop.permute.xlu0 %1968
        %1970 = vrot.lane.b32.xlu0 %v1603, 32
        %v1971 = vpop.permute.xlu0 %1970
        %vm1988 = vcmask 261120
        %v1990 = vsel %vm1988, %v1556, 0
        %v1993 = vsel %vm1988, %v1559, 0
        %v1996 = vsel %vm1988, %v1557, 0
        %v1999 = vsel %vm1988, %v1560, 0
        %2001 = vmatprep.subr.bf16.mxu0 0
        %2002 = vmatpush1.bf16.xpose.msra.mxu0 %v1996
        %2003 = vmatprep.subr.bf16.mxu0 0
        %2004 = vmatpush1.bf16.xpose.msra.mxu0 %v1999
        %2005 = vmatprep.subr.bf16.mxu0 0
        %2006 = vmatpush1.bf16.xpose.msra.mxu0 0
        %2007 = vmatprep.subr.bf16.mxu0 0
        %2008 = vmatpush1.bf16.xpose.msra.mxu0 0
        %2009 = vmatprep.subr.bf16.mxu0 0
        %2010 = vmatpush1.bf16.xpose.msra.mxu0 0
        %2011 = vmatprep.subr.bf16.mxu0 0
        %2012 = vmatpush1.bf16.xpose.msra.mxu0 0
        %2013 = vmatprep.subr.bf16.mxu0 0
        %2014 = vmatpush1.bf16.xpose.msra.mxu0 0
        %2015 = vmatprep.subr.bf16.mxu0 0
        %2016 = vmatpush1.bf16.xpose.msra.mxu0 0
        %2017 = vmatprep.subr.bf16.mxu0 0
        %2018 = vmatpush1.bf16.xpose.msra.mxu0 0
        %2019 = vmatprep.subr.bf16.mxu0 0
        %2020 = vmatpush1.bf16.xpose.msra.mxu0 0
        %2021 = vmatprep.subr.bf16.mxu0 0
        %2022 = vmatpush1.bf16.xpose.msra.mxu0 0
        %2023 = vmatprep.subr.bf16.mxu0 0
        %2024 = vmatpush1.bf16.xpose.msra.mxu0 0
        %2025 = vmatprep.subr.bf16.mxu0 0
        %2026 = vmatpush1.bf16.xpose.msra.mxu0 0
        %2027 = vmatprep.subr.bf16.mxu0 0
        %2028 = vmatpush1.bf16.xpose.msra.mxu0 0
        %2029 = vmatprep.subr.bf16.mxu0 0
        %2030 = vmatpush1.bf16.xpose.msra.mxu0 0
        %2031 = vmatprep.subr.bf16.mxu0 0
        %2032 = vmatpush1.bf16.xpose.msra.mxu0 0
        %2033 = vmatprep.mubr.bf16.mxu0 0
        %2034 = vmatmul.mubr.bf16.gmra.mrb[0].mxu0 %v1990
        %v2035 = vpop.f32.mrb[0].mxu0
        %v2036 = vadd.f32 0.0, %v2035
        %v2037 = vpop.f32.mrb[0].mxu0
        %v2038 = vpop.f32.mrb[0].mxu0
        %v2039 = vadd.f32 0.0, %v2038
        %v2040 = vpop.f32.mrb[0].mxu0
        %2041 = vmatprep.mubr.bf16.mxu0 0
        %2042 = vmatmul.mubr.bf16.gmra.mrb[0].mxu0 %v1993
        %v2043 = vpop.f32.mrb[0].mxu0
        %v2044 = vadd.f32 0.0, %v2043
        %v2045 = vpop.f32.mrb[0].mxu0
        %v2046 = vpop.f32.mrb[0].mxu0
        %v2047 = vadd.f32 0.0, %v2046
        %v2048 = vpop.f32.mrb[0].mxu0
        %2049 = vdwg.mxu0
        %v2051 = vsel %vm1988, %v1562, 0
        %v2054 = vsel %vm1988, %v1565, 0
        %v2057 = vsel %vm1988, %v1563, 0
        %v2060 = vsel %vm1988, %v1566, 0
        %2062 = vmatprep.subr.bf16.mxu0 0
        %2063 = vmatpush1.bf16.xpose.msra.mxu0 %v2057
        %2064 = vmatprep.subr.bf16.mxu0 0
        %2065 = vmatpush1.bf16.xpose.msra.mxu0 %v2060
        %2066 = vmatprep.subr.bf16.mxu0 0
        %2067 = vmatpush1.bf16.xpose.msra.mxu0 0
        %2068 = vmatprep.subr.bf16.mxu0 0
        %2069 = vmatpush1.bf16.xpose.msra.mxu0 0
        %2070 = vmatprep.subr.bf16.mxu0 0
        %2071 = vmatpush1.bf16.xpose.msra.mxu0 0
        %2072 = vmatprep.subr.bf16.mxu0 0
        %2073 = vmatpush1.bf16.xpose.msra.mxu0 0
        %2074 = vmatprep.subr.bf16.mxu0 0
        %2075 = vmatpush1.bf16.xpose.msra.mxu0 0
        %2076 = vmatprep.subr.bf16.mxu0 0
        %2077 = vmatpush1.bf16.xpose.msra.mxu0 0
        %2078 = vmatprep.subr.bf16.mxu0 0
        %2079 = vmatpush1.bf16.xpose.msra.mxu0 0
        %2080 = vmatprep.subr.bf16.mxu0 0
        %2081 = vmatpush1.bf16.xpose.msra.mxu0 0
        %2082 = vmatprep.subr.bf16.mxu0 0
        %2083 = vmatpush1.bf16.xpose.msra.mxu0 0
        %2084 = vmatprep.subr.bf16.mxu0 0
        %2085 = vmatpush1.bf16.xpose.msra.mxu0 0
        %2086 = vmatprep.subr.bf16.mxu0 0
        %2087 = vmatpush1.bf16.xpose.msra.mxu0 0
        %2088 = vmatprep.subr.bf16.mxu0 0
        %2089 = vmatpush1.bf16.xpose.msra.mxu0 0
        %2090 = vmatprep.subr.bf16.mxu0 0
        %2091 = vmatpush1.bf16.xpose.msra.mxu0 0
        %2092 = vmatprep.subr.bf16.mxu0 0
        %2093 = vmatpush1.bf16.xpose.msra.mxu0 0
        %2094 = vmatprep.mubr.bf16.mxu0 0
        %2095 = vmatmul.mubr.bf16.gmra.mrb[0].mxu0 %v2051
        %v2096 = vpop.f32.mrb[0].mxu0
        %v2097 = vadd.f32 0.0, %v2096
        %v2098 = vpop.f32.mrb[0].mxu0
        %v2099 = vpop.f32.mrb[0].mxu0
        %v2100 = vadd.f32 0.0, %v2099
        %v2101 = vpop.f32.mrb[0].mxu0
        %2102 = vmatprep.mubr.bf16.mxu0 0
        %2103 = vmatmul.mubr.bf16.gmra.mrb[0].mxu0 %v2054
        %v2104 = vpop.f32.mrb[0].mxu0
        %v2105 = vadd.f32 0.0, %v2104
        %v2106 = vpop.f32.mrb[0].mxu0
        %v2107 = vpop.f32.mrb[0].mxu0
        %v2108 = vadd.f32 0.0, %v2107
        %v2109 = vpop.f32.mrb[0].mxu0
        %2110 = vdwg.mxu0
        %v2112 = vsel %vm1988, %v1568, 0
        %v2115 = vsel %vm1988, %v1571, 0
        %v2118 = vsel %vm1988, %v1569, 0
        %v2121 = vsel %vm1988, %v1572, 0
        %2123 = vmatprep.subr.bf16.mxu0 0
        %2124 = vmatpush1.bf16.xpose.msra.mxu0 %v2118
        %2125 = vmatprep.subr.bf16.mxu0 0
        %2126 = vmatpush1.bf16.xpose.msra.mxu0 %v2121
        %2127 = vmatprep.subr.bf16.mxu0 0
        %2128 = vmatpush1.bf16.xpose.msra.mxu0 0
        %2129 = vmatprep.subr.bf16.mxu0 0
        %2130 = vmatpush1.bf16.xpose.msra.mxu0 0
        %2131 = vmatprep.subr.bf16.mxu0 0
        %2132 = vmatpush1.bf16.xpose.msra.mxu0 0
        %2133 = vmatprep.subr.bf16.mxu0 0
        %2134 = vmatpush1.bf16.xpose.msra.mxu0 0
        %2135 = vmatprep.subr.bf16.mxu0 0
        %2136 = vmatpush1.bf16.xpose.msra.mxu0 0
        %2137 = vmatprep.subr.bf16.mxu0 0
        %2138 = vmatpush1.bf16.xpose.msra.mxu0 0
        %2139 = vmatprep.subr.bf16.mxu0 0
        %2140 = vmatpush1.bf16.xpose.msra.mxu0 0
        %2141 = vmatprep.subr.bf16.mxu0 0
        %2142 = vmatpush1.bf16.xpose.msra.mxu0 0
        %2143 = vmatprep.subr.bf16.mxu0 0
        %2144 = vmatpush1.bf16.xpose.msra.mxu0 0
        %2145 = vmatprep.subr.bf16.mxu0 0
        %2146 = vmatpush1.bf16.xpose.msra.mxu0 0
        %2147 = vmatprep.subr.bf16.mxu0 0
        %2148 = vmatpush1.bf16.xpose.msra.mxu0 0
        %2149 = vmatprep.subr.bf16.mxu0 0
        %2150 = vmatpush1.bf16.xpose.msra.mxu0 0
        %2151 = vmatprep.subr.bf16.mxu0 0
        %2152 = vmatpush1.bf16.xpose.msra.mxu0 0
        %2153 = vmatprep.subr.bf16.mxu0 0
        %2154 = vmatpush1.bf16.xpose.msra.mxu0 0
        %2155 = vmatprep.mubr.bf16.mxu0 0
        %2156 = vmatmul.mubr.bf16.gmra.mrb[0].mxu0 %v2112
        %v2157 = vpop.f32.mrb[0].mxu0
        %v2158 = vadd.f32 0.0, %v2157
        %v2159 = vpop.f32.mrb[0].mxu0
        %v2160 = vpop.f32.mrb[0].mxu0
        %v2161 = vadd.f32 0.0, %v2160
        %v2162 = vpop.f32.mrb[0].mxu0
        %2163 = vmatprep.mubr.bf16.mxu0 0
        %2164 = vmatmul.mubr.bf16.gmra.mrb[0].mxu0 %v2115
        %v2165 = vpop.f32.mrb[0].mxu0
        %v2166 = vadd.f32 0.0, %v2165
        %v2167 = vpop.f32.mrb[0].mxu0
        %v2168 = vpop.f32.mrb[0].mxu0
        %v2169 = vadd.f32 0.0, %v2168
        %v2170 = vpop.f32.mrb[0].mxu0
        %2171 = vdwg.mxu0
        %v2173 = vsel %vm1988, %v1574, 0
        %v2176 = vsel %vm1988, %v1577, 0
        %v2179 = vsel %vm1988, %v1575, 0
        %v2182 = vsel %vm1988, %v1578, 0
        %2184 = vmatprep.subr.bf16.mxu0 0
        %2185 = vmatpush1.bf16.xpose.msra.mxu0 %v2179
        %2186 = vmatprep.subr.bf16.mxu0 0
        %2187 = vmatpush1.bf16.xpose.msra.mxu0 %v2182
        %2188 = vmatprep.subr.bf16.mxu0 0
        %2189 = vmatpush1.bf16.xpose.msra.mxu0 0
        %2190 = vmatprep.subr.bf16.mxu0 0
        %2191 = vmatpush1.bf16.xpose.msra.mxu0 0
        %2192 = vmatprep.subr.bf16.mxu0 0
        %2193 = vmatpush1.bf16.xpose.msra.mxu0 0
        %2194 = vmatprep.subr.bf16.mxu0 0
        %2195 = vmatpush1.bf16.xpose.msra.mxu0 0
        %2196 = vmatprep.subr.bf16.mxu0 0
        %2197 = vmatpush1.bf16.xpose.msra.mxu0 0
        %2198 = vmatprep.subr.bf16.mxu0 0
        %2199 = vmatpush1.bf16.xpose.msra.mxu0 0
        %2200 = vmatprep.subr.bf16.mxu0 0
        %2201 = vmatpush1.bf16.xpose.msra.mxu0 0
        %2202 = vmatprep.subr.bf16.mxu0 0
        %2203 = vmatpush1.bf16.xpose.msra.mxu0 0
        %2204 = vmatprep.subr.bf16.mxu0 0
        %2205 = vmatpush1.bf16.xpose.msra.mxu0 0
        %2206 = vmatprep.subr.bf16.mxu0 0
        %2207 = vmatpush1.bf16.xpose.msra.mxu0 0
        %2208 = vmatprep.subr.bf16.mxu0 0
        %2209 = vmatpush1.bf16.xpose.msra.mxu0 0
        %2210 = vmatprep.subr.bf16.mxu0 0
        %2211 = vmatpush1.bf16.xpose.msra.mxu0 0
        %2212 = vmatprep.subr.bf16.mxu0 0
        %2213 = vmatpush1.bf16.xpose.msra.mxu0 0
        %2214 = vmatprep.subr.bf16.mxu0 0
        %2215 = vmatpush1.bf16.xpose.msra.mxu0 0
        %2216 = vmatprep.mubr.bf16.mxu0 0
        %2217 = vmatmul.mubr.bf16.gmra.mrb[0].mxu0 %v2173
        %v2218 = vpop.f32.mrb[0].mxu0
        %v2219 = vadd.f32 0.0, %v2218
        %v2220 = vpop.f32.mrb[0].mxu0
        %v2221 = vpop.f32.mrb[0].mxu0
        %v2222 = vadd.f32 0.0, %v2221
        %v2223 = vpop.f32.mrb[0].mxu0
        %2224 = vmatprep.mubr.bf16.mxu0 0
        %2225 = vmatmul.mubr.bf16.gmra.mrb[0].mxu0 %v2176
        %v2226 = vpop.f32.mrb[0].mxu0
        %v2227 = vadd.f32 0.0, %v2226
        %v2228 = vpop.f32.mrb[0].mxu0
        %v2229 = vpop.f32.mrb[0].mxu0
        %v2230 = vadd.f32 0.0, %v2229
        %v2231 = vpop.f32.mrb[0].mxu0
        %2232 = vdwg.mxu0
        %v2234 = vsel %vm1988, %v1580, 0
        %v2237 = vsel %vm1988, %v1583, 0
        %v2240 = vsel %vm1988, %v1581, 0
        %v2243 = vsel %vm1988, %v1584, 0
        %2245 = vmatprep.subr.bf16.mxu0 0
        %2246 = vmatpush1.bf16.xpose.msra.mxu0 %v2240
        %2247 = vmatprep.subr.bf16.mxu0 0
        %2248 = vmatpush1.bf16.xpose.msra.mxu0 %v2243
        %2249 = vmatprep.subr.bf16.mxu0 0
        %2250 = vmatpush1.bf16.xpose.msra.mxu0 0
        %2251 = vmatprep.subr.bf16.mxu0 0
        %2252 = vmatpush1.bf16.xpose.msra.mxu0 0
        %2253 = vmatprep.subr.bf16.mxu0 0
        %2254 = vmatpush1.bf16.xpose.msra.mxu0 0
        %2255 = vmatprep.subr.bf16.mxu0 0
        %2256 = vmatpush1.bf16.xpose.msra.mxu0 0
        %2257 = vmatprep.subr.bf16.mxu0 0
        %2258 = vmatpush1.bf16.xpose.msra.mxu0 0
        %2259 = vmatprep.subr.bf16.mxu0 0
        %2260 = vmatpush1.bf16.xpose.msra.mxu0 0
        %2261 = vmatprep.subr.bf16.mxu0 0
        %2262 = vmatpush1.bf16.xpose.msra.mxu0 0
        %2263 = vmatprep.subr.bf16.mxu0 0
        %2264 = vmatpush1.bf16.xpose.msra.mxu0 0
        %2265 = vmatprep.subr.bf16.mxu0 0
        %2266 = vmatpush1.bf16.xpose.msra.mxu0 0
        %2267 = vmatprep.subr.bf16.mxu0 0
        %2268 = vmatpush1.bf16.xpose.msra.mxu0 0
        %2269 = vmatprep.subr.bf16.mxu0 0
        %2270 = vmatpush1.bf16.xpose.msra.mxu0 0
        %2271 = vmatprep.subr.bf16.mxu0 0
        %2272 = vmatpush1.bf16.xpose.msra.mxu0 0
        %2273 = vmatprep.subr.bf16.mxu0 0
        %2274 = vmatpush1.bf16.xpose.msra.mxu0 0
        %2275 = vmatprep.subr.bf16.mxu0 0
        %2276 = vmatpush1.bf16.xpose.msra.mxu0 0
        %2277 = vmatprep.mubr.bf16.mxu0 0
        %2278 = vmatmul.mubr.bf16.gmra.mrb[0].mxu0 %v2234
        %v2279 = vpop.f32.mrb[0].mxu0
        %v2280 = vadd.f32 0.0, %v2279
        %v2281 = vpop.f32.mrb[0].mxu0
        %v2282 = vpop.f32.mrb[0].mxu0
        %v2283 = vadd.f32 0.0, %v2282
        %v2284 = vpop.f32.mrb[0].mxu0
        %2285 = vmatprep.mubr.bf16.mxu0 0
        %2286 = vmatmul.mubr.bf16.gmra.mrb[0].mxu0 %v2237
        %v2287 = vpop.f32.mrb[0].mxu0
        %v2288 = vadd.f32 0.0, %v2287
        %v2289 = vpop.f32.mrb[0].mxu0
        %v2290 = vpop.f32.mrb[0].mxu0
        %v2291 = vadd.f32 0.0, %v2290
        %v2292 = vpop.f32.mrb[0].mxu0
        %2293 = vdwg.mxu0
        %v2295 = vsel %vm1988, %v1586, 0
        %v2298 = vsel %vm1988, %v1589, 0
        %v2301 = vsel %vm1988, %v1587, 0
        %v2304 = vsel %vm1988, %v1590, 0
        %2306 = vmatprep.subr.bf16.mxu0 0
        %2307 = vmatpush1.bf16.xpose.msra.mxu0 %v2301
        %2308 = vmatprep.subr.bf16.mxu0 0
        %2309 = vmatpush1.bf16.xpose.msra.mxu0 %v2304
        %2310 = vmatprep.subr.bf16.mxu0 0
        %2311 = vmatpush1.bf16.xpose.msra.mxu0 0
        %2312 = vmatprep.subr.bf16.mxu0 0
        %2313 = vmatpush1.bf16.xpose.msra.mxu0 0
        %2314 = vmatprep.subr.bf16.mxu0 0
        %2315 = vmatpush1.bf16.xpose.msra.mxu0 0
        %2316 = vmatprep.subr.bf16.mxu0 0
        %2317 = vmatpush1.bf16.xpose.msra.mxu0 0
        %2318 = vmatprep.subr.bf16.mxu0 0
        %2319 = vmatpush1.bf16.xpose.msra.mxu0 0
        %2320 = vmatprep.subr.bf16.mxu0 0
        %2321 = vmatpush1.bf16.xpose.msra.mxu0 0
        %2322 = vmatprep.subr.bf16.mxu0 0
        %2323 = vmatpush1.bf16.xpose.msra.mxu0 0
        %2324 = vmatprep.subr.bf16.mxu0 0
        %2325 = vmatpush1.bf16.xpose.msra.mxu0 0
        %2326 = vmatprep.subr.bf16.mxu0 0
        %2327 = vmatpush1.bf16.xpose.msra.mxu0 0
        %2328 = vmatprep.subr.bf16.mxu0 0
        %2329 = vmatpush1.bf16.xpose.msra.mxu0 0
        %2330 = vmatprep.subr.bf16.mxu0 0
        %2331 = vmatpush1.bf16.xpose.msra.mxu0 0
        %2332 = vmatprep.subr.bf16.mxu0 0
        %2333 = vmatpush1.bf16.xpose.msra.mxu0 0
        %2334 = vmatprep.subr.bf16.mxu0 0
        %2335 = vmatpush1.bf16.xpose.msra.mxu0 0
        %2336 = vmatprep.subr.bf16.mxu0 0
        %2337 = vmatpush1.bf16.xpose.msra.mxu0 0
        %2338 = vmatprep.mubr.bf16.mxu0 0
        %2339 = vmatmul.mubr.bf16.gmra.mrb[0].mxu0 %v2295
        %v2340 = vpop.f32.mrb[0].mxu0
        %v2341 = vadd.f32 0.0, %v2340
        %v2342 = vpop.f32.mrb[0].mxu0
        %v2343 = vpop.f32.mrb[0].mxu0
        %v2344 = vadd.f32 0.0, %v2343
        %v2345 = vpop.f32.mrb[0].mxu0
        %2346 = vmatprep.mubr.bf16.mxu0 0
        %2347 = vmatmul.mubr.bf16.gmra.mrb[0].mxu0 %v2298
        %v2348 = vpop.f32.mrb[0].mxu0
        %v2349 = vadd.f32 0.0, %v2348
        %v2350 = vpop.f32.mrb[0].mxu0
        %v2351 = vpop.f32.mrb[0].mxu0
        %v2352 = vadd.f32 0.0, %v2351
        %v2353 = vpop.f32.mrb[0].mxu0
        %2354 = vdwg.mxu0
        %v2356 = vsel %vm1988, %v1592, 0
        %v2359 = vsel %vm1988, %v1595, 0
        %v2362 = vsel %vm1988, %v1593, 0
        %v2365 = vsel %vm1988, %v1596, 0
        %2367 = vmatprep.subr.bf16.mxu0 0
        %2368 = vmatpush1.bf16.xpose.msra.mxu0 %v2362
        %2369 = vmatprep.subr.bf16.mxu0 0
        %2370 = vmatpush1.bf16.xpose.msra.mxu0 %v2365
        %2371 = vmatprep.subr.bf16.mxu0 0
        %2372 = vmatpush1.bf16.xpose.msra.mxu0 0
        %2373 = vmatprep.subr.bf16.mxu0 0
        %2374 = vmatpush1.bf16.xpose.msra.mxu0 0
        %2375 = vmatprep.subr.bf16.mxu0 0
        %2376 = vmatpush1.bf16.xpose.msra.mxu0 0
        %2377 = vmatprep.subr.bf16.mxu0 0
        %2378 = vmatpush1.bf16.xpose.msra.mxu0 0
        %2379 = vmatprep.subr.bf16.mxu0 0
        %2380 = vmatpush1.bf16.xpose.msra.mxu0 0
        %2381 = vmatprep.subr.bf16.mxu0 0
        %2382 = vmatpush1.bf16.xpose.msra.mxu0 0
        %2383 = vmatprep.subr.bf16.mxu0 0
        %2384 = vmatpush1.bf16.xpose.msra.mxu0 0
        %2385 = vmatprep.subr.bf16.mxu0 0
        %2386 = vmatpush1.bf16.xpose.msra.mxu0 0
        %2387 = vmatprep.subr.bf16.mxu0 0
        %2388 = vmatpush1.bf16.xpose.msra.mxu0 0
        %2389 = vmatprep.subr.bf16.mxu0 0
        %2390 = vmatpush1.bf16.xpose.msra.mxu0 0
        %2391 = vmatprep.subr.bf16.mxu0 0
        %2392 = vmatpush1.bf16.xpose.msra.mxu0 0
        %2393 = vmatprep.subr.bf16.mxu0 0
        %2394 = vmatpush1.bf16.xpose.msra.mxu0 0
        %2395 = vmatprep.subr.bf16.mxu0 0
        %2396 = vmatpush1.bf16.xpose.msra.mxu0 0
        %2397 = vmatprep.subr.bf16.mxu0 0
        %2398 = vmatpush1.bf16.xpose.msra.mxu0 0
        %2399 = vmatprep.mubr.bf16.mxu0 0
        %2400 = vmatmul.mubr.bf16.gmra.mrb[0].mxu0 %v2356
        %v2401 = vpop.f32.mrb[0].mxu0
        %v2402 = vadd.f32 0.0, %v2401
        %v2403 = vpop.f32.mrb[0].mxu0
        %v2404 = vpop.f32.mrb[0].mxu0
        %v2405 = vadd.f32 0.0, %v2404
        %v2406 = vpop.f32.mrb[0].mxu0
        %2407 = vmatprep.mubr.bf16.mxu0 0
        %2408 = vmatmul.mubr.bf16.gmra.mrb[0].mxu0 %v2359
        %v2409 = vpop.f32.mrb[0].mxu0
        %v2410 = vadd.f32 0.0, %v2409
        %v2411 = vpop.f32.mrb[0].mxu0
        %v2412 = vpop.f32.mrb[0].mxu0
        %v2413 = vadd.f32 0.0, %v2412
        %v2414 = vpop.f32.mrb[0].mxu0
        %2415 = vdwg.mxu0
        %v2417 = vsel %vm1988, %v1598, 0
        %v2420 = vsel %vm1988, %v1601, 0
        %v2423 = vsel %vm1988, %v1599, 0
        %v2426 = vsel %vm1988, %v1602, 0
        %2428 = vmatprep.subr.bf16.mxu0 0
        %2429 = vmatpush1.bf16.xpose.msra.mxu0 %v2423
        %2430 = vmatprep.subr.bf16.mxu0 0
        %2431 = vmatpush1.bf16.xpose.msra.mxu0 %v2426
        %2432 = vmatprep.subr.bf16.mxu0 0
        %2433 = vmatpush1.bf16.xpose.msra.mxu0 0
        %2434 = vmatprep.subr.bf16.mxu0 0
        %2435 = vmatpush1.bf16.xpose.msra.mxu0 0
        %2436 = vmatprep.subr.bf16.mxu0 0
        %2437 = vmatpush1.bf16.xpose.msra.mxu0 0
        %2438 = vmatprep.subr.bf16.mxu0 0
        %2439 = vmatpush1.bf16.xpose.msra.mxu0 0
        %2440 = vmatprep.subr.bf16.mxu0 0
        %2441 = vmatpush1.bf16.xpose.msra.mxu0 0
        %2442 = vmatprep.subr.bf16.mxu0 0
        %2443 = vmatpush1.bf16.xpose.msra.mxu0 0
        %2444 = vmatprep.subr.bf16.mxu0 0
        %2445 = vmatpush1.bf16.xpose.msra.mxu0 0
        %2446 = vmatprep.subr.bf16.mxu0 0
        %2447 = vmatpush1.bf16.xpose.msra.mxu0 0
        %2448 = vmatprep.subr.bf16.mxu0 0
        %2449 = vmatpush1.bf16.xpose.msra.mxu0 0
        %2450 = vmatprep.subr.bf16.mxu0 0
        %2451 = vmatpush1.bf16.xpose.msra.mxu0 0
        %2452 = vmatprep.subr.bf16.mxu0 0
        %2453 = vmatpush1.bf16.xpose.msra.mxu0 0
        %2454 = vmatprep.subr.bf16.mxu0 0
        %2455 = vmatpush1.bf16.xpose.msra.mxu0 0
        %2456 = vmatprep.subr.bf16.mxu0 0
        %2457 = vmatpush1.bf16.xpose.msra.mxu0 0
        %2458 = vmatprep.subr.bf16.mxu0 0
        %2459 = vmatpush1.bf16.xpose.msra.mxu0 0
        %2460 = vmatprep.mubr.bf16.mxu0 0
        %2461 = vmatmul.mubr.bf16.gmra.mrb[0].mxu0 %v2417
        %v2462 = vpop.f32.mrb[0].mxu0
        %v2463 = vadd.f32 0.0, %v2462
        %v2464 = vpop.f32.mrb[0].mxu0
        %v2465 = vpop.f32.mrb[0].mxu0
        %v2466 = vadd.f32 0.0, %v2465
        %v2467 = vpop.f32.mrb[0].mxu0
        %2468 = vmatprep.mubr.bf16.mxu0 0
        %2469 = vmatmul.mubr.bf16.gmra.mrb[0].mxu0 %v2420
        %v2470 = vpop.f32.mrb[0].mxu0
        %v2471 = vadd.f32 0.0, %v2470
        %v2472 = vpop.f32.mrb[0].mxu0
        %v2473 = vpop.f32.mrb[0].mxu0
        %v2474 = vadd.f32 0.0, %v2473
        %v2475 = vpop.f32.mrb[0].mxu0
        %2476 = vdwg.mxu0
        %v2478 = vsel %vm1988, %v1621, 0
        %v2481 = vsel %vm1988, %v1623, 0
        %v2484 = vsel %vm1988, %v1733, 0
        %v2487 = vsel %vm1988, %v1735, 0
        %2489 = vmatprep.subr.bf16.mxu0 0
        %2490 = vmatpush1.bf16.xpose.msra.mxu0 %v2484
        %2491 = vmatprep.subr.bf16.mxu0 0
        %2492 = vmatpush1.bf16.xpose.msra.mxu0 %v2487
        %2493 = vmatprep.subr.bf16.mxu0 0
        %2494 = vmatpush1.bf16.xpose.msra.mxu0 0
        %2495 = vmatprep.subr.bf16.mxu0 0
        %2496 = vmatpush1.bf16.xpose.msra.mxu0 0
        %2497 = vmatprep.subr.bf16.mxu0 0
        %2498 = vmatpush1.bf16.xpose.msra.mxu0 0
        %2499 = vmatprep.subr.bf16.mxu0 0
        %2500 = vmatpush1.bf16.xpose.msra.mxu0 0
        %2501 = vmatprep.subr.bf16.mxu0 0
        %2502 = vmatpush1.bf16.xpose.msra.mxu0 0
        %2503 = vmatprep.subr.bf16.mxu0 0
        %2504 = vmatpush1.bf16.xpose.msra.mxu0 0
        %2505 = vmatprep.subr.bf16.mxu0 0
        %2506 = vmatpush1.bf16.xpose.msra.mxu0 0
        %2507 = vmatprep.subr.bf16.mxu0 0
        %2508 = vmatpush1.bf16.xpose.msra.mxu0 0
        %2509 = vmatprep.subr.bf16.mxu0 0
        %2510 = vmatpush1.bf16.xpose.msra.mxu0 0
        %2511 = vmatprep.subr.bf16.mxu0 0
        %2512 = vmatpush1.bf16.xpose.msra.mxu0 0
        %2513 = vmatprep.subr.bf16.mxu0 0
        %2514 = vmatpush1.bf16.xpose.msra.mxu0 0
        %2515 = vmatprep.subr.bf16.mxu0 0
        %2516 = vmatpush1.bf16.xpose.msra.mxu0 0
        %2517 = vmatprep.subr.bf16.mxu0 0
        %2518 = vmatpush1.bf16.xpose.msra.mxu0 0
        %2519 = vmatprep.subr.bf16.mxu0 0
        %2520 = vmatpush1.bf16.xpose.msra.mxu0 0
        %2521 = vmatprep.mubr.bf16.mxu0 0
        %2522 = vmatmul.mubr.bf16.gmra.mrb[0].mxu0 %v2478
        %v2523 = vpop.f32.mrb[0].mxu0
        %v2524 = vadd.f32 0.0, %v2523
        %v2525 = vpop.f32.mrb[0].mxu0
        %v2526 = vpop.f32.mrb[0].mxu0
        %v2527 = vadd.f32 0.0, %v2526
        %v2528 = vpop.f32.mrb[0].mxu0
        %2529 = vmatprep.mubr.bf16.mxu0 0
        %2530 = vmatmul.mubr.bf16.gmra.mrb[0].mxu0 %v2481
        %v2531 = vpop.f32.mrb[0].mxu0
        %v2532 = vadd.f32 0.0, %v2531
        %v2533 = vpop.f32.mrb[0].mxu0
        %v2534 = vpop.f32.mrb[0].mxu0
        %v2535 = vadd.f32 0.0, %v2534
        %v2536 = vpop.f32.mrb[0].mxu0
        %2537 = vdwg.mxu0
        %v2539 = vsel %vm1988, %v1625, 0
        %v2542 = vsel %vm1988, %v1627, 0
        %v2545 = vsel %vm1988, %v1737, 0
        %v2548 = vsel %vm1988, %v1739, 0
        %2550 = vmatprep.subr.bf16.mxu0 0
        %2551 = vmatpush1.bf16.xpose.msra.mxu0 %v2545
        %2552 = vmatprep.subr.bf16.mxu0 0
        %2553 = vmatpush1.bf16.xpose.msra.mxu0 %v2548
        %2554 = vmatprep.subr.bf16.mxu0 0
        %2555 = vmatpush1.bf16.xpose.msra.mxu0 0
        %2556 = vmatprep.subr.bf16.mxu0 0
        %2557 = vmatpush1.bf16.xpose.msra.mxu0 0
        %2558 = vmatprep.subr.bf16.mxu0 0
        %2559 = vmatpush1.bf16.xpose.msra.mxu0 0
        %2560 = vmatprep.subr.bf16.mxu0 0
        %2561 = vmatpush1.bf16.xpose.msra.mxu0 0
        %2562 = vmatprep.subr.bf16.mxu0 0
        %2563 = vmatpush1.bf16.xpose.msra.mxu0 0
        %2564 = vmatprep.subr.bf16.mxu0 0
        %2565 = vmatpush1.bf16.xpose.msra.mxu0 0
        %2566 = vmatprep.subr.bf16.mxu0 0
        %2567 = vmatpush1.bf16.xpose.msra.mxu0 0
        %2568 = vmatprep.subr.bf16.mxu0 0
        %2569 = vmatpush1.bf16.xpose.msra.mxu0 0
        %2570 = vmatprep.subr.bf16.mxu0 0
        %2571 = vmatpush1.bf16.xpose.msra.mxu0 0
        %2572 = vmatprep.subr.bf16.mxu0 0
        %2573 = vmatpush1.bf16.xpose.msra.mxu0 0
        %2574 = vmatprep.subr.bf16.mxu0 0
        %2575 = vmatpush1.bf16.xpose.msra.mxu0 0
        %2576 = vmatprep.subr.bf16.mxu0 0
        %2577 = vmatpush1.bf16.xpose.msra.mxu0 0
        %2578 = vmatprep.subr.bf16.mxu0 0
        %2579 = vmatpush1.bf16.xpose.msra.mxu0 0
        %2580 = vmatprep.subr.bf16.mxu0 0
        %2581 = vmatpush1.bf16.xpose.msra.mxu0 0
        %2582 = vmatprep.mubr.bf16.mxu0 0
        %2583 = vmatmul.mubr.bf16.gmra.mrb[0].mxu0 %v2539
        %v2584 = vpop.f32.mrb[0].mxu0
        %v2585 = vadd.f32 0.0, %v2584
        %v2586 = vpop.f32.mrb[0].mxu0
        %v2587 = vpop.f32.mrb[0].mxu0
        %v2588 = vadd.f32 0.0, %v2587
        %v2589 = vpop.f32.mrb[0].mxu0
        %2590 = vmatprep.mubr.bf16.mxu0 0
        %2591 = vmatmul.mubr.bf16.gmra.mrb[0].mxu0 %v2542
        %v2592 = vpop.f32.mrb[0].mxu0
        %v2593 = vadd.f32 0.0, %v2592
        %v2594 = vpop.f32.mrb[0].mxu0
        %v2595 = vpop.f32.mrb[0].mxu0
        %v2596 = vadd.f32 0.0, %v2595
        %v2597 = vpop.f32.mrb[0].mxu0
        %2598 = vdwg.mxu0
        %v2600 = vsel %vm1988, %v1629, 0
        %v2603 = vsel %vm1988, %v1631, 0
        %v2606 = vsel %vm1988, %v1741, 0
        %v2609 = vsel %vm1988, %v1743, 0
        %2611 = vmatprep.subr.bf16.mxu0 0
        %2612 = vmatpush1.bf16.xpose.msra.mxu0 %v2606
        %2613 = vmatprep.subr.bf16.mxu0 0
        %2614 = vmatpush1.bf16.xpose.msra.mxu0 %v2609
        %2615 = vmatprep.subr.bf16.mxu0 0
        %2616 = vmatpush1.bf16.xpose.msra.mxu0 0
        %2617 = vmatprep.subr.bf16.mxu0 0
        %2618 = vmatpush1.bf16.xpose.msra.mxu0 0
        %2619 = vmatprep.subr.bf16.mxu0 0
        %2620 = vmatpush1.bf16.xpose.msra.mxu0 0
        %2621 = vmatprep.subr.bf16.mxu0 0
        %2622 = vmatpush1.bf16.xpose.msra.mxu0 0
        %2623 = vmatprep.subr.bf16.mxu0 0
        %2624 = vmatpush1.bf16.xpose.msra.mxu0 0
        %2625 = vmatprep.subr.bf16.mxu0 0
        %2626 = vmatpush1.bf16.xpose.msra.mxu0 0
        %2627 = vmatprep.subr.bf16.mxu0 0
        %2628 = vmatpush1.bf16.xpose.msra.mxu0 0
        %2629 = vmatprep.subr.bf16.mxu0 0
        %2630 = vmatpush1.bf16.xpose.msra.mxu0 0
        %2631 = vmatprep.subr.bf16.mxu0 0
        %2632 = vmatpush1.bf16.xpose.msra.mxu0 0
        %2633 = vmatprep.subr.bf16.mxu0 0
        %2634 = vmatpush1.bf16.xpose.msra.mxu0 0
        %2635 = vmatprep.subr.bf16.mxu0 0
        %2636 = vmatpush1.bf16.xpose.msra.mxu0 0
        %2637 = vmatprep.subr.bf16.mxu0 0
        %2638 = vmatpush1.bf16.xpose.msra.mxu0 0
        %2639 = vmatprep.subr.bf16.mxu0 0
        %2640 = vmatpush1.bf16.xpose.msra.mxu0 0
        %2641 = vmatprep.subr.bf16.mxu0 0
        %2642 = vmatpush1.bf16.xpose.msra.mxu0 0
        %2643 = vmatprep.mubr.bf16.mxu0 0
        %2644 = vmatmul.mubr.bf16.gmra.mrb[0].mxu0 %v2600
        %v2645 = vpop.f32.mrb[0].mxu0
        %v2646 = vadd.f32 0.0, %v2645
        %v2647 = vpop.f32.mrb[0].mxu0
        %v2648 = vpop.f32.mrb[0].mxu0
        %v2649 = vadd.f32 0.0, %v2648
        %v2650 = vpop.f32.mrb[0].mxu0
        %2651 = vmatprep.mubr.bf16.mxu0 0
        %2652 = vmatmul.mubr.bf16.gmra.mrb[0].mxu0 %v2603
        %v2653 = vpop.f32.mrb[0].mxu0
        %v2654 = vadd.f32 0.0, %v2653
        %v2655 = vpop.f32.mrb[0].mxu0
        %v2656 = vpop.f32.mrb[0].mxu0
        %v2657 = vadd.f32 0.0, %v2656
        %v2658 = vpop.f32.mrb[0].mxu0
        %2659 = vdwg.mxu0
        %v2661 = vsel %vm1988, %v1633, 0
        %v2664 = vsel %vm1988, %v1635, 0
        %v2667 = vsel %vm1988, %v1745, 0
        %v2670 = vsel %vm1988, %v1747, 0
        %2672 = vmatprep.subr.bf16.mxu0 0
        %2673 = vmatpush1.bf16.xpose.msra.mxu0 %v2667
        %2674 = vmatprep.subr.bf16.mxu0 0
        %2675 = vmatpush1.bf16.xpose.msra.mxu0 %v2670
        %2676 = vmatprep.subr.bf16.mxu0 0
        %2677 = vmatpush1.bf16.xpose.msra.mxu0 0
        %2678 = vmatprep.subr.bf16.mxu0 0
        %2679 = vmatpush1.bf16.xpose.msra.mxu0 0
        %2680 = vmatprep.subr.bf16.mxu0 0
        %2681 = vmatpush1.bf16.xpose.msra.mxu0 0
        %2682 = vmatprep.subr.bf16.mxu0 0
        %2683 = vmatpush1.bf16.xpose.msra.mxu0 0
        %2684 = vmatprep.subr.bf16.mxu0 0
        %2685 = vmatpush1.bf16.xpose.msra.mxu0 0
        %2686 = vmatprep.subr.bf16.mxu0 0
        %2687 = vmatpush1.bf16.xpose.msra.mxu0 0
        %2688 = vmatprep.subr.bf16.mxu0 0
        %2689 = vmatpush1.bf16.xpose.msra.mxu0 0
        %2690 = vmatprep.subr.bf16.mxu0 0
        %2691 = vmatpush1.bf16.xpose.msra.mxu0 0
        %2692 = vmatprep.subr.bf16.mxu0 0
        %2693 = vmatpush1.bf16.xpose.msra.mxu0 0
        %2694 = vmatprep.subr.bf16.mxu0 0
        %2695 = vmatpush1.bf16.xpose.msra.mxu0 0
        %2696 = vmatprep.subr.bf16.mxu0 0
        %2697 = vmatpush1.bf16.xpose.msra.mxu0 0
        %2698 = vmatprep.subr.bf16.mxu0 0
        %2699 = vmatpush1.bf16.xpose.msra.mxu0 0
        %2700 = vmatprep.subr.bf16.mxu0 0
        %2701 = vmatpush1.bf16.xpose.msra.mxu0 0
        %2702 = vmatprep.subr.bf16.mxu0 0
        %2703 = vmatpush1.bf16.xpose.msra.mxu0 0
        %2704 = vmatprep.mubr.bf16.mxu0 0
        %2705 = vmatmul.mubr.bf16.gmra.mrb[0].mxu0 %v2661
        %v2706 = vpop.f32.mrb[0].mxu0
        %v2707 = vadd.f32 0.0, %v2706
        %v2708 = vpop.f32.mrb[0].mxu0
        %v2709 = vpop.f32.mrb[0].mxu0
        %v2710 = vadd.f32 0.0, %v2709
        %v2711 = vpop.f32.mrb[0].mxu0
        %2712 = vmatprep.mubr.bf16.mxu0 0
        %2713 = vmatmul.mubr.bf16.gmra.mrb[0].mxu0 %v2664
        %v2714 = vpop.f32.mrb[0].mxu0
        %v2715 = vadd.f32 0.0, %v2714
        %v2716 = vpop.f32.mrb[0].mxu0
        %v2717 = vpop.f32.mrb[0].mxu0
        %v2718 = vadd.f32 0.0, %v2717
        %v2719 = vpop.f32.mrb[0].mxu0
        %2720 = vdwg.mxu0
        %v2722 = vsel %vm1988, %v1637, 0
        %v2725 = vsel %vm1988, %v1639, 0
        %v2728 = vsel %vm1988, %v1749, 0
        %v2731 = vsel %vm1988, %v1751, 0
        %2733 = vmatprep.subr.bf16.mxu0 0
        %2734 = vmatpush1.bf16.xpose.msra.mxu0 %v2728
        %2735 = vmatprep.subr.bf16.mxu0 0
        %2736 = vmatpush1.bf16.xpose.msra.mxu0 %v2731
        %2737 = vmatprep.subr.bf16.mxu0 0
        %2738 = vmatpush1.bf16.xpose.msra.mxu0 0
        %2739 = vmatprep.subr.bf16.mxu0 0
        %2740 = vmatpush1.bf16.xpose.msra.mxu0 0
        %2741 = vmatprep.subr.bf16.mxu0 0
        %2742 = vmatpush1.bf16.xpose.msra.mxu0 0
        %2743 = vmatprep.subr.bf16.mxu0 0
        %2744 = vmatpush1.bf16.xpose.msra.mxu0 0
        %2745 = vmatprep.subr.bf16.mxu0 0
        %2746 = vmatpush1.bf16.xpose.msra.mxu0 0
        %2747 = vmatprep.subr.bf16.mxu0 0
        %2748 = vmatpush1.bf16.xpose.msra.mxu0 0
        %2749 = vmatprep.subr.bf16.mxu0 0
        %2750 = vmatpush1.bf16.xpose.msra.mxu0 0
        %2751 = vmatprep.subr.bf16.mxu0 0
        %2752 = vmatpush1.bf16.xpose.msra.mxu0 0
        %2753 = vmatprep.subr.bf16.mxu0 0
        %2754 = vmatpush1.bf16.xpose.msra.mxu0 0
        %2755 = vmatprep.subr.bf16.mxu0 0
        %2756 = vmatpush1.bf16.xpose.msra.mxu0 0
        %2757 = vmatprep.subr.bf16.mxu0 0
        %2758 = vmatpush1.bf16.xpose.msra.mxu0 0
        %2759 = vmatprep.subr.bf16.mxu0 0
        %2760 = vmatpush1.bf16.xpose.msra.mxu0 0
        %2761 = vmatprep.subr.bf16.mxu0 0
        %2762 = vmatpush1.bf16.xpose.msra.mxu0 0
        %2763 = vmatprep.subr.bf16.mxu0 0
        %2764 = vmatpush1.bf16.xpose.msra.mxu0 0
        %2765 = vmatprep.mubr.bf16.mxu0 0
        %2766 = vmatmul.mubr.bf16.gmra.mrb[0].mxu0 %v2722
        %v2767 = vpop.f32.mrb[0].mxu0
        %v2768 = vadd.f32 0.0, %v2767
        %v2769 = vpop.f32.mrb[0].mxu0
        %v2770 = vpop.f32.mrb[0].mxu0
        %v2771 = vadd.f32 0.0, %v2770
        %v2772 = vpop.f32.mrb[0].mxu0
        %2773 = vmatprep.mubr.bf16.mxu0 0
        %2774 = vmatmul.mubr.bf16.gmra.mrb[0].mxu0 %v2725
        %v2775 = vpop.f32.mrb[0].mxu0
        %v2776 = vadd.f32 0.0, %v2775
        %v2777 = vpop.f32.mrb[0].mxu0
        %v2778 = vpop.f32.mrb[0].mxu0
        %v2779 = vadd.f32 0.0, %v2778
        %v2780 = vpop.f32.mrb[0].mxu0
        %2781 = vdwg.mxu0
        %v2783 = vsel %vm1988, %v1641, 0
        %v2786 = vsel %vm1988, %v1643, 0
        %v2789 = vsel %vm1988, %v1753, 0
        %v2792 = vsel %vm1988, %v1755, 0
        %2794 = vmatprep.subr.bf16.mxu0 0
        %2795 = vmatpush1.bf16.xpose.msra.mxu0 %v2789
        %2796 = vmatprep.subr.bf16.mxu0 0
        %2797 = vmatpush1.bf16.xpose.msra.mxu0 %v2792
        %2798 = vmatprep.subr.bf16.mxu0 0
        %2799 = vmatpush1.bf16.xpose.msra.mxu0 0
        %2800 = vmatprep.subr.bf16.mxu0 0
        %2801 = vmatpush1.bf16.xpose.msra.mxu0 0
        %2802 = vmatprep.subr.bf16.mxu0 0
        %2803 = vmatpush1.bf16.xpose.msra.mxu0 0
        %2804 = vmatprep.subr.bf16.mxu0 0
        %2805 = vmatpush1.bf16.xpose.msra.mxu0 0
        %2806 = vmatprep.subr.bf16.mxu0 0
        %2807 = vmatpush1.bf16.xpose.msra.mxu0 0
        %2808 = vmatprep.subr.bf16.mxu0 0
        %2809 = vmatpush1.bf16.xpose.msra.mxu0 0
        %2810 = vmatprep.subr.bf16.mxu0 0
        %2811 = vmatpush1.bf16.xpose.msra.mxu0 0
        %2812 = vmatprep.subr.bf16.mxu0 0
        %2813 = vmatpush1.bf16.xpose.msra.mxu0 0
        %2814 = vmatprep.subr.bf16.mxu0 0
        %2815 = vmatpush1.bf16.xpose.msra.mxu0 0
        %2816 = vmatprep.subr.bf16.mxu0 0
        %2817 = vmatpush1.bf16.xpose.msra.mxu0 0
        %2818 = vmatprep.subr.bf16.mxu0 0
        %2819 = vmatpush1.bf16.xpose.msra.mxu0 0
        %2820 = vmatprep.subr.bf16.mxu0 0
        %2821 = vmatpush1.bf16.xpose.msra.mxu0 0
        %2822 = vmatprep.subr.bf16.mxu0 0
        %2823 = vmatpush1.bf16.xpose.msra.mxu0 0
        %2824 = vmatprep.subr.bf16.mxu0 0
        %2825 = vmatpush1.bf16.xpose.msra.mxu0 0
        %2826 = vmatprep.mubr.bf16.mxu0 0
        %2827 = vmatmul.mubr.bf16.gmra.mrb[0].mxu0 %v2783
        %v2828 = vpop.f32.mrb[0].mxu0
        %v2829 = vadd.f32 0.0, %v2828
        %v2830 = vpop.f32.mrb[0].mxu0
        %v2831 = vpop.f32.mrb[0].mxu0
        %v2832 = vadd.f32 0.0, %v2831
        %v2833 = vpop.f32.mrb[0].mxu0
        %2834 = vmatprep.mubr.bf16.mxu0 0
        %2835 = vmatmul.mubr.bf16.gmra.mrb[0].mxu0 %v2786
        %v2836 = vpop.f32.mrb[0].mxu0
        %v2837 = vadd.f32 0.0, %v2836
        %v2838 = vpop.f32.mrb[0].mxu0
        %v2839 = vpop.f32.mrb[0].mxu0
        %v2840 = vadd.f32 0.0, %v2839
        %v2841 = vpop.f32.mrb[0].mxu0
        %2842 = vdwg.mxu0
        %v2844 = vsel %vm1988, %v1645, 0
        %v2847 = vsel %vm1988, %v1647, 0
        %v2850 = vsel %vm1988, %v1757, 0
        %v2853 = vsel %vm1988, %v1759, 0
        %2855 = vmatprep.subr.bf16.mxu0 0
        %2856 = vmatpush1.bf16.xpose.msra.mxu0 %v2850
        %2857 = vmatprep.subr.bf16.mxu0 0
        %2858 = vmatpush1.bf16.xpose.msra.mxu0 %v2853
        %2859 = vmatprep.subr.bf16.mxu0 0
        %2860 = vmatpush1.bf16.xpose.msra.mxu0 0
        %2861 = vmatprep.subr.bf16.mxu0 0
        %2862 = vmatpush1.bf16.xpose.msra.mxu0 0
        %2863 = vmatprep.subr.bf16.mxu0 0
        %2864 = vmatpush1.bf16.xpose.msra.mxu0 0
        %2865 = vmatprep.subr.bf16.mxu0 0
        %2866 = vmatpush1.bf16.xpose.msra.mxu0 0
        %2867 = vmatprep.subr.bf16.mxu0 0
        %2868 = vmatpush1.bf16.xpose.msra.mxu0 0
        %2869 = vmatprep.subr.bf16.mxu0 0
        %2870 = vmatpush1.bf16.xpose.msra.mxu0 0
        %2871 = vmatprep.subr.bf16.mxu0 0
        %2872 = vmatpush1.bf16.xpose.msra.mxu0 0
        %2873 = vmatprep.subr.bf16.mxu0 0
        %2874 = vmatpush1.bf16.xpose.msra.mxu0 0
        %2875 = vmatprep.subr.bf16.mxu0 0
        %2876 = vmatpush1.bf16.xpose.msra.mxu0 0
        %2877 = vmatprep.subr.bf16.mxu0 0
        %2878 = vmatpush1.bf16.xpose.msra.mxu0 0
        %2879 = vmatprep.subr.bf16.mxu0 0
        %2880 = vmatpush1.bf16.xpose.msra.mxu0 0
        %2881 = vmatprep.subr.bf16.mxu0 0
        %2882 = vmatpush1.bf16.xpose.msra.mxu0 0
        %2883 = vmatprep.subr.bf16.mxu0 0
        %2884 = vmatpush1.bf16.xpose.msra.mxu0 0
        %2885 = vmatprep.subr.bf16.mxu0 0
        %2886 = vmatpush1.bf16.xpose.msra.mxu0 0
        %2887 = vmatprep.mubr.bf16.mxu0 0
        %2888 = vmatmul.mubr.bf16.gmra.mrb[0].mxu0 %v2844
        %v2889 = vpop.f32.mrb[0].mxu0
        %v2890 = vadd.f32 0.0, %v2889
        %v2891 = vpop.f32.mrb[0].mxu0
        %v2892 = vpop.f32.mrb[0].mxu0
        %v2893 = vadd.f32 0.0, %v2892
        %v2894 = vpop.f32.mrb[0].mxu0
        %2895 = vmatprep.mubr.bf16.mxu0 0
        %2896 = vmatmul.mubr.bf16.gmra.mrb[0].mxu0 %v2847
        %v2897 = vpop.f32.mrb[0].mxu0
        %v2898 = vadd.f32 0.0, %v2897
        %v2899 = vpop.f32.mrb[0].mxu0
        %v2900 = vpop.f32.mrb[0].mxu0
        %v2901 = vadd.f32 0.0, %v2900
        %v2902 = vpop.f32.mrb[0].mxu0
        %2903 = vdwg.mxu0
        %v2905 = vsel %vm1988, %v1649, 0
        %v2908 = vsel %vm1988, %v1651, 0
        %v2911 = vsel %vm1988, %v1761, 0
        %v2914 = vsel %vm1988, %v1763, 0
        %2916 = vmatprep.subr.bf16.mxu0 0
        %2917 = vmatpush1.bf16.xpose.msra.mxu0 %v2911
        %2918 = vmatprep.subr.bf16.mxu0 0
        %2919 = vmatpush1.bf16.xpose.msra.mxu0 %v2914
        %2920 = vmatprep.subr.bf16.mxu0 0
        %2921 = vmatpush1.bf16.xpose.msra.mxu0 0
        %2922 = vmatprep.subr.bf16.mxu0 0
        %2923 = vmatpush1.bf16.xpose.msra.mxu0 0
        %2924 = vmatprep.subr.bf16.mxu0 0
        %2925 = vmatpush1.bf16.xpose.msra.mxu0 0
        %2926 = vmatprep.subr.bf16.mxu0 0
        %2927 = vmatpush1.bf16.xpose.msra.mxu0 0
        %2928 = vmatprep.subr.bf16.mxu0 0
        %2929 = vmatpush1.bf16.xpose.msra.mxu0 0
        %2930 = vmatprep.subr.bf16.mxu0 0
        %2931 = vmatpush1.bf16.xpose.msra.mxu0 0
        %2932 = vmatprep.subr.bf16.mxu0 0
        %2933 = vmatpush1.bf16.xpose.msra.mxu0 0
        %2934 = vmatprep.subr.bf16.mxu0 0
        %2935 = vmatpush1.bf16.xpose.msra.mxu0 0
        %2936 = vmatprep.subr.bf16.mxu0 0
        %2937 = vmatpush1.bf16.xpose.msra.mxu0 0
        %2938 = vmatprep.subr.bf16.mxu0 0
        %2939 = vmatpush1.bf16.xpose.msra.mxu0 0
        %2940 = vmatprep.subr.bf16.mxu0 0
        %2941 = vmatpush1.bf16.xpose.msra.mxu0 0
        %2942 = vmatprep.subr.bf16.mxu0 0
        %2943 = vmatpush1.bf16.xpose.msra.mxu0 0
        %2944 = vmatprep.subr.bf16.mxu0 0
        %2945 = vmatpush1.bf16.xpose.msra.mxu0 0
        %2946 = vmatprep.subr.bf16.mxu0 0
        %2947 = vmatpush1.bf16.xpose.msra.mxu0 0
        %2948 = vmatprep.mubr.bf16.mxu0 0
        %2949 = vmatmul.mubr.bf16.gmra.mrb[0].mxu0 %v2905
        %v2950 = vpop.f32.mrb[0].mxu0
        %v2951 = vadd.f32 0.0, %v2950
        %v2952 = vpop.f32.mrb[0].mxu0
        %v2953 = vpop.f32.mrb[0].mxu0
        %v2954 = vadd.f32 0.0, %v2953
        %v2955 = vpop.f32.mrb[0].mxu0
        %2956 = vmatprep.mubr.bf16.mxu0 0
        %2957 = vmatmul.mubr.bf16.gmra.mrb[0].mxu0 %v2908
        %v2958 = vpop.f32.mrb[0].mxu0
        %v2959 = vadd.f32 0.0, %v2958
        %v2960 = vpop.f32.mrb[0].mxu0
        %v2961 = vpop.f32.mrb[0].mxu0
        %v2962 = vadd.f32 0.0, %v2961
        %v2963 = vpop.f32.mrb[0].mxu0
        %2964 = vdwg.mxu0
        %v2966 = vsel %vm1988, %v1653, 0
        %v2969 = vsel %vm1988, %v1655, 0
        %v2972 = vsel %vm1988, %v1765, 0
        %v2975 = vsel %vm1988, %v1767, 0
        %2977 = vmatprep.subr.bf16.mxu0 0
        %2978 = vmatpush1.bf16.xpose.msra.mxu0 %v2972
        %2979 = vmatprep.subr.bf16.mxu0 0
        %2980 = vmatpush1.bf16.xpose.msra.mxu0 %v2975
        %2981 = vmatprep.subr.bf16.mxu0 0
        %2982 = vmatpush1.bf16.xpose.msra.mxu0 0
        %2983 = vmatprep.subr.bf16.mxu0 0
        %2984 = vmatpush1.bf16.xpose.msra.mxu0 0
        %2985 = vmatprep.subr.bf16.mxu0 0
        %2986 = vmatpush1.bf16.xpose.msra.mxu0 0
        %2987 = vmatprep.subr.bf16.mxu0 0
        %2988 = vmatpush1.bf16.xpose.msra.mxu0 0
        %2989 = vmatprep.subr.bf16.mxu0 0
        %2990 = vmatpush1.bf16.xpose.msra.mxu0 0
        %2991 = vmatprep.subr.bf16.mxu0 0
        %2992 = vmatpush1.bf16.xpose.msra.mxu0 0
        %2993 = vmatprep.subr.bf16.mxu0 0
        %2994 = vmatpush1.bf16.xpose.msra.mxu0 0
        %2995 = vmatprep.subr.bf16.mxu0 0
        %2996 = vmatpush1.bf16.xpose.msra.mxu0 0
        %2997 = vmatprep.subr.bf16.mxu0 0
        %2998 = vmatpush1.bf16.xpose.msra.mxu0 0
        %2999 = vmatprep.subr.bf16.mxu0 0
        %3000 = vmatpush1.bf16.xpose.msra.mxu0 0
        %3001 = vmatprep.subr.bf16.mxu0 0
        %3002 = vmatpush1.bf16.xpose.msra.mxu0 0
        %3003 = vmatprep.subr.bf16.mxu0 0
        %3004 = vmatpush1.bf16.xpose.msra.mxu0 0
        %3005 = vmatprep.subr.bf16.mxu0 0
        %3006 = vmatpush1.bf16.xpose.msra.mxu0 0
        %3007 = vmatprep.subr.bf16.mxu0 0
        %3008 = vmatpush1.bf16.xpose.msra.mxu0 0
        %3009 = vmatprep.mubr.bf16.mxu0 0
        %3010 = vmatmul.mubr.bf16.gmra.mrb[0].mxu0 %v2966
        %v3011 = vpop.f32.mrb[0].mxu0
        %v3012 = vadd.f32 0.0, %v3011
        %v3013 = vpop.f32.mrb[0].mxu0
        %v3014 = vpop.f32.mrb[0].mxu0
        %v3015 = vadd.f32 0.0, %v3014
        %v3016 = vpop.f32.mrb[0].mxu0
        %3017 = vmatprep.mubr.bf16.mxu0 0
        %3018 = vmatmul.mubr.bf16.gmra.mrb[0].mxu0 %v2969
        %v3019 = vpop.f32.mrb[0].mxu0
        %v3020 = vadd.f32 0.0, %v3019
        %v3021 = vpop.f32.mrb[0].mxu0
        %v3022 = vpop.f32.mrb[0].mxu0
        %v3023 = vadd.f32 0.0, %v3022
        %v3024 = vpop.f32.mrb[0].mxu0
        %3025 = vdwg.mxu0
        %v3027 = vsel %vm1988, %v1657, 0
        %v3030 = vsel %vm1988, %v1659, 0
        %v3033 = vsel %vm1988, %v1769, 0
        %v3036 = vsel %vm1988, %v1771, 0
        %3038 = vmatprep.subr.bf16.mxu0 0
        %3039 = vmatpush1.bf16.xpose.msra.mxu0 %v3033
        %3040 = vmatprep.subr.bf16.mxu0 0
        %3041 = vmatpush1.bf16.xpose.msra.mxu0 %v3036
        %3042 = vmatprep.subr.bf16.mxu0 0
        %3043 = vmatpush1.bf16.xpose.msra.mxu0 0
        %3044 = vmatprep.subr.bf16.mxu0 0
        %3045 = vmatpush1.bf16.xpose.msra.mxu0 0
        %3046 = vmatprep.subr.bf16.mxu0 0
        %3047 = vmatpush1.bf16.xpose.msra.mxu0 0
        %3048 = vmatprep.subr.bf16.mxu0 0
        %3049 = vmatpush1.bf16.xpose.msra.mxu0 0
        %3050 = vmatprep.subr.bf16.mxu0 0
        %3051 = vmatpush1.bf16.xpose.msra.mxu0 0
        %3052 = vmatprep.subr.bf16.mxu0 0
        %3053 = vmatpush1.bf16.xpose.msra.mxu0 0
        %3054 = vmatprep.subr.bf16.mxu0 0
        %3055 = vmatpush1.bf16.xpose.msra.mxu0 0
        %3056 = vmatprep.subr.bf16.mxu0 0
        %3057 = vmatpush1.bf16.xpose.msra.mxu0 0
        %3058 = vmatprep.subr.bf16.mxu0 0
        %3059 = vmatpush1.bf16.xpose.msra.mxu0 0
        %3060 = vmatprep.subr.bf16.mxu0 0
        %3061 = vmatpush1.bf16.xpose.msra.mxu0 0
        %3062 = vmatprep.subr.bf16.mxu0 0
        %3063 = vmatpush1.bf16.xpose.msra.mxu0 0
        %3064 = vmatprep.subr.bf16.mxu0 0
        %3065 = vmatpush1.bf16.xpose.msra.mxu0 0
        %3066 = vmatprep.subr.bf16.mxu0 0
        %3067 = vmatpush1.bf16.xpose.msra.mxu0 0
        %3068 = vmatprep.subr.bf16.mxu0 0
        %3069 = vmatpush1.bf16.xpose.msra.mxu0 0
        %3070 = vmatprep.mubr.bf16.mxu0 0
        %3071 = vmatmul.mubr.bf16.gmra.mrb[0].mxu0 %v3027
        %v3072 = vpop.f32.mrb[0].mxu0
        %v3073 = vadd.f32 0.0, %v3072
        %v3074 = vpop.f32.mrb[0].mxu0
        %v3075 = vpop.f32.mrb[0].mxu0
        %v3076 = vadd.f32 0.0, %v3075
        %v3077 = vpop.f32.mrb[0].mxu0
        %3078 = vmatprep.mubr.bf16.mxu0 0
        %3079 = vmatmul.mubr.bf16.gmra.mrb[0].mxu0 %v3030
        %v3080 = vpop.f32.mrb[0].mxu0
        %v3081 = vadd.f32 0.0, %v3080
        %v3082 = vpop.f32.mrb[0].mxu0
        %v3083 = vpop.f32.mrb[0].mxu0
        %v3084 = vadd.f32 0.0, %v3083
        %v3085 = vpop.f32.mrb[0].mxu0
        %3086 = vdwg.mxu0
        %v3088 = vsel %vm1988, %v1661, 0
        %v3091 = vsel %vm1988, %v1663, 0
        %v3094 = vsel %vm1988, %v1773, 0
        %v3097 = vsel %vm1988, %v1775, 0
        %3099 = vmatprep.subr.bf16.mxu0 0
        %3100 = vmatpush1.bf16.xpose.msra.mxu0 %v3094
        %3101 = vmatprep.subr.bf16.mxu0 0
        %3102 = vmatpush1.bf16.xpose.msra.mxu0 %v3097
        %3103 = vmatprep.subr.bf16.mxu0 0
        %3104 = vmatpush1.bf16.xpose.msra.mxu0 0
        %3105 = vmatprep.subr.bf16.mxu0 0
        %3106 = vmatpush1.bf16.xpose.msra.mxu0 0
        %3107 = vmatprep.subr.bf16.mxu0 0
        %3108 = vmatpush1.bf16.xpose.msra.mxu0 0
        %3109 = vmatprep.subr.bf16.mxu0 0
        %3110 = vmatpush1.bf16.xpose.msra.mxu0 0
        %3111 = vmatprep.subr.bf16.mxu0 0
        %3112 = vmatpush1.bf16.xpose.msra.mxu0 0
        %3113 = vmatprep.subr.bf16.mxu0 0
        %3114 = vmatpush1.bf16.xpose.msra.mxu0 0
        %3115 = vmatprep.subr.bf16.mxu0 0
        %3116 = vmatpush1.bf16.xpose.msra.mxu0 0
        %3117 = vmatprep.subr.bf16.mxu0 0
        %3118 = vmatpush1.bf16.xpose.msra.mxu0 0
        %3119 = vmatprep.subr.bf16.mxu0 0
        %3120 = vmatpush1.bf16.xpose.msra.mxu0 0
        %3121 = vmatprep.subr.bf16.mxu0 0
        %3122 = vmatpush1.bf16.xpose.msra.mxu0 0
        %3123 = vmatprep.subr.bf16.mxu0 0
        %3124 = vmatpush1.bf16.xpose.msra.mxu0 0
        %3125 = vmatprep.subr.bf16.mxu0 0
        %3126 = vmatpush1.bf16.xpose.msra.mxu0 0
        %3127 = vmatprep.subr.bf16.mxu0 0
        %3128 = vmatpush1.bf16.xpose.msra.mxu0 0
        %3129 = vmatprep.subr.bf16.mxu0 0
        %3130 = vmatpush1.bf16.xpose.msra.mxu0 0
        %3131 = vmatprep.mubr.bf16.mxu0 0
        %3132 = vmatmul.mubr.bf16.gmra.mrb[0].mxu0 %v3088
        %v3133 = vpop.f32.mrb[0].mxu0
        %v3134 = vadd.f32 0.0, %v3133
        %v3135 = vpop.f32.mrb[0].mxu0
        %v3136 = vpop.f32.mrb[0].mxu0
        %v3137 = vadd.f32 0.0, %v3136
        %v3138 = vpop.f32.mrb[0].mxu0
        %3139 = vmatprep.mubr.bf16.mxu0 0
        %3140 = vmatmul.mubr.bf16.gmra.mrb[0].mxu0 %v3091
        %v3141 = vpop.f32.mrb[0].mxu0
        %v3142 = vadd.f32 0.0, %v3141
        %v3143 = vpop.f32.mrb[0].mxu0
        %v3144 = vpop.f32.mrb[0].mxu0
        %v3145 = vadd.f32 0.0, %v3144
        %v3146 = vpop.f32.mrb[0].mxu0
        %3147 = vdwg.mxu0
        %v3149 = vsel %vm1988, %v1665, 0
        %v3152 = vsel %vm1988, %v1667, 0
        %v3155 = vsel %vm1988, %v1777, 0
        %v3158 = vsel %vm1988, %v1779, 0
        %3160 = vmatprep.subr.bf16.mxu0 0
        %3161 = vmatpush1.bf16.xpose.msra.mxu0 %v3155
        %3162 = vmatprep.subr.bf16.mxu0 0
        %3163 = vmatpush1.bf16.xpose.msra.mxu0 %v3158
        %3164 = vmatprep.subr.bf16.mxu0 0
        %3165 = vmatpush1.bf16.xpose.msra.mxu0 0
        %3166 = vmatprep.subr.bf16.mxu0 0
        %3167 = vmatpush1.bf16.xpose.msra.mxu0 0
        %3168 = vmatprep.subr.bf16.mxu0 0
        %3169 = vmatpush1.bf16.xpose.msra.mxu0 0
        %3170 = vmatprep.subr.bf16.mxu0 0
        %3171 = vmatpush1.bf16.xpose.msra.mxu0 0
        %3172 = vmatprep.subr.bf16.mxu0 0
        %3173 = vmatpush1.bf16.xpose.msra.mxu0 0
        %3174 = vmatprep.subr.bf16.mxu0 0
        %3175 = vmatpush1.bf16.xpose.msra.mxu0 0
        %3176 = vmatprep.subr.bf16.mxu0 0
        %3177 = vmatpush1.bf16.xpose.msra.mxu0 0
        %3178 = vmatprep.subr.bf16.mxu0 0
        %3179 = vmatpush1.bf16.xpose.msra.mxu0 0
        %3180 = vmatprep.subr.bf16.mxu0 0
        %3181 = vmatpush1.bf16.xpose.msra.mxu0 0
        %3182 = vmatprep.subr.bf16.mxu0 0
        %3183 = vmatpush1.bf16.xpose.msra.mxu0 0
        %3184 = vmatprep.subr.bf16.mxu0 0
        %3185 = vmatpush1.bf16.xpose.msra.mxu0 0
        %3186 = vmatprep.subr.bf16.mxu0 0
        %3187 = vmatpush1.bf16.xpose.msra.mxu0 0
        %3188 = vmatprep.subr.bf16.mxu0 0
        %3189 = vmatpush1.bf16.xpose.msra.mxu0 0
        %3190 = vmatprep.subr.bf16.mxu0 0
        %3191 = vmatpush1.bf16.xpose.msra.mxu0 0
        %3192 = vmatprep.mubr.bf16.mxu0 0
        %3193 = vmatmul.mubr.bf16.gmra.mrb[0].mxu0 %v3149
        %v3194 = vpop.f32.mrb[0].mxu0
        %v3195 = vadd.f32 0.0, %v3194
        %v3196 = vpop.f32.mrb[0].mxu0
        %v3197 = vpop.f32.mrb[0].mxu0
        %v3198 = vadd.f32 0.0, %v3197
        %v3199 = vpop.f32.mrb[0].mxu0
        %3200 = vmatprep.mubr.bf16.mxu0 0
        %3201 = vmatmul.mubr.bf16.gmra.mrb[0].mxu0 %v3152
        %v3202 = vpop.f32.mrb[0].mxu0
        %v3203 = vadd.f32 0.0, %v3202
        %v3204 = vpop.f32.mrb[0].mxu0
        %v3205 = vpop.f32.mrb[0].mxu0
        %v3206 = vadd.f32 0.0, %v3205
        %v3207 = vpop.f32.mrb[0].mxu0
        %3208 = vdwg.mxu0
        %v3210 = vsel %vm1988, %v1669, 0
        %v3213 = vsel %vm1988, %v1671, 0
        %v3216 = vsel %vm1988, %v1781, 0
        %v3219 = vsel %vm1988, %v1783, 0
        %3221 = vmatprep.subr.bf16.mxu0 0
        %3222 = vmatpush1.bf16.xpose.msra.mxu0 %v3216
        %3223 = vmatprep.subr.bf16.mxu0 0
        %3224 = vmatpush1.bf16.xpose.msra.mxu0 %v3219
        %3225 = vmatprep.subr.bf16.mxu0 0
        %3226 = vmatpush1.bf16.xpose.msra.mxu0 0
        %3227 = vmatprep.subr.bf16.mxu0 0
        %3228 = vmatpush1.bf16.xpose.msra.mxu0 0
        %3229 = vmatprep.subr.bf16.mxu0 0
        %3230 = vmatpush1.bf16.xpose.msra.mxu0 0
        %3231 = vmatprep.subr.bf16.mxu0 0
        %3232 = vmatpush1.bf16.xpose.msra.mxu0 0
        %3233 = vmatprep.subr.bf16.mxu0 0
        %3234 = vmatpush1.bf16.xpose.msra.mxu0 0
        %3235 = vmatprep.subr.bf16.mxu0 0
        %3236 = vmatpush1.bf16.xpose.msra.mxu0 0
        %3237 = vmatprep.subr.bf16.mxu0 0
        %3238 = vmatpush1.bf16.xpose.msra.mxu0 0
        %3239 = vmatprep.subr.bf16.mxu0 0
        %3240 = vmatpush1.bf16.xpose.msra.mxu0 0
        %3241 = vmatprep.subr.bf16.mxu0 0
        %3242 = vmatpush1.bf16.xpose.msra.mxu0 0
        %3243 = vmatprep.subr.bf16.mxu0 0
        %3244 = vmatpush1.bf16.xpose.msra.mxu0 0
        %3245 = vmatprep.subr.bf16.mxu0 0
        %3246 = vmatpush1.bf16.xpose.msra.mxu0 0
        %3247 = vmatprep.subr.bf16.mxu0 0
        %3248 = vmatpush1.bf16.xpose.msra.mxu0 0
        %3249 = vmatprep.subr.bf16.mxu0 0
        %3250 = vmatpush1.bf16.xpose.msra.mxu0 0
        %3251 = vmatprep.subr.bf16.mxu0 0
        %3252 = vmatpush1.bf16.xpose.msra.mxu0 0
        %3253 = vmatprep.mubr.bf16.mxu0 0
        %3254 = vmatmul.mubr.bf16.gmra.mrb[0].mxu0 %v3210
        %v3255 = vpop.f32.mrb[0].mxu0
        %v3256 = vadd.f32 0.0, %v3255
        %v3257 = vpop.f32.mrb[0].mxu0
        %v3258 = vpop.f32.mrb[0].mxu0
        %v3259 = vadd.f32 0.0, %v3258
        %v3260 = vpop.f32.mrb[0].mxu0
        %3261 = vmatprep.mubr.bf16.mxu0 0
        %3262 = vmatmul.mubr.bf16.gmra.mrb[0].mxu0 %v3213
        %v3263 = vpop.f32.mrb[0].mxu0
        %v3264 = vadd.f32 0.0, %v3263
        %v3265 = vpop.f32.mrb[0].mxu0
        %v3266 = vpop.f32.mrb[0].mxu0
        %v3267 = vadd.f32 0.0, %v3266
        %v3268 = vpop.f32.mrb[0].mxu0
        %3269 = vdwg.mxu0
        %v3271 = vsel %vm1988, %v1673, 0
        %v3274 = vsel %vm1988, %v1675, 0
        %v3277 = vsel %vm1988, %v1785, 0
        %v3280 = vsel %vm1988, %v1787, 0
        %3282 = vmatprep.subr.bf16.mxu0 0
        %3283 = vmatpush1.bf16.xpose.msra.mxu0 %v3277
        %3284 = vmatprep.subr.bf16.mxu0 0
        %3285 = vmatpush1.bf16.xpose.msra.mxu0 %v3280
        %3286 = vmatprep.subr.bf16.mxu0 0
        %3287 = vmatpush1.bf16.xpose.msra.mxu0 0
        %3288 = vmatprep.subr.bf16.mxu0 0
        %3289 = vmatpush1.bf16.xpose.msra.mxu0 0
        %3290 = vmatprep.subr.bf16.mxu0 0
        %3291 = vmatpush1.bf16.xpose.msra.mxu0 0
        %3292 = vmatprep.subr.bf16.mxu0 0
        %3293 = vmatpush1.bf16.xpose.msra.mxu0 0
        %3294 = vmatprep.subr.bf16.mxu0 0
        %3295 = vmatpush1.bf16.xpose.msra.mxu0 0
        %3296 = vmatprep.subr.bf16.mxu0 0
        %3297 = vmatpush1.bf16.xpose.msra.mxu0 0
        %3298 = vmatprep.subr.bf16.mxu0 0
        %3299 = vmatpush1.bf16.xpose.msra.mxu0 0
        %3300 = vmatprep.subr.bf16.mxu0 0
        %3301 = vmatpush1.bf16.xpose.msra.mxu0 0
        %3302 = vmatprep.subr.bf16.mxu0 0
        %3303 = vmatpush1.bf16.xpose.msra.mxu0 0
        %3304 = vmatprep.subr.bf16.mxu0 0
        %3305 = vmatpush1.bf16.xpose.msra.mxu0 0
        %3306 = vmatprep.subr.bf16.mxu0 0
        %3307 = vmatpush1.bf16.xpose.msra.mxu0 0
        %3308 = vmatprep.subr.bf16.mxu0 0
        %3309 = vmatpush1.bf16.xpose.msra.mxu0 0
        %3310 = vmatprep.subr.bf16.mxu0 0
        %3311 = vmatpush1.bf16.xpose.msra.mxu0 0
        %3312 = vmatprep.subr.bf16.mxu0 0
        %3313 = vmatpush1.bf16.xpose.msra.mxu0 0
        %3314 = vmatprep.mubr.bf16.mxu0 0
        %3315 = vmatmul.mubr.bf16.gmra.mrb[0].mxu0 %v3271
        %v3316 = vpop.f32.mrb[0].mxu0
        %v3317 = vadd.f32 0.0, %v3316
        %v3318 = vpop.f32.mrb[0].mxu0
        %v3319 = vpop.f32.mrb[0].mxu0
        %v3320 = vadd.f32 0.0, %v3319
        %v3321 = vpop.f32.mrb[0].mxu0
        %3322 = vmatprep.mubr.bf16.mxu0 0
        %3323 = vmatmul.mubr.bf16.gmra.mrb[0].mxu0 %v3274
        %v3324 = vpop.f32.mrb[0].mxu0
        %v3325 = vadd.f32 0.0, %v3324
        %v3326 = vpop.f32.mrb[0].mxu0
        %v3327 = vpop.f32.mrb[0].mxu0
        %v3328 = vadd.f32 0.0, %v3327
        %v3329 = vpop.f32.mrb[0].mxu0
        %3330 = vdwg.mxu0
        %v3332 = vsel %vm1988, %v1677, 0
        %v3335 = vsel %vm1988, %v1679, 0
        %v3338 = vsel %vm1988, %v1789, 0
        %v3341 = vsel %vm1988, %v1791, 0
        %3343 = vmatprep.subr.bf16.mxu0 0
        %3344 = vmatpush1.bf16.xpose.msra.mxu0 %v3338
        %3345 = vmatprep.subr.bf16.mxu0 0
        %3346 = vmatpush1.bf16.xpose.msra.mxu0 %v3341
        %3347 = vmatprep.subr.bf16.mxu0 0
        %3348 = vmatpush1.bf16.xpose.msra.mxu0 0
        %3349 = vmatprep.subr.bf16.mxu0 0
        %3350 = vmatpush1.bf16.xpose.msra.mxu0 0
        %3351 = vmatprep.subr.bf16.mxu0 0
        %3352 = vmatpush1.bf16.xpose.msra.mxu0 0
        %3353 = vmatprep.subr.bf16.mxu0 0
        %3354 = vmatpush1.bf16.xpose.msra.mxu0 0
        %3355 = vmatprep.subr.bf16.mxu0 0
        %3356 = vmatpush1.bf16.xpose.msra.mxu0 0
        %3357 = vmatprep.subr.bf16.mxu0 0
        %3358 = vmatpush1.bf16.xpose.msra.mxu0 0
        %3359 = vmatprep.subr.bf16.mxu0 0
        %3360 = vmatpush1.bf16.xpose.msra.mxu0 0
        %3361 = vmatprep.subr.bf16.mxu0 0
        %3362 = vmatpush1.bf16.xpose.msra.mxu0 0
        %3363 = vmatprep.subr.bf16.mxu0 0
        %3364 = vmatpush1.bf16.xpose.msra.mxu0 0
        %3365 = vmatprep.subr.bf16.mxu0 0
        %3366 = vmatpush1.bf16.xpose.msra.mxu0 0
        %3367 = vmatprep.subr.bf16.mxu0 0
        %3368 = vmatpush1.bf16.xpose.msra.mxu0 0
        %3369 = vmatprep.subr.bf16.mxu0 0
        %3370 = vmatpush1.bf16.xpose.msra.mxu0 0
        %3371 = vmatprep.subr.bf16.mxu0 0
        %3372 = vmatpush1.bf16.xpose.msra.mxu0 0
        %3373 = vmatprep.subr.bf16.mxu0 0
        %3374 = vmatpush1.bf16.xpose.msra.mxu0 0
        %3375 = vmatprep.mubr.bf16.mxu0 0
        %3376 = vmatmul.mubr.bf16.gmra.mrb[0].mxu0 %v3332
        %v3377 = vpop.f32.mrb[0].mxu0
        %v3378 = vadd.f32 0.0, %v3377
        %v3379 = vpop.f32.mrb[0].mxu0
        %v3380 = vpop.f32.mrb[0].mxu0
        %v3381 = vadd.f32 0.0, %v3380
        %v3382 = vpop.f32.mrb[0].mxu0
        %3383 = vmatprep.mubr.bf16.mxu0 0
        %3384 = vmatmul.mubr.bf16.gmra.mrb[0].mxu0 %v3335
        %v3385 = vpop.f32.mrb[0].mxu0
        %v3386 = vadd.f32 0.0, %v3385
        %v3387 = vpop.f32.mrb[0].mxu0
        %v3388 = vpop.f32.mrb[0].mxu0
        %v3389 = vadd.f32 0.0, %v3388
        %v3390 = vpop.f32.mrb[0].mxu0
        %3391 = vdwg.mxu0
        %v3393 = vsel %vm1988, %v1681, 0
        %v3396 = vsel %vm1988, %v1683, 0
        %v3399 = vsel %vm1988, %v1793, 0
        %v3402 = vsel %vm1988, %v1795, 0
        %3404 = vmatprep.subr.bf16.mxu0 0
        %3405 = vmatpush1.bf16.xpose.msra.mxu0 %v3399
        %3406 = vmatprep.subr.bf16.mxu0 0
        %3407 = vmatpush1.bf16.xpose.msra.mxu0 %v3402
        %3408 = vmatprep.subr.bf16.mxu0 0
        %3409 = vmatpush1.bf16.xpose.msra.mxu0 0
        %3410 = vmatprep.subr.bf16.mxu0 0
        %3411 = vmatpush1.bf16.xpose.msra.mxu0 0
        %3412 = vmatprep.subr.bf16.mxu0 0
        %3413 = vmatpush1.bf16.xpose.msra.mxu0 0
        %3414 = vmatprep.subr.bf16.mxu0 0
        %3415 = vmatpush1.bf16.xpose.msra.mxu0 0
        %3416 = vmatprep.subr.bf16.mxu0 0
        %3417 = vmatpush1.bf16.xpose.msra.mxu0 0
        %3418 = vmatprep.subr.bf16.mxu0 0
        %3419 = vmatpush1.bf16.xpose.msra.mxu0 0
        %3420 = vmatprep.subr.bf16.mxu0 0
        %3421 = vmatpush1.bf16.xpose.msra.mxu0 0
        %3422 = vmatprep.subr.bf16.mxu0 0
        %3423 = vmatpush1.bf16.xpose.msra.mxu0 0
        %3424 = vmatprep.subr.bf16.mxu0 0
        %3425 = vmatpush1.bf16.xpose.msra.mxu0 0
        %3426 = vmatprep.subr.bf16.mxu0 0
        %3427 = vmatpush1.bf16.xpose.msra.mxu0 0
        %3428 = vmatprep.subr.bf16.mxu0 0
        %3429 = vmatpush1.bf16.xpose.msra.mxu0 0
        %3430 = vmatprep.subr.bf16.mxu0 0
        %3431 = vmatpush1.bf16.xpose.msra.mxu0 0
        %3432 = vmatprep.subr.bf16.mxu0 0
        %3433 = vmatpush1.bf16.xpose.msra.mxu0 0
        %3434 = vmatprep.subr.bf16.mxu0 0
        %3435 = vmatpush1.bf16.xpose.msra.mxu0 0
        %3436 = vmatprep.mubr.bf16.mxu0 0
        %3437 = vmatmul.mubr.bf16.gmra.mrb[0].mxu0 %v3393
        %v3438 = vpop.f32.mrb[0].mxu0
        %v3439 = vadd.f32 0.0, %v3438
        %v3440 = vpop.f32.mrb[0].mxu0
        %v3441 = vpop.f32.mrb[0].mxu0
        %v3442 = vadd.f32 0.0, %v3441
        %v3443 = vpop.f32.mrb[0].mxu0
        %3444 = vmatprep.mubr.bf16.mxu0 0
        %3445 = vmatmul.mubr.bf16.gmra.mrb[0].mxu0 %v3396
        %v3446 = vpop.f32.mrb[0].mxu0
        %v3447 = vadd.f32 0.0, %v3446
        %v3448 = vpop.f32.mrb[0].mxu0
        %v3449 = vpop.f32.mrb[0].mxu0
        %v3450 = vadd.f32 0.0, %v3449
        %v3451 = vpop.f32.mrb[0].mxu0
        %3452 = vdwg.mxu0
        %v3454 = vsel %vm1988, %v1685, 0
        %v3457 = vsel %vm1988, %v1687, 0
        %v3460 = vsel %vm1988, %v1797, 0
        %v3463 = vsel %vm1988, %v1799, 0
        %3465 = vmatprep.subr.bf16.mxu0 0
        %3466 = vmatpush1.bf16.xpose.msra.mxu0 %v3460
        %3467 = vmatprep.subr.bf16.mxu0 0
        %3468 = vmatpush1.bf16.xpose.msra.mxu0 %v3463
        %3469 = vmatprep.subr.bf16.mxu0 0
        %3470 = vmatpush1.bf16.xpose.msra.mxu0 0
        %3471 = vmatprep.subr.bf16.mxu0 0
        %3472 = vmatpush1.bf16.xpose.msra.mxu0 0
        %3473 = vmatprep.subr.bf16.mxu0 0
        %3474 = vmatpush1.bf16.xpose.msra.mxu0 0
        %3475 = vmatprep.subr.bf16.mxu0 0
        %3476 = vmatpush1.bf16.xpose.msra.mxu0 0
        %3477 = vmatprep.subr.bf16.mxu0 0
        %3478 = vmatpush1.bf16.xpose.msra.mxu0 0
        %3479 = vmatprep.subr.bf16.mxu0 0
        %3480 = vmatpush1.bf16.xpose.msra.mxu0 0
        %3481 = vmatprep.subr.bf16.mxu0 0
        %3482 = vmatpush1.bf16.xpose.msra.mxu0 0
        %3483 = vmatprep.subr.bf16.mxu0 0
        %3484 = vmatpush1.bf16.xpose.msra.mxu0 0
        %3485 = vmatprep.subr.bf16.mxu0 0
        %3486 = vmatpush1.bf16.xpose.msra.mxu0 0
        %3487 = vmatprep.subr.bf16.mxu0 0
        %3488 = vmatpush1.bf16.xpose.msra.mxu0 0
        %3489 = vmatprep.subr.bf16.mxu0 0
        %3490 = vmatpush1.bf16.xpose.msra.mxu0 0
        %3491 = vmatprep.subr.bf16.mxu0 0
        %3492 = vmatpush1.bf16.xpose.msra.mxu0 0
        %3493 = vmatprep.subr.bf16.mxu0 0
        %3494 = vmatpush1.bf16.xpose.msra.mxu0 0
        %3495 = vmatprep.subr.bf16.mxu0 0
        %3496 = vmatpush1.bf16.xpose.msra.mxu0 0
        %3497 = vmatprep.mubr.bf16.mxu0 0
        %3498 = vmatmul.mubr.bf16.gmra.mrb[0].mxu0 %v3454
        %v3499 = vpop.f32.mrb[0].mxu0
        %v3500 = vadd.f32 0.0, %v3499
        %v3501 = vpop.f32.mrb[0].mxu0
        %v3502 = vpop.f32.mrb[0].mxu0
        %v3503 = vadd.f32 0.0, %v3502
        %v3504 = vpop.f32.mrb[0].mxu0
        %3505 = vmatprep.mubr.bf16.mxu0 0
        %3506 = vmatmul.mubr.bf16.gmra.mrb[0].mxu0 %v3457
        %v3507 = vpop.f32.mrb[0].mxu0
        %v3508 = vadd.f32 0.0, %v3507
        %v3509 = vpop.f32.mrb[0].mxu0
        %v3510 = vpop.f32.mrb[0].mxu0
        %v3511 = vadd.f32 0.0, %v3510
        %v3512 = vpop.f32.mrb[0].mxu0
        %3513 = vdwg.mxu0
        %v3515 = vsel %vm1988, %v1689, 0
        %v3518 = vsel %vm1988, %v1691, 0
        %v3521 = vsel %vm1988, %v1801, 0
        %v3524 = vsel %vm1988, %v1803, 0
        %3526 = vmatprep.subr.bf16.mxu0 0
        %3527 = vmatpush1.bf16.xpose.msra.mxu0 %v3521
        %3528 = vmatprep.subr.bf16.mxu0 0
        %3529 = vmatpush1.bf16.xpose.msra.mxu0 %v3524
        %3530 = vmatprep.subr.bf16.mxu0 0
        %3531 = vmatpush1.bf16.xpose.msra.mxu0 0
        %3532 = vmatprep.subr.bf16.mxu0 0
        %3533 = vmatpush1.bf16.xpose.msra.mxu0 0
        %3534 = vmatprep.subr.bf16.mxu0 0
        %3535 = vmatpush1.bf16.xpose.msra.mxu0 0
        %3536 = vmatprep.subr.bf16.mxu0 0
        %3537 = vmatpush1.bf16.xpose.msra.mxu0 0
        %3538 = vmatprep.subr.bf16.mxu0 0
        %3539 = vmatpush1.bf16.xpose.msra.mxu0 0
        %3540 = vmatprep.subr.bf16.mxu0 0
        %3541 = vmatpush1.bf16.xpose.msra.mxu0 0
        %3542 = vmatprep.subr.bf16.mxu0 0
        %3543 = vmatpush1.bf16.xpose.msra.mxu0 0
        %3544 = vmatprep.subr.bf16.mxu0 0
        %3545 = vmatpush1.bf16.xpose.msra.mxu0 0
        %3546 = vmatprep.subr.bf16.mxu0 0
        %3547 = vmatpush1.bf16.xpose.msra.mxu0 0
        %3548 = vmatprep.subr.bf16.mxu0 0
        %3549 = vmatpush1.bf16.xpose.msra.mxu0 0
        %3550 = vmatprep.subr.bf16.mxu0 0
        %3551 = vmatpush1.bf16.xpose.msra.mxu0 0
        %3552 = vmatprep.subr.bf16.mxu0 0
        %3553 = vmatpush1.bf16.xpose.msra.mxu0 0
        %3554 = vmatprep.subr.bf16.mxu0 0
        %3555 = vmatpush1.bf16.xpose.msra.mxu0 0
        %3556 = vmatprep.subr.bf16.mxu0 0
        %3557 = vmatpush1.bf16.xpose.msra.mxu0 0
        %3558 = vmatprep.mubr.bf16.mxu0 0
        %3559 = vmatmul.mubr.bf16.gmra.mrb[0].mxu0 %v3515
        %v3560 = vpop.f32.mrb[0].mxu0
        %v3561 = vadd.f32 0.0, %v3560
        %v3562 = vpop.f32.mrb[0].mxu0
        %v3563 = vpop.f32.mrb[0].mxu0
        %v3564 = vadd.f32 0.0, %v3563
        %v3565 = vpop.f32.mrb[0].mxu0
        %3566 = vmatprep.mubr.bf16.mxu0 0
        %3567 = vmatmul.mubr.bf16.gmra.mrb[0].mxu0 %v3518
        %v3568 = vpop.f32.mrb[0].mxu0
        %v3569 = vadd.f32 0.0, %v3568
        %v3570 = vpop.f32.mrb[0].mxu0
        %v3571 = vpop.f32.mrb[0].mxu0
        %v3572 = vadd.f32 0.0, %v3571
        %v3573 = vpop.f32.mrb[0].mxu0
        %3574 = vdwg.mxu0
        %v3576 = vsel %vm1988, %v1693, 0
        %v3579 = vsel %vm1988, %v1695, 0
        %v3582 = vsel %vm1988, %v1805, 0
        %v3585 = vsel %vm1988, %v1807, 0
        %3587 = vmatprep.subr.bf16.mxu0 0
        %3588 = vmatpush1.bf16.xpose.msra.mxu0 %v3582
        %3589 = vmatprep.subr.bf16.mxu0 0
        %3590 = vmatpush1.bf16.xpose.msra.mxu0 %v3585
        %3591 = vmatprep.subr.bf16.mxu0 0
        %3592 = vmatpush1.bf16.xpose.msra.mxu0 0
        %3593 = vmatprep.subr.bf16.mxu0 0
        %3594 = vmatpush1.bf16.xpose.msra.mxu0 0
        %3595 = vmatprep.subr.bf16.mxu0 0
        %3596 = vmatpush1.bf16.xpose.msra.mxu0 0
        %3597 = vmatprep.subr.bf16.mxu0 0
        %3598 = vmatpush1.bf16.xpose.msra.mxu0 0
        %3599 = vmatprep.subr.bf16.mxu0 0
        %3600 = vmatpush1.bf16.xpose.msra.mxu0 0
        %3601 = vmatprep.subr.bf16.mxu0 0
        %3602 = vmatpush1.bf16.xpose.msra.mxu0 0
        %3603 = vmatprep.subr.bf16.mxu0 0
        %3604 = vmatpush1.bf16.xpose.msra.mxu0 0
        %3605 = vmatprep.subr.bf16.mxu0 0
        %3606 = vmatpush1.bf16.xpose.msra.mxu0 0
        %3607 = vmatprep.subr.bf16.mxu0 0
        %3608 = vmatpush1.bf16.xpose.msra.mxu0 0
        %3609 = vmatprep.subr.bf16.mxu0 0
        %3610 = vmatpush1.bf16.xpose.msra.mxu0 0
        %3611 = vmatprep.subr.bf16.mxu0 0
        %3612 = vmatpush1.bf16.xpose.msra.mxu0 0
        %3613 = vmatprep.subr.bf16.mxu0 0
        %3614 = vmatpush1.bf16.xpose.msra.mxu0 0
        %3615 = vmatprep.subr.bf16.mxu0 0
        %3616 = vmatpush1.bf16.xpose.msra.mxu0 0
        %3617 = vmatprep.subr.bf16.mxu0 0
        %3618 = vmatpush1.bf16.xpose.msra.mxu0 0
        %3619 = vmatprep.mubr.bf16.mxu0 0
        %3620 = vmatmul.mubr.bf16.gmra.mrb[0].mxu0 %v3576
        %v3621 = vpop.f32.mrb[0].mxu0
        %v3622 = vadd.f32 0.0, %v3621
        %v3623 = vpop.f32.mrb[0].mxu0
        %v3624 = vpop.f32.mrb[0].mxu0
        %v3625 = vadd.f32 0.0, %v3624
        %v3626 = vpop.f32.mrb[0].mxu0
        %3627 = vmatprep.mubr.bf16.mxu0 0
        %3628 = vmatmul.mubr.bf16.gmra.mrb[0].mxu0 %v3579
        %v3629 = vpop.f32.mrb[0].mxu0
        %v3630 = vadd.f32 0.0, %v3629
        %v3631 = vpop.f32.mrb[0].mxu0
        %v3632 = vpop.f32.mrb[0].mxu0
        %v3633 = vadd.f32 0.0, %v3632
        %v3634 = vpop.f32.mrb[0].mxu0
        %3635 = vdwg.mxu0
        %v3637 = vsel %vm1988, %v1697, 0
        %v3640 = vsel %vm1988, %v1699, 0
        %v3643 = vsel %vm1988, %v1809, 0
        %v3646 = vsel %vm1988, %v1811, 0
        %3648 = vmatprep.subr.bf16.mxu0 0
        %3649 = vmatpush1.bf16.xpose.msra.mxu0 %v3643
        %3650 = vmatprep.subr.bf16.mxu0 0
        %3651 = vmatpush1.bf16.xpose.msra.mxu0 %v3646
        %3652 = vmatprep.subr.bf16.mxu0 0
        %3653 = vmatpush1.bf16.xpose.msra.mxu0 0
        %3654 = vmatprep.subr.bf16.mxu0 0
        %3655 = vmatpush1.bf16.xpose.msra.mxu0 0
        %3656 = vmatprep.subr.bf16.mxu0 0
        %3657 = vmatpush1.bf16.xpose.msra.mxu0 0
        %3658 = vmatprep.subr.bf16.mxu0 0
        %3659 = vmatpush1.bf16.xpose.msra.mxu0 0
        %3660 = vmatprep.subr.bf16.mxu0 0
        %3661 = vmatpush1.bf16.xpose.msra.mxu0 0
        %3662 = vmatprep.subr.bf16.mxu0 0
        %3663 = vmatpush1.bf16.xpose.msra.mxu0 0
        %3664 = vmatprep.subr.bf16.mxu0 0
        %3665 = vmatpush1.bf16.xpose.msra.mxu0 0
        %3666 = vmatprep.subr.bf16.mxu0 0
        %3667 = vmatpush1.bf16.xpose.msra.mxu0 0
        %3668 = vmatprep.subr.bf16.mxu0 0
        %3669 = vmatpush1.bf16.xpose.msra.mxu0 0
        %3670 = vmatprep.subr.bf16.mxu0 0
        %3671 = vmatpush1.bf16.xpose.msra.mxu0 0
        %3672 = vmatprep.subr.bf16.mxu0 0
        %3673 = vmatpush1.bf16.xpose.msra.mxu0 0
        %3674 = vmatprep.subr.bf16.mxu0 0
        %3675 = vmatpush1.bf16.xpose.msra.mxu0 0
        %3676 = vmatprep.subr.bf16.mxu0 0
        %3677 = vmatpush1.bf16.xpose.msra.mxu0 0
        %3678 = vmatprep.subr.bf16.mxu0 0
        %3679 = vmatpush1.bf16.xpose.msra.mxu0 0
        %3680 = vmatprep.mubr.bf16.mxu0 0
        %3681 = vmatmul.mubr.bf16.gmra.mrb[0].mxu0 %v3637
        %v3682 = vpop.f32.mrb[0].mxu0
        %v3683 = vadd.f32 0.0, %v3682
        %v3684 = vpop.f32.mrb[0].mxu0
        %v3685 = vpop.f32.mrb[0].mxu0
        %v3686 = vadd.f32 0.0, %v3685
        %v3687 = vpop.f32.mrb[0].mxu0
        %3688 = vmatprep.mubr.bf16.mxu0 0
        %3689 = vmatmul.mubr.bf16.gmra.mrb[0].mxu0 %v3640
        %v3690 = vpop.f32.mrb[0].mxu0
        %v3691 = vadd.f32 0.0, %v3690
        %v3692 = vpop.f32.mrb[0].mxu0
        %v3693 = vpop.f32.mrb[0].mxu0
        %v3694 = vadd.f32 0.0, %v3693
        %v3695 = vpop.f32.mrb[0].mxu0
        %3696 = vdwg.mxu0
        %v3698 = vsel %vm1988, %v1701, 0
        %v3701 = vsel %vm1988, %v1703, 0
        %v3704 = vsel %vm1988, %v1813, 0
        %v3707 = vsel %vm1988, %v1815, 0
        %3709 = vmatprep.subr.bf16.mxu0 0
        %3710 = vmatpush1.bf16.xpose.msra.mxu0 %v3704
        %3711 = vmatprep.subr.bf16.mxu0 0
        %3712 = vmatpush1.bf16.xpose.msra.mxu0 %v3707
        %3713 = vmatprep.subr.bf16.mxu0 0
        %3714 = vmatpush1.bf16.xpose.msra.mxu0 0
        %3715 = vmatprep.subr.bf16.mxu0 0
        %3716 = vmatpush1.bf16.xpose.msra.mxu0 0
        %3717 = vmatprep.subr.bf16.mxu0 0
        %3718 = vmatpush1.bf16.xpose.msra.mxu0 0
        %3719 = vmatprep.subr.bf16.mxu0 0
        %3720 = vmatpush1.bf16.xpose.msra.mxu0 0
        %3721 = vmatprep.subr.bf16.mxu0 0
        %3722 = vmatpush1.bf16.xpose.msra.mxu0 0
        %3723 = vmatprep.subr.bf16.mxu0 0
        %3724 = vmatpush1.bf16.xpose.msra.mxu0 0
        %3725 = vmatprep.subr.bf16.mxu0 0
        %3726 = vmatpush1.bf16.xpose.msra.mxu0 0
        %3727 = vmatprep.subr.bf16.mxu0 0
        %3728 = vmatpush1.bf16.xpose.msra.mxu0 0
        %3729 = vmatprep.subr.bf16.mxu0 0
        %3730 = vmatpush1.bf16.xpose.msra.mxu0 0
        %3731 = vmatprep.subr.bf16.mxu0 0
        %3732 = vmatpush1.bf16.xpose.msra.mxu0 0
        %3733 = vmatprep.subr.bf16.mxu0 0
        %3734 = vmatpush1.bf16.xpose.msra.mxu0 0
        %3735 = vmatprep.subr.bf16.mxu0 0
        %3736 = vmatpush1.bf16.xpose.msra.mxu0 0
        %3737 = vmatprep.subr.bf16.mxu0 0
        %3738 = vmatpush1.bf16.xpose.msra.mxu0 0
        %3739 = vmatprep.subr.bf16.mxu0 0
        %3740 = vmatpush1.bf16.xpose.msra.mxu0 0
        %3741 = vmatprep.mubr.bf16.mxu0 0
        %3742 = vmatmul.mubr.bf16.gmra.mrb[0].mxu0 %v3698
        %v3743 = vpop.f32.mrb[0].mxu0
        %v3744 = vadd.f32 0.0, %v3743
        %v3745 = vpop.f32.mrb[0].mxu0
        %v3746 = vpop.f32.mrb[0].mxu0
        %v3747 = vadd.f32 0.0, %v3746
        %v3748 = vpop.f32.mrb[0].mxu0
        %3749 = vmatprep.mubr.bf16.mxu0 0
        %3750 = vmatmul.mubr.bf16.gmra.mrb[0].mxu0 %v3701
        %v3751 = vpop.f32.mrb[0].mxu0
        %v3752 = vadd.f32 0.0, %v3751
        %v3753 = vpop.f32.mrb[0].mxu0
        %v3754 = vpop.f32.mrb[0].mxu0
        %v3755 = vadd.f32 0.0, %v3754
        %v3756 = vpop.f32.mrb[0].mxu0
        %3757 = vdwg.mxu0
        %v3759 = vsel %vm1988, %v1705, 0
        %v3762 = vsel %vm1988, %v1707, 0
        %v3765 = vsel %vm1988, %v1817, 0
        %v3768 = vsel %vm1988, %v1819, 0
        %3770 = vmatprep.subr.bf16.mxu0 0
        %3771 = vmatpush1.bf16.xpose.msra.mxu0 %v3765
        %3772 = vmatprep.subr.bf16.mxu0 0
        %3773 = vmatpush1.bf16.xpose.msra.mxu0 %v3768
        %3774 = vmatprep.subr.bf16.mxu0 0
        %3775 = vmatpush1.bf16.xpose.msra.mxu0 0
        %3776 = vmatprep.subr.bf16.mxu0 0
        %3777 = vmatpush1.bf16.xpose.msra.mxu0 0
        %3778 = vmatprep.subr.bf16.mxu0 0
        %3779 = vmatpush1.bf16.xpose.msra.mxu0 0
        %3780 = vmatprep.subr.bf16.mxu0 0
        %3781 = vmatpush1.bf16.xpose.msra.mxu0 0
        %3782 = vmatprep.subr.bf16.mxu0 0
        %3783 = vmatpush1.bf16.xpose.msra.mxu0 0
        %3784 = vmatprep.subr.bf16.mxu0 0
        %3785 = vmatpush1.bf16.xpose.msra.mxu0 0
        %3786 = vmatprep.subr.bf16.mxu0 0
        %3787 = vmatpush1.bf16.xpose.msra.mxu0 0
        %3788 = vmatprep.subr.bf16.mxu0 0
        %3789 = vmatpush1.bf16.xpose.msra.mxu0 0
        %3790 = vmatprep.subr.bf16.mxu0 0
        %3791 = vmatpush1.bf16.xpose.msra.mxu0 0
        %3792 = vmatprep.subr.bf16.mxu0 0
        %3793 = vmatpush1.bf16.xpose.msra.mxu0 0
        %3794 = vmatprep.subr.bf16.mxu0 0
        %3795 = vmatpush1.bf16.xpose.msra.mxu0 0
        %3796 = vmatprep.subr.bf16.mxu0 0
        %3797 = vmatpush1.bf16.xpose.msra.mxu0 0
        %3798 = vmatprep.subr.bf16.mxu0 0
        %3799 = vmatpush1.bf16.xpose.msra.mxu0 0
        %3800 = vmatprep.subr.bf16.mxu0 0
        %3801 = vmatpush1.bf16.xpose.msra.mxu0 0
        %3802 = vmatprep.mubr.bf16.mxu0 0
        %3803 = vmatmul.mubr.bf16.gmra.mrb[0].mxu0 %v3759
        %v3804 = vpop.f32.mrb[0].mxu0
        %v3805 = vadd.f32 0.0, %v3804
        %v3806 = vpop.f32.mrb[0].mxu0
        %v3807 = vpop.f32.mrb[0].mxu0
        %v3808 = vadd.f32 0.0, %v3807
        %v3809 = vpop.f32.mrb[0].mxu0
        %3810 = vmatprep.mubr.bf16.mxu0 0
        %3811 = vmatmul.mubr.bf16.gmra.mrb[0].mxu0 %v3762
        %v3812 = vpop.f32.mrb[0].mxu0
        %v3813 = vadd.f32 0.0, %v3812
        %v3814 = vpop.f32.mrb[0].mxu0
        %v3815 = vpop.f32.mrb[0].mxu0
        %v3816 = vadd.f32 0.0, %v3815
        %v3817 = vpop.f32.mrb[0].mxu0
        %3818 = vdwg.mxu0
        %v3820 = vsel %vm1988, %v1709, 0
        %v3823 = vsel %vm1988, %v1711, 0
        %v3826 = vsel %vm1988, %v1821, 0
        %v3829 = vsel %vm1988, %v1823, 0
        %3831 = vmatprep.subr.bf16.mxu0 0
        %3832 = vmatpush1.bf16.xpose.msra.mxu0 %v3826
        %3833 = vmatprep.subr.bf16.mxu0 0
        %3834 = vmatpush1.bf16.xpose.msra.mxu0 %v3829
        %3835 = vmatprep.subr.bf16.mxu0 0
        %3836 = vmatpush1.bf16.xpose.msra.mxu0 0
        %3837 = vmatprep.subr.bf16.mxu0 0
        %3838 = vmatpush1.bf16.xpose.msra.mxu0 0
        %3839 = vmatprep.subr.bf16.mxu0 0
        %3840 = vmatpush1.bf16.xpose.msra.mxu0 0
        %3841 = vmatprep.subr.bf16.mxu0 0
        %3842 = vmatpush1.bf16.xpose.msra.mxu0 0
        %3843 = vmatprep.subr.bf16.mxu0 0
        %3844 = vmatpush1.bf16.xpose.msra.mxu0 0
        %3845 = vmatprep.subr.bf16.mxu0 0
        %3846 = vmatpush1.bf16.xpose.msra.mxu0 0
        %3847 = vmatprep.subr.bf16.mxu0 0
        %3848 = vmatpush1.bf16.xpose.msra.mxu0 0
        %3849 = vmatprep.subr.bf16.mxu0 0
        %3850 = vmatpush1.bf16.xpose.msra.mxu0 0
        %3851 = vmatprep.subr.bf16.mxu0 0
        %3852 = vmatpush1.bf16.xpose.msra.mxu0 0
        %3853 = vmatprep.subr.bf16.mxu0 0
        %3854 = vmatpush1.bf16.xpose.msra.mxu0 0
        %3855 = vmatprep.subr.bf16.mxu0 0
        %3856 = vmatpush1.bf16.xpose.msra.mxu0 0
        %3857 = vmatprep.subr.bf16.mxu0 0
        %3858 = vmatpush1.bf16.xpose.msra.mxu0 0
        %3859 = vmatprep.subr.bf16.mxu0 0
        %3860 = vmatpush1.bf16.xpose.msra.mxu0 0
        %3861 = vmatprep.subr.bf16.mxu0 0
        %3862 = vmatpush1.bf16.xpose.msra.mxu0 0
        %3863 = vmatprep.mubr.bf16.mxu0 0
        %3864 = vmatmul.mubr.bf16.gmra.mrb[0].mxu0 %v3820
        %v3865 = vpop.f32.mrb[0].mxu0
        %v3866 = vadd.f32 0.0, %v3865
        %v3867 = vpop.f32.mrb[0].mxu0
        %v3868 = vpop.f32.mrb[0].mxu0
        %v3869 = vadd.f32 0.0, %v3868
        %v3870 = vpop.f32.mrb[0].mxu0
        %3871 = vmatprep.mubr.bf16.mxu0 0
        %3872 = vmatmul.mubr.bf16.gmra.mrb[0].mxu0 %v3823
        %v3873 = vpop.f32.mrb[0].mxu0
        %v3874 = vadd.f32 0.0, %v3873
        %v3875 = vpop.f32.mrb[0].mxu0
        %v3876 = vpop.f32.mrb[0].mxu0
        %v3877 = vadd.f32 0.0, %v3876
        %v3878 = vpop.f32.mrb[0].mxu0
        %3879 = vdwg.mxu0
        %v3881 = vsel %vm1988, %v1713, 0
        %v3884 = vsel %vm1988, %v1715, 0
        %v3887 = vsel %vm1988, %v1825, 0
        %v3890 = vsel %vm1988, %v1827, 0
        %3892 = vmatprep.subr.bf16.mxu0 0
        %3893 = vmatpush1.bf16.xpose.msra.mxu0 %v3887
        %3894 = vmatprep.subr.bf16.mxu0 0
        %3895 = vmatpush1.bf16.xpose.msra.mxu0 %v3890
        %3896 = vmatprep.subr.bf16.mxu0 0
        %3897 = vmatpush1.bf16.xpose.msra.mxu0 0
        %3898 = vmatprep.subr.bf16.mxu0 0
        %3899 = vmatpush1.bf16.xpose.msra.mxu0 0
        %3900 = vmatprep.subr.bf16.mxu0 0
        %3901 = vmatpush1.bf16.xpose.msra.mxu0 0
        %3902 = vmatprep.subr.bf16.mxu0 0
        %3903 = vmatpush1.bf16.xpose.msra.mxu0 0
        %3904 = vmatprep.subr.bf16.mxu0 0
        %3905 = vmatpush1.bf16.xpose.msra.mxu0 0
        %3906 = vmatprep.subr.bf16.mxu0 0
        %3907 = vmatpush1.bf16.xpose.msra.mxu0 0
        %3908 = vmatprep.subr.bf16.mxu0 0
        %3909 = vmatpush1.bf16.xpose.msra.mxu0 0
        %3910 = vmatprep.subr.bf16.mxu0 0
        %3911 = vmatpush1.bf16.xpose.msra.mxu0 0
        %3912 = vmatprep.subr.bf16.mxu0 0
        %3913 = vmatpush1.bf16.xpose.msra.mxu0 0
        %3914 = vmatprep.subr.bf16.mxu0 0
        %3915 = vmatpush1.bf16.xpose.msra.mxu0 0
        %3916 = vmatprep.subr.bf16.mxu0 0
        %3917 = vmatpush1.bf16.xpose.msra.mxu0 0
        %3918 = vmatprep.subr.bf16.mxu0 0
        %3919 = vmatpush1.bf16.xpose.msra.mxu0 0
        %3920 = vmatprep.subr.bf16.mxu0 0
        %3921 = vmatpush1.bf16.xpose.msra.mxu0 0
        %3922 = vmatprep.subr.bf16.mxu0 0
        %3923 = vmatpush1.bf16.xpose.msra.mxu0 0
        %3924 = vmatprep.mubr.bf16.mxu0 0
        %3925 = vmatmul.mubr.bf16.gmra.mrb[0].mxu0 %v3881
        %v3926 = vpop.f32.mrb[0].mxu0
        %v3927 = vadd.f32 0.0, %v3926
        %v3928 = vpop.f32.mrb[0].mxu0
        %v3929 = vpop.f32.mrb[0].mxu0
        %v3930 = vadd.f32 0.0, %v3929
        %v3931 = vpop.f32.mrb[0].mxu0
        %3932 = vmatprep.mubr.bf16.mxu0 0
        %3933 = vmatmul.mubr.bf16.gmra.mrb[0].mxu0 %v3884
        %v3934 = vpop.f32.mrb[0].mxu0
        %v3935 = vadd.f32 0.0, %v3934
        %v3936 = vpop.f32.mrb[0].mxu0
        %v3937 = vpop.f32.mrb[0].mxu0
        %v3938 = vadd.f32 0.0, %v3937
        %v3939 = vpop.f32.mrb[0].mxu0
        %3940 = vdwg.mxu0
        %v3941 = vsel %vm1988, %v2036, -inf
        %3942 = vmax.xlane.f32.xlu0 %v3941
        %v3943 = vpop.xlane.xlu0 %3942
        %v3944 = vsel %vm1988, %v2039, -inf
        %3945 = vmax.xlane.f32.xlu0 %v3944
        %v3946 = vpop.xlane.xlu0 %3945
        %v3947 = vsel %vm1988, %v2044, -inf
        %3948 = vmax.xlane.f32.xlu0 %v3947
        %v3949 = vpop.xlane.xlu0 %3948
        %v3950 = vsel %vm1988, %v2047, -inf
        %3951 = vmax.xlane.f32.xlu0 %v3950
        %v3952 = vpop.xlane.xlu0 %3951
        %v3953 = vsel %vm1988, %v2097, -inf
        %3954 = vmax.xlane.f32.xlu0 %v3953
        %v3955 = vpop.xlane.xlu0 %3954
        %v3956 = vsel %vm1988, %v2100, -inf
        %3957 = vmax.xlane.f32.xlu0 %v3956
        %v3958 = vpop.xlane.xlu0 %3957
        %v3959 = vsel %vm1988, %v2105, -inf
        %3960 = vmax.xlane.f32.xlu0 %v3959
        %v3961 = vpop.xlane.xlu0 %3960
        %v3962 = vsel %vm1988, %v2108, -inf
        %3963 = vmax.xlane.f32.xlu0 %v3962
        %v3964 = vpop.xlane.xlu0 %3963
        %v3965 = vsel %vm1988, %v2158, -inf
        %3966 = vmax.xlane.f32.xlu0 %v3965
        %v3967 = vpop.xlane.xlu0 %3966
        %v3968 = vsel %vm1988, %v2161, -inf
        %3969 = vmax.xlane.f32.xlu0 %v3968
        %v3970 = vpop.xlane.xlu0 %3969
        %v3971 = vsel %vm1988, %v2166, -inf
        %3972 = vmax.xlane.f32.xlu0 %v3971
        %v3973 = vpop.xlane.xlu0 %3972
        %v3974 = vsel %vm1988, %v2169, -inf
        %3975 = vmax.xlane.f32.xlu0 %v3974
        %v3976 = vpop.xlane.xlu0 %3975
        %v3977 = vsel %vm1988, %v2219, -inf
        %3978 = vmax.xlane.f32.xlu0 %v3977
        %v3979 = vpop.xlane.xlu0 %3978
        %v3980 = vsel %vm1988, %v2222, -inf
        %3981 = vmax.xlane.f32.xlu0 %v3980
        %v3982 = vpop.xlane.xlu0 %3981
        %v3983 = vsel %vm1988, %v2227, -inf
        %3984 = vmax.xlane.f32.xlu0 %v3983
        %v3985 = vpop.xlane.xlu0 %3984
        %v3986 = vsel %vm1988, %v2230, -inf
        %3987 = vmax.xlane.f32.xlu0 %v3986
        %v3988 = vpop.xlane.xlu0 %3987
        %v3989 = vsel %vm1988, %v2280, -inf
        %3990 = vmax.xlane.f32.xlu0 %v3989
        %v3991 = vpop.xlane.xlu0 %3990
        %v3992 = vsel %vm1988, %v2283, -inf
        %3993 = vmax.xlane.f32.xlu0 %v3992
        %v3994 = vpop.xlane.xlu0 %3993
        %v3995 = vsel %vm1988, %v2288, -inf
        %3996 = vmax.xlane.f32.xlu0 %v3995
        %v3997 = vpop.xlane.xlu0 %3996
        %v3998 = vsel %vm1988, %v2291, -inf
        %3999 = vmax.xlane.f32.xlu0 %v3998
        %v4000 = vpop.xlane.xlu0 %3999
        %v4001 = vsel %vm1988, %v2341, -inf
        %4002 = vmax.xlane.f32.xlu0 %v4001
        %v4003 = vpop.xlane.xlu0 %4002
        %v4004 = vsel %vm1988, %v2344, -inf
        %4005 = vmax.xlane.f32.xlu0 %v4004
        %v4006 = vpop.xlane.xlu0 %4005
        %v4007 = vsel %vm1988, %v2349, -inf
        %4008 = vmax.xlane.f32.xlu0 %v4007
        %v4009 = vpop.xlane.xlu0 %4008
        %v4010 = vsel %vm1988, %v2352, -inf
        %4011 = vmax.xlane.f32.xlu0 %v4010
        %v4012 = vpop.xlane.xlu0 %4011
        %v4013 = vsel %vm1988, %v2402, -inf
        %4014 = vmax.xlane.f32.xlu0 %v4013
        %v4015 = vpop.xlane.xlu0 %4014
        %v4016 = vsel %vm1988, %v2405, -inf
        %4017 = vmax.xlane.f32.xlu0 %v4016
        %v4018 = vpop.xlane.xlu0 %4017
        %v4019 = vsel %vm1988, %v2410, -inf
        %4020 = vmax.xlane.f32.xlu0 %v4019
        %v4021 = vpop.xlane.xlu0 %4020
        %v4022 = vsel %vm1988, %v2413, -inf
        %4023 = vmax.xlane.f32.xlu0 %v4022
        %v4024 = vpop.xlane.xlu0 %4023
        %v4025 = vsel %vm1988, %v2463, -inf
        %4026 = vmax.xlane.f32.xlu0 %v4025
        %v4027 = vpop.xlane.xlu0 %4026
        %v4028 = vsel %vm1988, %v2466, -inf
        %4029 = vmax.xlane.f32.xlu0 %v4028
        %v4030 = vpop.xlane.xlu0 %4029
        %v4031 = vsel %vm1988, %v2471, -inf
        %4032 = vmax.xlane.f32.xlu0 %v4031
        %v4033 = vpop.xlane.xlu0 %4032
        %v4034 = vsel %vm1988, %v2474, -inf
        %4035 = vmax.xlane.f32.xlu0 %v4034
        %v4036 = vpop.xlane.xlu0 %4035
        %v4037 = vsel %vm1988, %v2524, -inf
        %4038 = vmax.xlane.f32.xlu0 %v4037
        %v4039 = vpop.xlane.xlu0 %4038
        %v4040 = vsel %vm1988, %v2527, -inf
        %4041 = vmax.xlane.f32.xlu0 %v4040
        %v4042 = vpop.xlane.xlu0 %4041
        %v4043 = vsel %vm1988, %v2532, -inf
        %4044 = vmax.xlane.f32.xlu0 %v4043
        %v4045 = vpop.xlane.xlu0 %4044
        %v4046 = vsel %vm1988, %v2535, -inf
        %4047 = vmax.xlane.f32.xlu0 %v4046
        %v4048 = vpop.xlane.xlu0 %4047
        %v4049 = vsel %vm1988, %v2585, -inf
        %4050 = vmax.xlane.f32.xlu0 %v4049
        %v4051 = vpop.xlane.xlu0 %4050
        %v4052 = vsel %vm1988, %v2588, -inf
        %4053 = vmax.xlane.f32.xlu0 %v4052
        %v4054 = vpop.xlane.xlu0 %4053
        %v4055 = vsel %vm1988, %v2593, -inf
        %4056 = vmax.xlane.f32.xlu0 %v4055
        %v4057 = vpop.xlane.xlu0 %4056
        %v4058 = vsel %vm1988, %v2596, -inf
        %4059 = vmax.xlane.f32.xlu0 %v4058
        %v4060 = vpop.xlane.xlu0 %4059
        %v4061 = vsel %vm1988, %v2646, -inf
        %4062 = vmax.xlane.f32.xlu0 %v4061
        %v4063 = vpop.xlane.xlu0 %4062
        %v4064 = vsel %vm1988, %v2649, -inf
        %4065 = vmax.xlane.f32.xlu0 %v4064
        %v4066 = vpop.xlane.xlu0 %4065
        %v4067 = vsel %vm1988, %v2654, -inf
        %4068 = vmax.xlane.f32.xlu0 %v4067
        %v4069 = vpop.xlane.xlu0 %4068
        %v4070 = vsel %vm1988, %v2657, -inf
        %4071 = vmax.xlane.f32.xlu0 %v4070
        %v4072 = vpop.xlane.xlu0 %4071
        %v4073 = vsel %vm1988, %v2707, -inf
        %4074 = vmax.xlane.f32.xlu0 %v4073
        %v4075 = vpop.xlane.xlu0 %4074
        %v4076 = vsel %vm1988, %v2710, -inf
        %4077 = vmax.xlane.f32.xlu0 %v4076
        %v4078 = vpop.xlane.xlu0 %4077
        %v4079 = vsel %vm1988, %v2715, -inf
        %4080 = vmax.xlane.f32.xlu0 %v4079
        %v4081 = vpop.xlane.xlu0 %4080
        %v4082 = vsel %vm1988, %v2718, -inf
        %4083 = vmax.xlane.f32.xlu0 %v4082
        %v4084 = vpop.xlane.xlu0 %4083
        %v4085 = vsel %vm1988, %v2768, -inf
        %4086 = vmax.xlane.f32.xlu0 %v4085
        %v4087 = vpop.xlane.xlu0 %4086
        %v4088 = vsel %vm1988, %v2771, -inf
        %4089 = vmax.xlane.f32.xlu0 %v4088
        %v4090 = vpop.xlane.xlu0 %4089
        %v4091 = vsel %vm1988, %v2776, -inf
        %4092 = vmax.xlane.f32.xlu0 %v4091
        %v4093 = vpop.xlane.xlu0 %4092
        %v4094 = vsel %vm1988, %v2779, -inf
        %4095 = vmax.xlane.f32.xlu0 %v4094
        %v4096 = vpop.xlane.xlu0 %4095
        %v4097 = vsel %vm1988, %v2829, -inf
        %4098 = vmax.xlane.f32.xlu0 %v4097
        %v4099 = vpop.xlane.xlu0 %4098
        %v4100 = vsel %vm1988, %v2832, -inf
        %4101 = vmax.xlane.f32.xlu0 %v4100
        %v4102 = vpop.xlane.xlu0 %4101
        %v4103 = vsel %vm1988, %v2837, -inf
        %4104 = vmax.xlane.f32.xlu0 %v4103
        %v4105 = vpop.xlane.xlu0 %4104
        %v4106 = vsel %vm1988, %v2840, -inf
        %4107 = vmax.xlane.f32.xlu0 %v4106
        %v4108 = vpop.xlane.xlu0 %4107
        %v4109 = vsel %vm1988, %v2890, -inf
        %4110 = vmax.xlane.f32.xlu0 %v4109
        %v4111 = vpop.xlane.xlu0 %4110
        %v4112 = vsel %vm1988, %v2893, -inf
        %4113 = vmax.xlane.f32.xlu0 %v4112
        %v4114 = vpop.xlane.xlu0 %4113
        %v4115 = vsel %vm1988, %v2898, -inf
        %4116 = vmax.xlane.f32.xlu0 %v4115
        %v4117 = vpop.xlane.xlu0 %4116
        %v4118 = vsel %vm1988, %v2901, -inf
        %4119 = vmax.xlane.f32.xlu0 %v4118
        %v4120 = vpop.xlane.xlu0 %4119
        %v4121 = vsel %vm1988, %v2951, -inf
        %4122 = vmax.xlane.f32.xlu0 %v4121
        %v4123 = vpop.xlane.xlu0 %4122
        %v4124 = vsel %vm1988, %v2954, -inf
        %4125 = vmax.xlane.f32.xlu0 %v4124
        %v4126 = vpop.xlane.xlu0 %4125
        %v4127 = vsel %vm1988, %v2959, -inf
        %4128 = vmax.xlane.f32.xlu0 %v4127
        %v4129 = vpop.xlane.xlu0 %4128
        %v4130 = vsel %vm1988, %v2962, -inf
        %4131 = vmax.xlane.f32.xlu0 %v4130
        %v4132 = vpop.xlane.xlu0 %4131
        %v4133 = vsel %vm1988, %v3012, -inf
        %4134 = vmax.xlane.f32.xlu0 %v4133
        %v4135 = vpop.xlane.xlu0 %4134
        %v4136 = vsel %vm1988, %v3015, -inf
        %4137 = vmax.xlane.f32.xlu0 %v4136
        %v4138 = vpop.xlane.xlu0 %4137
        %v4139 = vsel %vm1988, %v3020, -inf
        %4140 = vmax.xlane.f32.xlu0 %v4139
        %v4141 = vpop.xlane.xlu0 %4140
        %v4142 = vsel %vm1988, %v3023, -inf
        %4143 = vmax.xlane.f32.xlu0 %v4142
        %v4144 = vpop.xlane.xlu0 %4143
        %v4145 = vsel %vm1988, %v3073, -inf
        %4146 = vmax.xlane.f32.xlu0 %v4145
        %v4147 = vpop.xlane.xlu0 %4146
        %v4148 = vsel %vm1988, %v3076, -inf
        %4149 = vmax.xlane.f32.xlu0 %v4148
        %v4150 = vpop.xlane.xlu0 %4149
        %v4151 = vsel %vm1988, %v3081, -inf
        %4152 = vmax.xlane.f32.xlu0 %v4151
        %v4153 = vpop.xlane.xlu0 %4152
        %v4154 = vsel %vm1988, %v3084, -inf
        %4155 = vmax.xlane.f32.xlu0 %v4154
        %v4156 = vpop.xlane.xlu0 %4155
        %v4157 = vsel %vm1988, %v3134, -inf
        %4158 = vmax.xlane.f32.xlu0 %v4157
        %v4159 = vpop.xlane.xlu0 %4158
        %v4160 = vsel %vm1988, %v3137, -inf
        %4161 = vmax.xlane.f32.xlu0 %v4160
        %v4162 = vpop.xlane.xlu0 %4161
        %v4163 = vsel %vm1988, %v3142, -inf
        %4164 = vmax.xlane.f32.xlu0 %v4163
        %v4165 = vpop.xlane.xlu0 %4164
        %v4166 = vsel %vm1988, %v3145, -inf
        %4167 = vmax.xlane.f32.xlu0 %v4166
        %v4168 = vpop.xlane.xlu0 %4167
        %v4169 = vsel %vm1988, %v3195, -inf
        %4170 = vmax.xlane.f32.xlu0 %v4169
        %v4171 = vpop.xlane.xlu0 %4170
        %v4172 = vsel %vm1988, %v3198, -inf
        %4173 = vmax.xlane.f32.xlu0 %v4172
        %v4174 = vpop.xlane.xlu0 %4173
        %v4175 = vsel %vm1988, %v3203, -inf
        %4176 = vmax.xlane.f32.xlu0 %v4175
        %v4177 = vpop.xlane.xlu0 %4176
        %v4178 = vsel %vm1988, %v3206, -inf
        %4179 = vmax.xlane.f32.xlu0 %v4178
        %v4180 = vpop.xlane.xlu0 %4179
        %v4181 = vsel %vm1988, %v3256, -inf
        %4182 = vmax.xlane.f32.xlu0 %v4181
        %v4183 = vpop.xlane.xlu0 %4182
        %v4184 = vsel %vm1988, %v3259, -inf
        %4185 = vmax.xlane.f32.xlu0 %v4184
        %v4186 = vpop.xlane.xlu0 %4185
        %v4187 = vsel %vm1988, %v3264, -inf
        %4188 = vmax.xlane.f32.xlu0 %v4187
        %v4189 = vpop.xlane.xlu0 %4188
        %v4190 = vsel %vm1988, %v3267, -inf
        %4191 = vmax.xlane.f32.xlu0 %v4190
        %v4192 = vpop.xlane.xlu0 %4191
        %v4193 = vsel %vm1988, %v3317, -inf
        %4194 = vmax.xlane.f32.xlu0 %v4193
        %v4195 = vpop.xlane.xlu0 %4194
        %v4196 = vsel %vm1988, %v3320, -inf
        %4197 = vmax.xlane.f32.xlu0 %v4196
        %v4198 = vpop.xlane.xlu0 %4197
        %v4199 = vsel %vm1988, %v3325, -inf
        %4200 = vmax.xlane.f32.xlu0 %v4199
        %v4201 = vpop.xlane.xlu0 %4200
        %v4202 = vsel %vm1988, %v3328, -inf
        %4203 = vmax.xlane.f32.xlu0 %v4202
        %v4204 = vpop.xlane.xlu0 %4203
        %v4205 = vsel %vm1988, %v3378, -inf
        %4206 = vmax.xlane.f32.xlu0 %v4205
        %v4207 = vpop.xlane.xlu0 %4206
        %v4208 = vsel %vm1988, %v3381, -inf
        %4209 = vmax.xlane.f32.xlu0 %v4208
        %v4210 = vpop.xlane.xlu0 %4209
        %v4211 = vsel %vm1988, %v3386, -inf
        %4212 = vmax.xlane.f32.xlu0 %v4211
        %v4213 = vpop.xlane.xlu0 %4212
        %v4214 = vsel %vm1988, %v3389, -inf
        %4215 = vmax.xlane.f32.xlu0 %v4214
        %v4216 = vpop.xlane.xlu0 %4215
        %v4217 = vsel %vm1988, %v3439, -inf
        %4218 = vmax.xlane.f32.xlu0 %v4217
        %v4219 = vpop.xlane.xlu0 %4218
        %v4220 = vsel %vm1988, %v3442, -inf
        %4221 = vmax.xlane.f32.xlu0 %v4220
        %v4222 = vpop.xlane.xlu0 %4221
        %v4223 = vsel %vm1988, %v3447, -inf
        %4224 = vmax.xlane.f32.xlu0 %v4223
        %v4225 = vpop.xlane.xlu0 %4224
        %v4226 = vsel %vm1988, %v3450, -inf
        %4227 = vmax.xlane.f32.xlu0 %v4226
        %v4228 = vpop.xlane.xlu0 %4227
        %v4229 = vsel %vm1988, %v3500, -inf
        %4230 = vmax.xlane.f32.xlu0 %v4229
        %v4231 = vpop.xlane.xlu0 %4230
        %v4232 = vsel %vm1988, %v3503, -inf
        %4233 = vmax.xlane.f32.xlu0 %v4232
        %v4234 = vpop.xlane.xlu0 %4233
        %v4235 = vsel %vm1988, %v3508, -inf
        %4236 = vmax.xlane.f32.xlu0 %v4235
        %v4237 = vpop.xlane.xlu0 %4236
        %v4238 = vsel %vm1988, %v3511, -inf
        %4239 = vmax.xlane.f32.xlu0 %v4238
        %v4240 = vpop.xlane.xlu0 %4239
        %v4241 = vsel %vm1988, %v3561, -inf
        %4242 = vmax.xlane.f32.xlu0 %v4241
        %v4243 = vpop.xlane.xlu0 %4242
        %v4244 = vsel %vm1988, %v3564, -inf
        %4245 = vmax.xlane.f32.xlu0 %v4244
        %v4246 = vpop.xlane.xlu0 %4245
        %v4247 = vsel %vm1988, %v3569, -inf
        %4248 = vmax.xlane.f32.xlu0 %v4247
        %v4249 = vpop.xlane.xlu0 %4248
        %v4250 = vsel %vm1988, %v3572, -inf
        %4251 = vmax.xlane.f32.xlu0 %v4250
        %v4252 = vpop.xlane.xlu0 %4251
        %v4253 = vsel %vm1988, %v3622, -inf
        %4254 = vmax.xlane.f32.xlu0 %v4253
        %v4255 = vpop.xlane.xlu0 %4254
        %v4256 = vsel %vm1988, %v3625, -inf
        %4257 = vmax.xlane.f32.xlu0 %v4256
        %v4258 = vpop.xlane.xlu0 %4257
        %v4259 = vsel %vm1988, %v3630, -inf
        %4260 = vmax.xlane.f32.xlu0 %v4259
        %v4261 = vpop.xlane.xlu0 %4260
        %v4262 = vsel %vm1988, %v3633, -inf
        %4263 = vmax.xlane.f32.xlu0 %v4262
        %v4264 = vpop.xlane.xlu0 %4263
        %v4265 = vsel %vm1988, %v3683, -inf
        %4266 = vmax.xlane.f32.xlu0 %v4265
        %v4267 = vpop.xlane.xlu0 %4266
        %v4268 = vsel %vm1988, %v3686, -inf
        %4269 = vmax.xlane.f32.xlu0 %v4268
        %v4270 = vpop.xlane.xlu0 %4269
        %v4271 = vsel %vm1988, %v3691, -inf
        %4272 = vmax.xlane.f32.xlu0 %v4271
        %v4273 = vpop.xlane.xlu0 %4272
        %v4274 = vsel %vm1988, %v3694, -inf
        %4275 = vmax.xlane.f32.xlu0 %v4274
        %v4276 = vpop.xlane.xlu0 %4275
        %v4277 = vsel %vm1988, %v3744, -inf
        %4278 = vmax.xlane.f32.xlu0 %v4277
        %v4279 = vpop.xlane.xlu0 %4278
        %v4280 = vsel %vm1988, %v3747, -inf
        %4281 = vmax.xlane.f32.xlu0 %v4280
        %v4282 = vpop.xlane.xlu0 %4281
        %v4283 = vsel %vm1988, %v3752, -inf
        %4284 = vmax.xlane.f32.xlu0 %v4283
        %v4285 = vpop.xlane.xlu0 %4284
        %v4286 = vsel %vm1988, %v3755, -inf
        %4287 = vmax.xlane.f32.xlu0 %v4286
        %v4288 = vpop.xlane.xlu0 %4287
        %v4289 = vsel %vm1988, %v3805, -inf
        %4290 = vmax.xlane.f32.xlu0 %v4289
        %v4291 = vpop.xlane.xlu0 %4290
        %v4292 = vsel %vm1988, %v3808, -inf
        %4293 = vmax.xlane.f32.xlu0 %v4292
        %v4294 = vpop.xlane.xlu0 %4293
        %v4295 = vsel %vm1988, %v3813, -inf
        %4296 = vmax.xlane.f32.xlu0 %v4295
        %v4297 = vpop.xlane.xlu0 %4296
        %v4298 = vsel %vm1988, %v3816, -inf
        %4299 = vmax.xlane.f32.xlu0 %v4298
        %v4300 = vpop.xlane.xlu0 %4299
        %v4301 = vsel %vm1988, %v3866, -inf
        %4302 = vmax.xlane.f32.xlu0 %v4301
        %v4303 = vpop.xlane.xlu0 %4302
        %v4304 = vsel %vm1988, %v3869, -inf
        %4305 = vmax.xlane.f32.xlu0 %v4304
        %v4306 = vpop.xlane.xlu0 %4305
        %v4307 = vsel %vm1988, %v3874, -inf
        %4308 = vmax.xlane.f32.xlu0 %v4307
        %v4309 = vpop.xlane.xlu0 %4308
        %v4310 = vsel %vm1988, %v3877, -inf
        %4311 = vmax.xlane.f32.xlu0 %v4310
        %v4312 = vpop.xlane.xlu0 %4311
        %v4313 = vsel %vm1988, %v3927, -inf
        %4314 = vmax.xlane.f32.xlu0 %v4313
        %v4315 = vpop.xlane.xlu0 %4314
        %v4316 = vsel %vm1988, %v3930, -inf
        %4317 = vmax.xlane.f32.xlu0 %v4316
        %v4318 = vpop.xlane.xlu0 %4317
        %v4319 = vsel %vm1988, %v3935, -inf
        %4320 = vmax.xlane.f32.xlu0 %v4319
        %v4321 = vpop.xlane.xlu0 %4320
        %v4322 = vsel %vm1988, %v3938, -inf
        %4323 = vmax.xlane.f32.xlu0 %v4322
        %v4324 = vpop.xlane.xlu0 %4323
        %v4325 = vsub.f32 %v2036, %v3943
        %v4326 = vsub.f32 %v2039, %v3946
        %v4327 = vsub.f32 %v2044, %v3949
        %v4328 = vsub.f32 %v2047, %v3952
        %v4329 = vsub.f32 %v2097, %v3955
        %v4330 = vsub.f32 %v2100, %v3958
        %v4331 = vsub.f32 %v2105, %v3961
        %v4332 = vsub.f32 %v2108, %v3964
        %v4333 = vsub.f32 %v2158, %v3967
        %v4334 = vsub.f32 %v2161, %v3970
        %v4335 = vsub.f32 %v2166, %v3973
        %v4336 = vsub.f32 %v2169, %v3976
        %v4337 = vsub.f32 %v2219, %v3979
        %v4338 = vsub.f32 %v2222, %v3982
        %v4339 = vsub.f32 %v2227, %v3985
        %v4340 = vsub.f32 %v2230, %v3988
        %v4341 = vsub.f32 %v2280, %v3991
        %v4342 = vsub.f32 %v2283, %v3994
        %v4343 = vsub.f32 %v2288, %v3997
        %v4344 = vsub.f32 %v2291, %v4000
        %v4345 = vsub.f32 %v2341, %v4003
        %v4346 = vsub.f32 %v2344, %v4006
        %v4347 = vsub.f32 %v2349, %v4009
        %v4348 = vsub.f32 %v2352, %v4012
        %v4349 = vsub.f32 %v2402, %v4015
        %v4350 = vsub.f32 %v2405, %v4018
        %v4351 = vsub.f32 %v2410, %v4021
        %v4352 = vsub.f32 %v2413, %v4024
        %v4353 = vsub.f32 %v2463, %v4027
        %v4354 = vsub.f32 %v2466, %v4030
        %v4355 = vsub.f32 %v2471, %v4033
        %v4356 = vsub.f32 %v2474, %v4036
        %v4357 = vsub.f32 %v2524, %v4039
        %v4358 = vsub.f32 %v2527, %v4042
        %v4359 = vsub.f32 %v2532, %v4045
        %v4360 = vsub.f32 %v2535, %v4048
        %v4361 = vsub.f32 %v2585, %v4051
        %v4362 = vsub.f32 %v2588, %v4054
        %v4363 = vsub.f32 %v2593, %v4057
        %v4364 = vsub.f32 %v2596, %v4060
        %v4365 = vsub.f32 %v2646, %v4063
        %v4366 = vsub.f32 %v2649, %v4066
        %v4367 = vsub.f32 %v2654, %v4069
        %v4368 = vsub.f32 %v2657, %v4072
        %v4369 = vsub.f32 %v2707, %v4075
        %v4370 = vsub.f32 %v2710, %v4078
        %v4371 = vsub.f32 %v2715, %v4081
        %v4372 = vsub.f32 %v2718, %v4084
        %v4373 = vsub.f32 %v2768, %v4087
        %v4374 = vsub.f32 %v2771, %v4090
        %v4375 = vsub.f32 %v2776, %v4093
        %v4376 = vsub.f32 %v2779, %v4096
        %v4377 = vsub.f32 %v2829, %v4099
        %v4378 = vsub.f32 %v2832, %v4102
        %v4379 = vsub.f32 %v2837, %v4105
        %v4380 = vsub.f32 %v2840, %v4108
        %v4381 = vsub.f32 %v2890, %v4111
        %v4382 = vsub.f32 %v2893, %v4114
        %v4383 = vsub.f32 %v2898, %v4117
        %v4384 = vsub.f32 %v2901, %v4120
        %v4385 = vsub.f32 %v2951, %v4123
        %v4386 = vsub.f32 %v2954, %v4126
        %v4387 = vsub.f32 %v2959, %v4129
        %v4388 = vsub.f32 %v2962, %v4132
        %v4389 = vsub.f32 %v3012, %v4135
        %v4390 = vsub.f32 %v3015, %v4138
        %v4391 = vsub.f32 %v3020, %v4141
        %v4392 = vsub.f32 %v3023, %v4144
        %v4393 = vsub.f32 %v3073, %v4147
        %v4394 = vsub.f32 %v3076, %v4150
        %v4395 = vsub.f32 %v3081, %v4153
        %v4396 = vsub.f32 %v3084, %v4156
        %v4397 = vsub.f32 %v3134, %v4159
        %v4398 = vsub.f32 %v3137, %v4162
        %v4399 = vsub.f32 %v3142, %v4165
        %v4400 = vsub.f32 %v3145, %v4168
        %v4401 = vsub.f32 %v3195, %v4171
        %v4402 = vsub.f32 %v3198, %v4174
        %v4403 = vsub.f32 %v3203, %v4177
        %v4404 = vsub.f32 %v3206, %v4180
        %v4405 = vsub.f32 %v3256, %v4183
        %v4406 = vsub.f32 %v3259, %v4186
        %v4407 = vsub.f32 %v3264, %v4189
        %v4408 = vsub.f32 %v3267, %v4192
        %v4409 = vsub.f32 %v3317, %v4195
        %v4410 = vsub.f32 %v3320, %v4198
        %v4411 = vsub.f32 %v3325, %v4201
        %v4412 = vsub.f32 %v3328, %v4204
        %v4413 = vsub.f32 %v3378, %v4207
        %v4414 = vsub.f32 %v3381, %v4210
        %v4415 = vsub.f32 %v3386, %v4213
        %v4416 = vsub.f32 %v3389, %v4216
        %v4417 = vsub.f32 %v3439, %v4219
        %v4418 = vsub.f32 %v3442, %v4222
        %v4419 = vsub.f32 %v3447, %v4225
        %v4420 = vsub.f32 %v3450, %v4228
        %v4421 = vsub.f32 %v3500, %v4231
        %v4422 = vsub.f32 %v3503, %v4234
        %v4423 = vsub.f32 %v3508, %v4237
        %v4424 = vsub.f32 %v3511, %v4240
        %v4425 = vsub.f32 %v3561, %v4243
        %v4426 = vsub.f32 %v3564, %v4246
        %v4427 = vsub.f32 %v3569, %v4249
        %v4428 = vsub.f32 %v3572, %v4252
        %v4429 = vsub.f32 %v3622, %v4255
        %v4430 = vsub.f32 %v3625, %v4258
        %v4431 = vsub.f32 %v3630, %v4261
        %v4432 = vsub.f32 %v3633, %v4264
        %v4433 = vsub.f32 %v3683, %v4267
        %v4434 = vsub.f32 %v3686, %v4270
        %v4435 = vsub.f32 %v3691, %v4273
        %v4436 = vsub.f32 %v3694, %v4276
        %v4437 = vsub.f32 %v3744, %v4279
        %v4438 = vsub.f32 %v3747, %v4282
        %v4439 = vsub.f32 %v3752, %v4285
        %v4440 = vsub.f32 %v3755, %v4288
        %v4441 = vsub.f32 %v3805, %v4291
        %v4442 = vsub.f32 %v3808, %v4294
        %v4443 = vsub.f32 %v3813, %v4297
        %v4444 = vsub.f32 %v3816, %v4300
        %v4445 = vsub.f32 %v3866, %v4303
        %v4446 = vsub.f32 %v3869, %v4306
        %v4447 = vsub.f32 %v3874, %v4309
        %v4448 = vsub.f32 %v3877, %v4312
        %v4449 = vsub.f32 %v3927, %v4315
        %v4450 = vsub.f32 %v3930, %v4318
        %v4451 = vsub.f32 %v3935, %v4321
        %v4452 = vsub.f32 %v3938, %v4324
        %v4453 = vmul.f32 %v4325, 1.442695
        %v4454 = vpow.pop %v4453
        %v4455 = vmul.f32 %v4326, 1.442695
        %v4456 = vpow.pop %v4455
        %v4457 = vmul.f32 %v4327, 1.442695
        %v4458 = vpow.pop %v4457
        %v4459 = vmul.f32 %v4328, 1.442695
        %v4460 = vpow.pop %v4459
        %v4461 = vmul.f32 %v4329, 1.442695
        %v4462 = vpow.pop %v4461
        %v4463 = vmul.f32 %v4330, 1.442695
        %v4464 = vpow.pop %v4463
        %v4465 = vmul.f32 %v4331, 1.442695
        %v4466 = vpow.pop %v4465
        %v4467 = vmul.f32 %v4332, 1.442695
        %v4468 = vpow.pop %v4467
        %v4469 = vmul.f32 %v4333, 1.442695
        %v4470 = vpow.pop %v4469
        %v4471 = vmul.f32 %v4334, 1.442695
        %v4472 = vpow.pop %v4471
        %v4473 = vmul.f32 %v4335, 1.442695
        %v4474 = vpow.pop %v4473
        %v4475 = vmul.f32 %v4336, 1.442695
        %v4476 = vpow.pop %v4475
        %v4477 = vmul.f32 %v4337, 1.442695
        %v4478 = vpow.pop %v4477
        %v4479 = vmul.f32 %v4338, 1.442695
        %v4480 = vpow.pop %v4479
        %v4481 = vmul.f32 %v4339, 1.442695
        %v4482 = vpow.pop %v4481
        %v4483 = vmul.f32 %v4340, 1.442695
        %v4484 = vpow.pop %v4483
        %v4485 = vmul.f32 %v4341, 1.442695
        %v4486 = vpow.pop %v4485
        %v4487 = vmul.f32 %v4342, 1.442695
        %v4488 = vpow.pop %v4487
        %v4489 = vmul.f32 %v4343, 1.442695
        %v4490 = vpow.pop %v4489
        %v4491 = vmul.f32 %v4344, 1.442695
        %v4492 = vpow.pop %v4491
        %v4493 = vmul.f32 %v4345, 1.442695
        %v4494 = vpow.pop %v4493
        %v4495 = vmul.f32 %v4346, 1.442695
        %v4496 = vpow.pop %v4495
        %v4497 = vmul.f32 %v4347, 1.442695
        %v4498 = vpow.pop %v4497
        %v4499 = vmul.f32 %v4348, 1.442695
        %v4500 = vpow.pop %v4499
        %v4501 = vmul.f32 %v4349, 1.442695
        %v4502 = vpow.pop %v4501
        %v4503 = vmul.f32 %v4350, 1.442695
        %v4504 = vpow.pop %v4503
        %v4505 = vmul.f32 %v4351, 1.442695
        %v4506 = vpow.pop %v4505
        %v4507 = vmul.f32 %v4352, 1.442695
        %v4508 = vpow.pop %v4507
        %v4509 = vmul.f32 %v4353, 1.442695
        %v4510 = vpow.pop %v4509
        %v4511 = vmul.f32 %v4354, 1.442695
        %v4512 = vpow.pop %v4511
        %v4513 = vmul.f32 %v4355, 1.442695
        %v4514 = vpow.pop %v4513
        %v4515 = vmul.f32 %v4356, 1.442695
        %v4516 = vpow.pop %v4515
        %v4517 = vmul.f32 %v4357, 1.442695
        %v4518 = vpow.pop %v4517
        %v4519 = vmul.f32 %v4358, 1.442695
        %v4520 = vpow.pop %v4519
        %v4521 = vmul.f32 %v4359, 1.442695
        %v4522 = vpow.pop %v4521
        %v4523 = vmul.f32 %v4360, 1.442695
        %v4524 = vpow.pop %v4523
        %v4525 = vmul.f32 %v4361, 1.442695
        %v4526 = vpow.pop %v4525
        %v4527 = vmul.f32 %v4362, 1.442695
        %v4528 = vpow.pop %v4527
        %v4529 = vmul.f32 %v4363, 1.442695
        %v4530 = vpow.pop %v4529
        %v4531 = vmul.f32 %v4364, 1.442695
        %v4532 = vpow.pop %v4531
        %v4533 = vmul.f32 %v4365, 1.442695
        %v4534 = vpow.pop %v4533
        %v4535 = vmul.f32 %v4366, 1.442695
        %v4536 = vpow.pop %v4535
        %v4537 = vmul.f32 %v4367, 1.442695
        %v4538 = vpow.pop %v4537
        %v4539 = vmul.f32 %v4368, 1.442695
        %v4540 = vpow.pop %v4539
        %v4541 = vmul.f32 %v4369, 1.442695
        %v4542 = vpow.pop %v4541
        %v4543 = vmul.f32 %v4370, 1.442695
        %v4544 = vpow.pop %v4543
        %v4545 = vmul.f32 %v4371, 1.442695
        %v4546 = vpow.pop %v4545
        %v4547 = vmul.f32 %v4372, 1.442695
        %v4548 = vpow.pop %v4547
        %v4549 = vmul.f32 %v4373, 1.442695
        %v4550 = vpow.pop %v4549
        %v4551 = vmul.f32 %v4374, 1.442695
        %v4552 = vpow.pop %v4551
        %v4553 = vmul.f32 %v4375, 1.442695
        %v4554 = vpow.pop %v4553
        %v4555 = vmul.f32 %v4376, 1.442695
        %v4556 = vpow.pop %v4555
        %v4557 = vmul.f32 %v4377, 1.442695
        %v4558 = vpow.pop %v4557
        %v4559 = vmul.f32 %v4378, 1.442695
        %v4560 = vpow.pop %v4559
        %v4561 = vmul.f32 %v4379, 1.442695
        %v4562 = vpow.pop %v4561
        %v4563 = vmul.f32 %v4380, 1.442695
        %v4564 = vpow.pop %v4563
        %v4565 = vmul.f32 %v4381, 1.442695
        %v4566 = vpow.pop %v4565
        %v4567 = vmul.f32 %v4382, 1.442695
        %v4568 = vpow.pop %v4567
        %v4569 = vmul.f32 %v4383, 1.442695
        %v4570 = vpow.pop %v4569
        %v4571 = vmul.f32 %v4384, 1.442695
        %v4572 = vpow.pop %v4571
        %v4573 = vmul.f32 %v4385, 1.442695
        %v4574 = vpow.pop %v4573
        %v4575 = vmul.f32 %v4386, 1.442695
        %v4576 = vpow.pop %v4575
        %v4577 = vmul.f32 %v4387, 1.442695
        %v4578 = vpow.pop %v4577
        %v4579 = vmul.f32 %v4388, 1.442695
        %v4580 = vpow.pop %v4579
        %v4581 = vmul.f32 %v4389, 1.442695
        %v4582 = vpow.pop %v4581
        %v4583 = vmul.f32 %v4390, 1.442695
        %v4584 = vpow.pop %v4583
        %v4585 = vmul.f32 %v4391, 1.442695
        %v4586 = vpow.pop %v4585
        %v4587 = vmul.f32 %v4392, 1.442695
        %v4588 = vpow.pop %v4587
        %v4589 = vmul.f32 %v4393, 1.442695
        %v4590 = vpow.pop %v4589
        %v4591 = vmul.f32 %v4394, 1.442695
        %v4592 = vpow.pop %v4591
        %v4593 = vmul.f32 %v4395, 1.442695
        %v4594 = vpow.pop %v4593
        %v4595 = vmul.f32 %v4396, 1.442695
        %v4596 = vpow.pop %v4595
        %v4597 = vmul.f32 %v4397, 1.442695
        %v4598 = vpow.pop %v4597
        %v4599 = vmul.f32 %v4398, 1.442695
        %v4600 = vpow.pop %v4599
        %v4601 = vmul.f32 %v4399, 1.442695
        %v4602 = vpow.pop %v4601
        %v4603 = vmul.f32 %v4400, 1.442695
        %v4604 = vpow.pop %v4603
        %v4605 = vmul.f32 %v4401, 1.442695
        %v4606 = vpow.pop %v4605
        %v4607 = vmul.f32 %v4402, 1.442695
        %v4608 = vpow.pop %v4607
        %v4609 = vmul.f32 %v4403, 1.442695
        %v4610 = vpow.pop %v4609
        %v4611 = vmul.f32 %v4404, 1.442695
        %v4612 = vpow.pop %v4611
        %v4613 = vmul.f32 %v4405, 1.442695
        %v4614 = vpow.pop %v4613
        %v4615 = vmul.f32 %v4406, 1.442695
        %v4616 = vpow.pop %v4615
        %v4617 = vmul.f32 %v4407, 1.442695
        %v4618 = vpow.pop %v4617
        %v4619 = vmul.f32 %v4408, 1.442695
        %v4620 = vpow.pop %v4619
        %v4621 = vmul.f32 %v4409, 1.442695
        %v4622 = vpow.pop %v4621
        %v4623 = vmul.f32 %v4410, 1.442695
        %v4624 = vpow.pop %v4623
        %v4625 = vmul.f32 %v4411, 1.442695
        %v4626 = vpow.pop %v4625
        %v4627 = vmul.f32 %v4412, 1.442695
        %v4628 = vpow.pop %v4627
        %v4629 = vmul.f32 %v4413, 1.442695
        %v4630 = vpow.pop %v4629
        %v4631 = vmul.f32 %v4414, 1.442695
        %v4632 = vpow.pop %v4631
        %v4633 = vmul.f32 %v4415, 1.442695
        %v4634 = vpow.pop %v4633
        %v4635 = vmul.f32 %v4416, 1.442695
        %v4636 = vpow.pop %v4635
        %v4637 = vmul.f32 %v4417, 1.442695
        %v4638 = vpow.pop %v4637
        %v4639 = vmul.f32 %v4418, 1.442695
        %v4640 = vpow.pop %v4639
        %v4641 = vmul.f32 %v4419, 1.442695
        %v4642 = vpow.pop %v4641
        %v4643 = vmul.f32 %v4420, 1.442695
        %v4644 = vpow.pop %v4643
        %v4645 = vmul.f32 %v4421, 1.442695
        %v4646 = vpow.pop %v4645
        %v4647 = vmul.f32 %v4422, 1.442695
        %v4648 = vpow.pop %v4647
        %v4649 = vmul.f32 %v4423, 1.442695
        %v4650 = vpow.pop %v4649
        %v4651 = vmul.f32 %v4424, 1.442695
        %v4652 = vpow.pop %v4651
        %v4653 = vmul.f32 %v4425, 1.442695
        %v4654 = vpow.pop %v4653
        %v4655 = vmul.f32 %v4426, 1.442695
        %v4656 = vpow.pop %v4655
        %v4657 = vmul.f32 %v4427, 1.442695
        %v4658 = vpow.pop %v4657
        %v4659 = vmul.f32 %v4428, 1.442695
        %v4660 = vpow.pop %v4659
        %v4661 = vmul.f32 %v4429, 1.442695
        %v4662 = vpow.pop %v4661
        %v4663 = vmul.f32 %v4430, 1.442695
        %v4664 = vpow.pop %v4663
        %v4665 = vmul.f32 %v4431, 1.442695
        %v4666 = vpow.pop %v4665
        %v4667 = vmul.f32 %v4432, 1.442695
        %v4668 = vpow.pop %v4667
        %v4669 = vmul.f32 %v4433, 1.442695
        %v4670 = vpow.pop %v4669
        %v4671 = vmul.f32 %v4434, 1.442695
        %v4672 = vpow.pop %v4671
        %v4673 = vmul.f32 %v4435, 1.442695
        %v4674 = vpow.pop %v4673
        %v4675 = vmul.f32 %v4436, 1.442695
        %v4676 = vpow.pop %v4675
        %v4677 = vmul.f32 %v4437, 1.442695
        %v4678 = vpow.pop %v4677
        %v4679 = vmul.f32 %v4438, 1.442695
        %v4680 = vpow.pop %v4679
        %v4681 = vmul.f32 %v4439, 1.442695
        %v4682 = vpow.pop %v4681
        %v4683 = vmul.f32 %v4440, 1.442695
        %v4684 = vpow.pop %v4683
        %v4685 = vmul.f32 %v4441, 1.442695
        %v4686 = vpow.pop %v4685
        %v4687 = vmul.f32 %v4442, 1.442695
        %v4688 = vpow.pop %v4687
        %v4689 = vmul.f32 %v4443, 1.442695
        %v4690 = vpow.pop %v4689
        %v4691 = vmul.f32 %v4444, 1.442695
        %v4692 = vpow.pop %v4691
        %v4693 = vmul.f32 %v4445, 1.442695
        %v4694 = vpow.pop %v4693
        %v4695 = vmul.f32 %v4446, 1.442695
        %v4696 = vpow.pop %v4695
        %v4697 = vmul.f32 %v4447, 1.442695
        %v4698 = vpow.pop %v4697
        %v4699 = vmul.f32 %v4448, 1.442695
        %v4700 = vpow.pop %v4699
        %v4701 = vmul.f32 %v4449, 1.442695
        %v4702 = vpow.pop %v4701
        %v4703 = vmul.f32 %v4450, 1.442695
        %v4704 = vpow.pop %v4703
        %v4705 = vmul.f32 %v4451, 1.442695
        %v4706 = vpow.pop %v4705
        %v4707 = vmul.f32 %v4452, 1.442695
        %v4708 = vpow.pop %v4707
        %v4709 = vsel %vm1988, %v4454, 0.0
        %4710 = vadd.xlane.f32.xlu0 %v4709
        %v4711 = vpop.xlane.xlu0 %4710
        %v4712 = vsel %vm1988, %v4456, 0.0
        %4713 = vadd.xlane.f32.xlu0 %v4712
        %v4714 = vpop.xlane.xlu0 %4713
        %v4715 = vsel %vm1988, %v4458, 0.0
        %4716 = vadd.xlane.f32.xlu0 %v4715
        %v4717 = vpop.xlane.xlu0 %4716
        %v4718 = vsel %vm1988, %v4460, 0.0
        %4719 = vadd.xlane.f32.xlu0 %v4718
        %v4720 = vpop.xlane.xlu0 %4719
        %v4721 = vsel %vm1988, %v4462, 0.0
        %4722 = vadd.xlane.f32.xlu0 %v4721
        %v4723 = vpop.xlane.xlu0 %4722
        %v4724 = vsel %vm1988, %v4464, 0.0
        %4725 = vadd.xlane.f32.xlu0 %v4724
        %v4726 = vpop.xlane.xlu0 %4725
        %v4727 = vsel %vm1988, %v4466, 0.0
        %4728 = vadd.xlane.f32.xlu0 %v4727
        %v4729 = vpop.xlane.xlu0 %4728
        %v4730 = vsel %vm1988, %v4468, 0.0
        %4731 = vadd.xlane.f32.xlu0 %v4730
        %v4732 = vpop.xlane.xlu0 %4731
        %v4733 = vsel %vm1988, %v4470, 0.0
        %4734 = vadd.xlane.f32.xlu0 %v4733
        %v4735 = vpop.xlane.xlu0 %4734
        %v4736 = vsel %vm1988, %v4472, 0.0
        %4737 = vadd.xlane.f32.xlu0 %v4736
        %v4738 = vpop.xlane.xlu0 %4737
        %v4739 = vsel %vm1988, %v4474, 0.0
        %4740 = vadd.xlane.f32.xlu0 %v4739
        %v4741 = vpop.xlane.xlu0 %4740
        %v4742 = vsel %vm1988, %v4476, 0.0
        %4743 = vadd.xlane.f32.xlu0 %v4742
        %v4744 = vpop.xlane.xlu0 %4743
        %v4745 = vsel %vm1988, %v4478, 0.0
        %4746 = vadd.xlane.f32.xlu0 %v4745
        %v4747 = vpop.xlane.xlu0 %4746
        %v4748 = vsel %vm1988, %v4480, 0.0
        %4749 = vadd.xlane.f32.xlu0 %v4748
        %v4750 = vpop.xlane.xlu0 %4749
        %v4751 = vsel %vm1988, %v4482, 0.0
        %4752 = vadd.xlane.f32.xlu0 %v4751
        %v4753 = vpop.xlane.xlu0 %4752
        %v4754 = vsel %vm1988, %v4484, 0.0
        %4755 = vadd.xlane.f32.xlu0 %v4754
        %v4756 = vpop.xlane.xlu0 %4755
        %v4757 = vsel %vm1988, %v4486, 0.0
        %4758 = vadd.xlane.f32.xlu0 %v4757
        %v4759 = vpop.xlane.xlu0 %4758
        %v4760 = vsel %vm1988, %v4488, 0.0
        %4761 = vadd.xlane.f32.xlu0 %v4760
        %v4762 = vpop.xlane.xlu0 %4761
        %v4763 = vsel %vm1988, %v4490, 0.0
        %4764 = vadd.xlane.f32.xlu0 %v4763
        %v4765 = vpop.xlane.xlu0 %4764
        %v4766 = vsel %vm1988, %v4492, 0.0
        %4767 = vadd.xlane.f32.xlu0 %v4766
        %v4768 = vpop.xlane.xlu0 %4767
        %v4769 = vsel %vm1988, %v4494, 0.0
        %4770 = vadd.xlane.f32.xlu0 %v4769
        %v4771 = vpop.xlane.xlu0 %4770
        %v4772 = vsel %vm1988, %v4496, 0.0
        %4773 = vadd.xlane.f32.xlu0 %v4772
        %v4774 = vpop.xlane.xlu0 %4773
        %v4775 = vsel %vm1988, %v4498, 0.0
        %4776 = vadd.xlane.f32.xlu0 %v4775
        %v4777 = vpop.xlane.xlu0 %4776
        %v4778 = vsel %vm1988, %v4500, 0.0
        %4779 = vadd.xlane.f32.xlu0 %v4778
        %v4780 = vpop.xlane.xlu0 %4779
        %v4781 = vsel %vm1988, %v4502, 0.0
        %4782 = vadd.xlane.f32.xlu0 %v4781
        %v4783 = vpop.xlane.xlu0 %4782
        %v4784 = vsel %vm1988, %v4504, 0.0
        %4785 = vadd.xlane.f32.xlu0 %v4784
        %v4786 = vpop.xlane.xlu0 %4785
        %v4787 = vsel %vm1988, %v4506, 0.0
        %4788 = vadd.xlane.f32.xlu0 %v4787
        %v4789 = vpop.xlane.xlu0 %4788
        %v4790 = vsel %vm1988, %v4508, 0.0
        %4791 = vadd.xlane.f32.xlu0 %v4790
        %v4792 = vpop.xlane.xlu0 %4791
        %v4793 = vsel %vm1988, %v4510, 0.0
        %4794 = vadd.xlane.f32.xlu0 %v4793
        %v4795 = vpop.xlane.xlu0 %4794
        %v4796 = vsel %vm1988, %v4512, 0.0
        %4797 = vadd.xlane.f32.xlu0 %v4796
        %v4798 = vpop.xlane.xlu0 %4797
        %v4799 = vsel %vm1988, %v4514, 0.0
        %4800 = vadd.xlane.f32.xlu0 %v4799
        %v4801 = vpop.xlane.xlu0 %4800
        %v4802 = vsel %vm1988, %v4516, 0.0
        %4803 = vadd.xlane.f32.xlu0 %v4802
        %v4804 = vpop.xlane.xlu0 %4803
        %v4805 = vsel %vm1988, %v4518, 0.0
        %4806 = vadd.xlane.f32.xlu0 %v4805
        %v4807 = vpop.xlane.xlu0 %4806
        %v4808 = vsel %vm1988, %v4520, 0.0
        %4809 = vadd.xlane.f32.xlu0 %v4808
        %v4810 = vpop.xlane.xlu0 %4809
        %v4811 = vsel %vm1988, %v4522, 0.0
        %4812 = vadd.xlane.f32.xlu0 %v4811
        %v4813 = vpop.xlane.xlu0 %4812
        %v4814 = vsel %vm1988, %v4524, 0.0
        %4815 = vadd.xlane.f32.xlu0 %v4814
        %v4816 = vpop.xlane.xlu0 %4815
        %v4817 = vsel %vm1988, %v4526, 0.0
        %4818 = vadd.xlane.f32.xlu0 %v4817
        %v4819 = vpop.xlane.xlu0 %4818
        %v4820 = vsel %vm1988, %v4528, 0.0
        %4821 = vadd.xlane.f32.xlu0 %v4820
        %v4822 = vpop.xlane.xlu0 %4821
        %v4823 = vsel %vm1988, %v4530, 0.0
        %4824 = vadd.xlane.f32.xlu0 %v4823
        %v4825 = vpop.xlane.xlu0 %4824
        %v4826 = vsel %vm1988, %v4532, 0.0
        %4827 = vadd.xlane.f32.xlu0 %v4826
        %v4828 = vpop.xlane.xlu0 %4827
        %v4829 = vsel %vm1988, %v4534, 0.0
        %4830 = vadd.xlane.f32.xlu0 %v4829
        %v4831 = vpop.xlane.xlu0 %4830
        %v4832 = vsel %vm1988, %v4536, 0.0
        %4833 = vadd.xlane.f32.xlu0 %v4832
        %v4834 = vpop.xlane.xlu0 %4833
        %v4835 = vsel %vm1988, %v4538, 0.0
        %4836 = vadd.xlane.f32.xlu0 %v4835
        %v4837 = vpop.xlane.xlu0 %4836
        %v4838 = vsel %vm1988, %v4540, 0.0
        %4839 = vadd.xlane.f32.xlu0 %v4838
        %v4840 = vpop.xlane.xlu0 %4839
        %v4841 = vsel %vm1988, %v4542, 0.0
        %4842 = vadd.xlane.f32.xlu0 %v4841
        %v4843 = vpop.xlane.xlu0 %4842
        %v4844 = vsel %vm1988, %v4544, 0.0
        %4845 = vadd.xlane.f32.xlu0 %v4844
        %v4846 = vpop.xlane.xlu0 %4845
        %v4847 = vsel %vm1988, %v4546, 0.0
        %4848 = vadd.xlane.f32.xlu0 %v4847
        %v4849 = vpop.xlane.xlu0 %4848
        %v4850 = vsel %vm1988, %v4548, 0.0
        %4851 = vadd.xlane.f32.xlu0 %v4850
        %v4852 = vpop.xlane.xlu0 %4851
        %v4853 = vsel %vm1988, %v4550, 0.0
        %4854 = vadd.xlane.f32.xlu0 %v4853
        %v4855 = vpop.xlane.xlu0 %4854
        %v4856 = vsel %vm1988, %v4552, 0.0
        %4857 = vadd.xlane.f32.xlu0 %v4856
        %v4858 = vpop.xlane.xlu0 %4857
        %v4859 = vsel %vm1988, %v4554, 0.0
        %4860 = vadd.xlane.f32.xlu0 %v4859
        %v4861 = vpop.xlane.xlu0 %4860
        %v4862 = vsel %vm1988, %v4556, 0.0
        %4863 = vadd.xlane.f32.xlu0 %v4862
        %v4864 = vpop.xlane.xlu0 %4863
        %v4865 = vsel %vm1988, %v4558, 0.0
        %4866 = vadd.xlane.f32.xlu0 %v4865
        %v4867 = vpop.xlane.xlu0 %4866
        %v4868 = vsel %vm1988, %v4560, 0.0
        %4869 = vadd.xlane.f32.xlu0 %v4868
        %v4870 = vpop.xlane.xlu0 %4869
        %v4871 = vsel %vm1988, %v4562, 0.0
        %4872 = vadd.xlane.f32.xlu0 %v4871
        %v4873 = vpop.xlane.xlu0 %4872
        %v4874 = vsel %vm1988, %v4564, 0.0
        %4875 = vadd.xlane.f32.xlu0 %v4874
        %v4876 = vpop.xlane.xlu0 %4875
        %v4877 = vsel %vm1988, %v4566, 0.0
        %4878 = vadd.xlane.f32.xlu0 %v4877
        %v4879 = vpop.xlane.xlu0 %4878
        %v4880 = vsel %vm1988, %v4568, 0.0
        %4881 = vadd.xlane.f32.xlu0 %v4880
        %v4882 = vpop.xlane.xlu0 %4881
        %v4883 = vsel %vm1988, %v4570, 0.0
        %4884 = vadd.xlane.f32.xlu0 %v4883
        %v4885 = vpop.xlane.xlu0 %4884
        %v4886 = vsel %vm1988, %v4572, 0.0
        %4887 = vadd.xlane.f32.xlu0 %v4886
        %v4888 = vpop.xlane.xlu0 %4887
        %v4889 = vsel %vm1988, %v4574, 0.0
        %4890 = vadd.xlane.f32.xlu0 %v4889
        %v4891 = vpop.xlane.xlu0 %4890
        %v4892 = vsel %vm1988, %v4576, 0.0
        %4893 = vadd.xlane.f32.xlu0 %v4892
        %v4894 = vpop.xlane.xlu0 %4893
        %v4895 = vsel %vm1988, %v4578, 0.0
        %4896 = vadd.xlane.f32.xlu0 %v4895
        %v4897 = vpop.xlane.xlu0 %4896
        %v4898 = vsel %vm1988, %v4580, 0.0
        %4899 = vadd.xlane.f32.xlu0 %v4898
        %v4900 = vpop.xlane.xlu0 %4899
        %v4901 = vsel %vm1988, %v4582, 0.0
        %4902 = vadd.xlane.f32.xlu0 %v4901
        %v4903 = vpop.xlane.xlu0 %4902
        %v4904 = vsel %vm1988, %v4584, 0.0
        %4905 = vadd.xlane.f32.xlu0 %v4904
        %v4906 = vpop.xlane.xlu0 %4905
        %v4907 = vsel %vm1988, %v4586, 0.0
        %4908 = vadd.xlane.f32.xlu0 %v4907
        %v4909 = vpop.xlane.xlu0 %4908
        %v4910 = vsel %vm1988, %v4588, 0.0
        %4911 = vadd.xlane.f32.xlu0 %v4910
        %v4912 = vpop.xlane.xlu0 %4911
        %v4913 = vsel %vm1988, %v4590, 0.0
        %4914 = vadd.xlane.f32.xlu0 %v4913
        %v4915 = vpop.xlane.xlu0 %4914
        %v4916 = vsel %vm1988, %v4592, 0.0
        %4917 = vadd.xlane.f32.xlu0 %v4916
        %v4918 = vpop.xlane.xlu0 %4917
        %v4919 = vsel %vm1988, %v4594, 0.0
        %4920 = vadd.xlane.f32.xlu0 %v4919
        %v4921 = vpop.xlane.xlu0 %4920
        %v4922 = vsel %vm1988, %v4596, 0.0
        %4923 = vadd.xlane.f32.xlu0 %v4922
        %v4924 = vpop.xlane.xlu0 %4923
        %v4925 = vsel %vm1988, %v4598, 0.0
        %4926 = vadd.xlane.f32.xlu0 %v4925
        %v4927 = vpop.xlane.xlu0 %4926
        %v4928 = vsel %vm1988, %v4600, 0.0
        %4929 = vadd.xlane.f32.xlu0 %v4928
        %v4930 = vpop.xlane.xlu0 %4929
        %v4931 = vsel %vm1988, %v4602, 0.0
        %4932 = vadd.xlane.f32.xlu0 %v4931
        %v4933 = vpop.xlane.xlu0 %4932
        %v4934 = vsel %vm1988, %v4604, 0.0
        %4935 = vadd.xlane.f32.xlu0 %v4934
        %v4936 = vpop.xlane.xlu0 %4935
        %v4937 = vsel %vm1988, %v4606, 0.0
        %4938 = vadd.xlane.f32.xlu0 %v4937
        %v4939 = vpop.xlane.xlu0 %4938
        %v4940 = vsel %vm1988, %v4608, 0.0
        %4941 = vadd.xlane.f32.xlu0 %v4940
        %v4942 = vpop.xlane.xlu0 %4941
        %v4943 = vsel %vm1988, %v4610, 0.0
        %4944 = vadd.xlane.f32.xlu0 %v4943
        %v4945 = vpop.xlane.xlu0 %4944
        %v4946 = vsel %vm1988, %v4612, 0.0
        %4947 = vadd.xlane.f32.xlu0 %v4946
        %v4948 = vpop.xlane.xlu0 %4947
        %v4949 = vsel %vm1988, %v4614, 0.0
        %4950 = vadd.xlane.f32.xlu0 %v4949
        %v4951 = vpop.xlane.xlu0 %4950
        %v4952 = vsel %vm1988, %v4616, 0.0
        %4953 = vadd.xlane.f32.xlu0 %v4952
        %v4954 = vpop.xlane.xlu0 %4953
        %v4955 = vsel %vm1988, %v4618, 0.0
        %4956 = vadd.xlane.f32.xlu0 %v4955
        %v4957 = vpop.xlane.xlu0 %4956
        %v4958 = vsel %vm1988, %v4620, 0.0
        %4959 = vadd.xlane.f32.xlu0 %v4958
        %v4960 = vpop.xlane.xlu0 %4959
        %v4961 = vsel %vm1988, %v4622, 0.0
        %4962 = vadd.xlane.f32.xlu0 %v4961
        %v4963 = vpop.xlane.xlu0 %4962
        %v4964 = vsel %vm1988, %v4624, 0.0
        %4965 = vadd.xlane.f32.xlu0 %v4964
        %v4966 = vpop.xlane.xlu0 %4965
        %v4967 = vsel %vm1988, %v4626, 0.0
        %4968 = vadd.xlane.f32.xlu0 %v4967
        %v4969 = vpop.xlane.xlu0 %4968
        %v4970 = vsel %vm1988, %v4628, 0.0
        %4971 = vadd.xlane.f32.xlu0 %v4970
        %v4972 = vpop.xlane.xlu0 %4971
        %v4973 = vsel %vm1988, %v4630, 0.0
        %4974 = vadd.xlane.f32.xlu0 %v4973
        %v4975 = vpop.xlane.xlu0 %4974
        %v4976 = vsel %vm1988, %v4632, 0.0
        %4977 = vadd.xlane.f32.xlu0 %v4976
        %v4978 = vpop.xlane.xlu0 %4977
        %v4979 = vsel %vm1988, %v4634, 0.0
        %4980 = vadd.xlane.f32.xlu0 %v4979
        %v4981 = vpop.xlane.xlu0 %4980
        %v4982 = vsel %vm1988, %v4636, 0.0
        %4983 = vadd.xlane.f32.xlu0 %v4982
        %v4984 = vpop.xlane.xlu0 %4983
        %v4985 = vsel %vm1988, %v4638, 0.0
        %4986 = vadd.xlane.f32.xlu0 %v4985
        %v4987 = vpop.xlane.xlu0 %4986
        %v4988 = vsel %vm1988, %v4640, 0.0
        %4989 = vadd.xlane.f32.xlu0 %v4988
        %v4990 = vpop.xlane.xlu0 %4989
        %v4991 = vsel %vm1988, %v4642, 0.0
        %4992 = vadd.xlane.f32.xlu0 %v4991
        %v4993 = vpop.xlane.xlu0 %4992
        %v4994 = vsel %vm1988, %v4644, 0.0
        %4995 = vadd.xlane.f32.xlu0 %v4994
        %v4996 = vpop.xlane.xlu0 %4995
        %v4997 = vsel %vm1988, %v4646, 0.0
        %4998 = vadd.xlane.f32.xlu0 %v4997
        %v4999 = vpop.xlane.xlu0 %4998
        %v5000 = vsel %vm1988, %v4648, 0.0
        %5001 = vadd.xlane.f32.xlu0 %v5000
        %v5002 = vpop.xlane.xlu0 %5001
        %v5003 = vsel %vm1988, %v4650, 0.0
        %5004 = vadd.xlane.f32.xlu0 %v5003
        %v5005 = vpop.xlane.xlu0 %5004
        %v5006 = vsel %vm1988, %v4652, 0.0
        %5007 = vadd.xlane.f32.xlu0 %v5006
        %v5008 = vpop.xlane.xlu0 %5007
        %v5009 = vsel %vm1988, %v4654, 0.0
        %5010 = vadd.xlane.f32.xlu0 %v5009
        %v5011 = vpop.xlane.xlu0 %5010
        %v5012 = vsel %vm1988, %v4656, 0.0
        %5013 = vadd.xlane.f32.xlu0 %v5012
        %v5014 = vpop.xlane.xlu0 %5013
        %v5015 = vsel %vm1988, %v4658, 0.0
        %5016 = vadd.xlane.f32.xlu0 %v5015
        %v5017 = vpop.xlane.xlu0 %5016
        %v5018 = vsel %vm1988, %v4660, 0.0
        %5019 = vadd.xlane.f32.xlu0 %v5018
        %v5020 = vpop.xlane.xlu0 %5019
        %v5021 = vsel %vm1988, %v4662, 0.0
        %5022 = vadd.xlane.f32.xlu0 %v5021
        %v5023 = vpop.xlane.xlu0 %5022
        %v5024 = vsel %vm1988, %v4664, 0.0
        %5025 = vadd.xlane.f32.xlu0 %v5024
        %v5026 = vpop.xlane.xlu0 %5025
        %v5027 = vsel %vm1988, %v4666, 0.0
        %5028 = vadd.xlane.f32.xlu0 %v5027
        %v5029 = vpop.xlane.xlu0 %5028
        %v5030 = vsel %vm1988, %v4668, 0.0
        %5031 = vadd.xlane.f32.xlu0 %v5030
        %v5032 = vpop.xlane.xlu0 %5031
        %v5033 = vsel %vm1988, %v4670, 0.0
        %5034 = vadd.xlane.f32.xlu0 %v5033
        %v5035 = vpop.xlane.xlu0 %5034
        %v5036 = vsel %vm1988, %v4672, 0.0
        %5037 = vadd.xlane.f32.xlu0 %v5036
        %v5038 = vpop.xlane.xlu0 %5037
        %v5039 = vsel %vm1988, %v4674, 0.0
        %5040 = vadd.xlane.f32.xlu0 %v5039
        %v5041 = vpop.xlane.xlu0 %5040
        %v5042 = vsel %vm1988, %v4676, 0.0
        %5043 = vadd.xlane.f32.xlu0 %v5042
        %v5044 = vpop.xlane.xlu0 %5043
        %v5045 = vsel %vm1988, %v4678, 0.0
        %5046 = vadd.xlane.f32.xlu0 %v5045
        %v5047 = vpop.xlane.xlu0 %5046
        %v5048 = vsel %vm1988, %v4680, 0.0
        %5049 = vadd.xlane.f32.xlu0 %v5048
        %v5050 = vpop.xlane.xlu0 %5049
        %v5051 = vsel %vm1988, %v4682, 0.0
        %5052 = vadd.xlane.f32.xlu0 %v5051
        %v5053 = vpop.xlane.xlu0 %5052
        %v5054 = vsel %vm1988, %v4684, 0.0
        %5055 = vadd.xlane.f32.xlu0 %v5054
        %v5056 = vpop.xlane.xlu0 %5055
        %v5057 = vsel %vm1988, %v4686, 0.0
        %5058 = vadd.xlane.f32.xlu0 %v5057
        %v5059 = vpop.xlane.xlu0 %5058
        %v5060 = vsel %vm1988, %v4688, 0.0
        %5061 = vadd.xlane.f32.xlu0 %v5060
        %v5062 = vpop.xlane.xlu0 %5061
        %v5063 = vsel %vm1988, %v4690, 0.0
        %5064 = vadd.xlane.f32.xlu0 %v5063
        %v5065 = vpop.xlane.xlu0 %5064
        %v5066 = vsel %vm1988, %v4692, 0.0
        %5067 = vadd.xlane.f32.xlu0 %v5066
        %v5068 = vpop.xlane.xlu0 %5067
        %v5069 = vsel %vm1988, %v4694, 0.0
        %5070 = vadd.xlane.f32.xlu0 %v5069
        %v5071 = vpop.xlane.xlu0 %5070
        %v5072 = vsel %vm1988, %v4696, 0.0
        %5073 = vadd.xlane.f32.xlu0 %v5072
        %v5074 = vpop.xlane.xlu0 %5073
        %v5075 = vsel %vm1988, %v4698, 0.0
        %5076 = vadd.xlane.f32.xlu0 %v5075
        %v5077 = vpop.xlane.xlu0 %5076
        %v5078 = vsel %vm1988, %v4700, 0.0
        %5079 = vadd.xlane.f32.xlu0 %v5078
        %v5080 = vpop.xlane.xlu0 %5079
        %v5081 = vsel %vm1988, %v4702, 0.0
        %5082 = vadd.xlane.f32.xlu0 %v5081
        %v5083 = vpop.xlane.xlu0 %5082
        %v5084 = vsel %vm1988, %v4704, 0.0
        %5085 = vadd.xlane.f32.xlu0 %v5084
        %v5086 = vpop.xlane.xlu0 %5085
        %v5087 = vsel %vm1988, %v4706, 0.0
        %5088 = vadd.xlane.f32.xlu0 %v5087
        %v5089 = vpop.xlane.xlu0 %5088
        %v5090 = vsel %vm1988, %v4708, 0.0
        %5091 = vadd.xlane.f32.xlu0 %v5090
        %v5092 = vpop.xlane.xlu0 %5091
        %v5093 = vrcp.pop %v4711
        %v5094 = vrcp.pop %v4714
        %v5095 = vrcp.pop %v4717
        %v5096 = vrcp.pop %v4720
        %v5097 = vrcp.pop %v4723
        %v5098 = vrcp.pop %v4726
        %v5099 = vrcp.pop %v4729
        %v5100 = vrcp.pop %v4732
        %v5101 = vrcp.pop %v4735
        %v5102 = vrcp.pop %v4738
        %v5103 = vrcp.pop %v4741
        %v5104 = vrcp.pop %v4744
        %v5105 = vrcp.pop %v4747
        %v5106 = vrcp.pop %v4750
        %v5107 = vrcp.pop %v4753
        %v5108 = vrcp.pop %v4756
        %v5109 = vrcp.pop %v4759
        %v5110 = vrcp.pop %v4762
        %v5111 = vrcp.pop %v4765
        %v5112 = vrcp.pop %v4768
        %v5113 = vrcp.pop %v4771
        %v5114 = vrcp.pop %v4774
        %v5115 = vrcp.pop %v4777
        %v5116 = vrcp.pop %v4780
        %v5117 = vrcp.pop %v4783
        %v5118 = vrcp.pop %v4786
        %v5119 = vrcp.pop %v4789
        %v5120 = vrcp.pop %v4792
        %v5121 = vrcp.pop %v4795
        %v5122 = vrcp.pop %v4798
        %v5123 = vrcp.pop %v4801
        %v5124 = vrcp.pop %v4804
        %v5125 = vrcp.pop %v4807
        %v5126 = vrcp.pop %v4810
        %v5127 = vrcp.pop %v4813
        %v5128 = vrcp.pop %v4816
        %v5129 = vrcp.pop %v4819
        %v5130 = vrcp.pop %v4822
        %v5131 = vrcp.pop %v4825
        %v5132 = vrcp.pop %v4828
        %v5133 = vrcp.pop %v4831
        %v5134 = vrcp.pop %v4834
        %v5135 = vrcp.pop %v4837
        %v5136 = vrcp.pop %v4840
        %v5137 = vrcp.pop %v4843
        %v5138 = vrcp.pop %v4846
        %v5139 = vrcp.pop %v4849
        %v5140 = vrcp.pop %v4852
        %v5141 = vrcp.pop %v4855
        %v5142 = vrcp.pop %v4858
        %v5143 = vrcp.pop %v4861
        %v5144 = vrcp.pop %v4864
        %v5145 = vrcp.pop %v4867
        %v5146 = vrcp.pop %v4870
        %v5147 = vrcp.pop %v4873
        %v5148 = vrcp.pop %v4876
        %v5149 = vrcp.pop %v4879
        %v5150 = vrcp.pop %v4882
        %v5151 = vrcp.pop %v4885
        %v5152 = vrcp.pop %v4888
        %v5153 = vrcp.pop %v4891
        %v5154 = vrcp.pop %v4894
        %v5155 = vrcp.pop %v4897
        %v5156 = vrcp.pop %v4900
        %v5157 = vrcp.pop %v4903
        %v5158 = vrcp.pop %v4906
        %v5159 = vrcp.pop %v4909
        %v5160 = vrcp.pop %v4912
        %v5161 = vrcp.pop %v4915
        %v5162 = vrcp.pop %v4918
        %v5163 = vrcp.pop %v4921
        %v5164 = vrcp.pop %v4924
        %v5165 = vrcp.pop %v4927
        %v5166 = vrcp.pop %v4930
        %v5167 = vrcp.pop %v4933
        %v5168 = vrcp.pop %v4936
        %v5169 = vrcp.pop %v4939
        %v5170 = vrcp.pop %v4942
        %v5171 = vrcp.pop %v4945
        %v5172 = vrcp.pop %v4948
        %v5173 = vrcp.pop %v4951
        %v5174 = vrcp.pop %v4954
        %v5175 = vrcp.pop %v4957
        %v5176 = vrcp.pop %v4960
        %v5177 = vrcp.pop %v4963
        %v5178 = vrcp.pop %v4966
        %v5179 = vrcp.pop %v4969
        %v5180 = vrcp.pop %v4972
        %v5181 = vrcp.pop %v4975
        %v5182 = vrcp.pop %v4978
        %v5183 = vrcp.pop %v4981
        %v5184 = vrcp.pop %v4984
        %v5185 = vrcp.pop %v4987
        %v5186 = vrcp.pop %v4990
        %v5187 = vrcp.pop %v4993
        %v5188 = vrcp.pop %v4996
        %v5189 = vrcp.pop %v4999
        %v5190 = vrcp.pop %v5002
        %v5191 = vrcp.pop %v5005
        %v5192 = vrcp.pop %v5008
        %v5193 = vrcp.pop %v5011
        %v5194 = vrcp.pop %v5014
        %v5195 = vrcp.pop %v5017
        %v5196 = vrcp.pop %v5020
        %v5197 = vrcp.pop %v5023
        %v5198 = vrcp.pop %v5026
        %v5199 = vrcp.pop %v5029
        %v5200 = vrcp.pop %v5032
        %v5201 = vrcp.pop %v5035
        %v5202 = vrcp.pop %v5038
        %v5203 = vrcp.pop %v5041
        %v5204 = vrcp.pop %v5044
        %v5205 = vrcp.pop %v5047
        %v5206 = vrcp.pop %v5050
        %v5207 = vrcp.pop %v5053
        %v5208 = vrcp.pop %v5056
        %v5209 = vrcp.pop %v5059
        %v5210 = vrcp.pop %v5062
        %v5211 = vrcp.pop %v5065
        %v5212 = vrcp.pop %v5068
        %v5213 = vrcp.pop %v5071
        %v5214 = vrcp.pop %v5074
        %v5215 = vrcp.pop %v5077
        %v5216 = vrcp.pop %v5080
        %v5217 = vrcp.pop %v5083
        %v5218 = vrcp.pop %v5086
        %v5219 = vrcp.pop %v5089
        %v5220 = vrcp.pop %v5092
        %v5221 = vmul.f32 %v4454, %v5093
        %v5222 = vmul.f32 %v4456, %v5094
        %v5223 = vmul.f32 %v4458, %v5095
        %v5224 = vmul.f32 %v4460, %v5096
        %v5225 = vmul.f32 %v4462, %v5097
        %v5226 = vmul.f32 %v4464, %v5098
        %v5227 = vmul.f32 %v4466, %v5099
        %v5228 = vmul.f32 %v4468, %v5100
        %v5229 = vmul.f32 %v4470, %v5101
        %v5230 = vmul.f32 %v4472, %v5102
        %v5231 = vmul.f32 %v4474, %v5103
        %v5232 = vmul.f32 %v4476, %v5104
        %v5233 = vmul.f32 %v4478, %v5105
        %v5234 = vmul.f32 %v4480, %v5106
        %v5235 = vmul.f32 %v4482, %v5107
        %v5236 = vmul.f32 %v4484, %v5108
        %v5237 = vmul.f32 %v4486, %v5109
        %v5238 = vmul.f32 %v4488, %v5110
        %v5239 = vmul.f32 %v4490, %v5111
        %v5240 = vmul.f32 %v4492, %v5112
        %v5241 = vmul.f32 %v4494, %v5113
        %v5242 = vmul.f32 %v4496, %v5114
        %v5243 = vmul.f32 %v4498, %v5115
        %v5244 = vmul.f32 %v4500, %v5116
        %v5245 = vmul.f32 %v4502, %v5117
        %v5246 = vmul.f32 %v4504, %v5118
        %v5247 = vmul.f32 %v4506, %v5119
        %v5248 = vmul.f32 %v4508, %v5120
        %v5249 = vmul.f32 %v4510, %v5121
        %v5250 = vmul.f32 %v4512, %v5122
        %v5251 = vmul.f32 %v4514, %v5123
        %v5252 = vmul.f32 %v4516, %v5124
        %v5253 = vmul.f32 %v4518, %v5125
        %v5254 = vmul.f32 %v4520, %v5126
        %v5255 = vmul.f32 %v4522, %v5127
        %v5256 = vmul.f32 %v4524, %v5128
        %v5257 = vmul.f32 %v4526, %v5129
        %v5258 = vmul.f32 %v4528, %v5130
        %v5259 = vmul.f32 %v4530, %v5131
        %v5260 = vmul.f32 %v4532, %v5132
        %v5261 = vmul.f32 %v4534, %v5133
        %v5262 = vmul.f32 %v4536, %v5134
        %v5263 = vmul.f32 %v4538, %v5135
        %v5264 = vmul.f32 %v4540, %v5136
        %v5265 = vmul.f32 %v4542, %v5137
        %v5266 = vmul.f32 %v4544, %v5138
        %v5267 = vmul.f32 %v4546, %v5139
        %v5268 = vmul.f32 %v4548, %v5140
        %v5269 = vmul.f32 %v4550, %v5141
        %v5270 = vmul.f32 %v4552, %v5142
        %v5271 = vmul.f32 %v4554, %v5143
        %v5272 = vmul.f32 %v4556, %v5144
        %v5273 = vmul.f32 %v4558, %v5145
        %v5274 = vmul.f32 %v4560, %v5146
        %v5275 = vmul.f32 %v4562, %v5147
        %v5276 = vmul.f32 %v4564, %v5148
        %v5277 = vmul.f32 %v4566, %v5149
        %v5278 = vmul.f32 %v4568, %v5150
        %v5279 = vmul.f32 %v4570, %v5151
        %v5280 = vmul.f32 %v4572, %v5152
        %v5281 = vmul.f32 %v4574, %v5153
        %v5282 = vmul.f32 %v4576, %v5154
        %v5283 = vmul.f32 %v4578, %v5155
        %v5284 = vmul.f32 %v4580, %v5156
        %v5285 = vmul.f32 %v4582, %v5157
        %v5286 = vmul.f32 %v4584, %v5158
        %v5287 = vmul.f32 %v4586, %v5159
        %v5288 = vmul.f32 %v4588, %v5160
        %v5289 = vmul.f32 %v4590, %v5161
        %v5290 = vmul.f32 %v4592, %v5162
        %v5291 = vmul.f32 %v4594, %v5163
        %v5292 = vmul.f32 %v4596, %v5164
        %v5293 = vmul.f32 %v4598, %v5165
        %v5294 = vmul.f32 %v4600, %v5166
        %v5295 = vmul.f32 %v4602, %v5167
        %v5296 = vmul.f32 %v4604, %v5168
        %v5297 = vmul.f32 %v4606, %v5169
        %v5298 = vmul.f32 %v4608, %v5170
        %v5299 = vmul.f32 %v4610, %v5171
        %v5300 = vmul.f32 %v4612, %v5172
        %v5301 = vmul.f32 %v4614, %v5173
        %v5302 = vmul.f32 %v4616, %v5174
        %v5303 = vmul.f32 %v4618, %v5175
        %v5304 = vmul.f32 %v4620, %v5176
        %v5305 = vmul.f32 %v4622, %v5177
        %v5306 = vmul.f32 %v4624, %v5178
        %v5307 = vmul.f32 %v4626, %v5179
        %v5308 = vmul.f32 %v4628, %v5180
        %v5309 = vmul.f32 %v4630, %v5181
        %v5310 = vmul.f32 %v4632, %v5182
        %v5311 = vmul.f32 %v4634, %v5183
        %v5312 = vmul.f32 %v4636, %v5184
        %v5313 = vmul.f32 %v4638, %v5185
        %v5314 = vmul.f32 %v4640, %v5186
        %v5315 = vmul.f32 %v4642, %v5187
        %v5316 = vmul.f32 %v4644, %v5188
        %v5317 = vmul.f32 %v4646, %v5189
        %v5318 = vmul.f32 %v4648, %v5190
        %v5319 = vmul.f32 %v4650, %v5191
        %v5320 = vmul.f32 %v4652, %v5192
        %v5321 = vmul.f32 %v4654, %v5193
        %v5322 = vmul.f32 %v4656, %v5194
        %v5323 = vmul.f32 %v4658, %v5195
        %v5324 = vmul.f32 %v4660, %v5196
        %v5325 = vmul.f32 %v4662, %v5197
        %v5326 = vmul.f32 %v4664, %v5198
        %v5327 = vmul.f32 %v4666, %v5199
        %v5328 = vmul.f32 %v4668, %v5200
        %v5329 = vmul.f32 %v4670, %v5201
        %v5330 = vmul.f32 %v4672, %v5202
        %v5331 = vmul.f32 %v4674, %v5203
        %v5332 = vmul.f32 %v4676, %v5204
        %v5333 = vmul.f32 %v4678, %v5205
        %v5334 = vmul.f32 %v4680, %v5206
        %v5335 = vmul.f32 %v4682, %v5207
        %v5336 = vmul.f32 %v4684, %v5208
        %v5337 = vmul.f32 %v4686, %v5209
        %v5338 = vmul.f32 %v4688, %v5210
        %v5339 = vmul.f32 %v4690, %v5211
        %v5340 = vmul.f32 %v4692, %v5212
        %v5341 = vmul.f32 %v4694, %v5213
        %v5342 = vmul.f32 %v4696, %v5214
        %v5343 = vmul.f32 %v4698, %v5215
        %v5344 = vmul.f32 %v4700, %v5216
        %v5345 = vmul.f32 %v4702, %v5217
        %v5346 = vmul.f32 %v4704, %v5218
        %v5347 = vmul.f32 %v4706, %v5219
        %v5348 = vmul.f32 %v4708, %v5220
        %v5349 = vpack.c.bf16 %v5222, %v5221
        %v5350 = vpack.c.bf16 %v5224, %v5223
        %v5351 = vpack.c.bf16 %v5226, %v5225
        %v5352 = vpack.c.bf16 %v5228, %v5227
        %v5353 = vpack.c.bf16 %v5230, %v5229
        %v5354 = vpack.c.bf16 %v5232, %v5231
        %v5355 = vpack.c.bf16 %v5234, %v5233
        %v5356 = vpack.c.bf16 %v5236, %v5235
        %v5357 = vpack.c.bf16 %v5238, %v5237
        %v5358 = vpack.c.bf16 %v5240, %v5239
        %v5359 = vpack.c.bf16 %v5242, %v5241
        %v5360 = vpack.c.bf16 %v5244, %v5243
        %v5361 = vpack.c.bf16 %v5246, %v5245
        %v5362 = vpack.c.bf16 %v5248, %v5247
        %v5363 = vpack.c.bf16 %v5250, %v5249
        %v5364 = vpack.c.bf16 %v5252, %v5251
        %v5365 = vpack.c.bf16 %v5254, %v5253
        %v5366 = vpack.c.bf16 %v5256, %v5255
        %v5367 = vpack.c.bf16 %v5258, %v5257
        %v5368 = vpack.c.bf16 %v5260, %v5259
        %v5369 = vpack.c.bf16 %v5262, %v5261
        %v5370 = vpack.c.bf16 %v5264, %v5263
        %v5371 = vpack.c.bf16 %v5266, %v5265
        %v5372 = vpack.c.bf16 %v5268, %v5267
        %v5373 = vpack.c.bf16 %v5270, %v5269
        %v5374 = vpack.c.bf16 %v5272, %v5271
        %v5375 = vpack.c.bf16 %v5274, %v5273
        %v5376 = vpack.c.bf16 %v5276, %v5275
        %v5377 = vpack.c.bf16 %v5278, %v5277
        %v5378 = vpack.c.bf16 %v5280, %v5279
        %v5379 = vpack.c.bf16 %v5282, %v5281
        %v5380 = vpack.c.bf16 %v5284, %v5283
        %v5381 = vpack.c.bf16 %v5286, %v5285
        %v5382 = vpack.c.bf16 %v5288, %v5287
        %v5383 = vpack.c.bf16 %v5290, %v5289
        %v5384 = vpack.c.bf16 %v5292, %v5291
        %v5385 = vpack.c.bf16 %v5294, %v5293
        %v5386 = vpack.c.bf16 %v5296, %v5295
        %v5387 = vpack.c.bf16 %v5298, %v5297
        %v5388 = vpack.c.bf16 %v5300, %v5299
        %v5389 = vpack.c.bf16 %v5302, %v5301
        %v5390 = vpack.c.bf16 %v5304, %v5303
        %v5391 = vpack.c.bf16 %v5306, %v5305
        %v5392 = vpack.c.bf16 %v5308, %v5307
        %v5393 = vpack.c.bf16 %v5310, %v5309
        %v5394 = vpack.c.bf16 %v5312, %v5311
        %v5395 = vpack.c.bf16 %v5314, %v5313
        %v5396 = vpack.c.bf16 %v5316, %v5315
        %v5397 = vpack.c.bf16 %v5318, %v5317
        %v5398 = vpack.c.bf16 %v5320, %v5319
        %v5399 = vpack.c.bf16 %v5322, %v5321
        %v5400 = vpack.c.bf16 %v5324, %v5323
        %v5401 = vpack.c.bf16 %v5326, %v5325
        %v5402 = vpack.c.bf16 %v5328, %v5327
        %v5403 = vpack.c.bf16 %v5330, %v5329
        %v5404 = vpack.c.bf16 %v5332, %v5331
        %v5405 = vpack.c.bf16 %v5334, %v5333
        %v5406 = vpack.c.bf16 %v5336, %v5335
        %v5407 = vpack.c.bf16 %v5338, %v5337
        %v5408 = vpack.c.bf16 %v5340, %v5339
        %v5409 = vpack.c.bf16 %v5342, %v5341
        %v5410 = vpack.c.bf16 %v5344, %v5343
        %v5411 = vpack.c.bf16 %v5346, %v5345
        %v5412 = vpack.c.bf16 %v5348, %v5347
        %v5414 = vsel %vm1988, %v5349, 0
        %v5417 = vsel %vm1988, %v5350, 0
        %5419 = vmatprep.subr.bf16.mxu0 0
        %5420 = vmatpush1.bf16.msra.mxu0 %v1558
        %5421 = vmatprep.subr.bf16.mxu0 0
        %5422 = vmatpush1.bf16.msra.mxu0 %v1561
        %5423 = vmatprep.subr.bf16.mxu0 0
        %5424 = vmatpush1.bf16.msra.mxu0 0
        %5425 = vmatprep.subr.bf16.mxu0 0
        %5426 = vmatpush1.bf16.msra.mxu0 0
        %5427 = vmatprep.subr.bf16.mxu0 0
        %5428 = vmatpush1.bf16.msra.mxu0 0
        %5429 = vmatprep.subr.bf16.mxu0 0
        %5430 = vmatpush1.bf16.msra.mxu0 0
        %5431 = vmatprep.subr.bf16.mxu0 0
        %5432 = vmatpush1.bf16.msra.mxu0 0
        %5433 = vmatprep.subr.bf16.mxu0 0
        %5434 = vmatpush1.bf16.msra.mxu0 0
        %5435 = vmatprep.subr.bf16.mxu0 0
        %5436 = vmatpush1.bf16.msra.mxu0 0
        %5437 = vmatprep.subr.bf16.mxu0 0
        %5438 = vmatpush1.bf16.msra.mxu0 0
        %5439 = vmatprep.subr.bf16.mxu0 0
        %5440 = vmatpush1.bf16.msra.mxu0 0
        %5441 = vmatprep.subr.bf16.mxu0 0
        %5442 = vmatpush1.bf16.msra.mxu0 0
        %5443 = vmatprep.subr.bf16.mxu0 0
        %5444 = vmatpush1.bf16.msra.mxu0 0
        %5445 = vmatprep.subr.bf16.mxu0 0
        %5446 = vmatpush1.bf16.msra.mxu0 0
        %5447 = vmatprep.subr.bf16.mxu0 0
        %5448 = vmatpush1.bf16.msra.mxu0 0
        %5449 = vmatprep.subr.bf16.mxu0 0
        %5450 = vmatpush1.bf16.msra.mxu0 0
        %5451 = vmatprep.mubr.bf16.mxu0 0
        %5452 = vmatmul.mubr.bf16.gmra.mrb[0].mxu0 %v5414
        %v5453 = vpop.f32.mrb[0].mxu0
        %v5454 = vadd.f32 0.0, %v5453
        %v5455 = vpop.f32.mrb[0].mxu0
        %v5456 = vpop.f32.mrb[0].mxu0
        %v5457 = vadd.f32 0.0, %v5456
        %v5458 = vpop.f32.mrb[0].mxu0
        %5459 = vmatprep.mubr.bf16.mxu0 0
        %5460 = vmatmul.mubr.bf16.gmra.mrb[0].mxu0 %v5417
        %v5461 = vpop.f32.mrb[0].mxu0
        %v5462 = vadd.f32 0.0, %v5461
        %v5463 = vpop.f32.mrb[0].mxu0
        %v5464 = vpop.f32.mrb[0].mxu0
        %v5465 = vadd.f32 0.0, %v5464
        %v5466 = vpop.f32.mrb[0].mxu0
        %5467 = vdwg.mxu0
        %v5469 = vsel %vm1988, %v5351, 0
        %v5472 = vsel %vm1988, %v5352, 0
        %5474 = vmatprep.subr.bf16.mxu0 0
        %5475 = vmatpush1.bf16.msra.mxu0 %v1564
        %5476 = vmatprep.subr.bf16.mxu0 0
        %5477 = vmatpush1.bf16.msra.mxu0 %v1567
        %5478 = vmatprep.subr.bf16.mxu0 0
        %5479 = vmatpush1.bf16.msra.mxu0 0
        %5480 = vmatprep.subr.bf16.mxu0 0
        %5481 = vmatpush1.bf16.msra.mxu0 0
        %5482 = vmatprep.subr.bf16.mxu0 0
        %5483 = vmatpush1.bf16.msra.mxu0 0
        %5484 = vmatprep.subr.bf16.mxu0 0
        %5485 = vmatpush1.bf16.msra.mxu0 0
        %5486 = vmatprep.subr.bf16.mxu0 0
        %5487 = vmatpush1.bf16.msra.mxu0 0
        %5488 = vmatprep.subr.bf16.mxu0 0
        %5489 = vmatpush1.bf16.msra.mxu0 0
        %5490 = vmatprep.subr.bf16.mxu0 0
        %5491 = vmatpush1.bf16.msra.mxu0 0
        %5492 = vmatprep.subr.bf16.mxu0 0
        %5493 = vmatpush1.bf16.msra.mxu0 0
        %5494 = vmatprep.subr.bf16.mxu0 0
        %5495 = vmatpush1.bf16.msra.mxu0 0
        %5496 = vmatprep.subr.bf16.mxu0 0
        %5497 = vmatpush1.bf16.msra.mxu0 0
        %5498 = vmatprep.subr.bf16.mxu0 0
        %5499 = vmatpush1.bf16.msra.mxu0 0
        %5500 = vmatprep.subr.bf16.mxu0 0
        %5501 = vmatpush1.bf16.msra.mxu0 0
        %5502 = vmatprep.subr.bf16.mxu0 0
        %5503 = vmatpush1.bf16.msra.mxu0 0
        %5504 = vmatprep.subr.bf16.mxu0 0
        %5505 = vmatpush1.bf16.msra.mxu0 0
        %5506 = vmatprep.mubr.bf16.mxu0 0
        %5507 = vmatmul.mubr.bf16.gmra.mrb[0].mxu0 %v5469
        %v5508 = vpop.f32.mrb[0].mxu0
        %v5509 = vadd.f32 0.0, %v5508
        %v5510 = vpop.f32.mrb[0].mxu0
        %v5511 = vpop.f32.mrb[0].mxu0
        %v5512 = vadd.f32 0.0, %v5511
        %v5513 = vpop.f32.mrb[0].mxu0
        %5514 = vmatprep.mubr.bf16.mxu0 0
        %5515 = vmatmul.mubr.bf16.gmra.mrb[0].mxu0 %v5472
        %v5516 = vpop.f32.mrb[0].mxu0
        %v5517 = vadd.f32 0.0, %v5516
        %v5518 = vpop.f32.mrb[0].mxu0
        %v5519 = vpop.f32.mrb[0].mxu0
        %v5520 = vadd.f32 0.0, %v5519
        %v5521 = vpop.f32.mrb[0].mxu0
        %5522 = vdwg.mxu0
        %v5524 = vsel %vm1988, %v5353, 0
        %v5527 = vsel %vm1988, %v5354, 0
        %5529 = vmatprep.subr.bf16.mxu0 0
        %5530 = vmatpush1.bf16.msra.mxu0 %v1570
        %5531 = vmatprep.subr.bf16.mxu0 0
        %5532 = vmatpush1.bf16.msra.mxu0 %v1573
        %5533 = vmatprep.subr.bf16.mxu0 0
        %5534 = vmatpush1.bf16.msra.mxu0 0
        %5535 = vmatprep.subr.bf16.mxu0 0
        %5536 = vmatpush1.bf16.msra.mxu0 0
        %5537 = vmatprep.subr.bf16.mxu0 0
        %5538 = vmatpush1.bf16.msra.mxu0 0
        %5539 = vmatprep.subr.bf16.mxu0 0
        %5540 = vmatpush1.bf16.msra.mxu0 0
        %5541 = vmatprep.subr.bf16.mxu0 0
        %5542 = vmatpush1.bf16.msra.mxu0 0
        %5543 = vmatprep.subr.bf16.mxu0 0
        %5544 = vmatpush1.bf16.msra.mxu0 0
        %5545 = vmatprep.subr.bf16.mxu0 0
        %5546 = vmatpush1.bf16.msra.mxu0 0
        %5547 = vmatprep.subr.bf16.mxu0 0
        %5548 = vmatpush1.bf16.msra.mxu0 0
        %5549 = vmatprep.subr.bf16.mxu0 0
        %5550 = vmatpush1.bf16.msra.mxu0 0
        %5551 = vmatprep.subr.bf16.mxu0 0
        %5552 = vmatpush1.bf16.msra.mxu0 0
        %5553 = vmatprep.subr.bf16.mxu0 0
        %5554 = vmatpush1.bf16.msra.mxu0 0
        %5555 = vmatprep.subr.bf16.mxu0 0
        %5556 = vmatpush1.bf16.msra.mxu0 0
        %5557 = vmatprep.subr.bf16.mxu0 0
        %5558 = vmatpush1.bf16.msra.mxu0 0
        %5559 = vmatprep.subr.bf16.mxu0 0
        %5560 = vmatpush1.bf16.msra.mxu0 0
        %5561 = vmatprep.mubr.bf16.mxu0 0
        %5562 = vmatmul.mubr.bf16.gmra.mrb[0].mxu0 %v5524
        %v5563 = vpop.f32.mrb[0].mxu0
        %v5564 = vadd.f32 0.0, %v5563
        %v5565 = vpop.f32.mrb[0].mxu0
        %v5566 = vpop.f32.mrb[0].mxu0
        %v5567 = vadd.f32 0.0, %v5566
        %v5568 = vpop.f32.mrb[0].mxu0
        %5569 = vmatprep.mubr.bf16.mxu0 0
        %5570 = vmatmul.mubr.bf16.gmra.mrb[0].mxu0 %v5527
        %v5571 = vpop.f32.mrb[0].mxu0
        %v5572 = vadd.f32 0.0, %v5571
        %v5573 = vpop.f32.mrb[0].mxu0
        %v5574 = vpop.f32.mrb[0].mxu0
        %v5575 = vadd.f32 0.0, %v5574
        %v5576 = vpop.f32.mrb[0].mxu0
        %5577 = vdwg.mxu0
        %v5579 = vsel %vm1988, %v5355, 0
        %v5582 = vsel %vm1988, %v5356, 0
        %5584 = vmatprep.subr.bf16.mxu0 0
        %5585 = vmatpush1.bf16.msra.mxu0 %v1576
        %5586 = vmatprep.subr.bf16.mxu0 0
        %5587 = vmatpush1.bf16.msra.mxu0 %v1579
        %5588 = vmatprep.subr.bf16.mxu0 0
        %5589 = vmatpush1.bf16.msra.mxu0 0
        %5590 = vmatprep.subr.bf16.mxu0 0
        %5591 = vmatpush1.bf16.msra.mxu0 0
        %5592 = vmatprep.subr.bf16.mxu0 0
        %5593 = vmatpush1.bf16.msra.mxu0 0
        %5594 = vmatprep.subr.bf16.mxu0 0
        %5595 = vmatpush1.bf16.msra.mxu0 0
        %5596 = vmatprep.subr.bf16.mxu0 0
        %5597 = vmatpush1.bf16.msra.mxu0 0
        %5598 = vmatprep.subr.bf16.mxu0 0
        %5599 = vmatpush1.bf16.msra.mxu0 0
        %5600 = vmatprep.subr.bf16.mxu0 0
        %5601 = vmatpush1.bf16.msra.mxu0 0
        %5602 = vmatprep.subr.bf16.mxu0 0
        %5603 = vmatpush1.bf16.msra.mxu0 0
        %5604 = vmatprep.subr.bf16.mxu0 0
        %5605 = vmatpush1.bf16.msra.mxu0 0
        %5606 = vmatprep.subr.bf16.mxu0 0
        %5607 = vmatpush1.bf16.msra.mxu0 0
        %5608 = vmatprep.subr.bf16.mxu0 0
        %5609 = vmatpush1.bf16.msra.mxu0 0
        %5610 = vmatprep.subr.bf16.mxu0 0
        %5611 = vmatpush1.bf16.msra.mxu0 0
        %5612 = vmatprep.subr.bf16.mxu0 0
        %5613 = vmatpush1.bf16.msra.mxu0 0
        %5614 = vmatprep.subr.bf16.mxu0 0
        %5615 = vmatpush1.bf16.msra.mxu0 0
        %5616 = vmatprep.mubr.bf16.mxu0 0
        %5617 = vmatmul.mubr.bf16.gmra.mrb[0].mxu0 %v5579
        %v5618 = vpop.f32.mrb[0].mxu0
        %v5619 = vadd.f32 0.0, %v5618
        %v5620 = vpop.f32.mrb[0].mxu0
        %v5621 = vpop.f32.mrb[0].mxu0
        %v5622 = vadd.f32 0.0, %v5621
        %v5623 = vpop.f32.mrb[0].mxu0
        %5624 = vmatprep.mubr.bf16.mxu0 0
        %5625 = vmatmul.mubr.bf16.gmra.mrb[0].mxu0 %v5582
        %v5626 = vpop.f32.mrb[0].mxu0
        %v5627 = vadd.f32 0.0, %v5626
        %v5628 = vpop.f32.mrb[0].mxu0
        %v5629 = vpop.f32.mrb[0].mxu0
        %v5630 = vadd.f32 0.0, %v5629
        %v5631 = vpop.f32.mrb[0].mxu0
        %5632 = vdwg.mxu0
        %v5634 = vsel %vm1988, %v5357, 0
        %v5637 = vsel %vm1988, %v5358, 0
        %5639 = vmatprep.subr.bf16.mxu0 0
        %5640 = vmatpush1.bf16.msra.mxu0 %v1582
        %5641 = vmatprep.subr.bf16.mxu0 0
        %5642 = vmatpush1.bf16.msra.mxu0 %v1585
        %5643 = vmatprep.subr.bf16.mxu0 0
        %5644 = vmatpush1.bf16.msra.mxu0 0
        %5645 = vmatprep.subr.bf16.mxu0 0
        %5646 = vmatpush1.bf16.msra.mxu0 0
        %5647 = vmatprep.subr.bf16.mxu0 0
        %5648 = vmatpush1.bf16.msra.mxu0 0
        %5649 = vmatprep.subr.bf16.mxu0 0
        %5650 = vmatpush1.bf16.msra.mxu0 0
        %5651 = vmatprep.subr.bf16.mxu0 0
        %5652 = vmatpush1.bf16.msra.mxu0 0
        %5653 = vmatprep.subr.bf16.mxu0 0
        %5654 = vmatpush1.bf16.msra.mxu0 0
        %5655 = vmatprep.subr.bf16.mxu0 0
        %5656 = vmatpush1.bf16.msra.mxu0 0
        %5657 = vmatprep.subr.bf16.mxu0 0
        %5658 = vmatpush1.bf16.msra.mxu0 0
        %5659 = vmatprep.subr.bf16.mxu0 0
        %5660 = vmatpush1.bf16.msra.mxu0 0
        %5661 = vmatprep.subr.bf16.mxu0 0
        %5662 = vmatpush1.bf16.msra.mxu0 0
        %5663 = vmatprep.subr.bf16.mxu0 0
        %5664 = vmatpush1.bf16.msra.mxu0 0
        %5665 = vmatprep.subr.bf16.mxu0 0
        %5666 = vmatpush1.bf16.msra.mxu0 0
        %5667 = vmatprep.subr.bf16.mxu0 0
        %5668 = vmatpush1.bf16.msra.mxu0 0
        %5669 = vmatprep.subr.bf16.mxu0 0
        %5670 = vmatpush1.bf16.msra.mxu0 0
        %5671 = vmatprep.mubr.bf16.mxu0 0
        %5672 = vmatmul.mubr.bf16.gmra.mrb[0].mxu0 %v5634
        %v5673 = vpop.f32.mrb[0].mxu0
        %v5674 = vadd.f32 0.0, %v5673
        %v5675 = vpop.f32.mrb[0].mxu0
        %v5676 = vpop.f32.mrb[0].mxu0
        %v5677 = vadd.f32 0.0, %v5676
        %v5678 = vpop.f32.mrb[0].mxu0
        %5679 = vmatprep.mubr.bf16.mxu0 0
        %5680 = vmatmul.mubr.bf16.gmra.mrb[0].mxu0 %v5637
        %v5681 = vpop.f32.mrb[0].mxu0
        %v5682 = vadd.f32 0.0, %v5681
        %v5683 = vpop.f32.mrb[0].mxu0
        %v5684 = vpop.f32.mrb[0].mxu0
        %v5685 = vadd.f32 0.0, %v5684
        %v5686 = vpop.f32.mrb[0].mxu0
        %5687 = vdwg.mxu0
        %v5689 = vsel %vm1988, %v5359, 0
        %v5692 = vsel %vm1988, %v5360, 0
        %5694 = vmatprep.subr.bf16.mxu0 0
        %5695 = vmatpush1.bf16.msra.mxu0 %v1588
        %5696 = vmatprep.subr.bf16.mxu0 0
        %5697 = vmatpush1.bf16.msra.mxu0 %v1591
        %5698 = vmatprep.subr.bf16.mxu0 0
        %5699 = vmatpush1.bf16.msra.mxu0 0
        %5700 = vmatprep.subr.bf16.mxu0 0
        %5701 = vmatpush1.bf16.msra.mxu0 0
        %5702 = vmatprep.subr.bf16.mxu0 0
        %5703 = vmatpush1.bf16.msra.mxu0 0
        %5704 = vmatprep.subr.bf16.mxu0 0
        %5705 = vmatpush1.bf16.msra.mxu0 0
        %5706 = vmatprep.subr.bf16.mxu0 0
        %5707 = vmatpush1.bf16.msra.mxu0 0
        %5708 = vmatprep.subr.bf16.mxu0 0
        %5709 = vmatpush1.bf16.msra.mxu0 0
        %5710 = vmatprep.subr.bf16.mxu0 0
        %5711 = vmatpush1.bf16.msra.mxu0 0
        %5712 = vmatprep.subr.bf16.mxu0 0
        %5713 = vmatpush1.bf16.msra.mxu0 0
        %5714 = vmatprep.subr.bf16.mxu0 0
        %5715 = vmatpush1.bf16.msra.mxu0 0
        %5716 = vmatprep.subr.bf16.mxu0 0
        %5717 = vmatpush1.bf16.msra.mxu0 0
        %5718 = vmatprep.subr.bf16.mxu0 0
        %5719 = vmatpush1.bf16.msra.mxu0 0
        %5720 = vmatprep.subr.bf16.mxu0 0
        %5721 = vmatpush1.bf16.msra.mxu0 0
        %5722 = vmatprep.subr.bf16.mxu0 0
        %5723 = vmatpush1.bf16.msra.mxu0 0
        %5724 = vmatprep.subr.bf16.mxu0 0
        %5725 = vmatpush1.bf16.msra.mxu0 0
        %5726 = vmatprep.mubr.bf16.mxu0 0
        %5727 = vmatmul.mubr.bf16.gmra.mrb[0].mxu0 %v5689
        %v5728 = vpop.f32.mrb[0].mxu0
        %v5729 = vadd.f32 0.0, %v5728
        %v5730 = vpop.f32.mrb[0].mxu0
        %v5731 = vpop.f32.mrb[0].mxu0
        %v5732 = vadd.f32 0.0, %v5731
        %v5733 = vpop.f32.mrb[0].mxu0
        %5734 = vmatprep.mubr.bf16.mxu0 0
        %5735 = vmatmul.mubr.bf16.gmra.mrb[0].mxu0 %v5692
        %v5736 = vpop.f32.mrb[0].mxu0
        %v5737 = vadd.f32 0.0, %v5736
        %v5738 = vpop.f32.mrb[0].mxu0
        %v5739 = vpop.f32.mrb[0].mxu0
        %v5740 = vadd.f32 0.0, %v5739
        %v5741 = vpop.f32.mrb[0].mxu0
        %5742 = vdwg.mxu0
        %v5744 = vsel %vm1988, %v5361, 0
        %v5747 = vsel %vm1988, %v5362, 0
        %5749 = vmatprep.subr.bf16.mxu0 0
        %5750 = vmatpush1.bf16.msra.mxu0 %v1594
        %5751 = vmatprep.subr.bf16.mxu0 0
        %5752 = vmatpush1.bf16.msra.mxu0 %v1597
        %5753 = vmatprep.subr.bf16.mxu0 0
        %5754 = vmatpush1.bf16.msra.mxu0 0
        %5755 = vmatprep.subr.bf16.mxu0 0
        %5756 = vmatpush1.bf16.msra.mxu0 0
        %5757 = vmatprep.subr.bf16.mxu0 0
        %5758 = vmatpush1.bf16.msra.mxu0 0
        %5759 = vmatprep.subr.bf16.mxu0 0
        %5760 = vmatpush1.bf16.msra.mxu0 0
        %5761 = vmatprep.subr.bf16.mxu0 0
        %5762 = vmatpush1.bf16.msra.mxu0 0
        %5763 = vmatprep.subr.bf16.mxu0 0
        %5764 = vmatpush1.bf16.msra.mxu0 0
        %5765 = vmatprep.subr.bf16.mxu0 0
        %5766 = vmatpush1.bf16.msra.mxu0 0
        %5767 = vmatprep.subr.bf16.mxu0 0
        %5768 = vmatpush1.bf16.msra.mxu0 0
        %5769 = vmatprep.subr.bf16.mxu0 0
        %5770 = vmatpush1.bf16.msra.mxu0 0
        %5771 = vmatprep.subr.bf16.mxu0 0
        %5772 = vmatpush1.bf16.msra.mxu0 0
        %5773 = vmatprep.subr.bf16.mxu0 0
        %5774 = vmatpush1.bf16.msra.mxu0 0
        %5775 = vmatprep.subr.bf16.mxu0 0
        %5776 = vmatpush1.bf16.msra.mxu0 0
        %5777 = vmatprep.subr.bf16.mxu0 0
        %5778 = vmatpush1.bf16.msra.mxu0 0
        %5779 = vmatprep.subr.bf16.mxu0 0
        %5780 = vmatpush1.bf16.msra.mxu0 0
        %5781 = vmatprep.mubr.bf16.mxu0 0
        %5782 = vmatmul.mubr.bf16.gmra.mrb[0].mxu0 %v5744
        %v5783 = vpop.f32.mrb[0].mxu0
        %v5784 = vadd.f32 0.0, %v5783
        %v5785 = vpop.f32.mrb[0].mxu0
        %v5786 = vpop.f32.mrb[0].mxu0
        %v5787 = vadd.f32 0.0, %v5786
        %v5788 = vpop.f32.mrb[0].mxu0
        %5789 = vmatprep.mubr.bf16.mxu0 0
        %5790 = vmatmul.mubr.bf16.gmra.mrb[0].mxu0 %v5747
        %v5791 = vpop.f32.mrb[0].mxu0
        %v5792 = vadd.f32 0.0, %v5791
        %v5793 = vpop.f32.mrb[0].mxu0
        %v5794 = vpop.f32.mrb[0].mxu0
        %v5795 = vadd.f32 0.0, %v5794
        %v5796 = vpop.f32.mrb[0].mxu0
        %5797 = vdwg.mxu0
        %v5799 = vsel %vm1988, %v5363, 0
        %v5802 = vsel %vm1988, %v5364, 0
        %5804 = vmatprep.subr.bf16.mxu0 0
        %5805 = vmatpush1.bf16.msra.mxu0 %v1600
        %5806 = vmatprep.subr.bf16.mxu0 0
        %5807 = vmatpush1.bf16.msra.mxu0 %v1603
        %5808 = vmatprep.subr.bf16.mxu0 0
        %5809 = vmatpush1.bf16.msra.mxu0 0
        %5810 = vmatprep.subr.bf16.mxu0 0
        %5811 = vmatpush1.bf16.msra.mxu0 0
        %5812 = vmatprep.subr.bf16.mxu0 0
        %5813 = vmatpush1.bf16.msra.mxu0 0
        %5814 = vmatprep.subr.bf16.mxu0 0
        %5815 = vmatpush1.bf16.msra.mxu0 0
        %5816 = vmatprep.subr.bf16.mxu0 0
        %5817 = vmatpush1.bf16.msra.mxu0 0
        %5818 = vmatprep.subr.bf16.mxu0 0
        %5819 = vmatpush1.bf16.msra.mxu0 0
        %5820 = vmatprep.subr.bf16.mxu0 0
        %5821 = vmatpush1.bf16.msra.mxu0 0
        %5822 = vmatprep.subr.bf16.mxu0 0
        %5823 = vmatpush1.bf16.msra.mxu0 0
        %5824 = vmatprep.subr.bf16.mxu0 0
        %5825 = vmatpush1.bf16.msra.mxu0 0
        %5826 = vmatprep.subr.bf16.mxu0 0
        %5827 = vmatpush1.bf16.msra.mxu0 0
        %5828 = vmatprep.subr.bf16.mxu0 0
        %5829 = vmatpush1.bf16.msra.mxu0 0
        %5830 = vmatprep.subr.bf16.mxu0 0
        %5831 = vmatpush1.bf16.msra.mxu0 0
        %5832 = vmatprep.subr.bf16.mxu0 0
        %5833 = vmatpush1.bf16.msra.mxu0 0
        %5834 = vmatprep.subr.bf16.mxu0 0
        %5835 = vmatpush1.bf16.msra.mxu0 0
        %5836 = vmatprep.mubr.bf16.mxu0 0
        %5837 = vmatmul.mubr.bf16.gmra.mrb[0].mxu0 %v5799
        %v5838 = vpop.f32.mrb[0].mxu0
        %v5839 = vadd.f32 0.0, %v5838
        %v5840 = vpop.f32.mrb[0].mxu0
        %v5841 = vpop.f32.mrb[0].mxu0
        %v5842 = vadd.f32 0.0, %v5841
        %v5843 = vpop.f32.mrb[0].mxu0
        %5844 = vmatprep.mubr.bf16.mxu0 0
        %5845 = vmatmul.mubr.bf16.gmra.mrb[0].mxu0 %v5802
        %v5846 = vpop.f32.mrb[0].mxu0
        %v5847 = vadd.f32 0.0, %v5846
        %v5848 = vpop.f32.mrb[0].mxu0
        %v5849 = vpop.f32.mrb[0].mxu0
        %v5850 = vadd.f32 0.0, %v5849
        %v5851 = vpop.f32.mrb[0].mxu0
        %5852 = vdwg.mxu0
        %v5854 = vsel %vm1988, %v5365, 0
        %v5857 = vsel %vm1988, %v5366, 0
        %5859 = vmatprep.subr.bf16.mxu0 0
        %5860 = vmatpush1.bf16.msra.mxu0 %v1845
        %5861 = vmatprep.subr.bf16.mxu0 0
        %5862 = vmatpush1.bf16.msra.mxu0 %v1847
        %5863 = vmatprep.subr.bf16.mxu0 0
        %5864 = vmatpush1.bf16.msra.mxu0 0
        %5865 = vmatprep.subr.bf16.mxu0 0
        %5866 = vmatpush1.bf16.msra.mxu0 0
        %5867 = vmatprep.subr.bf16.mxu0 0
        %5868 = vmatpush1.bf16.msra.mxu0 0
        %5869 = vmatprep.subr.bf16.mxu0 0
        %5870 = vmatpush1.bf16.msra.mxu0 0
        %5871 = vmatprep.subr.bf16.mxu0 0
        %5872 = vmatpush1.bf16.msra.mxu0 0
        %5873 = vmatprep.subr.bf16.mxu0 0
        %5874 = vmatpush1.bf16.msra.mxu0 0
        %5875 = vmatprep.subr.bf16.mxu0 0
        %5876 = vmatpush1.bf16.msra.mxu0 0
        %5877 = vmatprep.subr.bf16.mxu0 0
        %5878 = vmatpush1.bf16.msra.mxu0 0
        %5879 = vmatprep.subr.bf16.mxu0 0
        %5880 = vmatpush1.bf16.msra.mxu0 0
        %5881 = vmatprep.subr.bf16.mxu0 0
        %5882 = vmatpush1.bf16.msra.mxu0 0
        %5883 = vmatprep.subr.bf16.mxu0 0
        %5884 = vmatpush1.bf16.msra.mxu0 0
        %5885 = vmatprep.subr.bf16.mxu0 0
        %5886 = vmatpush1.bf16.msra.mxu0 0
        %5887 = vmatprep.subr.bf16.mxu0 0
        %5888 = vmatpush1.bf16.msra.mxu0 0
        %5889 = vmatprep.subr.bf16.mxu0 0
        %5890 = vmatpush1.bf16.msra.mxu0 0
        %5891 = vmatprep.mubr.bf16.mxu0 0
        %5892 = vmatmul.mubr.bf16.gmra.mrb[0].mxu0 %v5854
        %v5893 = vpop.f32.mrb[0].mxu0
        %v5894 = vadd.f32 0.0, %v5893
        %v5895 = vpop.f32.mrb[0].mxu0
        %v5896 = vpop.f32.mrb[0].mxu0
        %v5897 = vadd.f32 0.0, %v5896
        %v5898 = vpop.f32.mrb[0].mxu0
        %5899 = vmatprep.mubr.bf16.mxu0 0
        %5900 = vmatmul.mubr.bf16.gmra.mrb[0].mxu0 %v5857
        %v5901 = vpop.f32.mrb[0].mxu0
        %v5902 = vadd.f32 0.0, %v5901
        %v5903 = vpop.f32.mrb[0].mxu0
        %v5904 = vpop.f32.mrb[0].mxu0
        %v5905 = vadd.f32 0.0, %v5904
        %v5906 = vpop.f32.mrb[0].mxu0
        %5907 = vdwg.mxu0
        %v5909 = vsel %vm1988, %v5367, 0
        %v5912 = vsel %vm1988, %v5368, 0
        %5914 = vmatprep.subr.bf16.mxu0 0
        %5915 = vmatpush1.bf16.msra.mxu0 %v1849
        %5916 = vmatprep.subr.bf16.mxu0 0
        %5917 = vmatpush1.bf16.msra.mxu0 %v1851
        %5918 = vmatprep.subr.bf16.mxu0 0
        %5919 = vmatpush1.bf16.msra.mxu0 0
        %5920 = vmatprep.subr.bf16.mxu0 0
        %5921 = vmatpush1.bf16.msra.mxu0 0
        %5922 = vmatprep.subr.bf16.mxu0 0
        %5923 = vmatpush1.bf16.msra.mxu0 0
        %5924 = vmatprep.subr.bf16.mxu0 0
        %5925 = vmatpush1.bf16.msra.mxu0 0
        %5926 = vmatprep.subr.bf16.mxu0 0
        %5927 = vmatpush1.bf16.msra.mxu0 0
        %5928 = vmatprep.subr.bf16.mxu0 0
        %5929 = vmatpush1.bf16.msra.mxu0 0
        %5930 = vmatprep.subr.bf16.mxu0 0
        %5931 = vmatpush1.bf16.msra.mxu0 0
        %5932 = vmatprep.subr.bf16.mxu0 0
        %5933 = vmatpush1.bf16.msra.mxu0 0
        %5934 = vmatprep.subr.bf16.mxu0 0
        %5935 = vmatpush1.bf16.msra.mxu0 0
        %5936 = vmatprep.subr.bf16.mxu0 0
        %5937 = vmatpush1.bf16.msra.mxu0 0
        %5938 = vmatprep.subr.bf16.mxu0 0
        %5939 = vmatpush1.bf16.msra.mxu0 0
        %5940 = vmatprep.subr.bf16.mxu0 0
        %5941 = vmatpush1.bf16.msra.mxu0 0
        %5942 = vmatprep.subr.bf16.mxu0 0
        %5943 = vmatpush1.bf16.msra.mxu0 0
        %5944 = vmatprep.subr.bf16.mxu0 0
        %5945 = vmatpush1.bf16.msra.mxu0 0
        %5946 = vmatprep.mubr.bf16.mxu0 0
        %5947 = vmatmul.mubr.bf16.gmra.mrb[0].mxu0 %v5909
        %v5948 = vpop.f32.mrb[0].mxu0
        %v5949 = vadd.f32 0.0, %v5948
        %v5950 = vpop.f32.mrb[0].mxu0
        %v5951 = vpop.f32.mrb[0].mxu0
        %v5952 = vadd.f32 0.0, %v5951
        %v5953 = vpop.f32.mrb[0].mxu0
        %5954 = vmatprep.mubr.bf16.mxu0 0
        %5955 = vmatmul.mubr.bf16.gmra.mrb[0].mxu0 %v5912
        %v5956 = vpop.f32.mrb[0].mxu0
        %v5957 = vadd.f32 0.0, %v5956
        %v5958 = vpop.f32.mrb[0].mxu0
        %v5959 = vpop.f32.mrb[0].mxu0
        %v5960 = vadd.f32 0.0, %v5959
        %v5961 = vpop.f32.mrb[0].mxu0
        %5962 = vdwg.mxu0
        %v5964 = vsel %vm1988, %v5369, 0
        %v5967 = vsel %vm1988, %v5370, 0
        %5969 = vmatprep.subr.bf16.mxu0 0
        %5970 = vmatpush1.bf16.msra.mxu0 %v1853
        %5971 = vmatprep.subr.bf16.mxu0 0
        %5972 = vmatpush1.bf16.msra.mxu0 %v1855
        %5973 = vmatprep.subr.bf16.mxu0 0
        %5974 = vmatpush1.bf16.msra.mxu0 0
        %5975 = vmatprep.subr.bf16.mxu0 0
        %5976 = vmatpush1.bf16.msra.mxu0 0
        %5977 = vmatprep.subr.bf16.mxu0 0
        %5978 = vmatpush1.bf16.msra.mxu0 0
        %5979 = vmatprep.subr.bf16.mxu0 0
        %5980 = vmatpush1.bf16.msra.mxu0 0
        %5981 = vmatprep.subr.bf16.mxu0 0
        %5982 = vmatpush1.bf16.msra.mxu0 0
        %5983 = vmatprep.subr.bf16.mxu0 0
        %5984 = vmatpush1.bf16.msra.mxu0 0
        %5985 = vmatprep.subr.bf16.mxu0 0
        %5986 = vmatpush1.bf16.msra.mxu0 0
        %5987 = vmatprep.subr.bf16.mxu0 0
        %5988 = vmatpush1.bf16.msra.mxu0 0
        %5989 = vmatprep.subr.bf16.mxu0 0
        %5990 = vmatpush1.bf16.msra.mxu0 0
        %5991 = vmatprep.subr.bf16.mxu0 0
        %5992 = vmatpush1.bf16.msra.mxu0 0
        %5993 = vmatprep.subr.bf16.mxu0 0
        %5994 = vmatpush1.bf16.msra.mxu0 0
        %5995 = vmatprep.subr.bf16.mxu0 0
        %5996 = vmatpush1.bf16.msra.mxu0 0
        %5997 = vmatprep.subr.bf16.mxu0 0
        %5998 = vmatpush1.bf16.msra.mxu0 0
        %5999 = vmatprep.subr.bf16.mxu0 0
        %6000 = vmatpush1.bf16.msra.mxu0 0
        %6001 = vmatprep.mubr.bf16.mxu0 0
        %6002 = vmatmul.mubr.bf16.gmra.mrb[0].mxu0 %v5964
        %v6003 = vpop.f32.mrb[0].mxu0
        %v6004 = vadd.f32 0.0, %v6003
        %v6005 = vpop.f32.mrb[0].mxu0
        %v6006 = vpop.f32.mrb[0].mxu0
        %v6007 = vadd.f32 0.0, %v6006
        %v6008 = vpop.f32.mrb[0].mxu0
        %6009 = vmatprep.mubr.bf16.mxu0 0
        %6010 = vmatmul.mubr.bf16.gmra.mrb[0].mxu0 %v5967
        %v6011 = vpop.f32.mrb[0].mxu0
        %v6012 = vadd.f32 0.0, %v6011
        %v6013 = vpop.f32.mrb[0].mxu0
        %v6014 = vpop.f32.mrb[0].mxu0
        %v6015 = vadd.f32 0.0, %v6014
        %v6016 = vpop.f32.mrb[0].mxu0
        %6017 = vdwg.mxu0
        %v6019 = vsel %vm1988, %v5371, 0
        %v6022 = vsel %vm1988, %v5372, 0
        %6024 = vmatprep.subr.bf16.mxu0 0
        %6025 = vmatpush1.bf16.msra.mxu0 %v1857
        %6026 = vmatprep.subr.bf16.mxu0 0
        %6027 = vmatpush1.bf16.msra.mxu0 %v1859
        %6028 = vmatprep.subr.bf16.mxu0 0
        %6029 = vmatpush1.bf16.msra.mxu0 0
        %6030 = vmatprep.subr.bf16.mxu0 0
        %6031 = vmatpush1.bf16.msra.mxu0 0
        %6032 = vmatprep.subr.bf16.mxu0 0
        %6033 = vmatpush1.bf16.msra.mxu0 0
        %6034 = vmatprep.subr.bf16.mxu0 0
        %6035 = vmatpush1.bf16.msra.mxu0 0
        %6036 = vmatprep.subr.bf16.mxu0 0
        %6037 = vmatpush1.bf16.msra.mxu0 0
        %6038 = vmatprep.subr.bf16.mxu0 0
        %6039 = vmatpush1.bf16.msra.mxu0 0
        %6040 = vmatprep.subr.bf16.mxu0 0
        %6041 = vmatpush1.bf16.msra.mxu0 0
        %6042 = vmatprep.subr.bf16.mxu0 0
        %6043 = vmatpush1.bf16.msra.mxu0 0
        %6044 = vmatprep.subr.bf16.mxu0 0
        %6045 = vmatpush1.bf16.msra.mxu0 0
        %6046 = vmatprep.subr.bf16.mxu0 0
        %6047 = vmatpush1.bf16.msra.mxu0 0
        %6048 = vmatprep.subr.bf16.mxu0 0
        %6049 = vmatpush1.bf16.msra.mxu0 0
        %6050 = vmatprep.subr.bf16.mxu0 0
        %6051 = vmatpush1.bf16.msra.mxu0 0
        %6052 = vmatprep.subr.bf16.mxu0 0
        %6053 = vmatpush1.bf16.msra.mxu0 0
        %6054 = vmatprep.subr.bf16.mxu0 0
        %6055 = vmatpush1.bf16.msra.mxu0 0
        %6056 = vmatprep.mubr.bf16.mxu0 0
        %6057 = vmatmul.mubr.bf16.gmra.mrb[0].mxu0 %v6019
        %v6058 = vpop.f32.mrb[0].mxu0
        %v6059 = vadd.f32 0.0, %v6058
        %v6060 = vpop.f32.mrb[0].mxu0
        %v6061 = vpop.f32.mrb[0].mxu0
        %v6062 = vadd.f32 0.0, %v6061
        %v6063 = vpop.f32.mrb[0].mxu0
        %6064 = vmatprep.mubr.bf16.mxu0 0
        %6065 = vmatmul.mubr.bf16.gmra.mrb[0].mxu0 %v6022
        %v6066 = vpop.f32.mrb[0].mxu0
        %v6067 = vadd.f32 0.0, %v6066
        %v6068 = vpop.f32.mrb[0].mxu0
        %v6069 = vpop.f32.mrb[0].mxu0
        %v6070 = vadd.f32 0.0, %v6069
        %v6071 = vpop.f32.mrb[0].mxu0
        %6072 = vdwg.mxu0
        %v6074 = vsel %vm1988, %v5373, 0
        %v6077 = vsel %vm1988, %v5374, 0
        %6079 = vmatprep.subr.bf16.mxu0 0
        %6080 = vmatpush1.bf16.msra.mxu0 %v1861
        %6081 = vmatprep.subr.bf16.mxu0 0
        %6082 = vmatpush1.bf16.msra.mxu0 %v1863
        %6083 = vmatprep.subr.bf16.mxu0 0
        %6084 = vmatpush1.bf16.msra.mxu0 0
        %6085 = vmatprep.subr.bf16.mxu0 0
        %6086 = vmatpush1.bf16.msra.mxu0 0
        %6087 = vmatprep.subr.bf16.mxu0 0
        %6088 = vmatpush1.bf16.msra.mxu0 0
        %6089 = vmatprep.subr.bf16.mxu0 0
        %6090 = vmatpush1.bf16.msra.mxu0 0
        %6091 = vmatprep.subr.bf16.mxu0 0
        %6092 = vmatpush1.bf16.msra.mxu0 0
        %6093 = vmatprep.subr.bf16.mxu0 0
        %6094 = vmatpush1.bf16.msra.mxu0 0
        %6095 = vmatprep.subr.bf16.mxu0 0
        %6096 = vmatpush1.bf16.msra.mxu0 0
        %6097 = vmatprep.subr.bf16.mxu0 0
        %6098 = vmatpush1.bf16.msra.mxu0 0
        %6099 = vmatprep.subr.bf16.mxu0 0
        %6100 = vmatpush1.bf16.msra.mxu0 0
        %6101 = vmatprep.subr.bf16.mxu0 0
        %6102 = vmatpush1.bf16.msra.mxu0 0
        %6103 = vmatprep.subr.bf16.mxu0 0
        %6104 = vmatpush1.bf16.msra.mxu0 0
        %6105 = vmatprep.subr.bf16.mxu0 0
        %6106 = vmatpush1.bf16.msra.mxu0 0
        %6107 = vmatprep.subr.bf16.mxu0 0
        %6108 = vmatpush1.bf16.msra.mxu0 0
        %6109 = vmatprep.subr.bf16.mxu0 0
        %6110 = vmatpush1.bf16.msra.mxu0 0
        %6111 = vmatprep.mubr.bf16.mxu0 0
        %6112 = vmatmul.mubr.bf16.gmra.mrb[0].mxu0 %v6074
        %v6113 = vpop.f32.mrb[0].mxu0
        %v6114 = vadd.f32 0.0, %v6113
        %v6115 = vpop.f32.mrb[0].mxu0
        %v6116 = vpop.f32.mrb[0].mxu0
        %v6117 = vadd.f32 0.0, %v6116
        %v6118 = vpop.f32.mrb[0].mxu0
        %6119 = vmatprep.mubr.bf16.mxu0 0
        %6120 = vmatmul.mubr.bf16.gmra.mrb[0].mxu0 %v6077
        %v6121 = vpop.f32.mrb[0].mxu0
        %v6122 = vadd.f32 0.0, %v6121
        %v6123 = vpop.f32.mrb[0].mxu0
        %v6124 = vpop.f32.mrb[0].mxu0
        %v6125 = vadd.f32 0.0, %v6124
        %v6126 = vpop.f32.mrb[0].mxu0
        %6127 = vdwg.mxu0
        %v6129 = vsel %vm1988, %v5375, 0
        %v6132 = vsel %vm1988, %v5376, 0
        %6134 = vmatprep.subr.bf16.mxu0 0
        %6135 = vmatpush1.bf16.msra.mxu0 %v1865
        %6136 = vmatprep.subr.bf16.mxu0 0
        %6137 = vmatpush1.bf16.msra.mxu0 %v1867
        %6138 = vmatprep.subr.bf16.mxu0 0
        %6139 = vmatpush1.bf16.msra.mxu0 0
        %6140 = vmatprep.subr.bf16.mxu0 0
        %6141 = vmatpush1.bf16.msra.mxu0 0
        %6142 = vmatprep.subr.bf16.mxu0 0
        %6143 = vmatpush1.bf16.msra.mxu0 0
        %6144 = vmatprep.subr.bf16.mxu0 0
        %6145 = vmatpush1.bf16.msra.mxu0 0
        %6146 = vmatprep.subr.bf16.mxu0 0
        %6147 = vmatpush1.bf16.msra.mxu0 0
        %6148 = vmatprep.subr.bf16.mxu0 0
        %6149 = vmatpush1.bf16.msra.mxu0 0
        %6150 = vmatprep.subr.bf16.mxu0 0
        %6151 = vmatpush1.bf16.msra.mxu0 0
        %6152 = vmatprep.subr.bf16.mxu0 0
        %6153 = vmatpush1.bf16.msra.mxu0 0
        %6154 = vmatprep.subr.bf16.mxu0 0
        %6155 = vmatpush1.bf16.msra.mxu0 0
        %6156 = vmatprep.subr.bf16.mxu0 0
        %6157 = vmatpush1.bf16.msra.mxu0 0
        %6158 = vmatprep.subr.bf16.mxu0 0
        %6159 = vmatpush1.bf16.msra.mxu0 0
        %6160 = vmatprep.subr.bf16.mxu0 0
        %6161 = vmatpush1.bf16.msra.mxu0 0
        %6162 = vmatprep.subr.bf16.mxu0 0
        %6163 = vmatpush1.bf16.msra.mxu0 0
        %6164 = vmatprep.subr.bf16.mxu0 0
        %6165 = vmatpush1.bf16.msra.mxu0 0
        %6166 = vmatprep.mubr.bf16.mxu0 0
        %6167 = vmatmul.mubr.bf16.gmra.mrb[0].mxu0 %v6129
        %v6168 = vpop.f32.mrb[0].mxu0
        %v6169 = vadd.f32 0.0, %v6168
        %v6170 = vpop.f32.mrb[0].mxu0
        %v6171 = vpop.f32.mrb[0].mxu0
        %v6172 = vadd.f32 0.0, %v6171
        %v6173 = vpop.f32.mrb[0].mxu0
        %6174 = vmatprep.mubr.bf16.mxu0 0
        %6175 = vmatmul.mubr.bf16.gmra.mrb[0].mxu0 %v6132
        %v6176 = vpop.f32.mrb[0].mxu0
        %v6177 = vadd.f32 0.0, %v6176
        %v6178 = vpop.f32.mrb[0].mxu0
        %v6179 = vpop.f32.mrb[0].mxu0
        %v6180 = vadd.f32 0.0, %v6179
        %v6181 = vpop.f32.mrb[0].mxu0
        %6182 = vdwg.mxu0
        %v6184 = vsel %vm1988, %v5377, 0
        %v6187 = vsel %vm1988, %v5378, 0
        %6189 = vmatprep.subr.bf16.mxu0 0
        %6190 = vmatpush1.bf16.msra.mxu0 %v1869
        %6191 = vmatprep.subr.bf16.mxu0 0
        %6192 = vmatpush1.bf16.msra.mxu0 %v1871
        %6193 = vmatprep.subr.bf16.mxu0 0
        %6194 = vmatpush1.bf16.msra.mxu0 0
        %6195 = vmatprep.subr.bf16.mxu0 0
        %6196 = vmatpush1.bf16.msra.mxu0 0
        %6197 = vmatprep.subr.bf16.mxu0 0
        %6198 = vmatpush1.bf16.msra.mxu0 0
        %6199 = vmatprep.subr.bf16.mxu0 0
        %6200 = vmatpush1.bf16.msra.mxu0 0
        %6201 = vmatprep.subr.bf16.mxu0 0
        %6202 = vmatpush1.bf16.msra.mxu0 0
        %6203 = vmatprep.subr.bf16.mxu0 0
        %6204 = vmatpush1.bf16.msra.mxu0 0
        %6205 = vmatprep.subr.bf16.mxu0 0
        %6206 = vmatpush1.bf16.msra.mxu0 0
        %6207 = vmatprep.subr.bf16.mxu0 0
        %6208 = vmatpush1.bf16.msra.mxu0 0
        %6209 = vmatprep.subr.bf16.mxu0 0
        %6210 = vmatpush1.bf16.msra.mxu0 0
        %6211 = vmatprep.subr.bf16.mxu0 0
        %6212 = vmatpush1.bf16.msra.mxu0 0
        %6213 = vmatprep.subr.bf16.mxu0 0
        %6214 = vmatpush1.bf16.msra.mxu0 0
        %6215 = vmatprep.subr.bf16.mxu0 0
        %6216 = vmatpush1.bf16.msra.mxu0 0
        %6217 = vmatprep.subr.bf16.mxu0 0
        %6218 = vmatpush1.bf16.msra.mxu0 0
        %6219 = vmatprep.subr.bf16.mxu0 0
        %6220 = vmatpush1.bf16.msra.mxu0 0
        %6221 = vmatprep.mubr.bf16.mxu0 0
        %6222 = vmatmul.mubr.bf16.gmra.mrb[0].mxu0 %v6184
        %v6223 = vpop.f32.mrb[0].mxu0
        %v6224 = vadd.f32 0.0, %v6223
        %v6225 = vpop.f32.mrb[0].mxu0
        %v6226 = vpop.f32.mrb[0].mxu0
        %v6227 = vadd.f32 0.0, %v6226
        %v6228 = vpop.f32.mrb[0].mxu0
        %6229 = vmatprep.mubr.bf16.mxu0 0
        %6230 = vmatmul.mubr.bf16.gmra.mrb[0].mxu0 %v6187
        %v6231 = vpop.f32.mrb[0].mxu0
        %v6232 = vadd.f32 0.0, %v6231
        %v6233 = vpop.f32.mrb[0].mxu0
        %v6234 = vpop.f32.mrb[0].mxu0
        %v6235 = vadd.f32 0.0, %v6234
        %v6236 = vpop.f32.mrb[0].mxu0
        %6237 = vdwg.mxu0
        %v6239 = vsel %vm1988, %v5379, 0
        %v6242 = vsel %vm1988, %v5380, 0
        %6244 = vmatprep.subr.bf16.mxu0 0
        %6245 = vmatpush1.bf16.msra.mxu0 %v1873
        %6246 = vmatprep.subr.bf16.mxu0 0
        %6247 = vmatpush1.bf16.msra.mxu0 %v1875
        %6248 = vmatprep.subr.bf16.mxu0 0
        %6249 = vmatpush1.bf16.msra.mxu0 0
        %6250 = vmatprep.subr.bf16.mxu0 0
        %6251 = vmatpush1.bf16.msra.mxu0 0
        %6252 = vmatprep.subr.bf16.mxu0 0
        %6253 = vmatpush1.bf16.msra.mxu0 0
        %6254 = vmatprep.subr.bf16.mxu0 0
        %6255 = vmatpush1.bf16.msra.mxu0 0
        %6256 = vmatprep.subr.bf16.mxu0 0
        %6257 = vmatpush1.bf16.msra.mxu0 0
        %6258 = vmatprep.subr.bf16.mxu0 0
        %6259 = vmatpush1.bf16.msra.mxu0 0
        %6260 = vmatprep.subr.bf16.mxu0 0
        %6261 = vmatpush1.bf16.msra.mxu0 0
        %6262 = vmatprep.subr.bf16.mxu0 0
        %6263 = vmatpush1.bf16.msra.mxu0 0
        %6264 = vmatprep.subr.bf16.mxu0 0
        %6265 = vmatpush1.bf16.msra.mxu0 0
        %6266 = vmatprep.subr.bf16.mxu0 0
        %6267 = vmatpush1.bf16.msra.mxu0 0
        %6268 = vmatprep.subr.bf16.mxu0 0
        %6269 = vmatpush1.bf16.msra.mxu0 0
        %6270 = vmatprep.subr.bf16.mxu0 0
        %6271 = vmatpush1.bf16.msra.mxu0 0
        %6272 = vmatprep.subr.bf16.mxu0 0
        %6273 = vmatpush1.bf16.msra.mxu0 0
        %6274 = vmatprep.subr.bf16.mxu0 0
        %6275 = vmatpush1.bf16.msra.mxu0 0
        %6276 = vmatprep.mubr.bf16.mxu0 0
        %6277 = vmatmul.mubr.bf16.gmra.mrb[0].mxu0 %v6239
        %v6278 = vpop.f32.mrb[0].mxu0
        %v6279 = vadd.f32 0.0, %v6278
        %v6280 = vpop.f32.mrb[0].mxu0
        %v6281 = vpop.f32.mrb[0].mxu0
        %v6282 = vadd.f32 0.0, %v6281
        %v6283 = vpop.f32.mrb[0].mxu0
        %6284 = vmatprep.mubr.bf16.mxu0 0
        %6285 = vmatmul.mubr.bf16.gmra.mrb[0].mxu0 %v6242
        %v6286 = vpop.f32.mrb[0].mxu0
        %v6287 = vadd.f32 0.0, %v6286
        %v6288 = vpop.f32.mrb[0].mxu0
        %v6289 = vpop.f32.mrb[0].mxu0
        %v6290 = vadd.f32 0.0, %v6289
        %v6291 = vpop.f32.mrb[0].mxu0
        %6292 = vdwg.mxu0
        %v6294 = vsel %vm1988, %v5381, 0
        %v6297 = vsel %vm1988, %v5382, 0
        %6299 = vmatprep.subr.bf16.mxu0 0
        %6300 = vmatpush1.bf16.msra.mxu0 %v1893
        %6301 = vmatprep.subr.bf16.mxu0 0
        %6302 = vmatpush1.bf16.msra.mxu0 %v1895
        %6303 = vmatprep.subr.bf16.mxu0 0
        %6304 = vmatpush1.bf16.msra.mxu0 0
        %6305 = vmatprep.subr.bf16.mxu0 0
        %6306 = vmatpush1.bf16.msra.mxu0 0
        %6307 = vmatprep.subr.bf16.mxu0 0
        %6308 = vmatpush1.bf16.msra.mxu0 0
        %6309 = vmatprep.subr.bf16.mxu0 0
        %6310 = vmatpush1.bf16.msra.mxu0 0
        %6311 = vmatprep.subr.bf16.mxu0 0
        %6312 = vmatpush1.bf16.msra.mxu0 0
        %6313 = vmatprep.subr.bf16.mxu0 0
        %6314 = vmatpush1.bf16.msra.mxu0 0
        %6315 = vmatprep.subr.bf16.mxu0 0
        %6316 = vmatpush1.bf16.msra.mxu0 0
        %6317 = vmatprep.subr.bf16.mxu0 0
        %6318 = vmatpush1.bf16.msra.mxu0 0
        %6319 = vmatprep.subr.bf16.mxu0 0
        %6320 = vmatpush1.bf16.msra.mxu0 0
        %6321 = vmatprep.subr.bf16.mxu0 0
        %6322 = vmatpush1.bf16.msra.mxu0 0
        %6323 = vmatprep.subr.bf16.mxu0 0
        %6324 = vmatpush1.bf16.msra.mxu0 0
        %6325 = vmatprep.subr.bf16.mxu0 0
        %6326 = vmatpush1.bf16.msra.mxu0 0
        %6327 = vmatprep.subr.bf16.mxu0 0
        %6328 = vmatpush1.bf16.msra.mxu0 0
        %6329 = vmatprep.subr.bf16.mxu0 0
        %6330 = vmatpush1.bf16.msra.mxu0 0
        %6331 = vmatprep.mubr.bf16.mxu0 0
        %6332 = vmatmul.mubr.bf16.gmra.mrb[0].mxu0 %v6294
        %v6333 = vpop.f32.mrb[0].mxu0
        %v6334 = vadd.f32 0.0, %v6333
        %v6335 = vpop.f32.mrb[0].mxu0
        %v6336 = vpop.f32.mrb[0].mxu0
        %v6337 = vadd.f32 0.0, %v6336
        %v6338 = vpop.f32.mrb[0].mxu0
        %6339 = vmatprep.mubr.bf16.mxu0 0
        %6340 = vmatmul.mubr.bf16.gmra.mrb[0].mxu0 %v6297
        %v6341 = vpop.f32.mrb[0].mxu0
        %v6342 = vadd.f32 0.0, %v6341
        %v6343 = vpop.f32.mrb[0].mxu0
        %v6344 = vpop.f32.mrb[0].mxu0
        %v6345 = vadd.f32 0.0, %v6344
        %v6346 = vpop.f32.mrb[0].mxu0
        %6347 = vdwg.mxu0
        %v6349 = vsel %vm1988, %v5383, 0
        %v6352 = vsel %vm1988, %v5384, 0
        %6354 = vmatprep.subr.bf16.mxu0 0
        %6355 = vmatpush1.bf16.msra.mxu0 %v1897
        %6356 = vmatprep.subr.bf16.mxu0 0
        %6357 = vmatpush1.bf16.msra.mxu0 %v1899
        %6358 = vmatprep.subr.bf16.mxu0 0
        %6359 = vmatpush1.bf16.msra.mxu0 0
        %6360 = vmatprep.subr.bf16.mxu0 0
        %6361 = vmatpush1.bf16.msra.mxu0 0
        %6362 = vmatprep.subr.bf16.mxu0 0
        %6363 = vmatpush1.bf16.msra.mxu0 0
        %6364 = vmatprep.subr.bf16.mxu0 0
        %6365 = vmatpush1.bf16.msra.mxu0 0
        %6366 = vmatprep.subr.bf16.mxu0 0
        %6367 = vmatpush1.bf16.msra.mxu0 0
        %6368 = vmatprep.subr.bf16.mxu0 0
        %6369 = vmatpush1.bf16.msra.mxu0 0
        %6370 = vmatprep.subr.bf16.mxu0 0
        %6371 = vmatpush1.bf16.msra.mxu0 0
        %6372 = vmatprep.subr.bf16.mxu0 0
        %6373 = vmatpush1.bf16.msra.mxu0 0
        %6374 = vmatprep.subr.bf16.mxu0 0
        %6375 = vmatpush1.bf16.msra.mxu0 0
        %6376 = vmatprep.subr.bf16.mxu0 0
        %6377 = vmatpush1.bf16.msra.mxu0 0
        %6378 = vmatprep.subr.bf16.mxu0 0
        %6379 = vmatpush1.bf16.msra.mxu0 0
        %6380 = vmatprep.subr.bf16.mxu0 0
        %6381 = vmatpush1.bf16.msra.mxu0 0
        %6382 = vmatprep.subr.bf16.mxu0 0
        %6383 = vmatpush1.bf16.msra.mxu0 0
        %6384 = vmatprep.subr.bf16.mxu0 0
        %6385 = vmatpush1.bf16.msra.mxu0 0
        %6386 = vmatprep.mubr.bf16.mxu0 0
        %6387 = vmatmul.mubr.bf16.gmra.mrb[0].mxu0 %v6349
        %v6388 = vpop.f32.mrb[0].mxu0
        %v6389 = vadd.f32 0.0, %v6388
        %v6390 = vpop.f32.mrb[0].mxu0
        %v6391 = vpop.f32.mrb[0].mxu0
        %v6392 = vadd.f32 0.0, %v6391
        %v6393 = vpop.f32.mrb[0].mxu0
        %6394 = vmatprep.mubr.bf16.mxu0 0
        %6395 = vmatmul.mubr.bf16.gmra.mrb[0].mxu0 %v6352
        %v6396 = vpop.f32.mrb[0].mxu0
        %v6397 = vadd.f32 0.0, %v6396
        %v6398 = vpop.f32.mrb[0].mxu0
        %v6399 = vpop.f32.mrb[0].mxu0
        %v6400 = vadd.f32 0.0, %v6399
        %v6401 = vpop.f32.mrb[0].mxu0
        %6402 = vdwg.mxu0
        %v6404 = vsel %vm1988, %v5385, 0
        %v6407 = vsel %vm1988, %v5386, 0
        %6409 = vmatprep.subr.bf16.mxu0 0
        %6410 = vmatpush1.bf16.msra.mxu0 %v1901
        %6411 = vmatprep.subr.bf16.mxu0 0
        %6412 = vmatpush1.bf16.msra.mxu0 %v1903
        %6413 = vmatprep.subr.bf16.mxu0 0
        %6414 = vmatpush1.bf16.msra.mxu0 0
        %6415 = vmatprep.subr.bf16.mxu0 0
        %6416 = vmatpush1.bf16.msra.mxu0 0
        %6417 = vmatprep.subr.bf16.mxu0 0
        %6418 = vmatpush1.bf16.msra.mxu0 0
        %6419 = vmatprep.subr.bf16.mxu0 0
        %6420 = vmatpush1.bf16.msra.mxu0 0
        %6421 = vmatprep.subr.bf16.mxu0 0
        %6422 = vmatpush1.bf16.msra.mxu0 0
        %6423 = vmatprep.subr.bf16.mxu0 0
        %6424 = vmatpush1.bf16.msra.mxu0 0
        %6425 = vmatprep.subr.bf16.mxu0 0
        %6426 = vmatpush1.bf16.msra.mxu0 0
        %6427 = vmatprep.subr.bf16.mxu0 0
        %6428 = vmatpush1.bf16.msra.mxu0 0
        %6429 = vmatprep.subr.bf16.mxu0 0
        %6430 = vmatpush1.bf16.msra.mxu0 0
        %6431 = vmatprep.subr.bf16.mxu0 0
        %6432 = vmatpush1.bf16.msra.mxu0 0
        %6433 = vmatprep.subr.bf16.mxu0 0
        %6434 = vmatpush1.bf16.msra.mxu0 0
        %6435 = vmatprep.subr.bf16.mxu0 0
        %6436 = vmatpush1.bf16.msra.mxu0 0
        %6437 = vmatprep.subr.bf16.mxu0 0
        %6438 = vmatpush1.bf16.msra.mxu0 0
        %6439 = vmatprep.subr.bf16.mxu0 0
        %6440 = vmatpush1.bf16.msra.mxu0 0
        %6441 = vmatprep.mubr.bf16.mxu0 0
        %6442 = vmatmul.mubr.bf16.gmra.mrb[0].mxu0 %v6404
        %v6443 = vpop.f32.mrb[0].mxu0
        %v6444 = vadd.f32 0.0, %v6443
        %v6445 = vpop.f32.mrb[0].mxu0
        %v6446 = vpop.f32.mrb[0].mxu0
        %v6447 = vadd.f32 0.0, %v6446
        %v6448 = vpop.f32.mrb[0].mxu0
        %6449 = vmatprep.mubr.bf16.mxu0 0
        %6450 = vmatmul.mubr.bf16.gmra.mrb[0].mxu0 %v6407
        %v6451 = vpop.f32.mrb[0].mxu0
        %v6452 = vadd.f32 0.0, %v6451
        %v6453 = vpop.f32.mrb[0].mxu0
        %v6454 = vpop.f32.mrb[0].mxu0
        %v6455 = vadd.f32 0.0, %v6454
        %v6456 = vpop.f32.mrb[0].mxu0
        %6457 = vdwg.mxu0
        %v6459 = vsel %vm1988, %v5387, 0
        %v6462 = vsel %vm1988, %v5388, 0
        %6464 = vmatprep.subr.bf16.mxu0 0
        %6465 = vmatpush1.bf16.msra.mxu0 %v1905
        %6466 = vmatprep.subr.bf16.mxu0 0
        %6467 = vmatpush1.bf16.msra.mxu0 %v1907
        %6468 = vmatprep.subr.bf16.mxu0 0
        %6469 = vmatpush1.bf16.msra.mxu0 0
        %6470 = vmatprep.subr.bf16.mxu0 0
        %6471 = vmatpush1.bf16.msra.mxu0 0
        %6472 = vmatprep.subr.bf16.mxu0 0
        %6473 = vmatpush1.bf16.msra.mxu0 0
        %6474 = vmatprep.subr.bf16.mxu0 0
        %6475 = vmatpush1.bf16.msra.mxu0 0
        %6476 = vmatprep.subr.bf16.mxu0 0
        %6477 = vmatpush1.bf16.msra.mxu0 0
        %6478 = vmatprep.subr.bf16.mxu0 0
        %6479 = vmatpush1.bf16.msra.mxu0 0
        %6480 = vmatprep.subr.bf16.mxu0 0
        %6481 = vmatpush1.bf16.msra.mxu0 0
        %6482 = vmatprep.subr.bf16.mxu0 0
        %6483 = vmatpush1.bf16.msra.mxu0 0
        %6484 = vmatprep.subr.bf16.mxu0 0
        %6485 = vmatpush1.bf16.msra.mxu0 0
        %6486 = vmatprep.subr.bf16.mxu0 0
        %6487 = vmatpush1.bf16.msra.mxu0 0
        %6488 = vmatprep.subr.bf16.mxu0 0
        %6489 = vmatpush1.bf16.msra.mxu0 0
        %6490 = vmatprep.subr.bf16.mxu0 0
        %6491 = vmatpush1.bf16.msra.mxu0 0
        %6492 = vmatprep.subr.bf16.mxu0 0
        %6493 = vmatpush1.bf16.msra.mxu0 0
        %6494 = vmatprep.subr.bf16.mxu0 0
        %6495 = vmatpush1.bf16.msra.mxu0 0
        %6496 = vmatprep.mubr.bf16.mxu0 0
        %6497 = vmatmul.mubr.bf16.gmra.mrb[0].mxu0 %v6459
        %v6498 = vpop.f32.mrb[0].mxu0
        %v6499 = vadd.f32 0.0, %v6498
        %v6500 = vpop.f32.mrb[0].mxu0
        %v6501 = vpop.f32.mrb[0].mxu0
        %v6502 = vadd.f32 0.0, %v6501
        %v6503 = vpop.f32.mrb[0].mxu0
        %6504 = vmatprep.mubr.bf16.mxu0 0
        %6505 = vmatmul.mubr.bf16.gmra.mrb[0].mxu0 %v6462
        %v6506 = vpop.f32.mrb[0].mxu0
        %v6507 = vadd.f32 0.0, %v6506
        %v6508 = vpop.f32.mrb[0].mxu0
        %v6509 = vpop.f32.mrb[0].mxu0
        %v6510 = vadd.f32 0.0, %v6509
        %v6511 = vpop.f32.mrb[0].mxu0
        %6512 = vdwg.mxu0
        %v6514 = vsel %vm1988, %v5389, 0
        %v6517 = vsel %vm1988, %v5390, 0
        %6519 = vmatprep.subr.bf16.mxu0 0
        %6520 = vmatpush1.bf16.msra.mxu0 %v1909
        %6521 = vmatprep.subr.bf16.mxu0 0
        %6522 = vmatpush1.bf16.msra.mxu0 %v1911
        %6523 = vmatprep.subr.bf16.mxu0 0
        %6524 = vmatpush1.bf16.msra.mxu0 0
        %6525 = vmatprep.subr.bf16.mxu0 0
        %6526 = vmatpush1.bf16.msra.mxu0 0
        %6527 = vmatprep.subr.bf16.mxu0 0
        %6528 = vmatpush1.bf16.msra.mxu0 0
        %6529 = vmatprep.subr.bf16.mxu0 0
        %6530 = vmatpush1.bf16.msra.mxu0 0
        %6531 = vmatprep.subr.bf16.mxu0 0
        %6532 = vmatpush1.bf16.msra.mxu0 0
        %6533 = vmatprep.subr.bf16.mxu0 0
        %6534 = vmatpush1.bf16.msra.mxu0 0
        %6535 = vmatprep.subr.bf16.mxu0 0
        %6536 = vmatpush1.bf16.msra.mxu0 0
        %6537 = vmatprep.subr.bf16.mxu0 0
        %6538 = vmatpush1.bf16.msra.mxu0 0
        %6539 = vmatprep.subr.bf16.mxu0 0
        %6540 = vmatpush1.bf16.msra.mxu0 0
        %6541 = vmatprep.subr.bf16.mxu0 0
        %6542 = vmatpush1.bf16.msra.mxu0 0
        %6543 = vmatprep.subr.bf16.mxu0 0
        %6544 = vmatpush1.bf16.msra.mxu0 0
        %6545 = vmatprep.subr.bf16.mxu0 0
        %6546 = vmatpush1.bf16.msra.mxu0 0
        %6547 = vmatprep.subr.bf16.mxu0 0
        %6548 = vmatpush1.bf16.msra.mxu0 0
        %6549 = vmatprep.subr.bf16.mxu0 0
        %6550 = vmatpush1.bf16.msra.mxu0 0
        %6551 = vmatprep.mubr.bf16.mxu0 0
        %6552 = vmatmul.mubr.bf16.gmra.mrb[0].mxu0 %v6514
        %v6553 = vpop.f32.mrb[0].mxu0
        %v6554 = vadd.f32 0.0, %v6553
        %v6555 = vpop.f32.mrb[0].mxu0
        %v6556 = vpop.f32.mrb[0].mxu0
        %v6557 = vadd.f32 0.0, %v6556
        %v6558 = vpop.f32.mrb[0].mxu0
        %6559 = vmatprep.mubr.bf16.mxu0 0
        %6560 = vmatmul.mubr.bf16.gmra.mrb[0].mxu0 %v6517
        %v6561 = vpop.f32.mrb[0].mxu0
        %v6562 = vadd.f32 0.0, %v6561
        %v6563 = vpop.f32.mrb[0].mxu0
        %v6564 = vpop.f32.mrb[0].mxu0
        %v6565 = vadd.f32 0.0, %v6564
        %v6566 = vpop.f32.mrb[0].mxu0
        %6567 = vdwg.mxu0
        %v6569 = vsel %vm1988, %v5391, 0
        %v6572 = vsel %vm1988, %v5392, 0
        %6574 = vmatprep.subr.bf16.mxu0 0
        %6575 = vmatpush1.bf16.msra.mxu0 %v1913
        %6576 = vmatprep.subr.bf16.mxu0 0
        %6577 = vmatpush1.bf16.msra.mxu0 %v1915
        %6578 = vmatprep.subr.bf16.mxu0 0
        %6579 = vmatpush1.bf16.msra.mxu0 0
        %6580 = vmatprep.subr.bf16.mxu0 0
        %6581 = vmatpush1.bf16.msra.mxu0 0
        %6582 = vmatprep.subr.bf16.mxu0 0
        %6583 = vmatpush1.bf16.msra.mxu0 0
        %6584 = vmatprep.subr.bf16.mxu0 0
        %6585 = vmatpush1.bf16.msra.mxu0 0
        %6586 = vmatprep.subr.bf16.mxu0 0
        %6587 = vmatpush1.bf16.msra.mxu0 0
        %6588 = vmatprep.subr.bf16.mxu0 0
        %6589 = vmatpush1.bf16.msra.mxu0 0
        %6590 = vmatprep.subr.bf16.mxu0 0
        %6591 = vmatpush1.bf16.msra.mxu0 0
        %6592 = vmatprep.subr.bf16.mxu0 0
        %6593 = vmatpush1.bf16.msra.mxu0 0
        %6594 = vmatprep.subr.bf16.mxu0 0
        %6595 = vmatpush1.bf16.msra.mxu0 0
        %6596 = vmatprep.subr.bf16.mxu0 0
        %6597 = vmatpush1.bf16.msra.mxu0 0
        %6598 = vmatprep.subr.bf16.mxu0 0
        %6599 = vmatpush1.bf16.msra.mxu0 0
        %6600 = vmatprep.subr.bf16.mxu0 0
        %6601 = vmatpush1.bf16.msra.mxu0 0
        %6602 = vmatprep.subr.bf16.mxu0 0
        %6603 = vmatpush1.bf16.msra.mxu0 0
        %6604 = vmatprep.subr.bf16.mxu0 0
        %6605 = vmatpush1.bf16.msra.mxu0 0
        %6606 = vmatprep.mubr.bf16.mxu0 0
        %6607 = vmatmul.mubr.bf16.gmra.mrb[0].mxu0 %v6569
        %v6608 = vpop.f32.mrb[0].mxu0
        %v6609 = vadd.f32 0.0, %v6608
        %v6610 = vpop.f32.mrb[0].mxu0
        %v6611 = vpop.f32.mrb[0].mxu0
        %v6612 = vadd.f32 0.0, %v6611
        %v6613 = vpop.f32.mrb[0].mxu0
        %6614 = vmatprep.mubr.bf16.mxu0 0
        %6615 = vmatmul.mubr.bf16.gmra.mrb[0].mxu0 %v6572
        %v6616 = vpop.f32.mrb[0].mxu0
        %v6617 = vadd.f32 0.0, %v6616
        %v6618 = vpop.f32.mrb[0].mxu0
        %v6619 = vpop.f32.mrb[0].mxu0
        %v6620 = vadd.f32 0.0, %v6619
        %v6621 = vpop.f32.mrb[0].mxu0
        %6622 = vdwg.mxu0
        %v6624 = vsel %vm1988, %v5393, 0
        %v6627 = vsel %vm1988, %v5394, 0
        %6629 = vmatprep.subr.bf16.mxu0 0
        %6630 = vmatpush1.bf16.msra.mxu0 %v1917
        %6631 = vmatprep.subr.bf16.mxu0 0
        %6632 = vmatpush1.bf16.msra.mxu0 %v1919
        %6633 = vmatprep.subr.bf16.mxu0 0
        %6634 = vmatpush1.bf16.msra.mxu0 0
        %6635 = vmatprep.subr.bf16.mxu0 0
        %6636 = vmatpush1.bf16.msra.mxu0 0
        %6637 = vmatprep.subr.bf16.mxu0 0
        %6638 = vmatpush1.bf16.msra.mxu0 0
        %6639 = vmatprep.subr.bf16.mxu0 0
        %6640 = vmatpush1.bf16.msra.mxu0 0
        %6641 = vmatprep.subr.bf16.mxu0 0
        %6642 = vmatpush1.bf16.msra.mxu0 0
        %6643 = vmatprep.subr.bf16.mxu0 0
        %6644 = vmatpush1.bf16.msra.mxu0 0
        %6645 = vmatprep.subr.bf16.mxu0 0
        %6646 = vmatpush1.bf16.msra.mxu0 0
        %6647 = vmatprep.subr.bf16.mxu0 0
        %6648 = vmatpush1.bf16.msra.mxu0 0
        %6649 = vmatprep.subr.bf16.mxu0 0
        %6650 = vmatpush1.bf16.msra.mxu0 0
        %6651 = vmatprep.subr.bf16.mxu0 0
        %6652 = vmatpush1.bf16.msra.mxu0 0
        %6653 = vmatprep.subr.bf16.mxu0 0
        %6654 = vmatpush1.bf16.msra.mxu0 0
        %6655 = vmatprep.subr.bf16.mxu0 0
        %6656 = vmatpush1.bf16.msra.mxu0 0
        %6657 = vmatprep.subr.bf16.mxu0 0
        %6658 = vmatpush1.bf16.msra.mxu0 0
        %6659 = vmatprep.subr.bf16.mxu0 0
        %6660 = vmatpush1.bf16.msra.mxu0 0
        %6661 = vmatprep.mubr.bf16.mxu0 0
        %6662 = vmatmul.mubr.bf16.gmra.mrb[0].mxu0 %v6624
        %v6663 = vpop.f32.mrb[0].mxu0
        %v6664 = vadd.f32 0.0, %v6663
        %v6665 = vpop.f32.mrb[0].mxu0
        %v6666 = vpop.f32.mrb[0].mxu0
        %v6667 = vadd.f32 0.0, %v6666
        %v6668 = vpop.f32.mrb[0].mxu0
        %6669 = vmatprep.mubr.bf16.mxu0 0
        %6670 = vmatmul.mubr.bf16.gmra.mrb[0].mxu0 %v6627
        %v6671 = vpop.f32.mrb[0].mxu0
        %v6672 = vadd.f32 0.0, %v6671
        %v6673 = vpop.f32.mrb[0].mxu0
        %v6674 = vpop.f32.mrb[0].mxu0
        %v6675 = vadd.f32 0.0, %v6674
        %v6676 = vpop.f32.mrb[0].mxu0
        %6677 = vdwg.mxu0
        %v6679 = vsel %vm1988, %v5395, 0
        %v6682 = vsel %vm1988, %v5396, 0
        %6684 = vmatprep.subr.bf16.mxu0 0
        %6685 = vmatpush1.bf16.msra.mxu0 %v1921
        %6686 = vmatprep.subr.bf16.mxu0 0
        %6687 = vmatpush1.bf16.msra.mxu0 %v1923
        %6688 = vmatprep.subr.bf16.mxu0 0
        %6689 = vmatpush1.bf16.msra.mxu0 0
        %6690 = vmatprep.subr.bf16.mxu0 0
        %6691 = vmatpush1.bf16.msra.mxu0 0
        %6692 = vmatprep.subr.bf16.mxu0 0
        %6693 = vmatpush1.bf16.msra.mxu0 0
        %6694 = vmatprep.subr.bf16.mxu0 0
        %6695 = vmatpush1.bf16.msra.mxu0 0
        %6696 = vmatprep.subr.bf16.mxu0 0
        %6697 = vmatpush1.bf16.msra.mxu0 0
        %6698 = vmatprep.subr.bf16.mxu0 0
        %6699 = vmatpush1.bf16.msra.mxu0 0
        %6700 = vmatprep.subr.bf16.mxu0 0
        %6701 = vmatpush1.bf16.msra.mxu0 0
        %6702 = vmatprep.subr.bf16.mxu0 0
        %6703 = vmatpush1.bf16.msra.mxu0 0
        %6704 = vmatprep.subr.bf16.mxu0 0
        %6705 = vmatpush1.bf16.msra.mxu0 0
        %6706 = vmatprep.subr.bf16.mxu0 0
        %6707 = vmatpush1.bf16.msra.mxu0 0
        %6708 = vmatprep.subr.bf16.mxu0 0
        %6709 = vmatpush1.bf16.msra.mxu0 0
        %6710 = vmatprep.subr.bf16.mxu0 0
        %6711 = vmatpush1.bf16.msra.mxu0 0
        %6712 = vmatprep.subr.bf16.mxu0 0
        %6713 = vmatpush1.bf16.msra.mxu0 0
        %6714 = vmatprep.subr.bf16.mxu0 0
        %6715 = vmatpush1.bf16.msra.mxu0 0
        %6716 = vmatprep.mubr.bf16.mxu0 0
        %6717 = vmatmul.mubr.bf16.gmra.mrb[0].mxu0 %v6679
        %v6718 = vpop.f32.mrb[0].mxu0
        %v6719 = vadd.f32 0.0, %v6718
        %v6720 = vpop.f32.mrb[0].mxu0
        %v6721 = vpop.f32.mrb[0].mxu0
        %v6722 = vadd.f32 0.0, %v6721
        %v6723 = vpop.f32.mrb[0].mxu0
        %6724 = vmatprep.mubr.bf16.mxu0 0
        %6725 = vmatmul.mubr.bf16.gmra.mrb[0].mxu0 %v6682
        %v6726 = vpop.f32.mrb[0].mxu0
        %v6727 = vadd.f32 0.0, %v6726
        %v6728 = vpop.f32.mrb[0].mxu0
        %v6729 = vpop.f32.mrb[0].mxu0
        %v6730 = vadd.f32 0.0, %v6729
        %v6731 = vpop.f32.mrb[0].mxu0
        %6732 = vdwg.mxu0
        %v6734 = vsel %vm1988, %v5397, 0
        %v6737 = vsel %vm1988, %v5398, 0
        %6739 = vmatprep.subr.bf16.mxu0 0
        %6740 = vmatpush1.bf16.msra.mxu0 %v1941
        %6741 = vmatprep.subr.bf16.mxu0 0
        %6742 = vmatpush1.bf16.msra.mxu0 %v1943
        %6743 = vmatprep.subr.bf16.mxu0 0
        %6744 = vmatpush1.bf16.msra.mxu0 0
        %6745 = vmatprep.subr.bf16.mxu0 0
        %6746 = vmatpush1.bf16.msra.mxu0 0
        %6747 = vmatprep.subr.bf16.mxu0 0
        %6748 = vmatpush1.bf16.msra.mxu0 0
        %6749 = vmatprep.subr.bf16.mxu0 0
        %6750 = vmatpush1.bf16.msra.mxu0 0
        %6751 = vmatprep.subr.bf16.mxu0 0
        %6752 = vmatpush1.bf16.msra.mxu0 0
        %6753 = vmatprep.subr.bf16.mxu0 0
        %6754 = vmatpush1.bf16.msra.mxu0 0
        %6755 = vmatprep.subr.bf16.mxu0 0
        %6756 = vmatpush1.bf16.msra.mxu0 0
        %6757 = vmatprep.subr.bf16.mxu0 0
        %6758 = vmatpush1.bf16.msra.mxu0 0
        %6759 = vmatprep.subr.bf16.mxu0 0
        %6760 = vmatpush1.bf16.msra.mxu0 0
        %6761 = vmatprep.subr.bf16.mxu0 0
        %6762 = vmatpush1.bf16.msra.mxu0 0
        %6763 = vmatprep.subr.bf16.mxu0 0
        %6764 = vmatpush1.bf16.msra.mxu0 0
        %6765 = vmatprep.subr.bf16.mxu0 0
        %6766 = vmatpush1.bf16.msra.mxu0 0
        %6767 = vmatprep.subr.bf16.mxu0 0
        %6768 = vmatpush1.bf16.msra.mxu0 0
        %6769 = vmatprep.subr.bf16.mxu0 0
        %6770 = vmatpush1.bf16.msra.mxu0 0
        %6771 = vmatprep.mubr.bf16.mxu0 0
        %6772 = vmatmul.mubr.bf16.gmra.mrb[0].mxu0 %v6734
        %v6773 = vpop.f32.mrb[0].mxu0
        %v6774 = vadd.f32 0.0, %v6773
        %v6775 = vpop.f32.mrb[0].mxu0
        %v6776 = vpop.f32.mrb[0].mxu0
        %v6777 = vadd.f32 0.0, %v6776
        %v6778 = vpop.f32.mrb[0].mxu0
        %6779 = vmatprep.mubr.bf16.mxu0 0
        %6780 = vmatmul.mubr.bf16.gmra.mrb[0].mxu0 %v6737
        %v6781 = vpop.f32.mrb[0].mxu0
        %v6782 = vadd.f32 0.0, %v6781
        %v6783 = vpop.f32.mrb[0].mxu0
        %v6784 = vpop.f32.mrb[0].mxu0
        %v6785 = vadd.f32 0.0, %v6784
        %v6786 = vpop.f32.mrb[0].mxu0
        %6787 = vdwg.mxu0
        %v6789 = vsel %vm1988, %v5399, 0
        %v6792 = vsel %vm1988, %v5400, 0
        %6794 = vmatprep.subr.bf16.mxu0 0
        %6795 = vmatpush1.bf16.msra.mxu0 %v1945
        %6796 = vmatprep.subr.bf16.mxu0 0
        %6797 = vmatpush1.bf16.msra.mxu0 %v1947
        %6798 = vmatprep.subr.bf16.mxu0 0
        %6799 = vmatpush1.bf16.msra.mxu0 0
        %6800 = vmatprep.subr.bf16.mxu0 0
        %6801 = vmatpush1.bf16.msra.mxu0 0
        %6802 = vmatprep.subr.bf16.mxu0 0
        %6803 = vmatpush1.bf16.msra.mxu0 0
        %6804 = vmatprep.subr.bf16.mxu0 0
        %6805 = vmatpush1.bf16.msra.mxu0 0
        %6806 = vmatprep.subr.bf16.mxu0 0
        %6807 = vmatpush1.bf16.msra.mxu0 0
        %6808 = vmatprep.subr.bf16.mxu0 0
        %6809 = vmatpush1.bf16.msra.mxu0 0
        %6810 = vmatprep.subr.bf16.mxu0 0
        %6811 = vmatpush1.bf16.msra.mxu0 0
        %6812 = vmatprep.subr.bf16.mxu0 0
        %6813 = vmatpush1.bf16.msra.mxu0 0
        %6814 = vmatprep.subr.bf16.mxu0 0
        %6815 = vmatpush1.bf16.msra.mxu0 0
        %6816 = vmatprep.subr.bf16.mxu0 0
        %6817 = vmatpush1.bf16.msra.mxu0 0
        %6818 = vmatprep.subr.bf16.mxu0 0
        %6819 = vmatpush1.bf16.msra.mxu0 0
        %6820 = vmatprep.subr.bf16.mxu0 0
        %6821 = vmatpush1.bf16.msra.mxu0 0
        %6822 = vmatprep.subr.bf16.mxu0 0
        %6823 = vmatpush1.bf16.msra.mxu0 0
        %6824 = vmatprep.subr.bf16.mxu0 0
        %6825 = vmatpush1.bf16.msra.mxu0 0
        %6826 = vmatprep.mubr.bf16.mxu0 0
        %6827 = vmatmul.mubr.bf16.gmra.mrb[0].mxu0 %v6789
        %v6828 = vpop.f32.mrb[0].mxu0
        %v6829 = vadd.f32 0.0, %v6828
        %v6830 = vpop.f32.mrb[0].mxu0
        %v6831 = vpop.f32.mrb[0].mxu0
        %v6832 = vadd.f32 0.0, %v6831
        %v6833 = vpop.f32.mrb[0].mxu0
        %6834 = vmatprep.mubr.bf16.mxu0 0
        %6835 = vmatmul.mubr.bf16.gmra.mrb[0].mxu0 %v6792
        %v6836 = vpop.f32.mrb[0].mxu0
        %v6837 = vadd.f32 0.0, %v6836
        %v6838 = vpop.f32.mrb[0].mxu0
        %v6839 = vpop.f32.mrb[0].mxu0
        %v6840 = vadd.f32 0.0, %v6839
        %v6841 = vpop.f32.mrb[0].mxu0
        %6842 = vdwg.mxu0
        %v6844 = vsel %vm1988, %v5401, 0
        %v6847 = vsel %vm1988, %v5402, 0
        %6849 = vmatprep.subr.bf16.mxu0 0
        %6850 = vmatpush1.bf16.msra.mxu0 %v1949
        %6851 = vmatprep.subr.bf16.mxu0 0
        %6852 = vmatpush1.bf16.msra.mxu0 %v1951
        %6853 = vmatprep.subr.bf16.mxu0 0
        %6854 = vmatpush1.bf16.msra.mxu0 0
        %6855 = vmatprep.subr.bf16.mxu0 0
        %6856 = vmatpush1.bf16.msra.mxu0 0
        %6857 = vmatprep.subr.bf16.mxu0 0
        %6858 = vmatpush1.bf16.msra.mxu0 0
        %6859 = vmatprep.subr.bf16.mxu0 0
        %6860 = vmatpush1.bf16.msra.mxu0 0
        %6861 = vmatprep.subr.bf16.mxu0 0
        %6862 = vmatpush1.bf16.msra.mxu0 0
        %6863 = vmatprep.subr.bf16.mxu0 0
        %6864 = vmatpush1.bf16.msra.mxu0 0
        %6865 = vmatprep.subr.bf16.mxu0 0
        %6866 = vmatpush1.bf16.msra.mxu0 0
        %6867 = vmatprep.subr.bf16.mxu0 0
        %6868 = vmatpush1.bf16.msra.mxu0 0
        %6869 = vmatprep.subr.bf16.mxu0 0
        %6870 = vmatpush1.bf16.msra.mxu0 0
        %6871 = vmatprep.subr.bf16.mxu0 0
        %6872 = vmatpush1.bf16.msra.mxu0 0
        %6873 = vmatprep.subr.bf16.mxu0 0
        %6874 = vmatpush1.bf16.msra.mxu0 0
        %6875 = vmatprep.subr.bf16.mxu0 0
        %6876 = vmatpush1.bf16.msra.mxu0 0
        %6877 = vmatprep.subr.bf16.mxu0 0
        %6878 = vmatpush1.bf16.msra.mxu0 0
        %6879 = vmatprep.subr.bf16.mxu0 0
        %6880 = vmatpush1.bf16.msra.mxu0 0
        %6881 = vmatprep.mubr.bf16.mxu0 0
        %6882 = vmatmul.mubr.bf16.gmra.mrb[0].mxu0 %v6844
        %v6883 = vpop.f32.mrb[0].mxu0
        %v6884 = vadd.f32 0.0, %v6883
        %v6885 = vpop.f32.mrb[0].mxu0
        %v6886 = vpop.f32.mrb[0].mxu0
        %v6887 = vadd.f32 0.0, %v6886
        %v6888 = vpop.f32.mrb[0].mxu0
        %6889 = vmatprep.mubr.bf16.mxu0 0
        %6890 = vmatmul.mubr.bf16.gmra.mrb[0].mxu0 %v6847
        %v6891 = vpop.f32.mrb[0].mxu0
        %v6892 = vadd.f32 0.0, %v6891
        %v6893 = vpop.f32.mrb[0].mxu0
        %v6894 = vpop.f32.mrb[0].mxu0
        %v6895 = vadd.f32 0.0, %v6894
        %v6896 = vpop.f32.mrb[0].mxu0
        %6897 = vdwg.mxu0
        %v6899 = vsel %vm1988, %v5403, 0
        %v6902 = vsel %vm1988, %v5404, 0
        %6904 = vmatprep.subr.bf16.mxu0 0
        %6905 = vmatpush1.bf16.msra.mxu0 %v1953
        %6906 = vmatprep.subr.bf16.mxu0 0
        %6907 = vmatpush1.bf16.msra.mxu0 %v1955
        %6908 = vmatprep.subr.bf16.mxu0 0
        %6909 = vmatpush1.bf16.msra.mxu0 0
        %6910 = vmatprep.subr.bf16.mxu0 0
        %6911 = vmatpush1.bf16.msra.mxu0 0
        %6912 = vmatprep.subr.bf16.mxu0 0
        %6913 = vmatpush1.bf16.msra.mxu0 0
        %6914 = vmatprep.subr.bf16.mxu0 0
        %6915 = vmatpush1.bf16.msra.mxu0 0
        %6916 = vmatprep.subr.bf16.mxu0 0
        %6917 = vmatpush1.bf16.msra.mxu0 0
        %6918 = vmatprep.subr.bf16.mxu0 0
        %6919 = vmatpush1.bf16.msra.mxu0 0
        %6920 = vmatprep.subr.bf16.mxu0 0
        %6921 = vmatpush1.bf16.msra.mxu0 0
        %6922 = vmatprep.subr.bf16.mxu0 0
        %6923 = vmatpush1.bf16.msra.mxu0 0
        %6924 = vmatprep.subr.bf16.mxu0 0
        %6925 = vmatpush1.bf16.msra.mxu0 0
        %6926 = vmatprep.subr.bf16.mxu0 0
        %6927 = vmatpush1.bf16.msra.mxu0 0
        %6928 = vmatprep.subr.bf16.mxu0 0
        %6929 = vmatpush1.bf16.msra.mxu0 0
        %6930 = vmatprep.subr.bf16.mxu0 0
        %6931 = vmatpush1.bf16.msra.mxu0 0
        %6932 = vmatprep.subr.bf16.mxu0 0
        %6933 = vmatpush1.bf16.msra.mxu0 0
        %6934 = vmatprep.subr.bf16.mxu0 0
        %6935 = vmatpush1.bf16.msra.mxu0 0
        %6936 = vmatprep.mubr.bf16.mxu0 0
        %6937 = vmatmul.mubr.bf16.gmra.mrb[0].mxu0 %v6899
        %v6938 = vpop.f32.mrb[0].mxu0
        %v6939 = vadd.f32 0.0, %v6938
        %v6940 = vpop.f32.mrb[0].mxu0
        %v6941 = vpop.f32.mrb[0].mxu0
        %v6942 = vadd.f32 0.0, %v6941
        %v6943 = vpop.f32.mrb[0].mxu0
        %6944 = vmatprep.mubr.bf16.mxu0 0
        %6945 = vmatmul.mubr.bf16.gmra.mrb[0].mxu0 %v6902
        %v6946 = vpop.f32.mrb[0].mxu0
        %v6947 = vadd.f32 0.0, %v6946
        %v6948 = vpop.f32.mrb[0].mxu0
        %v6949 = vpop.f32.mrb[0].mxu0
        %v6950 = vadd.f32 0.0, %v6949
        %v6951 = vpop.f32.mrb[0].mxu0
        %6952 = vdwg.mxu0
        %v6954 = vsel %vm1988, %v5405, 0
        %v6957 = vsel %vm1988, %v5406, 0
        %6959 = vmatprep.subr.bf16.mxu0 0
        %6960 = vmatpush1.bf16.msra.mxu0 %v1957
        %6961 = vmatprep.subr.bf16.mxu0 0
        %6962 = vmatpush1.bf16.msra.mxu0 %v1959
        %6963 = vmatprep.subr.bf16.mxu0 0
        %6964 = vmatpush1.bf16.msra.mxu0 0
        %6965 = vmatprep.subr.bf16.mxu0 0
        %6966 = vmatpush1.bf16.msra.mxu0 0
        %6967 = vmatprep.subr.bf16.mxu0 0
        %6968 = vmatpush1.bf16.msra.mxu0 0
        %6969 = vmatprep.subr.bf16.mxu0 0
        %6970 = vmatpush1.bf16.msra.mxu0 0
        %6971 = vmatprep.subr.bf16.mxu0 0
        %6972 = vmatpush1.bf16.msra.mxu0 0
        %6973 = vmatprep.subr.bf16.mxu0 0
        %6974 = vmatpush1.bf16.msra.mxu0 0
        %6975 = vmatprep.subr.bf16.mxu0 0
        %6976 = vmatpush1.bf16.msra.mxu0 0
        %6977 = vmatprep.subr.bf16.mxu0 0
        %6978 = vmatpush1.bf16.msra.mxu0 0
        %6979 = vmatprep.subr.bf16.mxu0 0
        %6980 = vmatpush1.bf16.msra.mxu0 0
        %6981 = vmatprep.subr.bf16.mxu0 0
        %6982 = vmatpush1.bf16.msra.mxu0 0
        %6983 = vmatprep.subr.bf16.mxu0 0
        %6984 = vmatpush1.bf16.msra.mxu0 0
        %6985 = vmatprep.subr.bf16.mxu0 0
        %6986 = vmatpush1.bf16.msra.mxu0 0
        %6987 = vmatprep.subr.bf16.mxu0 0
        %6988 = vmatpush1.bf16.msra.mxu0 0
        %6989 = vmatprep.subr.bf16.mxu0 0
        %6990 = vmatpush1.bf16.msra.mxu0 0
        %6991 = vmatprep.mubr.bf16.mxu0 0
        %6992 = vmatmul.mubr.bf16.gmra.mrb[0].mxu0 %v6954
        %v6993 = vpop.f32.mrb[0].mxu0
        %v6994 = vadd.f32 0.0, %v6993
        %v6995 = vpop.f32.mrb[0].mxu0
        %v6996 = vpop.f32.mrb[0].mxu0
        %v6997 = vadd.f32 0.0, %v6996
        %v6998 = vpop.f32.mrb[0].mxu0
        %6999 = vmatprep.mubr.bf16.mxu0 0
        %7000 = vmatmul.mubr.bf16.gmra.mrb[0].mxu0 %v6957
        %v7001 = vpop.f32.mrb[0].mxu0
        %v7002 = vadd.f32 0.0, %v7001
        %v7003 = vpop.f32.mrb[0].mxu0
        %v7004 = vpop.f32.mrb[0].mxu0
        %v7005 = vadd.f32 0.0, %v7004
        %v7006 = vpop.f32.mrb[0].mxu0
        %7007 = vdwg.mxu0
        %v7009 = vsel %vm1988, %v5407, 0
        %v7012 = vsel %vm1988, %v5408, 0
        %7014 = vmatprep.subr.bf16.mxu0 0
        %7015 = vmatpush1.bf16.msra.mxu0 %v1961
        %7016 = vmatprep.subr.bf16.mxu0 0
        %7017 = vmatpush1.bf16.msra.mxu0 %v1963
        %7018 = vmatprep.subr.bf16.mxu0 0
        %7019 = vmatpush1.bf16.msra.mxu0 0
        %7020 = vmatprep.subr.bf16.mxu0 0
        %7021 = vmatpush1.bf16.msra.mxu0 0
        %7022 = vmatprep.subr.bf16.mxu0 0
        %7023 = vmatpush1.bf16.msra.mxu0 0
        %7024 = vmatprep.subr.bf16.mxu0 0
        %7025 = vmatpush1.bf16.msra.mxu0 0
        %7026 = vmatprep.subr.bf16.mxu0 0
        %7027 = vmatpush1.bf16.msra.mxu0 0
        %7028 = vmatprep.subr.bf16.mxu0 0
        %7029 = vmatpush1.bf16.msra.mxu0 0
        %7030 = vmatprep.subr.bf16.mxu0 0
        %7031 = vmatpush1.bf16.msra.mxu0 0
        %7032 = vmatprep.subr.bf16.mxu0 0
        %7033 = vmatpush1.bf16.msra.mxu0 0
        %7034 = vmatprep.subr.bf16.mxu0 0
        %7035 = vmatpush1.bf16.msra.mxu0 0
        %7036 = vmatprep.subr.bf16.mxu0 0
        %7037 = vmatpush1.bf16.msra.mxu0 0
        %7038 = vmatprep.subr.bf16.mxu0 0
        %7039 = vmatpush1.bf16.msra.mxu0 0
        %7040 = vmatprep.subr.bf16.mxu0 0
        %7041 = vmatpush1.bf16.msra.mxu0 0
        %7042 = vmatprep.subr.bf16.mxu0 0
        %7043 = vmatpush1.bf16.msra.mxu0 0
        %7044 = vmatprep.subr.bf16.mxu0 0
        %7045 = vmatpush1.bf16.msra.mxu0 0
        %7046 = vmatprep.mubr.bf16.mxu0 0
        %7047 = vmatmul.mubr.bf16.gmra.mrb[0].mxu0 %v7009
        %v7048 = vpop.f32.mrb[0].mxu0
        %v7049 = vadd.f32 0.0, %v7048
        %v7050 = vpop.f32.mrb[0].mxu0
        %v7051 = vpop.f32.mrb[0].mxu0
        %v7052 = vadd.f32 0.0, %v7051
        %v7053 = vpop.f32.mrb[0].mxu0
        %7054 = vmatprep.mubr.bf16.mxu0 0
        %7055 = vmatmul.mubr.bf16.gmra.mrb[0].mxu0 %v7012
        %v7056 = vpop.f32.mrb[0].mxu0
        %v7057 = vadd.f32 0.0, %v7056
        %v7058 = vpop.f32.mrb[0].mxu0
        %v7059 = vpop.f32.mrb[0].mxu0
        %v7060 = vadd.f32 0.0, %v7059
        %v7061 = vpop.f32.mrb[0].mxu0
        %7062 = vdwg.mxu0
        %v7064 = vsel %vm1988, %v5409, 0
        %v7067 = vsel %vm1988, %v5410, 0
        %7069 = vmatprep.subr.bf16.mxu0 0
        %7070 = vmatpush1.bf16.msra.mxu0 %v1965
        %7071 = vmatprep.subr.bf16.mxu0 0
        %7072 = vmatpush1.bf16.msra.mxu0 %v1967
        %7073 = vmatprep.subr.bf16.mxu0 0
        %7074 = vmatpush1.bf16.msra.mxu0 0
        %7075 = vmatprep.subr.bf16.mxu0 0
        %7076 = vmatpush1.bf16.msra.mxu0 0
        %7077 = vmatprep.subr.bf16.mxu0 0
        %7078 = vmatpush1.bf16.msra.mxu0 0
        %7079 = vmatprep.subr.bf16.mxu0 0
        %7080 = vmatpush1.bf16.msra.mxu0 0
        %7081 = vmatprep.subr.bf16.mxu0 0
        %7082 = vmatpush1.bf16.msra.mxu0 0
        %7083 = vmatprep.subr.bf16.mxu0 0
        %7084 = vmatpush1.bf16.msra.mxu0 0
        %7085 = vmatprep.subr.bf16.mxu0 0
        %7086 = vmatpush1.bf16.msra.mxu0 0
        %7087 = vmatprep.subr.bf16.mxu0 0
        %7088 = vmatpush1.bf16.msra.mxu0 0
        %7089 = vmatprep.subr.bf16.mxu0 0
        %7090 = vmatpush1.bf16.msra.mxu0 0
        %7091 = vmatprep.subr.bf16.mxu0 0
        %7092 = vmatpush1.bf16.msra.mxu0 0
        %7093 = vmatprep.subr.bf16.mxu0 0
        %7094 = vmatpush1.bf16.msra.mxu0 0
        %7095 = vmatprep.subr.bf16.mxu0 0
        %7096 = vmatpush1.bf16.msra.mxu0 0
        %7097 = vmatprep.subr.bf16.mxu0 0
        %7098 = vmatpush1.bf16.msra.mxu0 0
        %7099 = vmatprep.subr.bf16.mxu0 0
        %7100 = vmatpush1.bf16.msra.mxu0 0
        %7101 = vmatprep.mubr.bf16.mxu0 0
        %7102 = vmatmul.mubr.bf16.gmra.mrb[0].mxu0 %v7064
        %v7103 = vpop.f32.mrb[0].mxu0
        %v7104 = vadd.f32 0.0, %v7103
        %v7105 = vpop.f32.mrb[0].mxu0
        %v7106 = vpop.f32.mrb[0].mxu0
        %v7107 = vadd.f32 0.0, %v7106
        %v7108 = vpop.f32.mrb[0].mxu0
        %7109 = vmatprep.mubr.bf16.mxu0 0
        %7110 = vmatmul.mubr.bf16.gmra.mrb[0].mxu0 %v7067
        %v7111 = vpop.f32.mrb[0].mxu0
        %v7112 = vadd.f32 0.0, %v7111
        %v7113 = vpop.f32.mrb[0].mxu0
        %v7114 = vpop.f32.mrb[0].mxu0
        %v7115 = vadd.f32 0.0, %v7114
        %v7116 = vpop.f32.mrb[0].mxu0
        %7117 = vdwg.mxu0
        %v7119 = vsel %vm1988, %v5411, 0
        %v7122 = vsel %vm1988, %v5412, 0
        %7124 = vmatprep.subr.bf16.mxu0 0
        %7125 = vmatpush1.bf16.msra.mxu0 %v1969
        %7126 = vmatprep.subr.bf16.mxu0 0
        %7127 = vmatpush1.bf16.msra.mxu0 %v1971
        %7128 = vmatprep.subr.bf16.mxu0 0
        %7129 = vmatpush1.bf16.msra.mxu0 0
        %7130 = vmatprep.subr.bf16.mxu0 0
        %7131 = vmatpush1.bf16.msra.mxu0 0
        %7132 = vmatprep.subr.bf16.mxu0 0
        %7133 = vmatpush1.bf16.msra.mxu0 0
        %7134 = vmatprep.subr.bf16.mxu0 0
        %7135 = vmatpush1.bf16.msra.mxu0 0
        %7136 = vmatprep.subr.bf16.mxu0 0
        %7137 = vmatpush1.bf16.msra.mxu0 0
        %7138 = vmatprep.subr.bf16.mxu0 0
        %7139 = vmatpush1.bf16.msra.mxu0 0
        %7140 = vmatprep.subr.bf16.mxu0 0
        %7141 = vmatpush1.bf16.msra.mxu0 0
        %7142 = vmatprep.subr.bf16.mxu0 0
        %7143 = vmatpush1.bf16.msra.mxu0 0
        %7144 = vmatprep.subr.bf16.mxu0 0
        %7145 = vmatpush1.bf16.msra.mxu0 0
        %7146 = vmatprep.subr.bf16.mxu0 0
        %7147 = vmatpush1.bf16.msra.mxu0 0
        %7148 = vmatprep.subr.bf16.mxu0 0
        %7149 = vmatpush1.bf16.msra.mxu0 0
        %7150 = vmatprep.subr.bf16.mxu0 0
        %7151 = vmatpush1.bf16.msra.mxu0 0
        %7152 = vmatprep.subr.bf16.mxu0 0
        %7153 = vmatpush1.bf16.msra.mxu0 0
        %7154 = vmatprep.subr.bf16.mxu0 0
        %7155 = vmatpush1.bf16.msra.mxu0 0
        %7156 = vmatprep.mubr.bf16.mxu0 0
        %7157 = vmatmul.mubr.bf16.gmra.mrb[0].mxu0 %v7119
        %v7158 = vpop.f32.mrb[0].mxu0
        %v7159 = vadd.f32 0.0, %v7158
        %v7160 = vpop.f32.mrb[0].mxu0
        %v7161 = vpop.f32.mrb[0].mxu0
        %v7162 = vadd.f32 0.0, %v7161
        %v7163 = vpop.f32.mrb[0].mxu0
        %7164 = vmatprep.mubr.bf16.mxu0 0
        %7165 = vmatmul.mubr.bf16.gmra.mrb[0].mxu0 %v7122
        %v7166 = vpop.f32.mrb[0].mxu0
        %v7167 = vadd.f32 0.0, %v7166
        %v7168 = vpop.f32.mrb[0].mxu0
        %v7169 = vpop.f32.mrb[0].mxu0
        %v7170 = vadd.f32 0.0, %v7169
        %v7171 = vpop.f32.mrb[0].mxu0
        %7172 = vdwg.mxu0
        %7205 = vrot.lane.b32.xlu0 %v5894, 32
        %v7206 = vpop.permute.xlu0 %7205
        %7207 = vrot.lane.b32.xlu0 %v5897, 32
        %v7208 = vpop.permute.xlu0 %7207
        %7209 = vrot.lane.b32.xlu0 %v5902, 32
        %v7210 = vpop.permute.xlu0 %7209
        %7211 = vrot.lane.b32.xlu0 %v5905, 32
        %v7212 = vpop.permute.xlu0 %7211
        %7213 = vrot.lane.b32.xlu0 %v5949, 32
        %v7214 = vpop.permute.xlu0 %7213
        %7215 = vrot.lane.b32.xlu0 %v5952, 32
        %v7216 = vpop.permute.xlu0 %7215
        %7217 = vrot.lane.b32.xlu0 %v5957, 32
        %v7218 = vpop.permute.xlu0 %7217
        %7219 = vrot.lane.b32.xlu0 %v5960, 32
        %v7220 = vpop.permute.xlu0 %7219
        %7221 = vrot.lane.b32.xlu0 %v6004, 32
        %v7222 = vpop.permute.xlu0 %7221
        %7223 = vrot.lane.b32.xlu0 %v6007, 32
        %v7224 = vpop.permute.xlu0 %7223
        %7225 = vrot.lane.b32.xlu0 %v6012, 32
        %v7226 = vpop.permute.xlu0 %7225
        %7227 = vrot.lane.b32.xlu0 %v6015, 32
        %v7228 = vpop.permute.xlu0 %7227
        %7229 = vrot.lane.b32.xlu0 %v6059, 32
        %v7230 = vpop.permute.xlu0 %7229
        %7231 = vrot.lane.b32.xlu0 %v6062, 32
        %v7232 = vpop.permute.xlu0 %7231
        %7233 = vrot.lane.b32.xlu0 %v6067, 32
        %v7234 = vpop.permute.xlu0 %7233
        %7235 = vrot.lane.b32.xlu0 %v6070, 32
        %v7236 = vpop.permute.xlu0 %7235
        %7237 = vrot.lane.b32.xlu0 %v6114, 32
        %v7238 = vpop.permute.xlu0 %7237
        %7239 = vrot.lane.b32.xlu0 %v6117, 32
        %v7240 = vpop.permute.xlu0 %7239
        %7241 = vrot.lane.b32.xlu0 %v6122, 32
        %v7242 = vpop.permute.xlu0 %7241
        %7243 = vrot.lane.b32.xlu0 %v6125, 32
        %v7244 = vpop.permute.xlu0 %7243
        %7245 = vrot.lane.b32.xlu0 %v6169, 32
        %v7246 = vpop.permute.xlu0 %7245
        %7247 = vrot.lane.b32.xlu0 %v6172, 32
        %v7248 = vpop.permute.xlu0 %7247
        %7249 = vrot.lane.b32.xlu0 %v6177, 32
        %v7250 = vpop.permute.xlu0 %7249
        %7251 = vrot.lane.b32.xlu0 %v6180, 32
        %v7252 = vpop.permute.xlu0 %7251
        %7253 = vrot.lane.b32.xlu0 %v6224, 32
        %v7254 = vpop.permute.xlu0 %7253
        %7255 = vrot.lane.b32.xlu0 %v6227, 32
        %v7256 = vpop.permute.xlu0 %7255
        %7257 = vrot.lane.b32.xlu0 %v6232, 32
        %v7258 = vpop.permute.xlu0 %7257
        %7259 = vrot.lane.b32.xlu0 %v6235, 32
        %v7260 = vpop.permute.xlu0 %7259
        %7261 = vrot.lane.b32.xlu0 %v6279, 32
        %v7262 = vpop.permute.xlu0 %7261
        %7263 = vrot.lane.b32.xlu0 %v6282, 32
        %v7264 = vpop.permute.xlu0 %7263
        %7265 = vrot.lane.b32.xlu0 %v6287, 32
        %v7266 = vpop.permute.xlu0 %7265
        %7267 = vrot.lane.b32.xlu0 %v6290, 32
        %v7268 = vpop.permute.xlu0 %7267
        %7333 = vrot.lane.b32.xlu0 %v6334, 64
        %v7334 = vpop.permute.xlu0 %7333
        %7335 = vrot.lane.b32.xlu0 %v6337, 64
        %v7336 = vpop.permute.xlu0 %7335
        %7337 = vrot.lane.b32.xlu0 %v6342, 64
        %v7338 = vpop.permute.xlu0 %7337
        %7339 = vrot.lane.b32.xlu0 %v6345, 64
        %v7340 = vpop.permute.xlu0 %7339
        %7341 = vrot.lane.b32.xlu0 %v6389, 64
        %v7342 = vpop.permute.xlu0 %7341
        %7343 = vrot.lane.b32.xlu0 %v6392, 64
        %v7344 = vpop.permute.xlu0 %7343
        %7345 = vrot.lane.b32.xlu0 %v6397, 64
        %v7346 = vpop.permute.xlu0 %7345
        %7347 = vrot.lane.b32.xlu0 %v6400, 64
        %v7348 = vpop.permute.xlu0 %7347
        %7349 = vrot.lane.b32.xlu0 %v6444, 64
        %v7350 = vpop.permute.xlu0 %7349
        %7351 = vrot.lane.b32.xlu0 %v6447, 64
        %v7352 = vpop.permute.xlu0 %7351
        %7353 = vrot.lane.b32.xlu0 %v6452, 64
        %v7354 = vpop.permute.xlu0 %7353
        %7355 = vrot.lane.b32.xlu0 %v6455, 64
        %v7356 = vpop.permute.xlu0 %7355
        %7357 = vrot.lane.b32.xlu0 %v6499, 64
        %v7358 = vpop.permute.xlu0 %7357
        %7359 = vrot.lane.b32.xlu0 %v6502, 64
        %v7360 = vpop.permute.xlu0 %7359
        %7361 = vrot.lane.b32.xlu0 %v6507, 64
        %v7362 = vpop.permute.xlu0 %7361
        %7363 = vrot.lane.b32.xlu0 %v6510, 64
        %v7364 = vpop.permute.xlu0 %7363
        %7365 = vrot.lane.b32.xlu0 %v6554, 64
        %v7366 = vpop.permute.xlu0 %7365
        %7367 = vrot.lane.b32.xlu0 %v6557, 64
        %v7368 = vpop.permute.xlu0 %7367
        %7369 = vrot.lane.b32.xlu0 %v6562, 64
        %v7370 = vpop.permute.xlu0 %7369
        %7371 = vrot.lane.b32.xlu0 %v6565, 64
        %v7372 = vpop.permute.xlu0 %7371
        %7373 = vrot.lane.b32.xlu0 %v6609, 64
        %v7374 = vpop.permute.xlu0 %7373
        %7375 = vrot.lane.b32.xlu0 %v6612, 64
        %v7376 = vpop.permute.xlu0 %7375
        %7377 = vrot.lane.b32.xlu0 %v6617, 64
        %v7378 = vpop.permute.xlu0 %7377
        %7379 = vrot.lane.b32.xlu0 %v6620, 64
        %v7380 = vpop.permute.xlu0 %7379
        %7381 = vrot.lane.b32.xlu0 %v6664, 64
        %v7382 = vpop.permute.xlu0 %7381
        %7383 = vrot.lane.b32.xlu0 %v6667, 64
        %v7384 = vpop.permute.xlu0 %7383
        %7385 = vrot.lane.b32.xlu0 %v6672, 64
        %v7386 = vpop.permute.xlu0 %7385
        %7387 = vrot.lane.b32.xlu0 %v6675, 64
        %v7388 = vpop.permute.xlu0 %7387
        %7389 = vrot.lane.b32.xlu0 %v6719, 64
        %v7390 = vpop.permute.xlu0 %7389
        %7391 = vrot.lane.b32.xlu0 %v6722, 64
        %v7392 = vpop.permute.xlu0 %7391
        %7393 = vrot.lane.b32.xlu0 %v6727, 64
        %v7394 = vpop.permute.xlu0 %7393
        %7395 = vrot.lane.b32.xlu0 %v6730, 64
        %v7396 = vpop.permute.xlu0 %7395
        %7461 = vrot.lane.b32.xlu0 %v6774, 96
        %v7462 = vpop.permute.xlu0 %7461
        %7463 = vrot.lane.b32.xlu0 %v6777, 96
        %v7464 = vpop.permute.xlu0 %7463
        %7465 = vrot.lane.b32.xlu0 %v6782, 96
        %v7466 = vpop.permute.xlu0 %7465
        %7467 = vrot.lane.b32.xlu0 %v6785, 96
        %v7468 = vpop.permute.xlu0 %7467
        %7469 = vrot.lane.b32.xlu0 %v6829, 96
        %v7470 = vpop.permute.xlu0 %7469
        %7471 = vrot.lane.b32.xlu0 %v6832, 96
        %v7472 = vpop.permute.xlu0 %7471
        %7473 = vrot.lane.b32.xlu0 %v6837, 96
        %v7474 = vpop.permute.xlu0 %7473
        %7475 = vrot.lane.b32.xlu0 %v6840, 96
        %v7476 = vpop.permute.xlu0 %7475
        %7477 = vrot.lane.b32.xlu0 %v6884, 96
        %v7478 = vpop.permute.xlu0 %7477
        %7479 = vrot.lane.b32.xlu0 %v6887, 96
        %v7480 = vpop.permute.xlu0 %7479
        %7481 = vrot.lane.b32.xlu0 %v6892, 96
        %v7482 = vpop.permute.xlu0 %7481
        %7483 = vrot.lane.b32.xlu0 %v6895, 96
        %v7484 = vpop.permute.xlu0 %7483
        %7485 = vrot.lane.b32.xlu0 %v6939, 96
        %v7486 = vpop.permute.xlu0 %7485
        %7487 = vrot.lane.b32.xlu0 %v6942, 96
        %v7488 = vpop.permute.xlu0 %7487
        %7489 = vrot.lane.b32.xlu0 %v6947, 96
        %v7490 = vpop.permute.xlu0 %7489
        %7491 = vrot.lane.b32.xlu0 %v6950, 96
        %v7492 = vpop.permute.xlu0 %7491
        %7493 = vrot.lane.b32.xlu0 %v6994, 96
        %v7494 = vpop.permute.xlu0 %7493
        %7495 = vrot.lane.b32.xlu0 %v6997, 96
        %v7496 = vpop.permute.xlu0 %7495
        %7497 = vrot.lane.b32.xlu0 %v7002, 96
        %v7498 = vpop.permute.xlu0 %7497
        %7499 = vrot.lane.b32.xlu0 %v7005, 96
        %v7500 = vpop.permute.xlu0 %7499
        %7501 = vrot.lane.b32.xlu0 %v7049, 96
        %v7502 = vpop.permute.xlu0 %7501
        %7503 = vrot.lane.b32.xlu0 %v7052, 96
        %v7504 = vpop.permute.xlu0 %7503
        %7505 = vrot.lane.b32.xlu0 %v7057, 96
        %v7506 = vpop.permute.xlu0 %7505
        %7507 = vrot.lane.b32.xlu0 %v7060, 96
        %v7508 = vpop.permute.xlu0 %7507
        %7509 = vrot.lane.b32.xlu0 %v7104, 96
        %v7510 = vpop.permute.xlu0 %7509
        %7511 = vrot.lane.b32.xlu0 %v7107, 96
        %v7512 = vpop.permute.xlu0 %7511
        %7513 = vrot.lane.b32.xlu0 %v7112, 96
        %v7514 = vpop.permute.xlu0 %7513
        %7515 = vrot.lane.b32.xlu0 %v7115, 96
        %v7516 = vpop.permute.xlu0 %7515
        %7517 = vrot.lane.b32.xlu0 %v7159, 96
        %v7518 = vpop.permute.xlu0 %7517
        %7519 = vrot.lane.b32.xlu0 %v7162, 96
        %v7520 = vpop.permute.xlu0 %7519
        %7521 = vrot.lane.b32.xlu0 %v7167, 96
        %v7522 = vpop.permute.xlu0 %7521
        %7523 = vrot.lane.b32.xlu0 %v7170, 96
        %v7524 = vpop.permute.xlu0 %7523
        %v7557 = vsel %vm1988, %v5454, %v7206
        %v7558 = vsel %vm1988, %v5457, %v7208
        %v7559 = vsel %vm1988, %v5462, %v7210
        %v7560 = vsel %vm1988, %v5465, %v7212
        %v7561 = vsel %vm1988, %v5509, %v7214
        %v7562 = vsel %vm1988, %v5512, %v7216
        %v7563 = vsel %vm1988, %v5517, %v7218
        %v7564 = vsel %vm1988, %v5520, %v7220
        %v7565 = vsel %vm1988, %v5564, %v7222
        %v7566 = vsel %vm1988, %v5567, %v7224
        %v7567 = vsel %vm1988, %v5572, %v7226
        %v7568 = vsel %vm1988, %v5575, %v7228
        %v7569 = vsel %vm1988, %v5619, %v7230
        %v7570 = vsel %vm1988, %v5622, %v7232
        %v7571 = vsel %vm1988, %v5627, %v7234
        %v7572 = vsel %vm1988, %v5630, %v7236
        %v7573 = vsel %vm1988, %v5674, %v7238
        %v7574 = vsel %vm1988, %v5677, %v7240
        %v7575 = vsel %vm1988, %v5682, %v7242
        %v7576 = vsel %vm1988, %v5685, %v7244
        %v7577 = vsel %vm1988, %v5729, %v7246
        %v7578 = vsel %vm1988, %v5732, %v7248
        %v7579 = vsel %vm1988, %v5737, %v7250
        %v7580 = vsel %vm1988, %v5740, %v7252
        %v7581 = vsel %vm1988, %v5784, %v7254
        %v7582 = vsel %vm1988, %v5787, %v7256
        %v7583 = vsel %vm1988, %v5792, %v7258
        %v7584 = vsel %vm1988, %v5795, %v7260
        %v7585 = vsel %vm1988, %v5839, %v7262
        %v7586 = vsel %vm1988, %v5842, %v7264
        %v7587 = vsel %vm1988, %v5847, %v7266
        %v7588 = vsel %vm1988, %v5850, %v7268
        %vm7589 = vcmask 523264
        %v7590 = vsel %vm7589, %v7557, %v7334
        %v7591 = vsel %vm7589, %v7558, %v7336
        %v7592 = vsel %vm7589, %v7559, %v7338
        %v7593 = vsel %vm7589, %v7560, %v7340
        %v7594 = vsel %vm7589, %v7561, %v7342
        %v7595 = vsel %vm7589, %v7562, %v7344
        %v7596 = vsel %vm7589, %v7563, %v7346
        %v7597 = vsel %vm7589, %v7564, %v7348
        %v7598 = vsel %vm7589, %v7565, %v7350
        %v7599 = vsel %vm7589, %v7566, %v7352
        %v7600 = vsel %vm7589, %v7567, %v7354
        %v7601 = vsel %vm7589, %v7568, %v7356
        %v7602 = vsel %vm7589, %v7569, %v7358
        %v7603 = vsel %vm7589, %v7570, %v7360
        %v7604 = vsel %vm7589, %v7571, %v7362
        %v7605 = vsel %vm7589, %v7572, %v7364
        %v7606 = vsel %vm7589, %v7573, %v7366
        %v7607 = vsel %vm7589, %v7574, %v7368
        %v7608 = vsel %vm7589, %v7575, %v7370
        %v7609 = vsel %vm7589, %v7576, %v7372
        %v7610 = vsel %vm7589, %v7577, %v7374
        %v7611 = vsel %vm7589, %v7578, %v7376
        %v7612 = vsel %vm7589, %v7579, %v7378
        %v7613 = vsel %vm7589, %v7580, %v7380
        %v7614 = vsel %vm7589, %v7581, %v7382
        %v7615 = vsel %vm7589, %v7582, %v7384
        %v7616 = vsel %vm7589, %v7583, %v7386
        %v7617 = vsel %vm7589, %v7584, %v7388
        %v7618 = vsel %vm7589, %v7585, %v7390
        %v7619 = vsel %vm7589, %v7586, %v7392
        %v7620 = vsel %vm7589, %v7587, %v7394
        %v7621 = vsel %vm7589, %v7588, %v7396
        %vm7622 = vcmask 785408
        %v7623 = vsel %vm7622, %v7590, %v7462
        %v7624 = vsel %vm7622, %v7591, %v7464
        %v7625 = vsel %vm7622, %v7592, %v7466
        %v7626 = vsel %vm7622, %v7593, %v7468
        %v7627 = vsel %vm7622, %v7594, %v7470
        %v7628 = vsel %vm7622, %v7595, %v7472
        %v7629 = vsel %vm7622, %v7596, %v7474
        %v7630 = vsel %vm7622, %v7597, %v7476
        %v7631 = vsel %vm7622, %v7598, %v7478
        %v7632 = vsel %vm7622, %v7599, %v7480
        %v7633 = vsel %vm7622, %v7600, %v7482
        %v7634 = vsel %vm7622, %v7601, %v7484
        %v7635 = vsel %vm7622, %v7602, %v7486
        %v7636 = vsel %vm7622, %v7603, %v7488
        %v7637 = vsel %vm7622, %v7604, %v7490
        %v7638 = vsel %vm7622, %v7605, %v7492
        %v7639 = vsel %vm7622, %v7606, %v7494
        %v7640 = vsel %vm7622, %v7607, %v7496
        %v7641 = vsel %vm7622, %v7608, %v7498
        %v7642 = vsel %vm7622, %v7609, %v7500
        %v7643 = vsel %vm7622, %v7610, %v7502
        %v7644 = vsel %vm7622, %v7611, %v7504
        %v7645 = vsel %vm7622, %v7612, %v7506
        %v7646 = vsel %vm7622, %v7613, %v7508
        %v7647 = vsel %vm7622, %v7614, %v7510
        %v7648 = vsel %vm7622, %v7615, %v7512
        %v7649 = vsel %vm7622, %v7616, %v7514
        %v7650 = vsel %vm7622, %v7617, %v7516
        %v7651 = vsel %vm7622, %v7618, %v7518
        %v7652 = vsel %vm7622, %v7619, %v7520
        %v7653 = vsel %vm7622, %v7620, %v7522
        %v7654 = vsel %vm7622, %v7621, %v7524
        %v7655 = vpack.c.bf16 %v7624, %v7623
        %v7656 = vpack.c.bf16 %v7626, %v7625
        %v7657 = vpack.c.bf16 %v7628, %v7627
        %v7658 = vpack.c.bf16 %v7630, %v7629
        %v7659 = vpack.c.bf16 %v7632, %v7631
        %v7660 = vpack.c.bf16 %v7634, %v7633
        %v7661 = vpack.c.bf16 %v7636, %v7635
        %v7662 = vpack.c.bf16 %v7638, %v7637
        %v7663 = vpack.c.bf16 %v7640, %v7639
        %v7664 = vpack.c.bf16 %v7642, %v7641
        %v7665 = vpack.c.bf16 %v7644, %v7643
        %v7666 = vpack.c.bf16 %v7646, %v7645
        %v7667 = vpack.c.bf16 %v7648, %v7647
        %v7668 = vpack.c.bf16 %v7650, %v7649
        %v7669 = vpack.c.bf16 %v7652, %v7651
        %v7670 = vpack.c.bf16 %v7654, %v7653
        %v7671 = vld [vmem:[#allocation10] sm:$0xf]
        %v7672 = vld [vmem:[#allocation10 + $0x4] sm:$0xf]
        %v7673 = vld [vmem:[#allocation10 + $0x8] sm:$0xf]
        %v7674 = vld [vmem:[#allocation10 + $0xc] sm:$0xf]
        %v7675 = vld [vmem:[#allocation10 + $0x10] sm:$0xf]
        %v7676 = vld [vmem:[#allocation10 + $0x14] sm:$0xf]
        %v7677 = vld [vmem:[#allocation10 + $0x18] sm:$0xf]
        %v7678 = vld [vmem:[#allocation10 + $0x1c] sm:$0xf]
        %v7679 = vld [vmem:[#allocation10 + $0x20] sm:$0xf]
        %v7680 = vld [vmem:[#allocation10 + $0x24] sm:$0xf]
        %v7681 = vld [vmem:[#allocation10 + $0x28] sm:$0xf]
        %v7682 = vld [vmem:[#allocation10 + $0x2c] sm:$0xf]
        %v7683 = vld [vmem:[#allocation10 + $0x30] sm:$0xf]
        %v7684 = vld [vmem:[#allocation10 + $0x34] sm:$0xf]
        %v7685 = vld [vmem:[#allocation10 + $0x38] sm:$0xf]
        %v7686 = vld [vmem:[#allocation10 + $0x3c] sm:$0xf]
        %v7687 = vld [vmem:[%s6] sm:$0x1]
        %v7689 = vlaneseq
        %v7690 = vshrl.u32 %v7689, 7
        %v7691 = vsub.s32 0, %v7690
        %v7692 = vrot.slane %v7687, %v7691
        %v7710 = vunpack.c.l.b16 %v7671
        %v7711 = vunpack.c.l.b16 %v7672
        %v7712 = vunpack.c.l.b16 %v7673
        %v7713 = vunpack.c.l.b16 %v7674
        %v7714 = vunpack.c.l.b16 %v7675
        %v7715 = vunpack.c.l.b16 %v7676
        %v7716 = vunpack.c.l.b16 %v7677
        %v7717 = vunpack.c.l.b16 %v7678
        %v7718 = vunpack.c.l.b16 %v7679
        %v7719 = vunpack.c.l.b16 %v7680
        %v7720 = vunpack.c.l.b16 %v7681
        %v7721 = vunpack.c.l.b16 %v7682
        %v7722 = vunpack.c.l.b16 %v7683
        %v7723 = vunpack.c.l.b16 %v7684
        %v7724 = vunpack.c.l.b16 %v7685
        %v7725 = vunpack.c.l.b16 %v7686
        %v7726 = vpack.c.b16 %v7711, %v7710
        %v7727 = vpack.c.b16 %v7713, %v7712
        %v7728 = vpack.c.b16 %v7715, %v7714
        %v7729 = vpack.c.b16 %v7717, %v7716
        %v7730 = vpack.c.b16 %v7719, %v7718
        %v7731 = vpack.c.b16 %v7721, %v7720
        %v7732 = vpack.c.b16 %v7723, %v7722
        %v7733 = vpack.c.b16 %v7725, %v7724
        %7742 = vmatprep.subr.bf16.mxu0 0
        %7743 = vmatpush1.bf16.msra.mxu0 %v7726
        %7744 = vmatprep.subr.bf16.mxu0 0
        %7745 = vmatpush1.bf16.msra.mxu0 %v7727
        %7746 = vmatprep.subr.bf16.mxu0 0
        %7747 = vmatpush1.bf16.msra.mxu0 %v7728
        %7748 = vmatprep.subr.bf16.mxu0 0
        %7749 = vmatpush1.bf16.msra.mxu0 %v7729
        %7750 = vmatprep.subr.bf16.mxu0 0
        %7751 = vmatpush1.bf16.msra.mxu0 %v7730
        %7752 = vmatprep.subr.bf16.mxu0 0
        %7753 = vmatpush1.bf16.msra.mxu0 %v7731
        %7754 = vmatprep.subr.bf16.mxu0 0
        %7755 = vmatpush1.bf16.msra.mxu0 %v7732
        %7756 = vmatprep.subr.bf16.mxu0 0
        %7757 = vmatpush1.bf16.msra.mxu0 %v7733
        %7758 = vmatprep.subr.bf16.mxu0 0
        %7759 = vmatpush1.bf16.msra.mxu0 0
        %7760 = vmatprep.subr.bf16.mxu0 0
        %7761 = vmatpush1.bf16.msra.mxu0 0
        %7762 = vmatprep.subr.bf16.mxu0 0
        %7763 = vmatpush1.bf16.msra.mxu0 0
        %7764 = vmatprep.subr.bf16.mxu0 0
        %7765 = vmatpush1.bf16.msra.mxu0 0
        %7766 = vmatprep.subr.bf16.mxu0 0
        %7767 = vmatpush1.bf16.msra.mxu0 0
        %7768 = vmatprep.subr.bf16.mxu0 0
        %7769 = vmatpush1.bf16.msra.mxu0 0
        %7770 = vmatprep.subr.bf16.mxu0 0
        %7771 = vmatpush1.bf16.msra.mxu0 0
        %7772 = vmatprep.subr.bf16.mxu0 0
        %7773 = vmatpush1.bf16.msra.mxu0 0
        %7774 = vmatprep.mubr.bf16.mxu0 0
        %7775 = vmatmul.mubr.bf16.gmra.mrb[0].mxu0 %v7655
        %v7776 = vpop.f32.mrb[0].mxu0
        %v7777 = vadd.f32 %v7692, %v7776
        %v7778 = vpop.f32.mrb[0].mxu0
        %v7779 = vpop.f32.mrb[0].mxu0
        %v7780 = vadd.f32 %v7692, %v7779
        %v7781 = vpop.f32.mrb[0].mxu0
        %7782 = vmatprep.mubr.bf16.mxu0 0
        %7783 = vmatmul.mubr.bf16.gmra.mrb[0].mxu0 %v7656
        %v7784 = vpop.f32.mrb[0].mxu0
        %v7785 = vadd.f32 %v7692, %v7784
        %v7786 = vpop.f32.mrb[0].mxu0
        %v7787 = vpop.f32.mrb[0].mxu0
        %v7788 = vadd.f32 %v7692, %v7787
        %v7789 = vpop.f32.mrb[0].mxu0
        %7790 = vmatprep.mubr.bf16.mxu0 0
        %7791 = vmatmul.mubr.bf16.gmra.mrb[0].mxu0 %v7657
        %v7792 = vpop.f32.mrb[0].mxu0
        %v7793 = vadd.f32 %v7692, %v7792
        %v7794 = vpop.f32.mrb[0].mxu0
        %v7795 = vpop.f32.mrb[0].mxu0
        %v7796 = vadd.f32 %v7692, %v7795
        %v7797 = vpop.f32.mrb[0].mxu0
        %7798 = vmatprep.mubr.bf16.mxu0 0
        %7799 = vmatmul.mubr.bf16.gmra.mrb[0].mxu0 %v7658
        %v7800 = vpop.f32.mrb[0].mxu0
        %v7801 = vadd.f32 %v7692, %v7800
        %v7802 = vpop.f32.mrb[0].mxu0
        %v7803 = vpop.f32.mrb[0].mxu0
        %v7804 = vadd.f32 %v7692, %v7803
        %v7805 = vpop.f32.mrb[0].mxu0
        %7806 = vmatprep.mubr.bf16.mxu0 0
        %7807 = vmatmul.mubr.bf16.gmra.mrb[0].mxu0 %v7659
        %v7808 = vpop.f32.mrb[0].mxu0
        %v7809 = vadd.f32 %v7692, %v7808
        %v7810 = vpop.f32.mrb[0].mxu0
        %v7811 = vpop.f32.mrb[0].mxu0
        %v7812 = vadd.f32 %v7692, %v7811
        %v7813 = vpop.f32.mrb[0].mxu0
        %7814 = vmatprep.mubr.bf16.mxu0 0
        %7815 = vmatmul.mubr.bf16.gmra.mrb[0].mxu0 %v7660
        %v7816 = vpop.f32.mrb[0].mxu0
        %v7817 = vadd.f32 %v7692, %v7816
        %v7818 = vpop.f32.mrb[0].mxu0
        %v7819 = vpop.f32.mrb[0].mxu0
        %v7820 = vadd.f32 %v7692, %v7819
        %v7821 = vpop.f32.mrb[0].mxu0
        %7822 = vmatprep.mubr.bf16.mxu0 0
        %7823 = vmatmul.mubr.bf16.gmra.mrb[0].mxu0 %v7661
        %v7824 = vpop.f32.mrb[0].mxu0
        %v7825 = vadd.f32 %v7692, %v7824
        %v7826 = vpop.f32.mrb[0].mxu0
        %v7827 = vpop.f32.mrb[0].mxu0
        %v7828 = vadd.f32 %v7692, %v7827
        %v7829 = vpop.f32.mrb[0].mxu0
        %7830 = vmatprep.mubr.bf16.mxu0 0
        %7831 = vmatmul.mubr.bf16.gmra.mrb[0].mxu0 %v7662
        %v7832 = vpop.f32.mrb[0].mxu0
        %v7833 = vadd.f32 %v7692, %v7832
        %v7834 = vpop.f32.mrb[0].mxu0
        %v7835 = vpop.f32.mrb[0].mxu0
        %v7836 = vadd.f32 %v7692, %v7835
        %v7837 = vpop.f32.mrb[0].mxu0
        %7838 = vmatprep.mubr.bf16.mxu0 0
        %7839 = vmatmul.mubr.bf16.gmra.mrb[0].mxu0 %v7663
        %v7840 = vpop.f32.mrb[0].mxu0
        %v7841 = vadd.f32 %v7692, %v7840
        %v7842 = vpop.f32.mrb[0].mxu0
        %v7843 = vpop.f32.mrb[0].mxu0
        %v7844 = vadd.f32 %v7692, %v7843
        %v7845 = vpop.f32.mrb[0].mxu0
        %7846 = vmatprep.mubr.bf16.mxu0 0
        %7847 = vmatmul.mubr.bf16.gmra.mrb[0].mxu0 %v7664
        %v7848 = vpop.f32.mrb[0].mxu0
        %v7849 = vadd.f32 %v7692, %v7848
        %v7850 = vpop.f32.mrb[0].mxu0
        %v7851 = vpop.f32.mrb[0].mxu0
        %v7852 = vadd.f32 %v7692, %v7851
        %v7853 = vpop.f32.mrb[0].mxu0
        %7854 = vmatprep.mubr.bf16.mxu0 0
        %7855 = vmatmul.mubr.bf16.gmra.mrb[0].mxu0 %v7665
        %v7856 = vpop.f32.mrb[0].mxu0
        %v7857 = vadd.f32 %v7692, %v7856
        %v7858 = vpop.f32.mrb[0].mxu0
        %v7859 = vpop.f32.mrb[0].mxu0
        %v7860 = vadd.f32 %v7692, %v7859
        %v7861 = vpop.f32.mrb[0].mxu0
        %7862 = vmatprep.mubr.bf16.mxu0 0
        %7863 = vmatmul.mubr.bf16.gmra.mrb[0].mxu0 %v7666
        %v7864 = vpop.f32.mrb[0].mxu0
        %v7865 = vadd.f32 %v7692, %v7864
        %v7866 = vpop.f32.mrb[0].mxu0
        %v7867 = vpop.f32.mrb[0].mxu0
        %v7868 = vadd.f32 %v7692, %v7867
        %v7869 = vpop.f32.mrb[0].mxu0
        %7870 = vmatprep.mubr.bf16.mxu0 0
        %7871 = vmatmul.mubr.bf16.gmra.mrb[0].mxu0 %v7667
        %v7872 = vpop.f32.mrb[0].mxu0
        %v7873 = vadd.f32 %v7692, %v7872
        %v7874 = vpop.f32.mrb[0].mxu0
        %v7875 = vpop.f32.mrb[0].mxu0
        %v7876 = vadd.f32 %v7692, %v7875
        %v7877 = vpop.f32.mrb[0].mxu0
        %7878 = vmatprep.mubr.bf16.mxu0 0
        %7879 = vmatmul.mubr.bf16.gmra.mrb[0].mxu0 %v7668
        %v7880 = vpop.f32.mrb[0].mxu0
        %v7881 = vadd.f32 %v7692, %v7880
        %v7882 = vpop.f32.mrb[0].mxu0
        %v7883 = vpop.f32.mrb[0].mxu0
        %v7884 = vadd.f32 %v7692, %v7883
        %v7885 = vpop.f32.mrb[0].mxu0
        %7886 = vmatprep.mubr.bf16.mxu0 0
        %7887 = vmatmul.mubr.bf16.gmra.mrb[0].mxu0 %v7669
        %v7888 = vpop.f32.mrb[0].mxu0
        %v7889 = vadd.f32 %v7692, %v7888
        %v7890 = vpop.f32.mrb[0].mxu0
        %v7891 = vpop.f32.mrb[0].mxu0
        %v7892 = vadd.f32 %v7692, %v7891
        %v7893 = vpop.f32.mrb[0].mxu0
        %7894 = vmatprep.mubr.bf16.mxu0 0
        %7895 = vmatmul.mubr.bf16.gmra.mrb[0].mxu0 %v7670
        %v7896 = vpop.f32.mrb[0].mxu0
        %v7897 = vadd.f32 %v7692, %v7896
        %v7898 = vpop.f32.mrb[0].mxu0
        %v7899 = vpop.f32.mrb[0].mxu0
        %v7900 = vadd.f32 %v7692, %v7899
        %v7901 = vpop.f32.mrb[0].mxu0
        %7902 = vdwg.mxu0
        %v7903 = vadd.f32 %v546, %v7777
        %v7904 = vadd.f32 %v547, %v7780
        %v7905 = vadd.f32 %v548, %v7785
        %v7906 = vadd.f32 %v549, %v7788
        %v7907 = vadd.f32 %v550, %v7793
        %v7908 = vadd.f32 %v551, %v7796
        %v7909 = vadd.f32 %v552, %v7801
        %v7910 = vadd.f32 %v553, %v7804
        %v7911 = vadd.f32 %v554, %v7809
        %v7912 = vadd.f32 %v555, %v7812
        %v7913 = vadd.f32 %v556, %v7817
        %v7914 = vadd.f32 %v557, %v7820
        %v7915 = vadd.f32 %v558, %v7825
        %v7916 = vadd.f32 %v559, %v7828
        %v7917 = vadd.f32 %v560, %v7833
        %v7918 = vadd.f32 %v561, %v7836
        %v7919 = vadd.f32 %v562, %v7841
        %v7920 = vadd.f32 %v563, %v7844
        %v7921 = vadd.f32 %v564, %v7849
        %v7922 = vadd.f32 %v565, %v7852
        %v7923 = vadd.f32 %v566, %v7857
        %v7924 = vadd.f32 %v567, %v7860
        %v7925 = vadd.f32 %v568, %v7865
        %v7926 = vadd.f32 %v569, %v7868
        %v7927 = vadd.f32 %v570, %v7873
        %v7928 = vadd.f32 %v571, %v7876
        %v7929 = vadd.f32 %v572, %v7881
        %v7930 = vadd.f32 %v573, %v7884
        %v7931 = vadd.f32 %v574, %v7889
        %v7932 = vadd.f32 %v575, %v7892
        %v7933 = vadd.f32 %v576, %v7897
        %v7934 = vadd.f32 %v577, %v7900
        %v7935 = vld [vmem:[%s7] sm:$0x1]
        %v7936 = vld [vmem:[%s8] sm:$0x1]
        %7937 = vadd.xlane.f32.xlu0 %v7903
        %v7938 = vpop.xlane.xlu0 %7937
        %7939 = vadd.xlane.f32.xlu0 %v7904
        %v7940 = vpop.xlane.xlu0 %7939
        %7941 = vadd.xlane.f32.xlu0 %v7905
        %v7942 = vpop.xlane.xlu0 %7941
        %7943 = vadd.xlane.f32.xlu0 %v7906
        %v7944 = vpop.xlane.xlu0 %7943
        %7945 = vadd.xlane.f32.xlu0 %v7907
        %v7946 = vpop.xlane.xlu0 %7945
        %7947 = vadd.xlane.f32.xlu0 %v7908
        %v7948 = vpop.xlane.xlu0 %7947
        %7949 = vadd.xlane.f32.xlu0 %v7909
        %v7950 = vpop.xlane.xlu0 %7949
        %7951 = vadd.xlane.f32.xlu0 %v7910
        %v7952 = vpop.xlane.xlu0 %7951
        %7953 = vadd.xlane.f32.xlu0 %v7911
        %v7954 = vpop.xlane.xlu0 %7953
        %7955 = vadd.xlane.f32.xlu0 %v7912
        %v7956 = vpop.xlane.xlu0 %7955
        %7957 = vadd.xlane.f32.xlu0 %v7913
        %v7958 = vpop.xlane.xlu0 %7957
        %7959 = vadd.xlane.f32.xlu0 %v7914
        %v7960 = vpop.xlane.xlu0 %7959
        %7961 = vadd.xlane.f32.xlu0 %v7915
        %v7962 = vpop.xlane.xlu0 %7961
        %7963 = vadd.xlane.f32.xlu0 %v7916
        %v7964 = vpop.xlane.xlu0 %7963
        %7965 = vadd.xlane.f32.xlu0 %v7917
        %v7966 = vpop.xlane.xlu0 %7965
        %7967 = vadd.xlane.f32.xlu0 %v7918
        %v7968 = vpop.xlane.xlu0 %7967
        %7969 = vadd.xlane.f32.xlu0 %v7919
        %v7970 = vpop.xlane.xlu0 %7969
        %7971 = vadd.xlane.f32.xlu0 %v7920
        %v7972 = vpop.xlane.xlu0 %7971
        %7973 = vadd.xlane.f32.xlu0 %v7921
        %v7974 = vpop.xlane.xlu0 %7973
        %7975 = vadd.xlane.f32.xlu0 %v7922
        %v7976 = vpop.xlane.xlu0 %7975
        %7977 = vadd.xlane.f32.xlu0 %v7923
        %v7978 = vpop.xlane.xlu0 %7977
        %7979 = vadd.xlane.f32.xlu0 %v7924
        %v7980 = vpop.xlane.xlu0 %7979
        %7981 = vadd.xlane.f32.xlu0 %v7925
        %v7982 = vpop.xlane.xlu0 %7981
        %7983 = vadd.xlane.f32.xlu0 %v7926
        %v7984 = vpop.xlane.xlu0 %7983
        %7985 = vadd.xlane.f32.xlu0 %v7927
        %v7986 = vpop.xlane.xlu0 %7985
        %7987 = vadd.xlane.f32.xlu0 %v7928
        %v7988 = vpop.xlane.xlu0 %7987
        %7989 = vadd.xlane.f32.xlu0 %v7929
        %v7990 = vpop.xlane.xlu0 %7989
        %7991 = vadd.xlane.f32.xlu0 %v7930
        %v7992 = vpop.xlane.xlu0 %7991
        %7993 = vadd.xlane.f32.xlu0 %v7931
        %v7994 = vpop.xlane.xlu0 %7993
        %7995 = vadd.xlane.f32.xlu0 %v7932
        %v7996 = vpop.xlane.xlu0 %7995
        %7997 = vadd.xlane.f32.xlu0 %v7933
        %v7998 = vpop.xlane.xlu0 %7997
        %7999 = vadd.xlane.f32.xlu0 %v7934
        %v8000 = vpop.xlane.xlu0 %7999
        %v8001 = vmul.f32 %v7938, %v644
        %v8002 = vmul.f32 %v7940, %v644
        %v8003 = vmul.f32 %v7942, %v644
        %v8004 = vmul.f32 %v7944, %v644
        %v8005 = vmul.f32 %v7946, %v644
        %v8006 = vmul.f32 %v7948, %v644
        %v8007 = vmul.f32 %v7950, %v644
        %v8008 = vmul.f32 %v7952, %v644
        %v8009 = vmul.f32 %v7954, %v644
        %v8010 = vmul.f32 %v7956, %v644
        %v8011 = vmul.f32 %v7958, %v644
        %v8012 = vmul.f32 %v7960, %v644
        %v8013 = vmul.f32 %v7962, %v644
        %v8014 = vmul.f32 %v7964, %v644
        %v8015 = vmul.f32 %v7966, %v644
        %v8016 = vmul.f32 %v7968, %v644
        %v8017 = vmul.f32 %v7970, %v644
        %v8018 = vmul.f32 %v7972, %v644
        %v8019 = vmul.f32 %v7974, %v644
        %v8020 = vmul.f32 %v7976, %v644
        %v8021 = vmul.f32 %v7978, %v644
        %v8022 = vmul.f32 %v7980, %v644
        %v8023 = vmul.f32 %v7982, %v644
        %v8024 = vmul.f32 %v7984, %v644
        %v8025 = vmul.f32 %v7986, %v644
        %v8026 = vmul.f32 %v7988, %v644
        %v8027 = vmul.f32 %v7990, %v644
        %v8028 = vmul.f32 %v7992, %v644
        %v8029 = vmul.f32 %v7994, %v644
        %v8030 = vmul.f32 %v7996, %v644
        %v8031 = vmul.f32 %v7998, %v644
        %v8032 = vmul.f32 %v8000, %v644
        %v8033 = vsub.f32 %v7903, %v8001
        %v8034 = vsub.f32 %v7904, %v8002
        %v8035 = vsub.f32 %v7905, %v8003
        %v8036 = vsub.f32 %v7906, %v8004
        %v8037 = vsub.f32 %v7907, %v8005
        %v8038 = vsub.f32 %v7908, %v8006
        %v8039 = vsub.f32 %v7909, %v8007
        %v8040 = vsub.f32 %v7910, %v8008
        %v8041 = vsub.f32 %v7911, %v8009
        %v8042 = vsub.f32 %v7912, %v8010
        %v8043 = vsub.f32 %v7913, %v8011
        %v8044 = vsub.f32 %v7914, %v8012
        %v8045 = vsub.f32 %v7915, %v8013
        %v8046 = vsub.f32 %v7916, %v8014
        %v8047 = vsub.f32 %v7917, %v8015
        %v8048 = vsub.f32 %v7918, %v8016
        %v8049 = vsub.f32 %v7919, %v8017
        %v8050 = vsub.f32 %v7920, %v8018
        %v8051 = vsub.f32 %v7921, %v8019
        %v8052 = vsub.f32 %v7922, %v8020
        %v8053 = vsub.f32 %v7923, %v8021
        %v8054 = vsub.f32 %v7924, %v8022
        %v8055 = vsub.f32 %v7925, %v8023
        %v8056 = vsub.f32 %v7926, %v8024
        %v8057 = vsub.f32 %v7927, %v8025
        %v8058 = vsub.f32 %v7928, %v8026
        %v8059 = vsub.f32 %v7929, %v8027
        %v8060 = vsub.f32 %v7930, %v8028
        %v8061 = vsub.f32 %v7931, %v8029
        %v8062 = vsub.f32 %v7932, %v8030
        %v8063 = vsub.f32 %v7933, %v8031
        %v8064 = vsub.f32 %v7934, %v8032
        %v8065 = vmul.f32 %v8033, %v8033
        %v8066 = vmul.f32 %v8034, %v8034
        %v8067 = vmul.f32 %v8035, %v8035
        %v8068 = vmul.f32 %v8036, %v8036
        %v8069 = vmul.f32 %v8037, %v8037
        %v8070 = vmul.f32 %v8038, %v8038
        %v8071 = vmul.f32 %v8039, %v8039
        %v8072 = vmul.f32 %v8040, %v8040
        %v8073 = vmul.f32 %v8041, %v8041
        %v8074 = vmul.f32 %v8042, %v8042
        %v8075 = vmul.f32 %v8043, %v8043
        %v8076 = vmul.f32 %v8044, %v8044
        %v8077 = vmul.f32 %v8045, %v8045
        %v8078 = vmul.f32 %v8046, %v8046
        %v8079 = vmul.f32 %v8047, %v8047
        %v8080 = vmul.f32 %v8048, %v8048
        %v8081 = vmul.f32 %v8049, %v8049
        %v8082 = vmul.f32 %v8050, %v8050
        %v8083 = vmul.f32 %v8051, %v8051
        %v8084 = vmul.f32 %v8052, %v8052
        %v8085 = vmul.f32 %v8053, %v8053
        %v8086 = vmul.f32 %v8054, %v8054
        %v8087 = vmul.f32 %v8055, %v8055
        %v8088 = vmul.f32 %v8056, %v8056
        %v8089 = vmul.f32 %v8057, %v8057
        %v8090 = vmul.f32 %v8058, %v8058
        %v8091 = vmul.f32 %v8059, %v8059
        %v8092 = vmul.f32 %v8060, %v8060
        %v8093 = vmul.f32 %v8061, %v8061
        %v8094 = vmul.f32 %v8062, %v8062
        %v8095 = vmul.f32 %v8063, %v8063
        %v8096 = vmul.f32 %v8064, %v8064
        %8097 = vadd.xlane.f32.xlu0 %v8065
        %v8098 = vpop.xlane.xlu0 %8097
        %8099 = vadd.xlane.f32.xlu0 %v8066
        %v8100 = vpop.xlane.xlu0 %8099
        %8101 = vadd.xlane.f32.xlu0 %v8067
        %v8102 = vpop.xlane.xlu0 %8101
        %8103 = vadd.xlane.f32.xlu0 %v8068
        %v8104 = vpop.xlane.xlu0 %8103
        %8105 = vadd.xlane.f32.xlu0 %v8069
        %v8106 = vpop.xlane.xlu0 %8105
        %8107 = vadd.xlane.f32.xlu0 %v8070
        %v8108 = vpop.xlane.xlu0 %8107
        %8109 = vadd.xlane.f32.xlu0 %v8071
        %v8110 = vpop.xlane.xlu0 %8109
        %8111 = vadd.xlane.f32.xlu0 %v8072
        %v8112 = vpop.xlane.xlu0 %8111
        %8113 = vadd.xlane.f32.xlu0 %v8073
        %v8114 = vpop.xlane.xlu0 %8113
        %8115 = vadd.xlane.f32.xlu0 %v8074
        %v8116 = vpop.xlane.xlu0 %8115
        %8117 = vadd.xlane.f32.xlu0 %v8075
        %v8118 = vpop.xlane.xlu0 %8117
        %8119 = vadd.xlane.f32.xlu0 %v8076
        %v8120 = vpop.xlane.xlu0 %8119
        %8121 = vadd.xlane.f32.xlu0 %v8077
        %v8122 = vpop.xlane.xlu0 %8121
        %8123 = vadd.xlane.f32.xlu0 %v8078
        %v8124 = vpop.xlane.xlu0 %8123
        %8125 = vadd.xlane.f32.xlu0 %v8079
        %v8126 = vpop.xlane.xlu0 %8125
        %8127 = vadd.xlane.f32.xlu0 %v8080
        %v8128 = vpop.xlane.xlu0 %8127
        %8129 = vadd.xlane.f32.xlu0 %v8081
        %v8130 = vpop.xlane.xlu0 %8129
        %8131 = vadd.xlane.f32.xlu0 %v8082
        %v8132 = vpop.xlane.xlu0 %8131
        %8133 = vadd.xlane.f32.xlu0 %v8083
        %v8134 = vpop.xlane.xlu0 %8133
        %8135 = vadd.xlane.f32.xlu0 %v8084
        %v8136 = vpop.xlane.xlu0 %8135
        %8137 = vadd.xlane.f32.xlu0 %v8085
        %v8138 = vpop.xlane.xlu0 %8137
        %8139 = vadd.xlane.f32.xlu0 %v8086
        %v8140 = vpop.xlane.xlu0 %8139
        %8141 = vadd.xlane.f32.xlu0 %v8087
        %v8142 = vpop.xlane.xlu0 %8141
        %8143 = vadd.xlane.f32.xlu0 %v8088
        %v8144 = vpop.xlane.xlu0 %8143
        %8145 = vadd.xlane.f32.xlu0 %v8089
        %v8146 = vpop.xlane.xlu0 %8145
        %8147 = vadd.xlane.f32.xlu0 %v8090
        %v8148 = vpop.xlane.xlu0 %8147
        %8149 = vadd.xlane.f32.xlu0 %v8091
        %v8150 = vpop.xlane.xlu0 %8149
        %8151 = vadd.xlane.f32.xlu0 %v8092
        %v8152 = vpop.xlane.xlu0 %8151
        %8153 = vadd.xlane.f32.xlu0 %v8093
        %v8154 = vpop.xlane.xlu0 %8153
        %8155 = vadd.xlane.f32.xlu0 %v8094
        %v8156 = vpop.xlane.xlu0 %8155
        %8157 = vadd.xlane.f32.xlu0 %v8095
        %v8158 = vpop.xlane.xlu0 %8157
        %8159 = vadd.xlane.f32.xlu0 %v8096
        %v8160 = vpop.xlane.xlu0 %8159
        %v8161 = vmul.f32 %v8098, %v644
        %v8162 = vmul.f32 %v8100, %v644
        %v8163 = vmul.f32 %v8102, %v644
        %v8164 = vmul.f32 %v8104, %v644
        %v8165 = vmul.f32 %v8106, %v644
        %v8166 = vmul.f32 %v8108, %v644
        %v8167 = vmul.f32 %v8110, %v644
        %v8168 = vmul.f32 %v8112, %v644
        %v8169 = vmul.f32 %v8114, %v644
        %v8170 = vmul.f32 %v8116, %v644
        %v8171 = vmul.f32 %v8118, %v644
        %v8172 = vmul.f32 %v8120, %v644
        %v8173 = vmul.f32 %v8122, %v644
        %v8174 = vmul.f32 %v8124, %v644
        %v8175 = vmul.f32 %v8126, %v644
        %v8176 = vmul.f32 %v8128, %v644
        %v8177 = vmul.f32 %v8130, %v644
        %v8178 = vmul.f32 %v8132, %v644
        %v8179 = vmul.f32 %v8134, %v644
        %v8180 = vmul.f32 %v8136, %v644
        %v8181 = vmul.f32 %v8138, %v644
        %v8182 = vmul.f32 %v8140, %v644
        %v8183 = vmul.f32 %v8142, %v644
        %v8184 = vmul.f32 %v8144, %v644
        %v8185 = vmul.f32 %v8146, %v644
        %v8186 = vmul.f32 %v8148, %v644
        %v8187 = vmul.f32 %v8150, %v644
        %v8188 = vmul.f32 %v8152, %v644
        %v8189 = vmul.f32 %v8154, %v644
        %v8190 = vmul.f32 %v8156, %v644
        %v8191 = vmul.f32 %v8158, %v644
        %v8192 = vmul.f32 %v8160, %v644
        %v8193 = vadd.f32 %v8161, 1e-05
        %v8194 = vadd.f32 %v8162, 1e-05
        %v8195 = vadd.f32 %v8163, 1e-05
        %v8196 = vadd.f32 %v8164, 1e-05
        %v8197 = vadd.f32 %v8165, 1e-05
        %v8198 = vadd.f32 %v8166, 1e-05
        %v8199 = vadd.f32 %v8167, 1e-05
        %v8200 = vadd.f32 %v8168, 1e-05
        %v8201 = vadd.f32 %v8169, 1e-05
        %v8202 = vadd.f32 %v8170, 1e-05
        %v8203 = vadd.f32 %v8171, 1e-05
        %v8204 = vadd.f32 %v8172, 1e-05
        %v8205 = vadd.f32 %v8173, 1e-05
        %v8206 = vadd.f32 %v8174, 1e-05
        %v8207 = vadd.f32 %v8175, 1e-05
        %v8208 = vadd.f32 %v8176, 1e-05
        %v8209 = vadd.f32 %v8177, 1e-05
        %v8210 = vadd.f32 %v8178, 1e-05
        %v8211 = vadd.f32 %v8179, 1e-05
        %v8212 = vadd.f32 %v8180, 1e-05
        %v8213 = vadd.f32 %v8181, 1e-05
        %v8214 = vadd.f32 %v8182, 1e-05
        %v8215 = vadd.f32 %v8183, 1e-05
        %v8216 = vadd.f32 %v8184, 1e-05
        %v8217 = vadd.f32 %v8185, 1e-05
        %v8218 = vadd.f32 %v8186, 1e-05
        %v8219 = vadd.f32 %v8187, 1e-05
        %v8220 = vadd.f32 %v8188, 1e-05
        %v8221 = vadd.f32 %v8189, 1e-05
        %v8222 = vadd.f32 %v8190, 1e-05
        %v8223 = vadd.f32 %v8191, 1e-05
        %v8224 = vadd.f32 %v8192, 1e-05
        %v8225 = vrsqrt.pop %v8193
        %v8226 = vrsqrt.pop %v8194
        %v8227 = vrsqrt.pop %v8195
        %v8228 = vrsqrt.pop %v8196
        %v8229 = vrsqrt.pop %v8197
        %v8230 = vrsqrt.pop %v8198
        %v8231 = vrsqrt.pop %v8199
        %v8232 = vrsqrt.pop %v8200
        %v8233 = vrsqrt.pop %v8201
        %v8234 = vrsqrt.pop %v8202
        %v8235 = vrsqrt.pop %v8203
        %v8236 = vrsqrt.pop %v8204
        %v8237 = vrsqrt.pop %v8205
        %v8238 = vrsqrt.pop %v8206
        %v8239 = vrsqrt.pop %v8207
        %v8240 = vrsqrt.pop %v8208
        %v8241 = vrsqrt.pop %v8209
        %v8242 = vrsqrt.pop %v8210
        %v8243 = vrsqrt.pop %v8211
        %v8244 = vrsqrt.pop %v8212
        %v8245 = vrsqrt.pop %v8213
        %v8246 = vrsqrt.pop %v8214
        %v8247 = vrsqrt.pop %v8215
        %v8248 = vrsqrt.pop %v8216
        %v8249 = vrsqrt.pop %v8217
        %v8250 = vrsqrt.pop %v8218
        %v8251 = vrsqrt.pop %v8219
        %v8252 = vrsqrt.pop %v8220
        %v8253 = vrsqrt.pop %v8221
        %v8254 = vrsqrt.pop %v8222
        %v8255 = vrsqrt.pop %v8223
        %v8256 = vrsqrt.pop %v8224
        %v8257 = vmul.f32 %v8033, %v8225
        %v8258 = vmul.f32 %v8034, %v8226
        %v8259 = vmul.f32 %v8035, %v8227
        %v8260 = vmul.f32 %v8036, %v8228
        %v8261 = vmul.f32 %v8037, %v8229
        %v8262 = vmul.f32 %v8038, %v8230
        %v8263 = vmul.f32 %v8039, %v8231
        %v8264 = vmul.f32 %v8040, %v8232
        %v8265 = vmul.f32 %v8041, %v8233
        %v8266 = vmul.f32 %v8042, %v8234
        %v8267 = vmul.f32 %v8043, %v8235
        %v8268 = vmul.f32 %v8044, %v8236
        %v8269 = vmul.f32 %v8045, %v8237
        %v8270 = vmul.f32 %v8046, %v8238
        %v8271 = vmul.f32 %v8047, %v8239
        %v8272 = vmul.f32 %v8048, %v8240
        %v8273 = vmul.f32 %v8049, %v8241
        %v8274 = vmul.f32 %v8050, %v8242
        %v8275 = vmul.f32 %v8051, %v8243
        %v8276 = vmul.f32 %v8052, %v8244
        %v8277 = vmul.f32 %v8053, %v8245
        %v8278 = vmul.f32 %v8054, %v8246
        %v8279 = vmul.f32 %v8055, %v8247
        %v8280 = vmul.f32 %v8056, %v8248
        %v8281 = vmul.f32 %v8057, %v8249
        %v8282 = vmul.f32 %v8058, %v8250
        %v8283 = vmul.f32 %v8059, %v8251
        %v8284 = vmul.f32 %v8060, %v8252
        %v8285 = vmul.f32 %v8061, %v8253
        %v8286 = vmul.f32 %v8062, %v8254
        %v8287 = vmul.f32 %v8063, %v8255
        %v8288 = vmul.f32 %v8064, %v8256
        %v8290 = vlaneseq
        %v8291 = vshrl.u32 %v8290, 7
        %v8292 = vsub.s32 0, %v8291
        %v8293 = vrot.slane %v7935, %v8292
        %v8295 = vmul.f32 %v8257, %v8293
        %v8296 = vmul.f32 %v8258, %v8293
        %v8297 = vmul.f32 %v8259, %v8293
        %v8298 = vmul.f32 %v8260, %v8293
        %v8299 = vmul.f32 %v8261, %v8293
        %v8300 = vmul.f32 %v8262, %v8293
        %v8301 = vmul.f32 %v8263, %v8293
        %v8302 = vmul.f32 %v8264, %v8293
        %v8303 = vmul.f32 %v8265, %v8293
        %v8304 = vmul.f32 %v8266, %v8293
        %v8305 = vmul.f32 %v8267, %v8293
        %v8306 = vmul.f32 %v8268, %v8293
        %v8307 = vmul.f32 %v8269, %v8293
        %v8308 = vmul.f32 %v8270, %v8293
        %v8309 = vmul.f32 %v8271, %v8293
        %v8310 = vmul.f32 %v8272, %v8293
        %v8311 = vmul.f32 %v8273, %v8293
        %v8312 = vmul.f32 %v8274, %v8293
        %v8313 = vmul.f32 %v8275, %v8293
        %v8314 = vmul.f32 %v8276, %v8293
        %v8315 = vmul.f32 %v8277, %v8293
        %v8316 = vmul.f32 %v8278, %v8293
        %v8317 = vmul.f32 %v8279, %v8293
        %v8318 = vmul.f32 %v8280, %v8293
        %v8319 = vmul.f32 %v8281, %v8293
        %v8320 = vmul.f32 %v8282, %v8293
        %v8321 = vmul.f32 %v8283, %v8293
        %v8322 = vmul.f32 %v8284, %v8293
        %v8323 = vmul.f32 %v8285, %v8293
        %v8324 = vmul.f32 %v8286, %v8293
        %v8325 = vmul.f32 %v8287, %v8293
        %v8326 = vmul.f32 %v8288, %v8293
        %v8328 = vlaneseq
        %v8329 = vshrl.u32 %v8328, 7
        %v8330 = vsub.s32 0, %v8329
        %v8331 = vrot.slane %v7936, %v8330
        %v8333 = vadd.f32 %v8295, %v8331
        %v8334 = vadd.f32 %v8296, %v8331
        %v8335 = vadd.f32 %v8297, %v8331
        %v8336 = vadd.f32 %v8298, %v8331
        %v8337 = vadd.f32 %v8299, %v8331
        %v8338 = vadd.f32 %v8300, %v8331
        %v8339 = vadd.f32 %v8301, %v8331
        %v8340 = vadd.f32 %v8302, %v8331
        %v8341 = vadd.f32 %v8303, %v8331
        %v8342 = vadd.f32 %v8304, %v8331
        %v8343 = vadd.f32 %v8305, %v8331
        %v8344 = vadd.f32 %v8306, %v8331
        %v8345 = vadd.f32 %v8307, %v8331
        %v8346 = vadd.f32 %v8308, %v8331
        %v8347 = vadd.f32 %v8309, %v8331
        %v8348 = vadd.f32 %v8310, %v8331
        %v8349 = vadd.f32 %v8311, %v8331
        %v8350 = vadd.f32 %v8312, %v8331
        %v8351 = vadd.f32 %v8313, %v8331
        %v8352 = vadd.f32 %v8314, %v8331
        %v8353 = vadd.f32 %v8315, %v8331
        %v8354 = vadd.f32 %v8316, %v8331
        %v8355 = vadd.f32 %v8317, %v8331
        %v8356 = vadd.f32 %v8318, %v8331
        %v8357 = vadd.f32 %v8319, %v8331
        %v8358 = vadd.f32 %v8320, %v8331
        %v8359 = vadd.f32 %v8321, %v8331
        %v8360 = vadd.f32 %v8322, %v8331
        %v8361 = vadd.f32 %v8323, %v8331
        %v8362 = vadd.f32 %v8324, %v8331
        %v8363 = vadd.f32 %v8325, %v8331
        %v8364 = vadd.f32 %v8326, %v8331
        %v8365 = vpack.c.bf16 %v8334, %v8333
        %v8366 = vpack.c.bf16 %v8336, %v8335
        %v8367 = vpack.c.bf16 %v8338, %v8337
        %v8368 = vpack.c.bf16 %v8340, %v8339
        %v8369 = vpack.c.bf16 %v8342, %v8341
        %v8370 = vpack.c.bf16 %v8344, %v8343
        %v8371 = vpack.c.bf16 %v8346, %v8345
        %v8372 = vpack.c.bf16 %v8348, %v8347
        %v8373 = vpack.c.bf16 %v8350, %v8349
        %v8374 = vpack.c.bf16 %v8352, %v8351
        %v8375 = vpack.c.bf16 %v8354, %v8353
        %v8376 = vpack.c.bf16 %v8356, %v8355
        %v8377 = vpack.c.bf16 %v8358, %v8357
        %v8378 = vpack.c.bf16 %v8360, %v8359
        %v8379 = vpack.c.bf16 %v8362, %v8361
        %v8380 = vpack.c.bf16 %v8364, %v8363
        %v8381 = vld [vmem:[#allocation11] sm:$0xff]
        %v8382 = vld [vmem:[#allocation11 + $0x8] sm:$0xff]
        %v8383 = vld [vmem:[#allocation11 + $0x10] sm:$0xff]
        %v8384 = vld [vmem:[#allocation11 + $0x18] sm:$0xff]
        %v8385 = vld [vmem:[#allocation11 + $0x20] sm:$0xff]
        %v8386 = vld [vmem:[#allocation11 + $0x28] sm:$0xff]
        %v8387 = vld [vmem:[#allocation11 + $0x30] sm:$0xff]
        %v8388 = vld [vmem:[#allocation11 + $0x38] sm:$0xff]
        %v8389 = vld [vmem:[#allocation11 + $0x40] sm:$0xff]
        %v8390 = vld [vmem:[#allocation11 + $0x48] sm:$0xff]
        %v8391 = vld [vmem:[#allocation11 + $0x50] sm:$0xff]
        %v8392 = vld [vmem:[#allocation11 + $0x58] sm:$0xff]
        %v8393 = vld [vmem:[#allocation11 + $0x60] sm:$0xff]
        %v8394 = vld [vmem:[#allocation11 + $0x68] sm:$0xff]
        %v8395 = vld [vmem:[#allocation11 + $0x70] sm:$0xff]
        %v8396 = vld [vmem:[#allocation11 + $0x78] sm:$0xff]
        %v8397 = vld [vmem:[#allocation11 + $0x80] sm:$0xff]
        %v8398 = vld [vmem:[#allocation11 + $0x88] sm:$0xff]
        %v8399 = vld [vmem:[#allocation11 + $0x90] sm:$0xff]
        %v8400 = vld [vmem:[#allocation11 + $0x98] sm:$0xff]
        %v8401 = vld [vmem:[#allocation11 + $0xa0] sm:$0xff]
        %v8402 = vld [vmem:[#allocation11 + $0xa8] sm:$0xff]
        %v8403 = vld [vmem:[#allocation11 + $0xb0] sm:$0xff]
        %v8404 = vld [vmem:[#allocation11 + $0xb8] sm:$0xff]
        %v8405 = vld [vmem:[#allocation11 + $0xc0] sm:$0xff]
        %v8406 = vld [vmem:[#allocation11 + $0xc8] sm:$0xff]
        %v8407 = vld [vmem:[#allocation11 + $0xd0] sm:$0xff]
        %v8408 = vld [vmem:[#allocation11 + $0xd8] sm:$0xff]
        %v8409 = vld [vmem:[#allocation11 + $0xe0] sm:$0xff]
        %v8410 = vld [vmem:[#allocation11 + $0xe8] sm:$0xff]
        %v8411 = vld [vmem:[#allocation11 + $0xf0] sm:$0xff]
        %v8412 = vld [vmem:[#allocation11 + $0xf8] sm:$0xff]
        %v8413 = vld [vmem:[%s10] sm:$0xf]
        %v8415 = vlaneseq
        %v8416 = vshrl.u32 %v8415, 7
        %v8417 = vsub.s32 0, %v8416
        %v8418 = vrot.slane %v8413, %v8417
        %v8419 = vlaneseq
        %v8420 = vshrl.u32 %v8419, 7
        %v8421 = vsub.s32 1, %v8420
        %v8422 = vrot.slane %v8413, %v8421
        %v8423 = vlaneseq
        %v8424 = vshrl.u32 %v8423, 7
        %v8425 = vsub.s32 2, %v8424
        %v8426 = vrot.slane %v8413, %v8425
        %v8427 = vlaneseq
        %v8428 = vshrl.u32 %v8427, 7
        %v8429 = vsub.s32 3, %v8428
        %v8430 = vrot.slane %v8413, %v8429
        %v8467 = vunpack.c.l.b16 %v8381
        %v8468 = vunpack.c.h.b16 %v8381
        %v8469 = vunpack.c.l.b16 %v8382
        %v8470 = vunpack.c.h.b16 %v8382
        %v8471 = vunpack.c.l.b16 %v8383
        %v8472 = vunpack.c.h.b16 %v8383
        %v8473 = vunpack.c.l.b16 %v8384
        %v8474 = vunpack.c.h.b16 %v8384
        %v8475 = vunpack.c.l.b16 %v8385
        %v8476 = vunpack.c.h.b16 %v8385
        %v8477 = vunpack.c.l.b16 %v8386
        %v8478 = vunpack.c.h.b16 %v8386
        %v8479 = vunpack.c.l.b16 %v8387
        %v8480 = vunpack.c.h.b16 %v8387
        %v8481 = vunpack.c.l.b16 %v8388
        %v8482 = vunpack.c.h.b16 %v8388
        %v8483 = vunpack.c.l.b16 %v8389
        %v8484 = vunpack.c.h.b16 %v8389
        %v8485 = vunpack.c.l.b16 %v8390
        %v8486 = vunpack.c.h.b16 %v8390
        %v8487 = vunpack.c.l.b16 %v8391
        %v8488 = vunpack.c.h.b16 %v8391
        %v8489 = vunpack.c.l.b16 %v8392
        %v8490 = vunpack.c.h.b16 %v8392
        %v8491 = vunpack.c.l.b16 %v8393
        %v8492 = vunpack.c.h.b16 %v8393
        %v8493 = vunpack.c.l.b16 %v8394
        %v8494 = vunpack.c.h.b16 %v8394
        %v8495 = vunpack.c.l.b16 %v8395
        %v8496 = vunpack.c.h.b16 %v8395
        %v8497 = vunpack.c.l.b16 %v8396
        %v8498 = vunpack.c.h.b16 %v8396
        %v8499 = vunpack.c.l.b16 %v8397
        %v8500 = vunpack.c.h.b16 %v8397
        %v8501 = vunpack.c.l.b16 %v8398
        %v8502 = vunpack.c.h.b16 %v8398
        %v8503 = vunpack.c.l.b16 %v8399
        %v8504 = vunpack.c.h.b16 %v8399
        %v8505 = vunpack.c.l.b16 %v8400
        %v8506 = vunpack.c.h.b16 %v8400
        %v8507 = vunpack.c.l.b16 %v8401
        %v8508 = vunpack.c.h.b16 %v8401
        %v8509 = vunpack.c.l.b16 %v8402
        %v8510 = vunpack.c.h.b16 %v8402
        %v8511 = vunpack.c.l.b16 %v8403
        %v8512 = vunpack.c.h.b16 %v8403
        %v8513 = vunpack.c.l.b16 %v8404
        %v8514 = vunpack.c.h.b16 %v8404
        %v8515 = vunpack.c.l.b16 %v8405
        %v8516 = vunpack.c.h.b16 %v8405
        %v8517 = vunpack.c.l.b16 %v8406
        %v8518 = vunpack.c.h.b16 %v8406
        %v8519 = vunpack.c.l.b16 %v8407
        %v8520 = vunpack.c.h.b16 %v8407
        %v8521 = vunpack.c.l.b16 %v8408
        %v8522 = vunpack.c.h.b16 %v8408
        %v8523 = vunpack.c.l.b16 %v8409
        %v8524 = vunpack.c.h.b16 %v8409
        %v8525 = vunpack.c.l.b16 %v8410
        %v8526 = vunpack.c.h.b16 %v8410
        %v8527 = vunpack.c.l.b16 %v8411
        %v8528 = vunpack.c.h.b16 %v8411
        %v8529 = vunpack.c.l.b16 %v8412
        %v8530 = vunpack.c.h.b16 %v8412
        %v8531 = vpack.c.b16 %v8471, %v8467
        %v8532 = vpack.c.b16 %v8472, %v8468
        %v8533 = vpack.c.b16 %v8473, %v8469
        %v8534 = vpack.c.b16 %v8474, %v8470
        %v8535 = vpack.c.b16 %v8479, %v8475
        %v8536 = vpack.c.b16 %v8480, %v8476
        %v8537 = vpack.c.b16 %v8481, %v8477
        %v8538 = vpack.c.b16 %v8482, %v8478
        %v8539 = vpack.c.b16 %v8487, %v8483
        %v8540 = vpack.c.b16 %v8488, %v8484
        %v8541 = vpack.c.b16 %v8489, %v8485
        %v8542 = vpack.c.b16 %v8490, %v8486
        %v8543 = vpack.c.b16 %v8495, %v8491
        %v8544 = vpack.c.b16 %v8496, %v8492
        %v8545 = vpack.c.b16 %v8497, %v8493
        %v8546 = vpack.c.b16 %v8498, %v8494
        %v8547 = vpack.c.b16 %v8503, %v8499
        %v8548 = vpack.c.b16 %v8504, %v8500
        %v8549 = vpack.c.b16 %v8505, %v8501
        %v8550 = vpack.c.b16 %v8506, %v8502
        %v8551 = vpack.c.b16 %v8511, %v8507
        %v8552 = vpack.c.b16 %v8512, %v8508
        %v8553 = vpack.c.b16 %v8513, %v8509
        %v8554 = vpack.c.b16 %v8514, %v8510
        %v8555 = vpack.c.b16 %v8519, %v8515
        %v8556 = vpack.c.b16 %v8520, %v8516
        %v8557 = vpack.c.b16 %v8521, %v8517
        %v8558 = vpack.c.b16 %v8522, %v8518
        %v8559 = vpack.c.b16 %v8527, %v8523
        %v8560 = vpack.c.b16 %v8528, %v8524
        %v8561 = vpack.c.b16 %v8529, %v8525
        %v8562 = vpack.c.b16 %v8530, %v8526
        %8595 = vmatprep.subr.bf16.mxu0 %v8532
        %8596 = vmatpush1.bf16.msra.mxu0 %v8531
        %8597 = vmatprep.subr.bf16.mxu0 %v8536
        %8598 = vmatpush1.bf16.msra.mxu0 %v8535
        %8599 = vmatprep.subr.bf16.mxu0 %v8540
        %8600 = vmatpush1.bf16.msra.mxu0 %v8539
        %8601 = vmatprep.subr.bf16.mxu0 %v8544
        %8602 = vmatpush1.bf16.msra.mxu0 %v8543
        %8603 = vmatprep.subr.bf16.mxu0 %v8548
        %8604 = vmatpush1.bf16.msra.mxu0 %v8547
        %8605 = vmatprep.subr.bf16.mxu0 %v8552
        %8606 = vmatpush1.bf16.msra.mxu0 %v8551
        %8607 = vmatprep.subr.bf16.mxu0 %v8556
        %8608 = vmatpush1.bf16.msra.mxu0 %v8555
        %8609 = vmatprep.subr.bf16.mxu0 %v8560
        %8610 = vmatpush1.bf16.msra.mxu0 %v8559
        %8611 = vmatprep.subr.bf16.mxu0 0
        %8612 = vmatpush1.bf16.msra.mxu0 0
        %8613 = vmatprep.subr.bf16.mxu0 0
        %8614 = vmatpush1.bf16.msra.mxu0 0
        %8615 = vmatprep.subr.bf16.mxu0 0
        %8616 = vmatpush1.bf16.msra.mxu0 0
        %8617 = vmatprep.subr.bf16.mxu0 0
        %8618 = vmatpush1.bf16.msra.mxu0 0
        %8619 = vmatprep.subr.bf16.mxu0 0
        %8620 = vmatpush1.bf16.msra.mxu0 0
        %8621 = vmatprep.subr.bf16.mxu0 0
        %8622 = vmatpush1.bf16.msra.mxu0 0
        %8623 = vmatprep.subr.bf16.mxu0 0
        %8624 = vmatpush1.bf16.msra.mxu0 0
        %8625 = vmatprep.subr.bf16.mxu0 0
        %8626 = vmatpush1.bf16.msra.mxu0 0
        %8627 = vmatprep.mubr.bf16.mxu0 0
        %8628 = vmatmul.mubr.bf16.gmra.mrb[0].mxu0 %v8365
        %v8629 = vpop.f32.mrb[0].mxu0
        %v8630 = vadd.f32 %v8418, %v8629
        %v8631 = vpop.f32.mrb[0].mxu0
        %v8632 = vadd.f32 %v8422, %v8631
        %v8633 = vpop.f32.mrb[0].mxu0
        %v8634 = vadd.f32 %v8418, %v8633
        %v8635 = vpop.f32.mrb[0].mxu0
        %v8636 = vadd.f32 %v8422, %v8635
        %8637 = vmatprep.mubr.bf16.mxu0 0
        %8638 = vmatmul.mubr.bf16.gmra.mrb[0].mxu0 %v8366
        %v8639 = vpop.f32.mrb[0].mxu0
        %v8640 = vadd.f32 %v8418, %v8639
        %v8641 = vpop.f32.mrb[0].mxu0
        %v8642 = vadd.f32 %v8422, %v8641
        %v8643 = vpop.f32.mrb[0].mxu0
        %v8644 = vadd.f32 %v8418, %v8643
        %v8645 = vpop.f32.mrb[0].mxu0
        %v8646 = vadd.f32 %v8422, %v8645
        %8647 = vmatprep.mubr.bf16.mxu0 0
        %8648 = vmatmul.mubr.bf16.gmra.mrb[0].mxu0 %v8367
        %v8649 = vpop.f32.mrb[0].mxu0
        %v8650 = vadd.f32 %v8418, %v8649
        %v8651 = vpop.f32.mrb[0].mxu0
        %v8652 = vadd.f32 %v8422, %v8651
        %v8653 = vpop.f32.mrb[0].mxu0
        %v8654 = vadd.f32 %v8418, %v8653
        %v8655 = vpop.f32.mrb[0].mxu0
        %v8656 = vadd.f32 %v8422, %v8655
        %8657 = vmatprep.mubr.bf16.mxu0 0
        %8658 = vmatmul.mubr.bf16.gmra.mrb[0].mxu0 %v8368
        %v8659 = vpop.f32.mrb[0].mxu0
        %v8660 = vadd.f32 %v8418, %v8659
        %v8661 = vpop.f32.mrb[0].mxu0
        %v8662 = vadd.f32 %v8422, %v8661
        %v8663 = vpop.f32.mrb[0].mxu0
        %v8664 = vadd.f32 %v8418, %v8663
        %v8665 = vpop.f32.mrb[0].mxu0
        %v8666 = vadd.f32 %v8422, %v8665
        %8667 = vmatprep.mubr.bf16.mxu0 0
        %8668 = vmatmul.mubr.bf16.gmra.mrb[0].mxu0 %v8369
        %v8669 = vpop.f32.mrb[0].mxu0
        %v8670 = vadd.f32 %v8418, %v8669
        %v8671 = vpop.f32.mrb[0].mxu0
        %v8672 = vadd.f32 %v8422, %v8671
        %v8673 = vpop.f32.mrb[0].mxu0
        %v8674 = vadd.f32 %v8418, %v8673
        %v8675 = vpop.f32.mrb[0].mxu0
        %v8676 = vadd.f32 %v8422, %v8675
        %8677 = vmatprep.mubr.bf16.mxu0 0
        %8678 = vmatmul.mubr.bf16.gmra.mrb[0].mxu0 %v8370
        %v8679 = vpop.f32.mrb[0].mxu0
        %v8680 = vadd.f32 %v8418, %v8679
        %v8681 = vpop.f32.mrb[0].mxu0
        %v8682 = vadd.f32 %v8422, %v8681
        %v8683 = vpop.f32.mrb[0].mxu0
        %v8684 = vadd.f32 %v8418, %v8683
        %v8685 = vpop.f32.mrb[0].mxu0
        %v8686 = vadd.f32 %v8422, %v8685
        %8687 = vmatprep.mubr.bf16.mxu0 0
        %8688 = vmatmul.mubr.bf16.gmra.mrb[0].mxu0 %v8371
        %v8689 = vpop.f32.mrb[0].mxu0
        %v8690 = vadd.f32 %v8418, %v8689
        %v8691 = vpop.f32.mrb[0].mxu0
        %v8692 = vadd.f32 %v8422, %v8691
        %v8693 = vpop.f32.mrb[0].mxu0
        %v8694 = vadd.f32 %v8418, %v8693
        %v8695 = vpop.f32.mrb[0].mxu0
        %v8696 = vadd.f32 %v8422, %v8695
        %8697 = vmatprep.mubr.bf16.mxu0 0
        %8698 = vmatmul.mubr.bf16.gmra.mrb[0].mxu0 %v8372
        %v8699 = vpop.f32.mrb[0].mxu0
        %v8700 = vadd.f32 %v8418, %v8699
        %v8701 = vpop.f32.mrb[0].mxu0
        %v8702 = vadd.f32 %v8422, %v8701
        %v8703 = vpop.f32.mrb[0].mxu0
        %v8704 = vadd.f32 %v8418, %v8703
        %v8705 = vpop.f32.mrb[0].mxu0
        %v8706 = vadd.f32 %v8422, %v8705
        %8707 = vmatprep.mubr.bf16.mxu0 0
        %8708 = vmatmul.mubr.bf16.gmra.mrb[0].mxu0 %v8373
        %v8709 = vpop.f32.mrb[0].mxu0
        %v8710 = vadd.f32 %v8418, %v8709
        %v8711 = vpop.f32.mrb[0].mxu0
        %v8712 = vadd.f32 %v8422, %v8711
        %v8713 = vpop.f32.mrb[0].mxu0
        %v8714 = vadd.f32 %v8418, %v8713
        %v8715 = vpop.f32.mrb[0].mxu0
        %v8716 = vadd.f32 %v8422, %v8715
        %8717 = vmatprep.mubr.bf16.mxu0 0
        %8718 = vmatmul.mubr.bf16.gmra.mrb[0].mxu0 %v8374
        %v8719 = vpop.f32.mrb[0].mxu0
        %v8720 = vadd.f32 %v8418, %v8719
        %v8721 = vpop.f32.mrb[0].mxu0
        %v8722 = vadd.f32 %v8422, %v8721
        %v8723 = vpop.f32.mrb[0].mxu0
        %v8724 = vadd.f32 %v8418, %v8723
        %v8725 = vpop.f32.mrb[0].mxu0
        %v8726 = vadd.f32 %v8422, %v8725
        %8727 = vmatprep.mubr.bf16.mxu0 0
        %8728 = vmatmul.mubr.bf16.gmra.mrb[0].mxu0 %v8375
        %v8729 = vpop.f32.mrb[0].mxu0
        %v8730 = vadd.f32 %v8418, %v8729
        %v8731 = vpop.f32.mrb[0].mxu0
        %v8732 = vadd.f32 %v8422, %v8731
        %v8733 = vpop.f32.mrb[0].mxu0
        %v8734 = vadd.f32 %v8418, %v8733
        %v8735 = vpop.f32.mrb[0].mxu0
        %v8736 = vadd.f32 %v8422, %v8735
        %8737 = vmatprep.mubr.bf16.mxu0 0
        %8738 = vmatmul.mubr.bf16.gmra.mrb[0].mxu0 %v8376
        %v8739 = vpop.f32.mrb[0].mxu0
        %v8740 = vadd.f32 %v8418, %v8739
        %v8741 = vpop.f32.mrb[0].mxu0
        %v8742 = vadd.f32 %v8422, %v8741
        %v8743 = vpop.f32.mrb[0].mxu0
        %v8744 = vadd.f32 %v8418, %v8743
        %v8745 = vpop.f32.mrb[0].mxu0
        %v8746 = vadd.f32 %v8422, %v8745
        %8747 = vmatprep.mubr.bf16.mxu0 0
        %8748 = vmatmul.mubr.bf16.gmra.mrb[0].mxu0 %v8377
        %v8749 = vpop.f32.mrb[0].mxu0
        %v8750 = vadd.f32 %v8418, %v8749
        %v8751 = vpop.f32.mrb[0].mxu0
        %v8752 = vadd.f32 %v8422, %v8751
        %v8753 = vpop.f32.mrb[0].mxu0
        %v8754 = vadd.f32 %v8418, %v8753
        %v8755 = vpop.f32.mrb[0].mxu0
        %v8756 = vadd.f32 %v8422, %v8755
        %8757 = vmatprep.mubr.bf16.mxu0 0
        %8758 = vmatmul.mubr.bf16.gmra.mrb[0].mxu0 %v8378
        %v8759 = vpop.f32.mrb[0].mxu0
        %v8760 = vadd.f32 %v8418, %v8759
        %v8761 = vpop.f32.mrb[0].mxu0
        %v8762 = vadd.f32 %v8422, %v8761
        %v8763 = vpop.f32.mrb[0].mxu0
        %v8764 = vadd.f32 %v8418, %v8763
        %v8765 = vpop.f32.mrb[0].mxu0
        %v8766 = vadd.f32 %v8422, %v8765
        %8767 = vmatprep.mubr.bf16.mxu0 0
        %8768 = vmatmul.mubr.bf16.gmra.mrb[0].mxu0 %v8379
        %v8769 = vpop.f32.mrb[0].mxu0
        %v8770 = vadd.f32 %v8418, %v8769
        %v8771 = vpop.f32.mrb[0].mxu0
        %v8772 = vadd.f32 %v8422, %v8771
        %v8773 = vpop.f32.mrb[0].mxu0
        %v8774 = vadd.f32 %v8418, %v8773
        %v8775 = vpop.f32.mrb[0].mxu0
        %v8776 = vadd.f32 %v8422, %v8775
        %8777 = vmatprep.mubr.bf16.mxu0 0
        %8778 = vmatmul.mubr.bf16.gmra.mrb[0].mxu0 %v8380
        %v8779 = vpop.f32.mrb[0].mxu0
        %v8780 = vadd.f32 %v8418, %v8779
        %v8781 = vpop.f32.mrb[0].mxu0
        %v8782 = vadd.f32 %v8422, %v8781
        %v8783 = vpop.f32.mrb[0].mxu0
        %v8784 = vadd.f32 %v8418, %v8783
        %v8785 = vpop.f32.mrb[0].mxu0
        %v8786 = vadd.f32 %v8422, %v8785
        %8787 = vdwg.mxu0
        %8788 = vmatprep.subr.bf16.mxu0 %v8534
        %8789 = vmatpush1.bf16.msra.mxu0 %v8533
        %8790 = vmatprep.subr.bf16.mxu0 %v8538
        %8791 = vmatpush1.bf16.msra.mxu0 %v8537
        %8792 = vmatprep.subr.bf16.mxu0 %v8542
        %8793 = vmatpush1.bf16.msra.mxu0 %v8541
        %8794 = vmatprep.subr.bf16.mxu0 %v8546
        %8795 = vmatpush1.bf16.msra.mxu0 %v8545
        %8796 = vmatprep.subr.bf16.mxu0 %v8550
        %8797 = vmatpush1.bf16.msra.mxu0 %v8549
        %8798 = vmatprep.subr.bf16.mxu0 %v8554
        %8799 = vmatpush1.bf16.msra.mxu0 %v8553
        %8800 = vmatprep.subr.bf16.mxu0 %v8558
        %8801 = vmatpush1.bf16.msra.mxu0 %v8557
        %8802 = vmatprep.subr.bf16.mxu0 %v8562
        %8803 = vmatpush1.bf16.msra.mxu0 %v8561
        %8804 = vmatprep.subr.bf16.mxu0 0
        %8805 = vmatpush1.bf16.msra.mxu0 0
        %8806 = vmatprep.subr.bf16.mxu0 0
        %8807 = vmatpush1.bf16.msra.mxu0 0
        %8808 = vmatprep.subr.bf16.mxu0 0
        %8809 = vmatpush1.bf16.msra.mxu0 0
        %8810 = vmatprep.subr.bf16.mxu0 0
        %8811 = vmatpush1.bf16.msra.mxu0 0
        %8812 = vmatprep.subr.bf16.mxu0 0
        %8813 = vmatpush1.bf16.msra.mxu0 0
        %8814 = vmatprep.subr.bf16.mxu0 0
        %8815 = vmatpush1.bf16.msra.mxu0 0
        %8816 = vmatprep.subr.bf16.mxu0 0
        %8817 = vmatpush1.bf16.msra.mxu0 0
        %8818 = vmatprep.subr.bf16.mxu0 0
        %8819 = vmatpush1.bf16.msra.mxu0 0
        %8820 = vmatprep.mubr.bf16.mxu0 0
        %8821 = vmatmul.mubr.bf16.gmra.mrb[0].mxu0 %v8365
        %v8822 = vpop.f32.mrb[0].mxu0
        %v8823 = vadd.f32 %v8426, %v8822
        %v8824 = vpop.f32.mrb[0].mxu0
        %v8825 = vadd.f32 %v8430, %v8824
        %v8826 = vpop.f32.mrb[0].mxu0
        %v8827 = vadd.f32 %v8426, %v8826
        %v8828 = vpop.f32.mrb[0].mxu0
        %v8829 = vadd.f32 %v8430, %v8828
        %8830 = vmatprep.mubr.bf16.mxu0 0
        %8831 = vmatmul.mubr.bf16.gmra.mrb[0].mxu0 %v8366
        %v8832 = vpop.f32.mrb[0].mxu0
        %v8833 = vadd.f32 %v8426, %v8832
        %v8834 = vpop.f32.mrb[0].mxu0
        %v8835 = vadd.f32 %v8430, %v8834
        %v8836 = vpop.f32.mrb[0].mxu0
        %v8837 = vadd.f32 %v8426, %v8836
        %v8838 = vpop.f32.mrb[0].mxu0
        %v8839 = vadd.f32 %v8430, %v8838
        %8840 = vmatprep.mubr.bf16.mxu0 0
        %8841 = vmatmul.mubr.bf16.gmra.mrb[0].mxu0 %v8367
        %v8842 = vpop.f32.mrb[0].mxu0
        %v8843 = vadd.f32 %v8426, %v8842
        %v8844 = vpop.f32.mrb[0].mxu0
        %v8845 = vadd.f32 %v8430, %v8844
        %v8846 = vpop.f32.mrb[0].mxu0
        %v8847 = vadd.f32 %v8426, %v8846
        %v8848 = vpop.f32.mrb[0].mxu0
        %v8849 = vadd.f32 %v8430, %v8848
        %8850 = vmatprep.mubr.bf16.mxu0 0
        %8851 = vmatmul.mubr.bf16.gmra.mrb[0].mxu0 %v8368
        %v8852 = vpop.f32.mrb[0].mxu0
        %v8853 = vadd.f32 %v8426, %v8852
        %v8854 = vpop.f32.mrb[0].mxu0
        %v8855 = vadd.f32 %v8430, %v8854
        %v8856 = vpop.f32.mrb[0].mxu0
        %v8857 = vadd.f32 %v8426, %v8856
        %v8858 = vpop.f32.mrb[0].mxu0
        %v8859 = vadd.f32 %v8430, %v8858
        %8860 = vmatprep.mubr.bf16.mxu0 0
        %8861 = vmatmul.mubr.bf16.gmra.mrb[0].mxu0 %v8369
        %v8862 = vpop.f32.mrb[0].mxu0
        %v8863 = vadd.f32 %v8426, %v8862
        %v8864 = vpop.f32.mrb[0].mxu0
        %v8865 = vadd.f32 %v8430, %v8864
        %v8866 = vpop.f32.mrb[0].mxu0
        %v8867 = vadd.f32 %v8426, %v8866
        %v8868 = vpop.f32.mrb[0].mxu0
        %v8869 = vadd.f32 %v8430, %v8868
        %8870 = vmatprep.mubr.bf16.mxu0 0
        %8871 = vmatmul.mubr.bf16.gmra.mrb[0].mxu0 %v8370
        %v8872 = vpop.f32.mrb[0].mxu0
        %v8873 = vadd.f32 %v8426, %v8872
        %v8874 = vpop.f32.mrb[0].mxu0
        %v8875 = vadd.f32 %v8430, %v8874
        %v8876 = vpop.f32.mrb[0].mxu0
        %v8877 = vadd.f32 %v8426, %v8876
        %v8878 = vpop.f32.mrb[0].mxu0
        %v8879 = vadd.f32 %v8430, %v8878
        %8880 = vmatprep.mubr.bf16.mxu0 0
        %8881 = vmatmul.mubr.bf16.gmra.mrb[0].mxu0 %v8371
        %v8882 = vpop.f32.mrb[0].mxu0
        %v8883 = vadd.f32 %v8426, %v8882
        %v8884 = vpop.f32.mrb[0].mxu0
        %v8885 = vadd.f32 %v8430, %v8884
        %v8886 = vpop.f32.mrb[0].mxu0
        %v8887 = vadd.f32 %v8426, %v8886
        %v8888 = vpop.f32.mrb[0].mxu0
        %v8889 = vadd.f32 %v8430, %v8888
        %8890 = vmatprep.mubr.bf16.mxu0 0
        %8891 = vmatmul.mubr.bf16.gmra.mrb[0].mxu0 %v8372
        %v8892 = vpop.f32.mrb[0].mxu0
        %v8893 = vadd.f32 %v8426, %v8892
        %v8894 = vpop.f32.mrb[0].mxu0
        %v8895 = vadd.f32 %v8430, %v8894
        %v8896 = vpop.f32.mrb[0].mxu0
        %v8897 = vadd.f32 %v8426, %v8896
        %v8898 = vpop.f32.mrb[0].mxu0
        %v8899 = vadd.f32 %v8430, %v8898
        %8900 = vmatprep.mubr.bf16.mxu0 0
        %8901 = vmatmul.mubr.bf16.gmra.mrb[0].mxu0 %v8373
        %v8902 = vpop.f32.mrb[0].mxu0
        %v8903 = vadd.f32 %v8426, %v8902
        %v8904 = vpop.f32.mrb[0].mxu0
        %v8905 = vadd.f32 %v8430, %v8904
        %v8906 = vpop.f32.mrb[0].mxu0
        %v8907 = vadd.f32 %v8426, %v8906
        %v8908 = vpop.f32.mrb[0].mxu0
        %v8909 = vadd.f32 %v8430, %v8908
        %8910 = vmatprep.mubr.bf16.mxu0 0
        %8911 = vmatmul.mubr.bf16.gmra.mrb[0].mxu0 %v8374
        %v8912 = vpop.f32.mrb[0].mxu0
        %v8913 = vadd.f32 %v8426, %v8912
        %v8914 = vpop.f32.mrb[0].mxu0
        %v8915 = vadd.f32 %v8430, %v8914
        %v8916 = vpop.f32.mrb[0].mxu0
        %v8917 = vadd.f32 %v8426, %v8916
        %v8918 = vpop.f32.mrb[0].mxu0
        %v8919 = vadd.f32 %v8430, %v8918
        %8920 = vmatprep.mubr.bf16.mxu0 0
        %8921 = vmatmul.mubr.bf16.gmra.mrb[0].mxu0 %v8375
        %v8922 = vpop.f32.mrb[0].mxu0
        %v8923 = vadd.f32 %v8426, %v8922
        %v8924 = vpop.f32.mrb[0].mxu0
        %v8925 = vadd.f32 %v8430, %v8924
        %v8926 = vpop.f32.mrb[0].mxu0
        %v8927 = vadd.f32 %v8426, %v8926
        %v8928 = vpop.f32.mrb[0].mxu0
        %v8929 = vadd.f32 %v8430, %v8928
        %8930 = vmatprep.mubr.bf16.mxu0 0
        %8931 = vmatmul.mubr.bf16.gmra.mrb[0].mxu0 %v8376
        %v8932 = vpop.f32.mrb[0].mxu0
        %v8933 = vadd.f32 %v8426, %v8932
        %v8934 = vpop.f32.mrb[0].mxu0
        %v8935 = vadd.f32 %v8430, %v8934
        %v8936 = vpop.f32.mrb[0].mxu0
        %v8937 = vadd.f32 %v8426, %v8936
        %v8938 = vpop.f32.mrb[0].mxu0
        %v8939 = vadd.f32 %v8430, %v8938
        %8940 = vmatprep.mubr.bf16.mxu0 0
        %8941 = vmatmul.mubr.bf16.gmra.mrb[0].mxu0 %v8377
        %v8942 = vpop.f32.mrb[0].mxu0
        %v8943 = vadd.f32 %v8426, %v8942
        %v8944 = vpop.f32.mrb[0].mxu0
        %v8945 = vadd.f32 %v8430, %v8944
        %v8946 = vpop.f32.mrb[0].mxu0
        %v8947 = vadd.f32 %v8426, %v8946
        %v8948 = vpop.f32.mrb[0].mxu0
        %v8949 = vadd.f32 %v8430, %v8948
        %8950 = vmatprep.mubr.bf16.mxu0 0
        %8951 = vmatmul.mubr.bf16.gmra.mrb[0].mxu0 %v8378
        %v8952 = vpop.f32.mrb[0].mxu0
        %v8953 = vadd.f32 %v8426, %v8952
        %v8954 = vpop.f32.mrb[0].mxu0
        %v8955 = vadd.f32 %v8430, %v8954
        %v8956 = vpop.f32.mrb[0].mxu0
        %v8957 = vadd.f32 %v8426, %v8956
        %v8958 = vpop.f32.mrb[0].mxu0
        %v8959 = vadd.f32 %v8430, %v8958
        %8960 = vmatprep.mubr.bf16.mxu0 0
        %8961 = vmatmul.mubr.bf16.gmra.mrb[0].mxu0 %v8379
        %v8962 = vpop.f32.mrb[0].mxu0
        %v8963 = vadd.f32 %v8426, %v8962
        %v8964 = vpop.f32.mrb[0].mxu0
        %v8965 = vadd.f32 %v8430, %v8964
        %v8966 = vpop.f32.mrb[0].mxu0
        %v8967 = vadd.f32 %v8426, %v8966
        %v8968 = vpop.f32.mrb[0].mxu0
        %v8969 = vadd.f32 %v8430, %v8968
        %8970 = vmatprep.mubr.bf16.mxu0 0
        %8971 = vmatmul.mubr.bf16.gmra.mrb[0].mxu0 %v8380
        %v8972 = vpop.f32.mrb[0].mxu0
        %v8973 = vadd.f32 %v8426, %v8972
        %v8974 = vpop.f32.mrb[0].mxu0
        %v8975 = vadd.f32 %v8430, %v8974
        %v8976 = vpop.f32.mrb[0].mxu0
        %v8977 = vadd.f32 %v8426, %v8976
        %v8978 = vpop.f32.mrb[0].mxu0
        %v8979 = vadd.f32 %v8430, %v8978
        %8980 = vdwg.mxu0
        %v8981 = vmul.f32 %v8630, 0.70710677
        %v8982 = vmul.f32 %v8632, 0.70710677
        %v8983 = vmul.f32 %v8823, 0.70710677
        %v8984 = vmul.f32 %v8825, 0.70710677
        %v8985 = vmul.f32 %v8634, 0.70710677
        %v8986 = vmul.f32 %v8636, 0.70710677
        %v8987 = vmul.f32 %v8827, 0.70710677
        %v8988 = vmul.f32 %v8829, 0.70710677
        %v8989 = vmul.f32 %v8640, 0.70710677
        %v8990 = vmul.f32 %v8642, 0.70710677
        %v8991 = vmul.f32 %v8833, 0.70710677
        %v8992 = vmul.f32 %v8835, 0.70710677
        %v8993 = vmul.f32 %v8644, 0.70710677
        %v8994 = vmul.f32 %v8646, 0.70710677
        %v8995 = vmul.f32 %v8837, 0.70710677
        %v8996 = vmul.f32 %v8839, 0.70710677
        %v8997 = vmul.f32 %v8650, 0.70710677
        %v8998 = vmul.f32 %v8652, 0.70710677
        %v8999 = vmul.f32 %v8843, 0.70710677
        %v9000 = vmul.f32 %v8845, 0.70710677
        %v9001 = vmul.f32 %v8654, 0.70710677
        %v9002 = vmul.f32 %v8656, 0.70710677
        %v9003 = vmul.f32 %v8847, 0.70710677
        %v9004 = vmul.f32 %v8849, 0.70710677
        %v9005 = vmul.f32 %v8660, 0.70710677
        %v9006 = vmul.f32 %v8662, 0.70710677
        %v9007 = vmul.f32 %v8853, 0.70710677
        %v9008 = vmul.f32 %v8855, 0.70710677
        %v9009 = vmul.f32 %v8664, 0.70710677
        %v9010 = vmul.f32 %v8666, 0.70710677
        %v9011 = vmul.f32 %v8857, 0.70710677
        %v9012 = vmul.f32 %v8859, 0.70710677
        %v9013 = vmul.f32 %v8670, 0.70710677
        %v9014 = vmul.f32 %v8672, 0.70710677
        %v9015 = vmul.f32 %v8863, 0.70710677
        %v9016 = vmul.f32 %v8865, 0.70710677
        %v9017 = vmul.f32 %v8674, 0.70710677
        %v9018 = vmul.f32 %v8676, 0.70710677
        %v9019 = vmul.f32 %v8867, 0.70710677
        %v9020 = vmul.f32 %v8869, 0.70710677
        %v9021 = vmul.f32 %v8680, 0.70710677
        %v9022 = vmul.f32 %v8682, 0.70710677
        %v9023 = vmul.f32 %v8873, 0.70710677
        %v9024 = vmul.f32 %v8875, 0.70710677
        %v9025 = vmul.f32 %v8684, 0.70710677
        %v9026 = vmul.f32 %v8686, 0.70710677
        %v9027 = vmul.f32 %v8877, 0.70710677
        %v9028 = vmul.f32 %v8879, 0.70710677
        %v9029 = vmul.f32 %v8690, 0.70710677
        %v9030 = vmul.f32 %v8692, 0.70710677
        %v9031 = vmul.f32 %v8883, 0.70710677
        %v9032 = vmul.f32 %v8885, 0.70710677
        %v9033 = vmul.f32 %v8694, 0.70710677
        %v9034 = vmul.f32 %v8696, 0.70710677
        %v9035 = vmul.f32 %v8887, 0.70710677
        %v9036 = vmul.f32 %v8889, 0.70710677
        %v9037 = vmul.f32 %v8700, 0.70710677
        %v9038 = vmul.f32 %v8702, 0.70710677
        %v9039 = vmul.f32 %v8893, 0.70710677
        %v9040 = vmul.f32 %v8895, 0.70710677
        %v9041 = vmul.f32 %v8704, 0.70710677
        %v9042 = vmul.f32 %v8706, 0.70710677
        %v9043 = vmul.f32 %v8897, 0.70710677
        %v9044 = vmul.f32 %v8899, 0.70710677
        %v9045 = vmul.f32 %v8710, 0.70710677
        %v9046 = vmul.f32 %v8712, 0.70710677
        %v9047 = vmul.f32 %v8903, 0.70710677
        %v9048 = vmul.f32 %v8905, 0.70710677
        %v9049 = vmul.f32 %v8714, 0.70710677
        %v9050 = vmul.f32 %v8716, 0.70710677
        %v9051 = vmul.f32 %v8907, 0.70710677
        %v9052 = vmul.f32 %v8909, 0.70710677
        %v9053 = vmul.f32 %v8720, 0.70710677
        %v9054 = vmul.f32 %v8722, 0.70710677
        %v9055 = vmul.f32 %v8913, 0.70710677
        %v9056 = vmul.f32 %v8915, 0.70710677
        %v9057 = vmul.f32 %v8724, 0.70710677
        %v9058 = vmul.f32 %v8726, 0.70710677
        %v9059 = vmul.f32 %v8917, 0.70710677
        %v9060 = vmul.f32 %v8919, 0.70710677
        %v9061 = vmul.f32 %v8730, 0.70710677
        %v9062 = vmul.f32 %v8732, 0.70710677
        %v9063 = vmul.f32 %v8923, 0.70710677
        %v9064 = vmul.f32 %v8925, 0.70710677
        %v9065 = vmul.f32 %v8734, 0.70710677
        %v9066 = vmul.f32 %v8736, 0.70710677
        %v9067 = vmul.f32 %v8927, 0.70710677
        %v9068 = vmul.f32 %v8929, 0.70710677
        %v9069 = vmul.f32 %v8740, 0.70710677
        %v9070 = vmul.f32 %v8742, 0.70710677
        %v9071 = vmul.f32 %v8933, 0.70710677
        %v9072 = vmul.f32 %v8935, 0.70710677
        %v9073 = vmul.f32 %v8744, 0.70710677
        %v9074 = vmul.f32 %v8746, 0.70710677
        %v9075 = vmul.f32 %v8937, 0.70710677
        %v9076 = vmul.f32 %v8939, 0.70710677
        %v9077 = vmul.f32 %v8750, 0.70710677
        %v9078 = vmul.f32 %v8752, 0.70710677
        %v9079 = vmul.f32 %v8943, 0.70710677
        %v9080 = vmul.f32 %v8945, 0.70710677
        %v9081 = vmul.f32 %v8754, 0.70710677
        %v9082 = vmul.f32 %v8756, 0.70710677
        %v9083 = vmul.f32 %v8947, 0.70710677
        %v9084 = vmul.f32 %v8949, 0.70710677
        %v9085 = vmul.f32 %v8760, 0.70710677
        %v9086 = vmul.f32 %v8762, 0.70710677
        %v9087 = vmul.f32 %v8953, 0.70710677
        %v9088 = vmul.f32 %v8955, 0.70710677
        %v9089 = vmul.f32 %v8764, 0.70710677
        %v9090 = vmul.f32 %v8766, 0.70710677
        %v9091 = vmul.f32 %v8957, 0.70710677
        %v9092 = vmul.f32 %v8959, 0.70710677
        %v9093 = vmul.f32 %v8770, 0.70710677
        %v9094 = vmul.f32 %v8772, 0.70710677
        %v9095 = vmul.f32 %v8963, 0.70710677
        %v9096 = vmul.f32 %v8965, 0.70710677
        %v9097 = vmul.f32 %v8774, 0.70710677
        %v9098 = vmul.f32 %v8776, 0.70710677
        %v9099 = vmul.f32 %v8967, 0.70710677
        %v9100 = vmul.f32 %v8969, 0.70710677
        %v9101 = vmul.f32 %v8780, 0.70710677
        %v9102 = vmul.f32 %v8782, 0.70710677
        %v9103 = vmul.f32 %v8973, 0.70710677
        %v9104 = vmul.f32 %v8975, 0.70710677
        %v9105 = vmul.f32 %v8784, 0.70710677
        %v9106 = vmul.f32 %v8786, 0.70710677
        %v9107 = vmul.f32 %v8977, 0.70710677
        %v9108 = vmul.f32 %v8979, 0.70710677
        %v9109 = verf.f32.pop %v8630
        %v9110 = verf.f32.pop %v8632
        %v9111 = verf.f32.pop %v8823
        %v9112 = verf.f32.pop %v8825
        %v9113 = verf.f32.pop %v8634
        %v9114 = verf.f32.pop %v8636
        %v9115 = verf.f32.pop %v8827
        %v9116 = verf.f32.pop %v8829
        %v9117 = verf.f32.pop %v8640
        %v9118 = verf.f32.pop %v8642
        %v9119 = verf.f32.pop %v8833
        %v9120 = verf.f32.pop %v8835
        %v9121 = verf.f32.pop %v8644
        %v9122 = verf.f32.pop %v8646
        %v9123 = verf.f32.pop %v8837
        %v9124 = verf.f32.pop %v8839
        %v9125 = verf.f32.pop %v8650
        %v9126 = verf.f32.pop %v8652
        %v9127 = verf.f32.pop %v8843
        %v9128 = verf.f32.pop %v8845
        %v9129 = verf.f32.pop %v8654
        %v9130 = verf.f32.pop %v8656
        %v9131 = verf.f32.pop %v8847
        %v9132 = verf.f32.pop %v8849
        %v9133 = verf.f32.pop %v8660
        %v9134 = verf.f32.pop %v8662
        %v9135 = verf.f32.pop %v8853
        %v9136 = verf.f32.pop %v8855
        %v9137 = verf.f32.pop %v8664
        %v9138 = verf.f32.pop %v8666
        %v9139 = verf.f32.pop %v8857
        %v9140 = verf.f32.pop %v8859
        %v9141 = verf.f32.pop %v8670
        %v9142 = verf.f32.pop %v8672
        %v9143 = verf.f32.pop %v8863
        %v9144 = verf.f32.pop %v8865
        %v9145 = verf.f32.pop %v8674
        %v9146 = verf.f32.pop %v8676
        %v9147 = verf.f32.pop %v8867
        %v9148 = verf.f32.pop %v8869
        %v9149 = verf.f32.pop %v8680
        %v9150 = verf.f32.pop %v8682
        %v9151 = verf.f32.pop %v8873
        %v9152 = verf.f32.pop %v8875
        %v9153 = verf.f32.pop %v8684
        %v9154 = verf.f32.pop %v8686
        %v9155 = verf.f32.pop %v8877
        %v9156 = verf.f32.pop %v8879
        %v9157 = verf.f32.pop %v8690
        %v9158 = verf.f32.pop %v8692
        %v9159 = verf.f32.pop %v8883
        %v9160 = verf.f32.pop %v8885
        %v9161 = verf.f32.pop %v8694
        %v9162 = verf.f32.pop %v8696
        %v9163 = verf.f32.pop %v8887
        %v9164 = verf.f32.pop %v8889
        %v9165 = verf.f32.pop %v8700
        %v9166 = verf.f32.pop %v8702
        %v9167 = verf.f32.pop %v8893
        %v9168 = verf.f32.pop %v8895
        %v9169 = verf.f32.pop %v8704
        %v9170 = verf.f32.pop %v8706
        %v9171 = verf.f32.pop %v8897
        %v9172 = verf.f32.pop %v8899
        %v9173 = verf.f32.pop %v8710
        %v9174 = verf.f32.pop %v8712
        %v9175 = verf.f32.pop %v8903
        %v9176 = verf.f32.pop %v8905
        %v9177 = verf.f32.pop %v8714
        %v9178 = verf.f32.pop %v8716
        %v9179 = verf.f32.pop %v8907
        %v9180 = verf.f32.pop %v8909
        %v9181 = verf.f32.pop %v8720
        %v9182 = verf.f32.pop %v8722
        %v9183 = verf.f32.pop %v8913
        %v9184 = verf.f32.pop %v8915
        %v9185 = verf.f32.pop %v8724
        %v9186 = verf.f32.pop %v8726
        %v9187 = verf.f32.pop %v8917
        %v9188 = verf.f32.pop %v8919
        %v9189 = verf.f32.pop %v8730
        %v9190 = verf.f32.pop %v8732
        %v9191 = verf.f32.pop %v8923
        %v9192 = verf.f32.pop %v8925
        %v9193 = verf.f32.pop %v8734
        %v9194 = verf.f32.pop %v8736
        %v9195 = verf.f32.pop %v8927
        %v9196 = verf.f32.pop %v8929
        %v9197 = verf.f32.pop %v8740
        %v9198 = verf.f32.pop %v8742
        %v9199 = verf.f32.pop %v8933
        %v9200 = verf.f32.pop %v8935
        %v9201 = verf.f32.pop %v8744
        %v9202 = verf.f32.pop %v8746
        %v9203 = verf.f32.pop %v8937
        %v9204 = verf.f32.pop %v8939
        %v9205 = verf.f32.pop %v8750
        %v9206 = verf.f32.pop %v8752
        %v9207 = verf.f32.pop %v8943
        %v9208 = verf.f32.pop %v8945
        %v9209 = verf.f32.pop %v8754
        %v9210 = verf.f32.pop %v8756
        %v9211 = verf.f32.pop %v8947
        %v9212 = verf.f32.pop %v8949
        %v9213 = verf.f32.pop %v8760
        %v9214 = verf.f32.pop %v8762
        %v9215 = verf.f32.pop %v8953
        %v9216 = verf.f32.pop %v8955
        %v9217 = verf.f32.pop %v8764
        %v9218 = verf.f32.pop %v8766
        %v9219 = verf.f32.pop %v8957
        %v9220 = verf.f32.pop %v8959
        %v9221 = verf.f32.pop %v8770
        %v9222 = verf.f32.pop %v8772
        %v9223 = verf.f32.pop %v8963
        %v9224 = verf.f32.pop %v8965
        %v9225 = verf.f32.pop %v8774
        %v9226 = verf.f32.pop %v8776
        %v9227 = verf.f32.pop %v8967
        %v9228 = verf.f32.pop %v8969
        %v9229 = verf.f32.pop %v8780
        %v9230 = verf.f32.pop %v8782
        %v9231 = verf.f32.pop %v8973
        %v9232 = verf.f32.pop %v8975
        %v9233 = verf.f32.pop %v8784
        %v9234 = verf.f32.pop %v8786
        %v9235 = verf.f32.pop %v8977
        %v9236 = verf.f32.pop %v8979
        %v9237 = vadd.f32 %v9109, 1.0
        %v9238 = vadd.f32 %v9110, 1.0
        %v9239 = vadd.f32 %v9111, 1.0
        %v9240 = vadd.f32 %v9112, 1.0
        %v9241 = vadd.f32 %v9113, 1.0
        %v9242 = vadd.f32 %v9114, 1.0
        %v9243 = vadd.f32 %v9115, 1.0
        %v9244 = vadd.f32 %v9116, 1.0
        %v9245 = vadd.f32 %v9117, 1.0
        %v9246 = vadd.f32 %v9118, 1.0
        %v9247 = vadd.f32 %v9119, 1.0
        %v9248 = vadd.f32 %v9120, 1.0
        %v9249 = vadd.f32 %v9121, 1.0
        %v9250 = vadd.f32 %v9122, 1.0
        %v9251 = vadd.f32 %v9123, 1.0
        %v9252 = vadd.f32 %v9124, 1.0
        %v9253 = vadd.f32 %v9125, 1.0
        %v9254 = vadd.f32 %v9126, 1.0
        %v9255 = vadd.f32 %v9127, 1.0
        %v9256 = vadd.f32 %v9128, 1.0
        %v9257 = vadd.f32 %v9129, 1.0
        %v9258 = vadd.f32 %v9130, 1.0
        %v9259 = vadd.f32 %v9131, 1.0
        %v9260 = vadd.f32 %v9132, 1.0
        %v9261 = vadd.f32 %v9133, 1.0
        %v9262 = vadd.f32 %v9134, 1.0
        %v9263 = vadd.f32 %v9135, 1.0
        %v9264 = vadd.f32 %v9136, 1.0
        %v9265 = vadd.f32 %v9137, 1.0
        %v9266 = vadd.f32 %v9138, 1.0
        %v9267 = vadd.f32 %v9139, 1.0
        %v9268 = vadd.f32 %v9140, 1.0
        %v9269 = vadd.f32 %v9141, 1.0
        %v9270 = vadd.f32 %v9142, 1.0
        %v9271 = vadd.f32 %v9143, 1.0
        %v9272 = vadd.f32 %v9144, 1.0
        %v9273 = vadd.f32 %v9145, 1.0
        %v9274 = vadd.f32 %v9146, 1.0
        %v9275 = vadd.f32 %v9147, 1.0
        %v9276 = vadd.f32 %v9148, 1.0
        %v9277 = vadd.f32 %v9149, 1.0
        %v9278 = vadd.f32 %v9150, 1.0
        %v9279 = vadd.f32 %v9151, 1.0
        %v9280 = vadd.f32 %v9152, 1.0
        %v9281 = vadd.f32 %v9153, 1.0
        %v9282 = vadd.f32 %v9154, 1.0
        %v9283 = vadd.f32 %v9155, 1.0
        %v9284 = vadd.f32 %v9156, 1.0
        %v9285 = vadd.f32 %v9157, 1.0
        %v9286 = vadd.f32 %v9158, 1.0
        %v9287 = vadd.f32 %v9159, 1.0
        %v9288 = vadd.f32 %v9160, 1.0
        %v9289 = vadd.f32 %v9161, 1.0
        %v9290 = vadd.f32 %v9162, 1.0
        %v9291 = vadd.f32 %v9163, 1.0
        %v9292 = vadd.f32 %v9164, 1.0
        %v9293 = vadd.f32 %v9165, 1.0
        %v9294 = vadd.f32 %v9166, 1.0
        %v9295 = vadd.f32 %v9167, 1.0
        %v9296 = vadd.f32 %v9168, 1.0
        %v9297 = vadd.f32 %v9169, 1.0
        %v9298 = vadd.f32 %v9170, 1.0
        %v9299 = vadd.f32 %v9171, 1.0
        %v9300 = vadd.f32 %v9172, 1.0
        %v9301 = vadd.f32 %v9173, 1.0
        %v9302 = vadd.f32 %v9174, 1.0
        %v9303 = vadd.f32 %v9175, 1.0
        %v9304 = vadd.f32 %v9176, 1.0
        %v9305 = vadd.f32 %v9177, 1.0
        %v9306 = vadd.f32 %v9178, 1.0
        %v9307 = vadd.f32 %v9179, 1.0
        %v9308 = vadd.f32 %v9180, 1.0
        %v9309 = vadd.f32 %v9181, 1.0
        %v9310 = vadd.f32 %v9182, 1.0
        %v9311 = vadd.f32 %v9183, 1.0
        %v9312 = vadd.f32 %v9184, 1.0
        %v9313 = vadd.f32 %v9185, 1.0
        %v9314 = vadd.f32 %v9186, 1.0
        %v9315 = vadd.f32 %v9187, 1.0
        %v9316 = vadd.f32 %v9188, 1.0
        %v9317 = vadd.f32 %v9189, 1.0
        %v9318 = vadd.f32 %v9190, 1.0
        %v9319 = vadd.f32 %v9191, 1.0
        %v9320 = vadd.f32 %v9192, 1.0
        %v9321 = vadd.f32 %v9193, 1.0
        %v9322 = vadd.f32 %v9194, 1.0
        %v9323 = vadd.f32 %v9195, 1.0
        %v9324 = vadd.f32 %v9196, 1.0
        %v9325 = vadd.f32 %v9197, 1.0
        %v9326 = vadd.f32 %v9198, 1.0
        %v9327 = vadd.f32 %v9199, 1.0
        %v9328 = vadd.f32 %v9200, 1.0
        %v9329 = vadd.f32 %v9201, 1.0
        %v9330 = vadd.f32 %v9202, 1.0
        %v9331 = vadd.f32 %v9203, 1.0
        %v9332 = vadd.f32 %v9204, 1.0
        %v9333 = vadd.f32 %v9205, 1.0
        %v9334 = vadd.f32 %v9206, 1.0
        %v9335 = vadd.f32 %v9207, 1.0
        %v9336 = vadd.f32 %v9208, 1.0
        %v9337 = vadd.f32 %v9209, 1.0
        %v9338 = vadd.f32 %v9210, 1.0
        %v9339 = vadd.f32 %v9211, 1.0
        %v9340 = vadd.f32 %v9212, 1.0
        %v9341 = vadd.f32 %v9213, 1.0
        %v9342 = vadd.f32 %v9214, 1.0
        %v9343 = vadd.f32 %v9215, 1.0
        %v9344 = vadd.f32 %v9216, 1.0
        %v9345 = vadd.f32 %v9217, 1.0
        %v9346 = vadd.f32 %v9218, 1.0
        %v9347 = vadd.f32 %v9219, 1.0
        %v9348 = vadd.f32 %v9220, 1.0
        %v9349 = vadd.f32 %v9221, 1.0
        %v9350 = vadd.f32 %v9222, 1.0
        %v9351 = vadd.f32 %v9223, 1.0
        %v9352 = vadd.f32 %v9224, 1.0
        %v9353 = vadd.f32 %v9225, 1.0
        %v9354 = vadd.f32 %v9226, 1.0
        %v9355 = vadd.f32 %v9227, 1.0
        %v9356 = vadd.f32 %v9228, 1.0
        %v9357 = vadd.f32 %v9229, 1.0
        %v9358 = vadd.f32 %v9230, 1.0
        %v9359 = vadd.f32 %v9231, 1.0
        %v9360 = vadd.f32 %v9232, 1.0
        %v9361 = vadd.f32 %v9233, 1.0
        %v9362 = vadd.f32 %v9234, 1.0
        %v9363 = vadd.f32 %v9235, 1.0
        %v9364 = vadd.f32 %v9236, 1.0
        %v9365 = vmul.f32 %v8981, %v9237
        %v9366 = vmul.f32 %v8982, %v9238
        %v9367 = vmul.f32 %v8983, %v9239
        %v9368 = vmul.f32 %v8984, %v9240
        %v9369 = vmul.f32 %v8985, %v9241
        %v9370 = vmul.f32 %v8986, %v9242
        %v9371 = vmul.f32 %v8987, %v9243
        %v9372 = vmul.f32 %v8988, %v9244
        %v9373 = vmul.f32 %v8989, %v9245
        %v9374 = vmul.f32 %v8990, %v9246
        %v9375 = vmul.f32 %v8991, %v9247
        %v9376 = vmul.f32 %v8992, %v9248
        %v9377 = vmul.f32 %v8993, %v9249
        %v9378 = vmul.f32 %v8994, %v9250
        %v9379 = vmul.f32 %v8995, %v9251
        %v9380 = vmul.f32 %v8996, %v9252
        %v9381 = vmul.f32 %v8997, %v9253
        %v9382 = vmul.f32 %v8998, %v9254
        %v9383 = vmul.f32 %v8999, %v9255
        %v9384 = vmul.f32 %v9000, %v9256
        %v9385 = vmul.f32 %v9001, %v9257
        %v9386 = vmul.f32 %v9002, %v9258
        %v9387 = vmul.f32 %v9003, %v9259
        %v9388 = vmul.f32 %v9004, %v9260
        %v9389 = vmul.f32 %v9005, %v9261
        %v9390 = vmul.f32 %v9006, %v9262
        %v9391 = vmul.f32 %v9007, %v9263
        %v9392 = vmul.f32 %v9008, %v9264
        %v9393 = vmul.f32 %v9009, %v9265
        %v9394 = vmul.f32 %v9010, %v9266
        %v9395 = vmul.f32 %v9011, %v9267
        %v9396 = vmul.f32 %v9012, %v9268
        %v9397 = vmul.f32 %v9013, %v9269
        %v9398 = vmul.f32 %v9014, %v9270
        %v9399 = vmul.f32 %v9015, %v9271
        %v9400 = vmul.f32 %v9016, %v9272
        %v9401 = vmul.f32 %v9017, %v9273
        %v9402 = vmul.f32 %v9018, %v9274
        %v9403 = vmul.f32 %v9019, %v9275
        %v9404 = vmul.f32 %v9020, %v9276
        %v9405 = vmul.f32 %v9021, %v9277
        %v9406 = vmul.f32 %v9022, %v9278
        %v9407 = vmul.f32 %v9023, %v9279
        %v9408 = vmul.f32 %v9024, %v9280
        %v9409 = vmul.f32 %v9025, %v9281
        %v9410 = vmul.f32 %v9026, %v9282
        %v9411 = vmul.f32 %v9027, %v9283
        %v9412 = vmul.f32 %v9028, %v9284
        %v9413 = vmul.f32 %v9029, %v9285
        %v9414 = vmul.f32 %v9030, %v9286
        %v9415 = vmul.f32 %v9031, %v9287
        %v9416 = vmul.f32 %v9032, %v9288
        %v9417 = vmul.f32 %v9033, %v9289
        %v9418 = vmul.f32 %v9034, %v9290
        %v9419 = vmul.f32 %v9035, %v9291
        %v9420 = vmul.f32 %v9036, %v9292
        %v9421 = vmul.f32 %v9037, %v9293
        %v9422 = vmul.f32 %v9038, %v9294
        %v9423 = vmul.f32 %v9039, %v9295
        %v9424 = vmul.f32 %v9040, %v9296
        %v9425 = vmul.f32 %v9041, %v9297
        %v9426 = vmul.f32 %v9042, %v9298
        %v9427 = vmul.f32 %v9043, %v9299
        %v9428 = vmul.f32 %v9044, %v9300
        %v9429 = vmul.f32 %v9045, %v9301
        %v9430 = vmul.f32 %v9046, %v9302
        %v9431 = vmul.f32 %v9047, %v9303
        %v9432 = vmul.f32 %v9048, %v9304
        %v9433 = vmul.f32 %v9049, %v9305
        %v9434 = vmul.f32 %v9050, %v9306
        %v9435 = vmul.f32 %v9051, %v9307
        %v9436 = vmul.f32 %v9052, %v9308
        %v9437 = vmul.f32 %v9053, %v9309
        %v9438 = vmul.f32 %v9054, %v9310
        %v9439 = vmul.f32 %v9055, %v9311
        %v9440 = vmul.f32 %v9056, %v9312
        %v9441 = vmul.f32 %v9057, %v9313
        %v9442 = vmul.f32 %v9058, %v9314
        %v9443 = vmul.f32 %v9059, %v9315
        %v9444 = vmul.f32 %v9060, %v9316
        %v9445 = vmul.f32 %v9061, %v9317
        %v9446 = vmul.f32 %v9062, %v9318
        %v9447 = vmul.f32 %v9063, %v9319
        %v9448 = vmul.f32 %v9064, %v9320
        %v9449 = vmul.f32 %v9065, %v9321
        %v9450 = vmul.f32 %v9066, %v9322
        %v9451 = vmul.f32 %v9067, %v9323
        %v9452 = vmul.f32 %v9068, %v9324
        %v9453 = vmul.f32 %v9069, %v9325
        %v9454 = vmul.f32 %v9070, %v9326
        %v9455 = vmul.f32 %v9071, %v9327
        %v9456 = vmul.f32 %v9072, %v9328
        %v9457 = vmul.f32 %v9073, %v9329
        %v9458 = vmul.f32 %v9074, %v9330
        %v9459 = vmul.f32 %v9075, %v9331
        %v9460 = vmul.f32 %v9076, %v9332
        %v9461 = vmul.f32 %v9077, %v9333
        %v9462 = vmul.f32 %v9078, %v9334
        %v9463 = vmul.f32 %v9079, %v9335
        %v9464 = vmul.f32 %v9080, %v9336
        %v9465 = vmul.f32 %v9081, %v9337
        %v9466 = vmul.f32 %v9082, %v9338
        %v9467 = vmul.f32 %v9083, %v9339
        %v9468 = vmul.f32 %v9084, %v9340
        %v9469 = vmul.f32 %v9085, %v9341
        %v9470 = vmul.f32 %v9086, %v9342
        %v9471 = vmul.f32 %v9087, %v9343
        %v9472 = vmul.f32 %v9088, %v9344
        %v9473 = vmul.f32 %v9089, %v9345
        %v9474 = vmul.f32 %v9090, %v9346
        %v9475 = vmul.f32 %v9091, %v9347
        %v9476 = vmul.f32 %v9092, %v9348
        %v9477 = vmul.f32 %v9093, %v9349
        %v9478 = vmul.f32 %v9094, %v9350
        %v9479 = vmul.f32 %v9095, %v9351
        %v9480 = vmul.f32 %v9096, %v9352
        %v9481 = vmul.f32 %v9097, %v9353
        %v9482 = vmul.f32 %v9098, %v9354
        %v9483 = vmul.f32 %v9099, %v9355
        %v9484 = vmul.f32 %v9100, %v9356
        %v9485 = vmul.f32 %v9101, %v9357
        %v9486 = vmul.f32 %v9102, %v9358
        %v9487 = vmul.f32 %v9103, %v9359
        %v9488 = vmul.f32 %v9104, %v9360
        %v9489 = vmul.f32 %v9105, %v9361
        %v9490 = vmul.f32 %v9106, %v9362
        %v9491 = vmul.f32 %v9107, %v9363
        %v9492 = vmul.f32 %v9108, %v9364
        %v9493 = vpack.c.bf16 %v9369, %v9365
        %v9494 = vpack.c.bf16 %v9370, %v9366
        %v9495 = vpack.c.bf16 %v9371, %v9367
        %v9496 = vpack.c.bf16 %v9372, %v9368
        %v9497 = vpack.c.bf16 %v9377, %v9373
        %v9498 = vpack.c.bf16 %v9378, %v9374
        %v9499 = vpack.c.bf16 %v9379, %v9375
        %v9500 = vpack.c.bf16 %v9380, %v9376
        %v9501 = vpack.c.bf16 %v9385, %v9381
        %v9502 = vpack.c.bf16 %v9386, %v9382
        %v9503 = vpack.c.bf16 %v9387, %v9383
        %v9504 = vpack.c.bf16 %v9388, %v9384
        %v9505 = vpack.c.bf16 %v9393, %v9389
        %v9506 = vpack.c.bf16 %v9394, %v9390
        %v9507 = vpack.c.bf16 %v9395, %v9391
        %v9508 = vpack.c.bf16 %v9396, %v9392
        %v9509 = vpack.c.bf16 %v9401, %v9397
        %v9510 = vpack.c.bf16 %v9402, %v9398
        %v9511 = vpack.c.bf16 %v9403, %v9399
        %v9512 = vpack.c.bf16 %v9404, %v9400
        %v9513 = vpack.c.bf16 %v9409, %v9405
        %v9514 = vpack.c.bf16 %v9410, %v9406
        %v9515 = vpack.c.bf16 %v9411, %v9407
        %v9516 = vpack.c.bf16 %v9412, %v9408
        %v9517 = vpack.c.bf16 %v9417, %v9413
        %v9518 = vpack.c.bf16 %v9418, %v9414
        %v9519 = vpack.c.bf16 %v9419, %v9415
        %v9520 = vpack.c.bf16 %v9420, %v9416
        %v9521 = vpack.c.bf16 %v9425, %v9421
        %v9522 = vpack.c.bf16 %v9426, %v9422
        %v9523 = vpack.c.bf16 %v9427, %v9423
        %v9524 = vpack.c.bf16 %v9428, %v9424
        %v9525 = vpack.c.bf16 %v9433, %v9429
        %v9526 = vpack.c.bf16 %v9434, %v9430
        %v9527 = vpack.c.bf16 %v9435, %v9431
        %v9528 = vpack.c.bf16 %v9436, %v9432
        %v9529 = vpack.c.bf16 %v9441, %v9437
        %v9530 = vpack.c.bf16 %v9442, %v9438
        %v9531 = vpack.c.bf16 %v9443, %v9439
        %v9532 = vpack.c.bf16 %v9444, %v9440
        %v9533 = vpack.c.bf16 %v9449, %v9445
        %v9534 = vpack.c.bf16 %v9450, %v9446
        %v9535 = vpack.c.bf16 %v9451, %v9447
        %v9536 = vpack.c.bf16 %v9452, %v9448
        %v9537 = vpack.c.bf16 %v9457, %v9453
        %v9538 = vpack.c.bf16 %v9458, %v9454
        %v9539 = vpack.c.bf16 %v9459, %v9455
        %v9540 = vpack.c.bf16 %v9460, %v9456
        %v9541 = vpack.c.bf16 %v9465, %v9461
        %v9542 = vpack.c.bf16 %v9466, %v9462
        %v9543 = vpack.c.bf16 %v9467, %v9463
        %v9544 = vpack.c.bf16 %v9468, %v9464
        %v9545 = vpack.c.bf16 %v9473, %v9469
        %v9546 = vpack.c.bf16 %v9474, %v9470
        %v9547 = vpack.c.bf16 %v9475, %v9471
        %v9548 = vpack.c.bf16 %v9476, %v9472
        %v9549 = vpack.c.bf16 %v9481, %v9477
        %v9550 = vpack.c.bf16 %v9482, %v9478
        %v9551 = vpack.c.bf16 %v9483, %v9479
        %v9552 = vpack.c.bf16 %v9484, %v9480
        %v9553 = vpack.c.bf16 %v9489, %v9485
        %v9554 = vpack.c.bf16 %v9490, %v9486
        %v9555 = vpack.c.bf16 %v9491, %v9487
        %v9556 = vpack.c.bf16 %v9492, %v9488
        %v9557 = vld [vmem:[#allocation13] sm:$0xf]
        %v9558 = vld [vmem:[#allocation13 + $0x4] sm:$0xf]
        %v9559 = vld [vmem:[#allocation13 + $0x8] sm:$0xf]
        %v9560 = vld [vmem:[#allocation13 + $0xc] sm:$0xf]
        %v9561 = vld [vmem:[#allocation13 + $0x10] sm:$0xf]
        %v9562 = vld [vmem:[#allocation13 + $0x14] sm:$0xf]
        %v9563 = vld [vmem:[#allocation13 + $0x18] sm:$0xf]
        %v9564 = vld [vmem:[#allocation13 + $0x1c] sm:$0xf]
        %v9565 = vld [vmem:[#allocation13 + $0x20] sm:$0xf]
        %v9566 = vld [vmem:[#allocation13 + $0x24] sm:$0xf]
        %v9567 = vld [vmem:[#allocation13 + $0x28] sm:$0xf]
        %v9568 = vld [vmem:[#allocation13 + $0x2c] sm:$0xf]
        %v9569 = vld [vmem:[#allocation13 + $0x30] sm:$0xf]
        %v9570 = vld [vmem:[#allocation13 + $0x34] sm:$0xf]
        %v9571 = vld [vmem:[#allocation13 + $0x38] sm:$0xf]
        %v9572 = vld [vmem:[#allocation13 + $0x3c] sm:$0xf]
        %v9573 = vld [vmem:[#allocation13 + $0x40] sm:$0xf]
        %v9574 = vld [vmem:[#allocation13 + $0x44] sm:$0xf]
        %v9575 = vld [vmem:[#allocation13 + $0x48] sm:$0xf]
        %v9576 = vld [vmem:[#allocation13 + $0x4c] sm:$0xf]
        %v9577 = vld [vmem:[#allocation13 + $0x50] sm:$0xf]
        %v9578 = vld [vmem:[#allocation13 + $0x54] sm:$0xf]
        %v9579 = vld [vmem:[#allocation13 + $0x58] sm:$0xf]
        %v9580 = vld [vmem:[#allocation13 + $0x5c] sm:$0xf]
        %v9581 = vld [vmem:[#allocation13 + $0x60] sm:$0xf]
        %v9582 = vld [vmem:[#allocation13 + $0x64] sm:$0xf]
        %v9583 = vld [vmem:[#allocation13 + $0x68] sm:$0xf]
        %v9584 = vld [vmem:[#allocation13 + $0x6c] sm:$0xf]
        %v9585 = vld [vmem:[#allocation13 + $0x70] sm:$0xf]
        %v9586 = vld [vmem:[#allocation13 + $0x74] sm:$0xf]
        %v9587 = vld [vmem:[#allocation13 + $0x78] sm:$0xf]
        %v9588 = vld [vmem:[#allocation13 + $0x7c] sm:$0xf]
        %v9589 = vld [vmem:[#allocation13 + $0x80] sm:$0xf]
        %v9590 = vld [vmem:[#allocation13 + $0x84] sm:$0xf]
        %v9591 = vld [vmem:[#allocation13 + $0x88] sm:$0xf]
        %v9592 = vld [vmem:[#allocation13 + $0x8c] sm:$0xf]
        %v9593 = vld [vmem:[#allocation13 + $0x90] sm:$0xf]
        %v9594 = vld [vmem:[#allocation13 + $0x94] sm:$0xf]
        %v9595 = vld [vmem:[#allocation13 + $0x98] sm:$0xf]
        %v9596 = vld [vmem:[#allocation13 + $0x9c] sm:$0xf]
        %v9597 = vld [vmem:[#allocation13 + $0xa0] sm:$0xf]
        %v9598 = vld [vmem:[#allocation13 + $0xa4] sm:$0xf]
        %v9599 = vld [vmem:[#allocation13 + $0xa8] sm:$0xf]
        %v9600 = vld [vmem:[#allocation13 + $0xac] sm:$0xf]
        %v9601 = vld [vmem:[#allocation13 + $0xb0] sm:$0xf]
        %v9602 = vld [vmem:[#allocation13 + $0xb4] sm:$0xf]
        %v9603 = vld [vmem:[#allocation13 + $0xb8] sm:$0xf]
        %v9604 = vld [vmem:[#allocation13 + $0xbc] sm:$0xf]
        %v9605 = vld [vmem:[#allocation13 + $0xc0] sm:$0xf]
        %v9606 = vld [vmem:[#allocation13 + $0xc4] sm:$0xf]
        %v9607 = vld [vmem:[#allocation13 + $0xc8] sm:$0xf]
        %v9608 = vld [vmem:[#allocation13 + $0xcc] sm:$0xf]
        %v9609 = vld [vmem:[#allocation13 + $0xd0] sm:$0xf]
        %v9610 = vld [vmem:[#allocation13 + $0xd4] sm:$0xf]
        %v9611 = vld [vmem:[#allocation13 + $0xd8] sm:$0xf]
        %v9612 = vld [vmem:[#allocation13 + $0xdc] sm:$0xf]
        %v9613 = vld [vmem:[#allocation13 + $0xe0] sm:$0xf]
        %v9614 = vld [vmem:[#allocation13 + $0xe4] sm:$0xf]
        %v9615 = vld [vmem:[#allocation13 + $0xe8] sm:$0xf]
        %v9616 = vld [vmem:[#allocation13 + $0xec] sm:$0xf]
        %v9617 = vld [vmem:[#allocation13 + $0xf0] sm:$0xf]
        %v9618 = vld [vmem:[#allocation13 + $0xf4] sm:$0xf]
        %v9619 = vld [vmem:[#allocation13 + $0xf8] sm:$0xf]
        %v9620 = vld [vmem:[#allocation13 + $0xfc] sm:$0xf]
        %v9621 = vld [vmem:[%s12] sm:$0x1]
        %v9623 = vlaneseq
        %v9624 = vshrl.u32 %v9623, 7
        %v9625 = vsub.s32 0, %v9624
        %v9626 = vrot.slane %v9621, %v9625
        %v9692 = vunpack.c.l.b16 %v9557
        %v9693 = vunpack.c.l.b16 %v9558
        %v9694 = vunpack.c.l.b16 %v9559
        %v9695 = vunpack.c.l.b16 %v9560
        %v9696 = vunpack.c.l.b16 %v9561
        %v9697 = vunpack.c.l.b16 %v9562
        %v9698 = vunpack.c.l.b16 %v9563
        %v9699 = vunpack.c.l.b16 %v9564
        %v9700 = vunpack.c.l.b16 %v9565
        %v9701 = vunpack.c.l.b16 %v9566
        %v9702 = vunpack.c.l.b16 %v9567
        %v9703 = vunpack.c.l.b16 %v9568
        %v9704 = vunpack.c.l.b16 %v9569
        %v9705 = vunpack.c.l.b16 %v9570
        %v9706 = vunpack.c.l.b16 %v9571
        %v9707 = vunpack.c.l.b16 %v9572
        %v9708 = vunpack.c.l.b16 %v9573
        %v9709 = vunpack.c.l.b16 %v9574
        %v9710 = vunpack.c.l.b16 %v9575
        %v9711 = vunpack.c.l.b16 %v9576
        %v9712 = vunpack.c.l.b16 %v9577
        %v9713 = vunpack.c.l.b16 %v9578
        %v9714 = vunpack.c.l.b16 %v9579
        %v9715 = vunpack.c.l.b16 %v9580
        %v9716 = vunpack.c.l.b16 %v9581
        %v9717 = vunpack.c.l.b16 %v9582
        %v9718 = vunpack.c.l.b16 %v9583
        %v9719 = vunpack.c.l.b16 %v9584
        %v9720 = vunpack.c.l.b16 %v9585
        %v9721 = vunpack.c.l.b16 %v9586
        %v9722 = vunpack.c.l.b16 %v9587
        %v9723 = vunpack.c.l.b16 %v9588
        %v9724 = vunpack.c.l.b16 %v9589
        %v9725 = vunpack.c.l.b16 %v9590
        %v9726 = vunpack.c.l.b16 %v9591
        %v9727 = vunpack.c.l.b16 %v9592
        %v9728 = vunpack.c.l.b16 %v9593
        %v9729 = vunpack.c.l.b16 %v9594
        %v9730 = vunpack.c.l.b16 %v9595
        %v9731 = vunpack.c.l.b16 %v9596
        %v9732 = vunpack.c.l.b16 %v9597
        %v9733 = vunpack.c.l.b16 %v9598
        %v9734 = vunpack.c.l.b16 %v9599
        %v9735 = vunpack.c.l.b16 %v9600
        %v9736 = vunpack.c.l.b16 %v9601
        %v9737 = vunpack.c.l.b16 %v9602
        %v9738 = vunpack.c.l.b16 %v9603
        %v9739 = vunpack.c.l.b16 %v9604
        %v9740 = vunpack.c.l.b16 %v9605
        %v9741 = vunpack.c.l.b16 %v9606
        %v9742 = vunpack.c.l.b16 %v9607
        %v9743 = vunpack.c.l.b16 %v9608
        %v9744 = vunpack.c.l.b16 %v9609
        %v9745 = vunpack.c.l.b16 %v9610
        %v9746 = vunpack.c.l.b16 %v9611
        %v9747 = vunpack.c.l.b16 %v9612
        %v9748 = vunpack.c.l.b16 %v9613
        %v9749 = vunpack.c.l.b16 %v9614
        %v9750 = vunpack.c.l.b16 %v9615
        %v9751 = vunpack.c.l.b16 %v9616
        %v9752 = vunpack.c.l.b16 %v9617
        %v9753 = vunpack.c.l.b16 %v9618
        %v9754 = vunpack.c.l.b16 %v9619
        %v9755 = vunpack.c.l.b16 %v9620
        %v9756 = vpack.c.b16 %v9693, %v9692
        %v9757 = vpack.c.b16 %v9695, %v9694
        %v9758 = vpack.c.b16 %v9697, %v9696
        %v9759 = vpack.c.b16 %v9699, %v9698
        %v9760 = vpack.c.b16 %v9701, %v9700
        %v9761 = vpack.c.b16 %v9703, %v9702
        %v9762 = vpack.c.b16 %v9705, %v9704
        %v9763 = vpack.c.b16 %v9707, %v9706
        %v9764 = vpack.c.b16 %v9709, %v9708
        %v9765 = vpack.c.b16 %v9711, %v9710
        %v9766 = vpack.c.b16 %v9713, %v9712
        %v9767 = vpack.c.b16 %v9715, %v9714
        %v9768 = vpack.c.b16 %v9717, %v9716
        %v9769 = vpack.c.b16 %v9719, %v9718
        %v9770 = vpack.c.b16 %v9721, %v9720
        %v9771 = vpack.c.b16 %v9723, %v9722
        %v9772 = vpack.c.b16 %v9725, %v9724
        %v9773 = vpack.c.b16 %v9727, %v9726
        %v9774 = vpack.c.b16 %v9729, %v9728
        %v9775 = vpack.c.b16 %v9731, %v9730
        %v9776 = vpack.c.b16 %v9733, %v9732
        %v9777 = vpack.c.b16 %v9735, %v9734
        %v9778 = vpack.c.b16 %v9737, %v9736
        %v9779 = vpack.c.b16 %v9739, %v9738
        %v9780 = vpack.c.b16 %v9741, %v9740
        %v9781 = vpack.c.b16 %v9743, %v9742
        %v9782 = vpack.c.b16 %v9745, %v9744
        %v9783 = vpack.c.b16 %v9747, %v9746
        %v9784 = vpack.c.b16 %v9749, %v9748
        %v9785 = vpack.c.b16 %v9751, %v9750
        %v9786 = vpack.c.b16 %v9753, %v9752
        %v9787 = vpack.c.b16 %v9755, %v9754
        %9820 = vmatprep.subr.bf16.mxu0 0
        %9821 = vmatpush1.bf16.msra.mxu0 %v9756
        %9822 = vmatprep.subr.bf16.mxu0 0
        %9823 = vmatpush1.bf16.msra.mxu0 %v9757
        %9824 = vmatprep.subr.bf16.mxu0 0
        %9825 = vmatpush1.bf16.msra.mxu0 %v9758
        %9826 = vmatprep.subr.bf16.mxu0 0
        %9827 = vmatpush1.bf16.msra.mxu0 %v9759
        %9828 = vmatprep.subr.bf16.mxu0 0
        %9829 = vmatpush1.bf16.msra.mxu0 %v9760
        %9830 = vmatprep.subr.bf16.mxu0 0
        %9831 = vmatpush1.bf16.msra.mxu0 %v9761
        %9832 = vmatprep.subr.bf16.mxu0 0
        %9833 = vmatpush1.bf16.msra.mxu0 %v9762
        %9834 = vmatprep.subr.bf16.mxu0 0
        %9835 = vmatpush1.bf16.msra.mxu0 %v9763
        %9836 = vmatprep.subr.bf16.mxu0 0
        %9837 = vmatpush1.bf16.msra.mxu0 %v9764
        %9838 = vmatprep.subr.bf16.mxu0 0
        %9839 = vmatpush1.bf16.msra.mxu0 %v9765
        %9840 = vmatprep.subr.bf16.mxu0 0
        %9841 = vmatpush1.bf16.msra.mxu0 %v9766
        %9842 = vmatprep.subr.bf16.mxu0 0
        %9843 = vmatpush1.bf16.msra.mxu0 %v9767
        %9844 = vmatprep.subr.bf16.mxu0 0
        %9845 = vmatpush1.bf16.msra.mxu0 %v9768
        %9846 = vmatprep.subr.bf16.mxu0 0
        %9847 = vmatpush1.bf16.msra.mxu0 %v9769
        %9848 = vmatprep.subr.bf16.mxu0 0
        %9849 = vmatpush1.bf16.msra.mxu0 %v9770
        %9850 = vmatprep.subr.bf16.mxu0 0
        %9851 = vmatpush1.bf16.msra.mxu0 %v9771
        %9852 = vmatprep.mubr.bf16.mxu0 %v9494
        %9853 = vmatmul.mubr.bf16.gmra.mrb[0].mxu0 %v9493
        %v9854 = vpop.f32.mrb[0].mxu0
        %v9855 = vadd.f32 %v9626, %v9854
        %v9856 = vpop.f32.mrb[0].mxu0
        %v9857 = vpop.f32.mrb[0].mxu0
        %v9858 = vadd.f32 %v9626, %v9857
        %v9859 = vpop.f32.mrb[0].mxu0
        %9860 = vmatprep.mubr.bf16.mxu0 %v9498
        %9861 = vmatmul.mubr.bf16.gmra.mrb[0].mxu0 %v9497
        %v9862 = vpop.f32.mrb[0].mxu0
        %v9863 = vadd.f32 %v9626, %v9862
        %v9864 = vpop.f32.mrb[0].mxu0
        %v9865 = vpop.f32.mrb[0].mxu0
        %v9866 = vadd.f32 %v9626, %v9865
        %v9867 = vpop.f32.mrb[0].mxu0
        %9868 = vmatprep.mubr.bf16.mxu0 %v9502
        %9869 = vmatmul.mubr.bf16.gmra.mrb[0].mxu0 %v9501
        %v9870 = vpop.f32.mrb[0].mxu0
        %v9871 = vadd.f32 %v9626, %v9870
        %v9872 = vpop.f32.mrb[0].mxu0
        %v9873 = vpop.f32.mrb[0].mxu0
        %v9874 = vadd.f32 %v9626, %v9873
        %v9875 = vpop.f32.mrb[0].mxu0
        %9876 = vmatprep.mubr.bf16.mxu0 %v9506
        %9877 = vmatmul.mubr.bf16.gmra.mrb[0].mxu0 %v9505
        %v9878 = vpop.f32.mrb[0].mxu0
        %v9879 = vadd.f32 %v9626, %v9878
        %v9880 = vpop.f32.mrb[0].mxu0
        %v9881 = vpop.f32.mrb[0].mxu0
        %v9882 = vadd.f32 %v9626, %v9881
        %v9883 = vpop.f32.mrb[0].mxu0
        %9884 = vmatprep.mubr.bf16.mxu0 %v9510
        %9885 = vmatmul.mubr.bf16.gmra.mrb[0].mxu0 %v9509
        %v9886 = vpop.f32.mrb[0].mxu0
        %v9887 = vadd.f32 %v9626, %v9886
        %v9888 = vpop.f32.mrb[0].mxu0
        %v9889 = vpop.f32.mrb[0].mxu0
        %v9890 = vadd.f32 %v9626, %v9889
        %v9891 = vpop.f32.mrb[0].mxu0
        %9892 = vmatprep.mubr.bf16.mxu0 %v9514
        %9893 = vmatmul.mubr.bf16.gmra.mrb[0].mxu0 %v9513
        %v9894 = vpop.f32.mrb[0].mxu0
        %v9895 = vadd.f32 %v9626, %v9894
        %v9896 = vpop.f32.mrb[0].mxu0
        %v9897 = vpop.f32.mrb[0].mxu0
        %v9898 = vadd.f32 %v9626, %v9897
        %v9899 = vpop.f32.mrb[0].mxu0
        %9900 = vmatprep.mubr.bf16.mxu0 %v9518
        %9901 = vmatmul.mubr.bf16.gmra.mrb[0].mxu0 %v9517
        %v9902 = vpop.f32.mrb[0].mxu0
        %v9903 = vadd.f32 %v9626, %v9902
        %v9904 = vpop.f32.mrb[0].mxu0
        %v9905 = vpop.f32.mrb[0].mxu0
        %v9906 = vadd.f32 %v9626, %v9905
        %v9907 = vpop.f32.mrb[0].mxu0
        %9908 = vmatprep.mubr.bf16.mxu0 %v9522
        %9909 = vmatmul.mubr.bf16.gmra.mrb[0].mxu0 %v9521
        %v9910 = vpop.f32.mrb[0].mxu0
        %v9911 = vadd.f32 %v9626, %v9910
        %v9912 = vpop.f32.mrb[0].mxu0
        %v9913 = vpop.f32.mrb[0].mxu0
        %v9914 = vadd.f32 %v9626, %v9913
        %v9915 = vpop.f32.mrb[0].mxu0
        %9916 = vmatprep.mubr.bf16.mxu0 %v9526
        %9917 = vmatmul.mubr.bf16.gmra.mrb[0].mxu0 %v9525
        %v9918 = vpop.f32.mrb[0].mxu0
        %v9919 = vadd.f32 %v9626, %v9918
        %v9920 = vpop.f32.mrb[0].mxu0
        %v9921 = vpop.f32.mrb[0].mxu0
        %v9922 = vadd.f32 %v9626, %v9921
        %v9923 = vpop.f32.mrb[0].mxu0
        %9924 = vmatprep.mubr.bf16.mxu0 %v9530
        %9925 = vmatmul.mubr.bf16.gmra.mrb[0].mxu0 %v9529
        %v9926 = vpop.f32.mrb[0].mxu0
        %v9927 = vadd.f32 %v9626, %v9926
        %v9928 = vpop.f32.mrb[0].mxu0
        %v9929 = vpop.f32.mrb[0].mxu0
        %v9930 = vadd.f32 %v9626, %v9929
        %v9931 = vpop.f32.mrb[0].mxu0
        %9932 = vmatprep.mubr.bf16.mxu0 %v9534
        %9933 = vmatmul.mubr.bf16.gmra.mrb[0].mxu0 %v9533
        %v9934 = vpop.f32.mrb[0].mxu0
        %v9935 = vadd.f32 %v9626, %v9934
        %v9936 = vpop.f32.mrb[0].mxu0
        %v9937 = vpop.f32.mrb[0].mxu0
        %v9938 = vadd.f32 %v9626, %v9937
        %v9939 = vpop.f32.mrb[0].mxu0
        %9940 = vmatprep.mubr.bf16.mxu0 %v9538
        %9941 = vmatmul.mubr.bf16.gmra.mrb[0].mxu0 %v9537
        %v9942 = vpop.f32.mrb[0].mxu0
        %v9943 = vadd.f32 %v9626, %v9942
        %v9944 = vpop.f32.mrb[0].mxu0
        %v9945 = vpop.f32.mrb[0].mxu0
        %v9946 = vadd.f32 %v9626, %v9945
        %v9947 = vpop.f32.mrb[0].mxu0
        %9948 = vmatprep.mubr.bf16.mxu0 %v9542
        %9949 = vmatmul.mubr.bf16.gmra.mrb[0].mxu0 %v9541
        %v9950 = vpop.f32.mrb[0].mxu0
        %v9951 = vadd.f32 %v9626, %v9950
        %v9952 = vpop.f32.mrb[0].mxu0
        %v9953 = vpop.f32.mrb[0].mxu0
        %v9954 = vadd.f32 %v9626, %v9953
        %v9955 = vpop.f32.mrb[0].mxu0
        %9956 = vmatprep.mubr.bf16.mxu0 %v9546
        %9957 = vmatmul.mubr.bf16.gmra.mrb[0].mxu0 %v9545
        %v9958 = vpop.f32.mrb[0].mxu0
        %v9959 = vadd.f32 %v9626, %v9958
        %v9960 = vpop.f32.mrb[0].mxu0
        %v9961 = vpop.f32.mrb[0].mxu0
        %v9962 = vadd.f32 %v9626, %v9961
        %v9963 = vpop.f32.mrb[0].mxu0
        %9964 = vmatprep.mubr.bf16.mxu0 %v9550
        %9965 = vmatmul.mubr.bf16.gmra.mrb[0].mxu0 %v9549
        %v9966 = vpop.f32.mrb[0].mxu0
        %v9967 = vadd.f32 %v9626, %v9966
        %v9968 = vpop.f32.mrb[0].mxu0
        %v9969 = vpop.f32.mrb[0].mxu0
        %v9970 = vadd.f32 %v9626, %v9969
        %v9971 = vpop.f32.mrb[0].mxu0
        %9972 = vmatprep.mubr.bf16.mxu0 %v9554
        %9973 = vmatmul.mubr.bf16.gmra.mrb[0].mxu0 %v9553
        %v9974 = vpop.f32.mrb[0].mxu0
        %v9975 = vadd.f32 %v9626, %v9974
        %v9976 = vpop.f32.mrb[0].mxu0
        %v9977 = vpop.f32.mrb[0].mxu0
        %v9978 = vadd.f32 %v9626, %v9977
        %v9979 = vpop.f32.mrb[0].mxu0
        %9980 = vdwg.mxu0
        %9981 = vmatprep.subr.bf16.mxu0 0
        %9982 = vmatpush1.bf16.msra.mxu0 %v9772
        %9983 = vmatprep.subr.bf16.mxu0 0
        %9984 = vmatpush1.bf16.msra.mxu0 %v9773
        %9985 = vmatprep.subr.bf16.mxu0 0
        %9986 = vmatpush1.bf16.msra.mxu0 %v9774
        %9987 = vmatprep.subr.bf16.mxu0 0
        %9988 = vmatpush1.bf16.msra.mxu0 %v9775
        %9989 = vmatprep.subr.bf16.mxu0 0
        %9990 = vmatpush1.bf16.msra.mxu0 %v9776
        %9991 = vmatprep.subr.bf16.mxu0 0
        %9992 = vmatpush1.bf16.msra.mxu0 %v9777
        %9993 = vmatprep.subr.bf16.mxu0 0
        %9994 = vmatpush1.bf16.msra.mxu0 %v9778
        %9995 = vmatprep.subr.bf16.mxu0 0
        %9996 = vmatpush1.bf16.msra.mxu0 %v9779
        %9997 = vmatprep.subr.bf16.mxu0 0
        %9998 = vmatpush1.bf16.msra.mxu0 %v9780
        %9999 = vmatprep.subr.bf16.mxu0 0
        %10000 = vmatpush1.bf16.msra.mxu0 %v9781
        %10001 = vmatprep.subr.bf16.mxu0 0
        %10002 = vmatpush1.bf16.msra.mxu0 %v9782
        %10003 = vmatprep.subr.bf16.mxu0 0
        %10004 = vmatpush1.bf16.msra.mxu0 %v9783
        %10005 = vmatprep.subr.bf16.mxu0 0
        %10006 = vmatpush1.bf16.msra.mxu0 %v9784
        %10007 = vmatprep.subr.bf16.mxu0 0
        %10008 = vmatpush1.bf16.msra.mxu0 %v9785
        %10009 = vmatprep.subr.bf16.mxu0 0
        %10010 = vmatpush1.bf16.msra.mxu0 %v9786
        %10011 = vmatprep.subr.bf16.mxu0 0
        %10012 = vmatpush1.bf16.msra.mxu0 %v9787
        %10013 = vmatprep.mubr.bf16.mxu0 %v9496
        %10014 = vmatmul.mubr.bf16.gmra.mrb[0].mxu0 %v9495
        %v10015 = vpop.f32.mrb[0].mxu0
        %v10016 = vadd.f32 %v9855, %v10015
        %v10017 = vpop.f32.mrb[0].mxu0
        %v10018 = vpop.f32.mrb[0].mxu0
        %v10019 = vadd.f32 %v9858, %v10018
        %v10020 = vpop.f32.mrb[0].mxu0
        %10021 = vmatprep.mubr.bf16.mxu0 %v9500
        %10022 = vmatmul.mubr.bf16.gmra.mrb[0].mxu0 %v9499
        %v10023 = vpop.f32.mrb[0].mxu0
        %v10024 = vadd.f32 %v9863, %v10023
        %v10025 = vpop.f32.mrb[0].mxu0
        %v10026 = vpop.f32.mrb[0].mxu0
        %v10027 = vadd.f32 %v9866, %v10026
        %v10028 = vpop.f32.mrb[0].mxu0
        %10029 = vmatprep.mubr.bf16.mxu0 %v9504
        %10030 = vmatmul.mubr.bf16.gmra.mrb[0].mxu0 %v9503
        %v10031 = vpop.f32.mrb[0].mxu0
        %v10032 = vadd.f32 %v9871, %v10031
        %v10033 = vpop.f32.mrb[0].mxu0
        %v10034 = vpop.f32.mrb[0].mxu0
        %v10035 = vadd.f32 %v9874, %v10034
        %v10036 = vpop.f32.mrb[0].mxu0
        %10037 = vmatprep.mubr.bf16.mxu0 %v9508
        %10038 = vmatmul.mubr.bf16.gmra.mrb[0].mxu0 %v9507
        %v10039 = vpop.f32.mrb[0].mxu0
        %v10040 = vadd.f32 %v9879, %v10039
        %v10041 = vpop.f32.mrb[0].mxu0
        %v10042 = vpop.f32.mrb[0].mxu0
        %v10043 = vadd.f32 %v9882, %v10042
        %v10044 = vpop.f32.mrb[0].mxu0
        %10045 = vmatprep.mubr.bf16.mxu0 %v9512
        %10046 = vmatmul.mubr.bf16.gmra.mrb[0].mxu0 %v9511
        %v10047 = vpop.f32.mrb[0].mxu0
        %v10048 = vadd.f32 %v9887, %v10047
        %v10049 = vpop.f32.mrb[0].mxu0
        %v10050 = vpop.f32.mrb[0].mxu0
        %v10051 = vadd.f32 %v9890, %v10050
        %v10052 = vpop.f32.mrb[0].mxu0
        %10053 = vmatprep.mubr.bf16.mxu0 %v9516
        %10054 = vmatmul.mubr.bf16.gmra.mrb[0].mxu0 %v9515
        %v10055 = vpop.f32.mrb[0].mxu0
        %v10056 = vadd.f32 %v9895, %v10055
        %v10057 = vpop.f32.mrb[0].mxu0
        %v10058 = vpop.f32.mrb[0].mxu0
        %v10059 = vadd.f32 %v9898, %v10058
        %v10060 = vpop.f32.mrb[0].mxu0
        %10061 = vmatprep.mubr.bf16.mxu0 %v9520
        %10062 = vmatmul.mubr.bf16.gmra.mrb[0].mxu0 %v9519
        %v10063 = vpop.f32.mrb[0].mxu0
        %v10064 = vadd.f32 %v9903, %v10063
        %v10065 = vpop.f32.mrb[0].mxu0
        %v10066 = vpop.f32.mrb[0].mxu0
        %v10067 = vadd.f32 %v9906, %v10066
        %v10068 = vpop.f32.mrb[0].mxu0
        %10069 = vmatprep.mubr.bf16.mxu0 %v9524
        %10070 = vmatmul.mubr.bf16.gmra.mrb[0].mxu0 %v9523
        %v10071 = vpop.f32.mrb[0].mxu0
        %v10072 = vadd.f32 %v9911, %v10071
        %v10073 = vpop.f32.mrb[0].mxu0
        %v10074 = vpop.f32.mrb[0].mxu0
        %v10075 = vadd.f32 %v9914, %v10074
        %v10076 = vpop.f32.mrb[0].mxu0
        %10077 = vmatprep.mubr.bf16.mxu0 %v9528
        %10078 = vmatmul.mubr.bf16.gmra.mrb[0].mxu0 %v9527
        %v10079 = vpop.f32.mrb[0].mxu0
        %v10080 = vadd.f32 %v9919, %v10079
        %v10081 = vpop.f32.mrb[0].mxu0
        %v10082 = vpop.f32.mrb[0].mxu0
        %v10083 = vadd.f32 %v9922, %v10082
        %v10084 = vpop.f32.mrb[0].mxu0
        %10085 = vmatprep.mubr.bf16.mxu0 %v9532
        %10086 = vmatmul.mubr.bf16.gmra.mrb[0].mxu0 %v9531
        %v10087 = vpop.f32.mrb[0].mxu0
        %v10088 = vadd.f32 %v9927, %v10087
        %v10089 = vpop.f32.mrb[0].mxu0
        %v10090 = vpop.f32.mrb[0].mxu0
        %v10091 = vadd.f32 %v9930, %v10090
        %v10092 = vpop.f32.mrb[0].mxu0
        %10093 = vmatprep.mubr.bf16.mxu0 %v9536
        %10094 = vmatmul.mubr.bf16.gmra.mrb[0].mxu0 %v9535
        %v10095 = vpop.f32.mrb[0].mxu0
        %v10096 = vadd.f32 %v9935, %v10095
        %v10097 = vpop.f32.mrb[0].mxu0
        %v10098 = vpop.f32.mrb[0].mxu0
        %v10099 = vadd.f32 %v9938, %v10098
        %v10100 = vpop.f32.mrb[0].mxu0
        %10101 = vmatprep.mubr.bf16.mxu0 %v9540
        %10102 = vmatmul.mubr.bf16.gmra.mrb[0].mxu0 %v9539
        %v10103 = vpop.f32.mrb[0].mxu0
        %v10104 = vadd.f32 %v9943, %v10103
        %v10105 = vpop.f32.mrb[0].mxu0
        %v10106 = vpop.f32.mrb[0].mxu0
        %v10107 = vadd.f32 %v9946, %v10106
        %v10108 = vpop.f32.mrb[0].mxu0
        %10109 = vmatprep.mubr.bf16.mxu0 %v9544
        %10110 = vmatmul.mubr.bf16.gmra.mrb[0].mxu0 %v9543
        %v10111 = vpop.f32.mrb[0].mxu0
        %v10112 = vadd.f32 %v9951, %v10111
        %v10113 = vpop.f32.mrb[0].mxu0
        %v10114 = vpop.f32.mrb[0].mxu0
        %v10115 = vadd.f32 %v9954, %v10114
        %v10116 = vpop.f32.mrb[0].mxu0
        %10117 = vmatprep.mubr.bf16.mxu0 %v9548
        %10118 = vmatmul.mubr.bf16.gmra.mrb[0].mxu0 %v9547
        %v10119 = vpop.f32.mrb[0].mxu0
        %v10120 = vadd.f32 %v9959, %v10119
        %v10121 = vpop.f32.mrb[0].mxu0
        %v10122 = vpop.f32.mrb[0].mxu0
        %v10123 = vadd.f32 %v9962, %v10122
        %v10124 = vpop.f32.mrb[0].mxu0
        %10125 = vmatprep.mubr.bf16.mxu0 %v9552
        %10126 = vmatmul.mubr.bf16.gmra.mrb[0].mxu0 %v9551
        %v10127 = vpop.f32.mrb[0].mxu0
        %v10128 = vadd.f32 %v9967, %v10127
        %v10129 = vpop.f32.mrb[0].mxu0
        %v10130 = vpop.f32.mrb[0].mxu0
        %v10131 = vadd.f32 %v9970, %v10130
        %v10132 = vpop.f32.mrb[0].mxu0
        %10133 = vmatprep.mubr.bf16.mxu0 %v9556
        %10134 = vmatmul.mubr.bf16.gmra.mrb[0].mxu0 %v9555
        %v10135 = vpop.f32.mrb[0].mxu0
        %v10136 = vadd.f32 %v9975, %v10135
        %v10137 = vpop.f32.mrb[0].mxu0
        %v10138 = vpop.f32.mrb[0].mxu0
        %v10139 = vadd.f32 %v9978, %v10138
        %v10140 = vpop.f32.mrb[0].mxu0
        %10141 = vdwg.mxu0
        %v10142 = vadd.f32 %v7903, %v10016
        %v10143 = vadd.f32 %v7904, %v10019
        %v10144 = vadd.f32 %v7905, %v10024
        %v10145 = vadd.f32 %v7906, %v10027
        %v10146 = vadd.f32 %v7907, %v10032
        %v10147 = vadd.f32 %v7908, %v10035
        %v10148 = vadd.f32 %v7909, %v10040
        %v10149 = vadd.f32 %v7910, %v10043
        %v10150 = vadd.f32 %v7911, %v10048
        %v10151 = vadd.f32 %v7912, %v10051
        %v10152 = vadd.f32 %v7913, %v10056
        %v10153 = vadd.f32 %v7914, %v10059
        %v10154 = vadd.f32 %v7915, %v10064
        %v10155 = vadd.f32 %v7916, %v10067
        %v10156 = vadd.f32 %v7917, %v10072
        %v10157 = vadd.f32 %v7918, %v10075
        %v10158 = vadd.f32 %v7919, %v10080
        %v10159 = vadd.f32 %v7920, %v10083
        %v10160 = vadd.f32 %v7921, %v10088
        %v10161 = vadd.f32 %v7922, %v10091
        %v10162 = vadd.f32 %v7923, %v10096
        %v10163 = vadd.f32 %v7924, %v10099
        %v10164 = vadd.f32 %v7925, %v10104
        %v10165 = vadd.f32 %v7926, %v10107
        %v10166 = vadd.f32 %v7927, %v10112
        %v10167 = vadd.f32 %v7928, %v10115
        %v10168 = vadd.f32 %v7929, %v10120
        %v10169 = vadd.f32 %v7930, %v10123
        %v10170 = vadd.f32 %v7931, %v10128
        %v10171 = vadd.f32 %v7932, %v10131
        %v10172 = vadd.f32 %v7933, %v10136
        %v10173 = vadd.f32 %v7934, %v10139
        %10174 = vst [vmem:[%s542] sm:$0xff] %v10142
        %10175 = vst [vmem:[%s542 + $0x8] sm:$0xff] %v10143
        %10176 = vst [vmem:[%s542 + $0x10] sm:$0xff] %v10144
        %10177 = vst [vmem:[%s542 + $0x18] sm:$0xff] %v10145
        %10178 = vst [vmem:[%s542 + $0x20] sm:$0xff] %v10146
        %10179 = vst [vmem:[%s542 + $0x28] sm:$0xff] %v10147
        %10180 = vst [vmem:[%s542 + $0x30] sm:$0xff] %v10148
        %10181 = vst [vmem:[%s542 + $0x38] sm:$0xff] %v10149
        %10182 = vst [vmem:[%s542 + $0x40] sm:$0xff] %v10150
        %10183 = vst [vmem:[%s542 + $0x48] sm:$0xff] %v10151
        %10184 = vst [vmem:[%s542 + $0x50] sm:$0xff] %v10152
        %10185 = vst [vmem:[%s542 + $0x58] sm:$0xff] %v10153
        %10186 = vst [vmem:[%s542 + $0x60] sm:$0xff] %v10154
        %10187 = vst [vmem:[%s542 + $0x68] sm:$0xff] %v10155
        %10188 = vst [vmem:[%s542 + $0x70] sm:$0xff] %v10156
        %10189 = vst [vmem:[%s542 + $0x78] sm:$0xff] %v10157
        %10190 = vst [vmem:[%s542 + $0x80] sm:$0xff] %v10158
        %10191 = vst [vmem:[%s542 + $0x88] sm:$0xff] %v10159
        %10192 = vst [vmem:[%s542 + $0x90] sm:$0xff] %v10160
        %10193 = vst [vmem:[%s542 + $0x98] sm:$0xff] %v10161
        %10194 = vst [vmem:[%s542 + $0xa0] sm:$0xff] %v10162
        %10195 = vst [vmem:[%s542 + $0xa8] sm:$0xff] %v10163
        %10196 = vst [vmem:[%s542 + $0xb0] sm:$0xff] %v10164
        %10197 = vst [vmem:[%s542 + $0xb8] sm:$0xff] %v10165
        %10198 = vst [vmem:[%s542 + $0xc0] sm:$0xff] %v10166
        %10199 = vst [vmem:[%s542 + $0xc8] sm:$0xff] %v10167
        %10200 = vst [vmem:[%s542 + $0xd0] sm:$0xff] %v10168
        %10201 = vst [vmem:[%s542 + $0xd8] sm:$0xff] %v10169
        %10202 = vst [vmem:[%s542 + $0xe0] sm:$0xff] %v10170
        %10203 = vst [vmem:[%s542 + $0xe8] sm:$0xff] %v10171
        %10204 = vst [vmem:[%s542 + $0xf0] sm:$0xff] %v10172
        %10205 = vst [vmem:[%s542 + $0xf8] sm:$0xff] %v10173
        %s10206 = sand.u32 %s319, 1
        %s10207 = scalar_lea.sflag [#allocation4], %s10206
        %s10208 = sand.u32 %s319, 1
        %s10209 = smul.addr %s10208, 256
        %s10210 = scalar_lea.vmem [#allocation14], %s10209
        // Predicated region
        $region101: #{tpu_custom_call.1} parent=71 // pred_check
          %p10211 = pneg %p329
        $region102: #{tpu_custom_call.1} parent=71 // pred_check_branch
          %10213 = sbr.rel (%p10211) target = $region104
        $region103: #{tpu_custom_call.1} parent=71 // pred_region
          %s10214 = smul.u32 8, %s33
          %s10216 = ssub.s32 4096, 4096
          %10217 = vsyncadd %s10207, %s10216
          %s10218 = smul.addr %s10214, 4
          %s10219 = smul.addr %s10218, 128
          %s10220 = scalar_lea.hbm %s13, %s10219
          %s10221 = sshll.u32 %s10210, 4
          %s10222 = int_to_ptr.vmem [resolvable:$true] %s10221
          %10227 = dma.vmem_to_hbm [thread:$0]  %s10222, 4096, %s10220, %s10207, 128, 128, 8
        $region104: #{tpu_custom_call.1} parent=71 // pred_fallthru
          _
      $region72: #{tpu_custom_call.1} parent=5 // pred_fallthru
        _
      %p10228 = scmp.le.s32.totalorder 2, %s28
      // Predicated region
      $region105: #{tpu_custom_call.1} parent=5 // pred_check
        %p10229 = pneg %p10228
      $region106: #{tpu_custom_call.1} parent=5 // pred_check_branch
        %10231 = sbr.rel (%p10229) target = $region108
      $region107: #{tpu_custom_call.1} parent=5 // pred_region
        %s10232 = ssub.s32 %s28, 2
        // Predicated region
        $region109: #{tpu_custom_call.1} parent=107 // pred_check
          %p10233 = pneg %p335
        $region110: #{tpu_custom_call.1} parent=107 // pred_check_branch
          %10235 = sbr.rel (%p10233) target = $region112
        $region111: #{tpu_custom_call.1} parent=107 // pred_region
          %s10236 = sand.u32 %s320, 1
          %s10237 = scalar_lea.sflag [#allocation4], %s10236
          %s10238 = sand.u32 %s320, 1
          %s10239 = smul.addr %s10238, 256
          %s10240 = scalar_lea.vmem [#allocation14], %s10239
          %10241 = dma.done %s10237, 4096
        $region112: #{tpu_custom_call.1} parent=107 // pred_fallthru
          _
      $region108: #{tpu_custom_call.1} parent=5 // pred_fallthru
        _
    $region6: #{tpu_custom_call.1} parent=1 // loop_footer
      %s32 = sadd.s32 1, %s28
    $region7: #{tpu_custom_call.1} parent=1 // loop_footer_branch
      %27 = sbr.rel target = $region3
    $region8: #{tpu_custom_call.1} parent=1 // loop_exit
      _
    %10242 = vsyncpa [#allocation3], 1
    %s10243 = scalar_lea.sflag [#allocation3], 1
    %10244 = vsyncpa %s10243, 1
    %10245 = vsyncpa [#allocation6], 1
    %10246 = vsyncpa [#allocation9], 1
    %10247 = vsyncpa [#allocation12], 1
    %10248 = vsyncpa [#allocation4], 1
    %s10249 = scalar_lea.sflag [#allocation4], 1
    %10250 = vsyncpa %s10249, 1

</llo_original>
